<compile_context>
chip_gen: v7x
topology: tpu7x:2x2x1
jax: 0.10.0
libtpu: 0.0.40
codegen_flags: <defaults>
</compile_context>

<pallas_src>
import numpy as np

import jax
import jax.numpy as jnp
from jax.experimental import pallas as pl
from jax.experimental.pallas import tpu as pltpu

K = 5  # every conv / deconv / fc1-as-conv kernel in Recon_Net is 5x5

_VMEM = pl.BlockSpec(memory_space=pltpu.MemorySpace.VMEM)

_PARAM_ORDER = (
    "s1", "t1", "b1", "rp1",
    "s2", "t2", "b2", "rp2",
    "sfc", "tfc1", "bfc1",
    "w2t", "bfc2", "w3t", "bfc3",
    "rup2", "cup2",
    "sd2", "td2", "bd2",
    "rup1", "cup1",
    "sd1", "td1", "bd1",
)


# ---------------------------------------------------------------------------
# In-kernel building blocks (2-D MXU matmuls + VPU elementwise only)
# ---------------------------------------------------------------------------

def _conv_block(x, s_ref, t_ref, b_ref, relu):
    """Generic 5x5 conv / deconv / fc1 on the (N*H, C*W) layout.

    x:     (N*Hin, Cin*Win) activation value.
    s_ref: (K, N*Hout, N*Hin) 0/1 row-gather matrices (one per kh tap; zero
           rows implement the H zero-padding of 'full' convs / deconvs).
    t_ref: (K*Cin*Win, Lout) banded Toeplitz weight matrix (kw taps folded).
    b_ref: (1, Lout) bias replicated to the output lane order.
    """
    pieces = [
        jnp.dot(s_ref[kh], x, preferred_element_type=jnp.float32)
        for kh in range(K)
    ]
    xcat = jnp.concatenate(pieces, axis=1)                  # (N*Hout, K*Cin*Win)
    out = jnp.dot(xcat, t_ref[...], preferred_element_type=jnp.float32)
    out = out + b_ref[...]
    if relu:
        out = jnp.maximum(out, 0.0)
    return out


def _maxpool2x2(o, rp_ref):
    """2x2 / stride-2 max-pool with plane index.

    o:      (N*Ho, 2*C*Vo) conv output with lane order (dw, c, v) -- the pool's
            column subsampling is already folded into the conv weight matrix.
    rp_ref: (2, N*Ho/2, N*Ho) 0/1 row-subsample matrices (dh = 0, 1).
    Returns (val, plane) of shape (N*Ho/2, C*Vo); plane in {0..3} encodes
    (dh, dw) row-major -- PyTorch's first-max convention.
    """
    half = o.shape[1] // 2
    cols = (o[:, :half], o[:, half:])                       # dw = 0, 1
    planes = [
        jnp.dot(rp_ref[dh], cols[dw], preferred_element_type=jnp.float32)
        for dh in range(2) for dw in range(2)
    ]
    best = planes[0]
    idx = jnp.zeros(best.shape, dtype=jnp.int32)
    for p in range(1, 4):
        better = planes[p] > best
        best = jnp.where(better, planes[p], best)
        idx = jnp.where(better, p, idx)
    return best, idx


def _relu_unpool2x2(val, plane, rup_ref, cup_ref):
    """F.relu(MaxUnpool2d(2, 2)(val, indices)) on the (N*H, C*W) layout.

    val/plane: (N*H2, C*W2);  rup_ref: (2, N*H, N*H2);  cup_ref: (2, C*W2, C*W)
    """
    rv = jnp.maximum(val, 0.0)      # relu commutes with the zero-fill scatter
    m = [jnp.where(plane == p, rv, 0.0) for p in range(4)]
    row0 = (jnp.dot(m[0], cup_ref[0], preferred_element_type=jnp.float32)
            + jnp.dot(m[1], cup_ref[1], preferred_element_type=jnp.float32))
    row1 = (jnp.dot(m[2], cup_ref[0], preferred_element_type=jnp.float32)
            + jnp.dot(m[3], cup_ref[1], preferred_element_type=jnp.float32))
    return (jnp.dot(rup_ref[0], row0, preferred_element_type=jnp.float32)
            + jnp.dot(rup_ref[1], row1, preferred_element_type=jnp.float32))


def _recon_kernel(x_ref,
                  s1, t1, b1, rp1,
                  s2, t2, b2, rp2,
                  sfc, tfc1, bfc1,
                  w2t, bfc2, w3t, bfc3,
                  rup2, cup2,
                  sd2, td2, bd2,
                  rup1, cup1,
                  sd1, td1, bd1,
                  y_ref, xr_ref):
    x = x_ref[...]                                          # (N*32, 3*32)

    # ------------------------------ encoder ------------------------------
    o1 = _conv_block(x, s1, t1, b1, relu=True)              # (N*28, 2*6*14)
    z1, p1 = _maxpool2x2(o1, rp1)                           # (N*14, 6*14)
    o2 = _conv_block(z1, s2, t2, b2, relu=True)             # (N*10, 2*16*5)
    z2, p2 = _maxpool2x2(o2, rp2)                           # (N*5,  16*5)

    # ----------------------- classifier head (fused) ---------------------
    y1 = _conv_block(z2, sfc, tfc1, bfc1, relu=True)        # (N, 120)
    y2 = jnp.dot(y1, w2t[...], preferred_element_type=jnp.float32) + bfc2[...]
    y2 = jnp.maximum(y2, 0.0)                               # (N, 84)
    y3 = jnp.dot(y2, w3t[...], preferred_element_type=jnp.float32) + bfc3[...]
    y_ref[...] = y3                                         # (N, 10)

    # ------------------------------ decoder ------------------------------
    u2 = _relu_unpool2x2(z2, p2, rup2, cup2)                # (N*10, 16*10)
    d2 = _conv_block(u2, sd2, td2, bd2, relu=False)         # (N*14, 6*14)
    u1 = _relu_unpool2x2(d2, p1, rup1, cup1)                # (N*28, 6*28)
    xr = _conv_block(u1, sd1, td1, bd1, relu=False)         # (N*32, 3*32)
    xr_ref[...] = xr


# ---------------------------------------------------------------------------
# One-time (outside jit) parameter reformatting into matmul layouts
# ---------------------------------------------------------------------------

def _band_T(w_conv, w_in, j_cols, c0):
    """Banded (Toeplitz) weight matrix so the conv's kw taps become one matmul.

    Rows ordered (kh, ci, c); columns ordered (co, j).
    T[(kh,ci,c),(co,j)] = w[co, ci, kh, c - j + c0] when the kw is in range.
    """
    cout, cin, kh_, kw_ = w_conv.shape
    c = np.arange(w_in)[:, None]
    j = np.asarray(j_cols, dtype=np.int64)[None, :]
    kw = c - j + c0
    valid = (kw >= 0) & (kw < kw_)
    kw_c = np.clip(kw, 0, kw_ - 1)
    gathered = w_conv[:, :, :, kw_c]                        # (Cout,Cin,K,w_in,J)
    gathered = gathered * jnp.asarray(valid, w_conv.dtype)
    t = jnp.transpose(gathered, (2, 1, 3, 0, 4))            # (K,Cin,w_in,Cout,J)
    return t.reshape(kh_ * cin * w_in, cout * j.shape[1])


def _row_gather_S(n, h_in, h_out, pad):
    """(K, n*h_out, n*h_in) 0/1 matrices: S[kh] @ x picks row (i + kh - pad)
    of each per-sample block (zero row when out of range -> folded H pad)."""
    i = np.arange(h_out)[:, None]
    r = np.arange(h_in)[None, :]
    eye_n = np.eye(n, dtype=np.float32)
    mats = [np.kron(eye_n, (r == i + kh - pad).astype(np.float32))
            for kh in range(K)]
    return jnp.asarray(np.stack(mats))


def _pool_rows_R(n, h_in):
    """(2, n*h_in//2, n*h_in) 0/1 row-subsample matrices (dh = 0, 1)."""
    h_out = h_in // 2
    u = np.arange(h_out)[:, None]
    i = np.arange(h_in)[None, :]
    eye_n = np.eye(n, dtype=np.float32)
    mats = [np.kron(eye_n, (i == 2 * u + dh).astype(np.float32))
            for dh in (0, 1)]
    return jnp.asarray(np.stack(mats))


def _unpool_cols_C(channels, w_small):
    """(2, channels*w_small, channels*2*w_small) 0/1 column-upsample mats."""
    v = np.arange(w_small)[:, None]
    j = np.arange(2 * w_small)[None, :]
    eye_c = np.eye(channels, dtype=np.float32)
    mats = [np.kron(eye_c, (j == 2 * v + dw).astype(np.float32))
            for dw in (0, 1)]
    return jnp.asarray(np.stack(mats))


def prepare_params(params, n):
    """Reformat PyTorch-layout parameters into the fused-kernel layouts."""
    p = {}
    # conv1 (+ folded 2x2-pool column subsampling) --------------------------
    p["s1"] = _row_gather_S(n, 32, 28, 0)
    p["t1"] = jnp.concatenate(
        [_band_T(params["conv1_w"], 32, 2 * np.arange(14) + dw, 0)
         for dw in (0, 1)], axis=1)
    p["b1"] = jnp.tile(jnp.repeat(params["conv1_b"], 14), 2)[None, :]
    p["rp1"] = _pool_rows_R(n, 28)
    # conv2 (+ folded pool) --------------------------------------------------
    p["s2"] = _row_gather_S(n, 14, 10, 0)
    p["t2"] = jnp.concatenate(
        [_band_T(params["conv2_w"], 14, 2 * np.arange(5) + dw, 0)
         for dw in (0, 1)], axis=1)
    p["b2"] = jnp.tile(jnp.repeat(params["conv2_b"], 5), 2)[None, :]
    p["rp2"] = _pool_rows_R(n, 10)
    # fc head (fc1 as a 5x5 valid conv => torch.flatten order preserved) ----
    wfc1 = params["fc1_w"].reshape(120, 16, K, K)
    p["sfc"] = _row_gather_S(n, 5, 1, 0)
    p["tfc1"] = _band_T(wfc1, 5, np.arange(1), 0)
    p["bfc1"] = params["fc1_b"][None, :]
    p["w2t"] = params["fc2_w"].T
    p["bfc2"] = params["fc2_b"][None, :]
    p["w3t"] = params["fc3_w"].T
    p["bfc3"] = params["fc3_b"][None, :]
    # unpool2 + deconv2 (full conv with flipped / channel-swapped weights) --
    p["rup2"] = jnp.transpose(_pool_rows_R(n, 10), (0, 2, 1))
    p["cup2"] = _unpool_cols_C(16, 5)
    wd2 = jnp.flip(params["deconv2_w"], axis=(2, 3)).transpose(1, 0, 2, 3)
    p["sd2"] = _row_gather_S(n, 10, 14, 4)
    p["td2"] = _band_T(wd2, 10, np.arange(14), 4)
    p["bd2"] = jnp.repeat(params["deconv2_b"], 14)[None, :]
    # unpool1 + deconv1 ------------------------------------------------------
    p["rup1"] = jnp.transpose(_pool_rows_R(n, 28), (0, 2, 1))
    p["cup1"] = _unpool_cols_C(6, 14)
    wd1 = jnp.flip(params["deconv1_w"], axis=(2, 3)).transpose(1, 0, 2, 3)
    p["sd1"] = _row_gather_S(n, 28, 32, 4)
    p["td1"] = _band_T(wd1, 28, np.arange(32), 4)
    p["bd1"] = jnp.repeat(params["deconv1_b"], 32)[None, :]
    return p


# ---------------------------------------------------------------------------
# Forward pass (single pallas_call) + thin boundary layout glue
# ---------------------------------------------------------------------------

def recon_net_forward(prepared, x):
    """x: (N, 3, 32, 32) NCHW -> (y: (N, 10), x_rec: (N, 3, 32, 32))."""
    n, c, h, w = x.shape
    x2d = x.transpose(0, 2, 1, 3).reshape(n * h, c * w)     # rows (n,h), lanes (c,w)
    ins = [x2d] + [prepared[k] for k in _PARAM_ORDER]
    y, xr2d = pl.pallas_call(
        _recon_kernel,
        out_shape=(jax.ShapeDtypeStruct((n, 10), jnp.float32),
                   jax.ShapeDtypeStruct((n * 32, 3 * 32), jnp.float32)),
        in_specs=[_VMEM] * len(ins),
        out_specs=(_VMEM, _VMEM),
    )(*ins)
    x_rec = xr2d.reshape(n, 32, 3, 32).transpose(0, 2, 1, 3)
    return y, x_rec


# ---------------------------------------------------------------------------
# Pure-JAX (XLA) reference with identical semantics, for a numeric self-check
# ---------------------------------------------------------------------------

def _ref_forward(params, x):
    prec = jax.lax.Precision.HIGHEST

    def conv2d(xn, w, b):
        n, cin, hh, ww = xn.shape
        cout = w.shape[0]
        ho, wo = hh - 4, ww - 4
        cols = []
        for ci in range(cin):
            for kh in range(K):
                for kw in range(K):
                    cols.append(xn[:, ci, kh:kh + ho, kw:kw + wo])
        patches = jnp.stack(cols, axis=-1).reshape(n * ho * wo, cin * K * K)
        out = jnp.dot(patches, w.reshape(cout, -1).T, precision=prec) + b
        return out.reshape(n, ho, wo, cout).transpose(0, 3, 1, 2)

    def pool(xn):
        n, cc, hh, ww = xn.shape
        ho, wo = hh // 2, ww // 2
        xr = xn.reshape(n, cc, ho, 2, wo, 2)
        planes = [xr[:, :, :, dh, :, dw] for dh in (0, 1) for dw in (0, 1)]
        best = planes[0]
        idx = jnp.zeros(best.shape, jnp.int32)
        for k in range(1, 4):
            better = planes[k] > best
            best = jnp.where(better, planes[k], best)
            idx = jnp.where(better, k, idx)
        return best, idx

    def unpool_relu(v, idx):
        rv = jnp.maximum(v, 0.0)
        planes = [jnp.where(idx == p, rv, 0.0) for p in range(4)]
        n, cc, ho, wo = v.shape
        arr = jnp.stack(planes, 0).reshape(2, 2, n, cc, ho, wo)
        return arr.transpose(2, 3, 4, 0, 5, 1).reshape(n, cc, 2 * ho, 2 * wo)

    def deconv(xn, w_t, b):
        w_eq = jnp.flip(w_t, axis=(2, 3)).transpose(1, 0, 2, 3)
        xp = jnp.pad(xn, ((0, 0), (0, 0), (4, 4), (4, 4)))
        return conv2d(xp, w_eq, b)

    c1 = jax.nn.relu(conv2d(x, params["conv1_w"], params["conv1_b"]))
    z1, i1 = pool(c1)
    c2 = jax.nn.relu(conv2d(z1, params["conv2_w"], params["conv2_b"]))
    z2, i2 = pool(c2)
    u2 = unpool_relu(z2, i2)
    d2 = deconv(u2, params["deconv2_w"], params["deconv2_b"])
    u1 = unpool_relu(d2, i1)
    xr = deconv(u1, params["deconv1_w"], params["deconv1_b"])
    y = z2.reshape(z2.shape[0], -1)
    y = jax.nn.relu(jnp.dot(y, params["fc1_w"].T, precision=prec) + params["fc1_b"])
    y = jax.nn.relu(jnp.dot(y, params["fc2_w"].T, precision=prec) + params["fc2_b"])
    y = jnp.dot(y, params["fc3_w"].T, precision=prec) + params["fc3_b"]
    return y, xr


# ---------------------------------------------------------------------------

def init_params(key):
    shapes = {
        "conv1_w": (6, 3, K, K),    "conv1_b": (6,),
        "conv2_w": (16, 6, K, K),   "conv2_b": (16,),
        "deconv1_w": (6, 3, K, K),  "deconv1_b": (3,),    # ConvTranspose2d(6,3,5)
        "deconv2_w": (16, 6, K, K), "deconv2_b": (6,),    # ConvTranspose2d(16,6,5)
        "fc1_w": (120, 16 * 5 * 5), "fc1_b": (120,),
        "fc2_w": (84, 120),         "fc2_b": (84,),
        "fc3_w": (10, 84),          "fc3_b": (10,),
    }
    keys = jax.random.split(key, len(shapes))
    params = {}
    for k_rng, (name, shape) in zip(keys, sorted(shapes.items())):
        params[name] = 0.1 * jax.random.normal(k_rng, shape, dtype=jnp.float32)
    return params


if __name__ == "__main__":
    root = jax.random.PRNGKey(0)
    k_param, k_x = jax.random.split(root)
    params = init_params(k_param)
    # fc1 expects 16*5*5 features, which implies a 32x32 spatial input.
    x = jax.random.normal(k_x, (2, 3, 32, 32), dtype=jnp.float32)

    prepared = prepare_params(params, n=2)        # one-time, outside jit
    fwd = jax.jit(recon_net_forward)
    y, x_rec = fwd(prepared, x)
    jax.block_until_ready((y, x_rec))

    assert y.shape == (2, 10), y.shape
    assert x_rec.shape == (2, 3, 32, 32), x_rec.shape
    assert bool(jnp.isfinite(y).all()) and bool(jnp.isfinite(x_rec).all())

    # Numeric self-check against a pure-XLA reference of the same module.
    y_ref, xr_ref = jax.jit(_ref_forward)(params, x)
    jax.block_until_ready((y_ref, xr_ref))
    y_err = float(jnp.max(jnp.abs(y - y_ref)))
    xr_err = float(jnp.mean(jnp.abs(x_rec - xr_ref)))
    assert y_err < 5e-2, f"classifier head mismatch: {y_err}"
    assert xr_err < 5e-2, f"reconstruction mismatch: {xr_err}"

    print("KERNEL_OK")
</pallas_src>

<mosaic_0001>
module attributes {stable_mosaic.version = 11 : i64} {
  func.func @_recon_kernel(%arg0: memref<64x96xf32, #tpu.memory_space<vmem>>, %arg1: memref<5x56x64xf32, #tpu.memory_space<vmem>>, %arg2: memref<480x168xf32, #tpu.memory_space<vmem>>, %arg3: memref<1x168xf32, #tpu.memory_space<vmem>>, %arg4: memref<2x28x56xf32, #tpu.memory_space<vmem>>, %arg5: memref<5x20x28xf32, #tpu.memory_space<vmem>>, %arg6: memref<420x160xf32, #tpu.memory_space<vmem>>, %arg7: memref<1x160xf32, #tpu.memory_space<vmem>>, %arg8: memref<2x10x20xf32, #tpu.memory_space<vmem>>, %arg9: memref<5x2x10xf32, #tpu.memory_space<vmem>>, %arg10: memref<400x120xf32, #tpu.memory_space<vmem>>, %arg11: memref<1x120xf32, #tpu.memory_space<vmem>>, %arg12: memref<120x84xf32, #tpu.memory_space<vmem>>, %arg13: memref<1x84xf32, #tpu.memory_space<vmem>>, %arg14: memref<84x10xf32, #tpu.memory_space<vmem>>, %arg15: memref<1x10xf32, #tpu.memory_space<vmem>>, %arg16: memref<2x20x10xf32, #tpu.memory_space<vmem>>, %arg17: memref<2x80x160xf32, #tpu.memory_space<vmem>>, %arg18: memref<5x28x20xf32, #tpu.memory_space<vmem>>, %arg19: memref<800x84xf32, #tpu.memory_space<vmem>>, %arg20: memref<1x84xf32, #tpu.memory_space<vmem>>, %arg21: memref<2x56x28xf32, #tpu.memory_space<vmem>>, %arg22: memref<2x84x168xf32, #tpu.memory_space<vmem>>, %arg23: memref<5x64x56xf32, #tpu.memory_space<vmem>>, %arg24: memref<840x96xf32, #tpu.memory_space<vmem>>, %arg25: memref<1x96xf32, #tpu.memory_space<vmem>>, %arg26: memref<2x10xf32, #tpu.memory_space<vmem>>, %arg27: memref<64x96xf32, #tpu.memory_space<vmem>>) attributes {dimension_semantics = [], scalar_prefetch = 0 : i64, scratch_operands = 0 : i64, tpu.core_type = #tpu.core_type<tc>} {
    %c0 = arith.constant 0 : index
    %c0_0 = arith.constant 0 : index
    %0 = vector.load %arg0[%c0, %c0_0] : memref<64x96xf32, #tpu.memory_space<vmem>>, vector<64x96xf32>
    %c0_1 = arith.constant 0 : index
    %c0_2 = arith.constant 0 : index
    %c0_3 = arith.constant 0 : index
    %1 = vector.load %arg1[%c0_1, %c0_2, %c0_3] : memref<5x56x64xf32, #tpu.memory_space<vmem>>, vector<1x56x64xf32>
    %2 = vector.shape_cast %1 : vector<1x56x64xf32> to vector<56x64xf32>
    %cst = arith.constant dense<0.000000e+00> : vector<56x96xf32>
    %3 = tpu.matmul %2, %0, %cst {dimension_numbers = #tpu.dot_dimension_numbers<[1], [0], [0], [1], [0, 0, 1, 1], [], []>} : vector<56x64xf32>, vector<64x96xf32>, vector<56x96xf32> -> vector<56x96xf32>
    %c1 = arith.constant 1 : index
    %c0_4 = arith.constant 0 : index
    %c0_5 = arith.constant 0 : index
    %4 = vector.load %arg1[%c1, %c0_4, %c0_5] : memref<5x56x64xf32, #tpu.memory_space<vmem>>, vector<1x56x64xf32>
    %5 = vector.shape_cast %4 : vector<1x56x64xf32> to vector<56x64xf32>
    %cst_6 = arith.constant dense<0.000000e+00> : vector<56x96xf32>
    %6 = tpu.matmul %5, %0, %cst_6 {dimension_numbers = #tpu.dot_dimension_numbers<[1], [0], [0], [1], [0, 0, 1, 1], [], []>} : vector<56x64xf32>, vector<64x96xf32>, vector<56x96xf32> -> vector<56x96xf32>
    %c2 = arith.constant 2 : index
    %c0_7 = arith.constant 0 : index
    %c0_8 = arith.constant 0 : index
    %7 = vector.load %arg1[%c2, %c0_7, %c0_8] : memref<5x56x64xf32, #tpu.memory_space<vmem>>, vector<1x56x64xf32>
    %8 = vector.shape_cast %7 : vector<1x56x64xf32> to vector<56x64xf32>
    %cst_9 = arith.constant dense<0.000000e+00> : vector<56x96xf32>
    %9 = tpu.matmul %8, %0, %cst_9 {dimension_numbers = #tpu.dot_dimension_numbers<[1], [0], [0], [1], [0, 0, 1, 1], [], []>} : vector<56x64xf32>, vector<64x96xf32>, vector<56x96xf32> -> vector<56x96xf32>
    %c3 = arith.constant 3 : index
    %c0_10 = arith.constant 0 : index
    %c0_11 = arith.constant 0 : index
    %10 = vector.load %arg1[%c3, %c0_10, %c0_11] : memref<5x56x64xf32, #tpu.memory_space<vmem>>, vector<1x56x64xf32>
    %11 = vector.shape_cast %10 : vector<1x56x64xf32> to vector<56x64xf32>
    %cst_12 = arith.constant dense<0.000000e+00> : vector<56x96xf32>
    %12 = tpu.matmul %11, %0, %cst_12 {dimension_numbers = #tpu.dot_dimension_numbers<[1], [0], [0], [1], [0, 0, 1, 1], [], []>} : vector<56x64xf32>, vector<64x96xf32>, vector<56x96xf32> -> vector<56x96xf32>
    %c4 = arith.constant 4 : index
    %c0_13 = arith.constant 0 : index
    %c0_14 = arith.constant 0 : index
    %13 = vector.load %arg1[%c4, %c0_13, %c0_14] : memref<5x56x64xf32, #tpu.memory_space<vmem>>, vector<1x56x64xf32>
    %14 = vector.shape_cast %13 : vector<1x56x64xf32> to vector<56x64xf32>
    %cst_15 = arith.constant dense<0.000000e+00> : vector<56x96xf32>
    %15 = tpu.matmul %14, %0, %cst_15 {dimension_numbers = #tpu.dot_dimension_numbers<[1], [0], [0], [1], [0, 0, 1, 1], [], []>} : vector<56x64xf32>, vector<64x96xf32>, vector<56x96xf32> -> vector<56x96xf32>
    %16 = tpu.concatenate %3, %6, %9, %12, %15 in 1 : vector<56x96xf32>, vector<56x96xf32>, vector<56x96xf32>, vector<56x96xf32>, vector<56x96xf32> -> vector<56x480xf32>
    %c0_16 = arith.constant 0 : index
    %c0_17 = arith.constant 0 : index
    %17 = vector.load %arg2[%c0_16, %c0_17] : memref<480x168xf32, #tpu.memory_space<vmem>>, vector<480x168xf32>
    %cst_18 = arith.constant dense<0.000000e+00> : vector<56x168xf32>
    %18 = tpu.matmul %16, %17, %cst_18 {dimension_numbers = #tpu.dot_dimension_numbers<[1], [0], [0], [1], [0, 0, 1, 1], [], []>} : vector<56x480xf32>, vector<480x168xf32>, vector<56x168xf32> -> vector<56x168xf32>
    %c0_19 = arith.constant 0 : index
    %c0_20 = arith.constant 0 : index
    %19 = vector.load %arg3[%c0_19, %c0_20] : memref<1x168xf32, #tpu.memory_space<vmem>>, vector<1x168xf32>
    %20 = vector.broadcast %19 : vector<1x168xf32> to vector<56x168xf32>
    %21 = arith.addf %18, %20 : vector<56x168xf32>
    %cst_21 = arith.constant 0.000000e+00 : f32
    %22 = vector.broadcast %cst_21 : f32 to vector<56x168xf32>
    %23 = arith.maximumf %21, %22 : vector<56x168xf32>
    %24 = vector.extract_strided_slice %23 {offsets = [0, 0], sizes = [56, 84], strides = [1, 1]} : vector<56x168xf32> to vector<56x84xf32>
    %25 = vector.extract_strided_slice %23 {offsets = [0, 84], sizes = [56, 84], strides = [1, 1]} : vector<56x168xf32> to vector<56x84xf32>
    %c0_22 = arith.constant 0 : index
    %c0_23 = arith.constant 0 : index
    %c0_24 = arith.constant 0 : index
    %26 = vector.load %arg4[%c0_22, %c0_23, %c0_24] : memref<2x28x56xf32, #tpu.memory_space<vmem>>, vector<1x28x56xf32>
    %27 = vector.shape_cast %26 : vector<1x28x56xf32> to vector<28x56xf32>
    %cst_25 = arith.constant dense<0.000000e+00> : vector<28x84xf32>
    %28 = tpu.matmul %27, %24, %cst_25 {dimension_numbers = #tpu.dot_dimension_numbers<[1], [0], [0], [1], [0, 0, 1, 1], [], []>} : vector<28x56xf32>, vector<56x84xf32>, vector<28x84xf32> -> vector<28x84xf32>
    %c0_26 = arith.constant 0 : index
    %c0_27 = arith.constant 0 : index
    %c0_28 = arith.constant 0 : index
    %29 = vector.load %arg4[%c0_26, %c0_27, %c0_28] : memref<2x28x56xf32, #tpu.memory_space<vmem>>, vector<1x28x56xf32>
    %30 = vector.shape_cast %29 : vector<1x28x56xf32> to vector<28x56xf32>
    %cst_29 = arith.constant dense<0.000000e+00> : vector<28x84xf32>
    %31 = tpu.matmul %30, %25, %cst_29 {dimension_numbers = #tpu.dot_dimension_numbers<[1], [0], [0], [1], [0, 0, 1, 1], [], []>} : vector<28x56xf32>, vector<56x84xf32>, vector<28x84xf32> -> vector<28x84xf32>
    %c1_30 = arith.constant 1 : index
    %c0_31 = arith.constant 0 : index
    %c0_32 = arith.constant 0 : index
    %32 = vector.load %arg4[%c1_30, %c0_31, %c0_32] : memref<2x28x56xf32, #tpu.memory_space<vmem>>, vector<1x28x56xf32>
    %33 = vector.shape_cast %32 : vector<1x28x56xf32> to vector<28x56xf32>
    %cst_33 = arith.constant dense<0.000000e+00> : vector<28x84xf32>
    %34 = tpu.matmul %33, %24, %cst_33 {dimension_numbers = #tpu.dot_dimension_numbers<[1], [0], [0], [1], [0, 0, 1, 1], [], []>} : vector<28x56xf32>, vector<56x84xf32>, vector<28x84xf32> -> vector<28x84xf32>
    %c1_34 = arith.constant 1 : index
    %c0_35 = arith.constant 0 : index
    %c0_36 = arith.constant 0 : index
    %35 = vector.load %arg4[%c1_34, %c0_35, %c0_36] : memref<2x28x56xf32, #tpu.memory_space<vmem>>, vector<1x28x56xf32>
    %36 = vector.shape_cast %35 : vector<1x28x56xf32> to vector<28x56xf32>
    %cst_37 = arith.constant dense<0.000000e+00> : vector<28x84xf32>
    %37 = tpu.matmul %36, %25, %cst_37 {dimension_numbers = #tpu.dot_dimension_numbers<[1], [0], [0], [1], [0, 0, 1, 1], [], []>} : vector<28x56xf32>, vector<56x84xf32>, vector<28x84xf32> -> vector<28x84xf32>
    %c0_i32 = arith.constant 0 : i32
    %38 = vector.broadcast %c0_i32 : i32 to vector<28x84xi32>
    %39 = arith.cmpf ogt, %31, %28 : vector<28x84xf32>
    %40 = arith.select %39, %31, %28 : vector<28x84xi1>, vector<28x84xf32>
    %c1_i32 = arith.constant 1 : i32
    %41 = vector.broadcast %c1_i32 : i32 to vector<28x84xi32>
    %42 = arith.select %39, %41, %38 : vector<28x84xi1>, vector<28x84xi32>
    %43 = arith.cmpf ogt, %34, %40 : vector<28x84xf32>
    %44 = arith.select %43, %34, %40 : vector<28x84xi1>, vector<28x84xf32>
    %c2_i32 = arith.constant 2 : i32
    %45 = vector.broadcast %c2_i32 : i32 to vector<28x84xi32>
    %46 = arith.select %43, %45, %42 : vector<28x84xi1>, vector<28x84xi32>
    %47 = arith.cmpf ogt, %37, %44 : vector<28x84xf32>
    %48 = arith.select %47, %37, %44 : vector<28x84xi1>, vector<28x84xf32>
    %c3_i32 = arith.constant 3 : i32
    %49 = vector.broadcast %c3_i32 : i32 to vector<28x84xi32>
    %50 = arith.select %47, %49, %46 : vector<28x84xi1>, vector<28x84xi32>
    %c0_38 = arith.constant 0 : index
    %c0_39 = arith.constant 0 : index
    %c0_40 = arith.constant 0 : index
    %51 = vector.load %arg5[%c0_38, %c0_39, %c0_40] : memref<5x20x28xf32, #tpu.memory_space<vmem>>, vector<1x20x28xf32>
    %52 = vector.shape_cast %51 : vector<1x20x28xf32> to vector<20x28xf32>
    %cst_41 = arith.constant dense<0.000000e+00> : vector<20x84xf32>
    %53 = tpu.matmul %52, %48, %cst_41 {dimension_numbers = #tpu.dot_dimension_numbers<[1], [0], [0], [1], [0, 0, 1, 1], [], []>} : vector<20x28xf32>, vector<28x84xf32>, vector<20x84xf32> -> vector<20x84xf32>
    %c1_42 = arith.constant 1 : index
    %c0_43 = arith.constant 0 : index
    %c0_44 = arith.constant 0 : index
    %54 = vector.load %arg5[%c1_42, %c0_43, %c0_44] : memref<5x20x28xf32, #tpu.memory_space<vmem>>, vector<1x20x28xf32>
    %55 = vector.shape_cast %54 : vector<1x20x28xf32> to vector<20x28xf32>
    %cst_45 = arith.constant dense<0.000000e+00> : vector<20x84xf32>
    %56 = tpu.matmul %55, %48, %cst_45 {dimension_numbers = #tpu.dot_dimension_numbers<[1], [0], [0], [1], [0, 0, 1, 1], [], []>} : vector<20x28xf32>, vector<28x84xf32>, vector<20x84xf32> -> vector<20x84xf32>
    %c2_46 = arith.constant 2 : index
    %c0_47 = arith.constant 0 : index
    %c0_48 = arith.constant 0 : index
    %57 = vector.load %arg5[%c2_46, %c0_47, %c0_48] : memref<5x20x28xf32, #tpu.memory_space<vmem>>, vector<1x20x28xf32>
    %58 = vector.shape_cast %57 : vector<1x20x28xf32> to vector<20x28xf32>
    %cst_49 = arith.constant dense<0.000000e+00> : vector<20x84xf32>
    %59 = tpu.matmul %58, %48, %cst_49 {dimension_numbers = #tpu.dot_dimension_numbers<[1], [0], [0], [1], [0, 0, 1, 1], [], []>} : vector<20x28xf32>, vector<28x84xf32>, vector<20x84xf32> -> vector<20x84xf32>
    %c3_50 = arith.constant 3 : index
    %c0_51 = arith.constant 0 : index
    %c0_52 = arith.constant 0 : index
    %60 = vector.load %arg5[%c3_50, %c0_51, %c0_52] : memref<5x20x28xf32, #tpu.memory_space<vmem>>, vector<1x20x28xf32>
    %61 = vector.shape_cast %60 : vector<1x20x28xf32> to vector<20x28xf32>
    %cst_53 = arith.constant dense<0.000000e+00> : vector<20x84xf32>
    %62 = tpu.matmul %61, %48, %cst_53 {dimension_numbers = #tpu.dot_dimension_numbers<[1], [0], [0], [1], [0, 0, 1, 1], [], []>} : vector<20x28xf32>, vector<28x84xf32>, vector<20x84xf32> -> vector<20x84xf32>
    %c4_54 = arith.constant 4 : index
    %c0_55 = arith.constant 0 : index
    %c0_56 = arith.constant 0 : index
    %63 = vector.load %arg5[%c4_54, %c0_55, %c0_56] : memref<5x20x28xf32, #tpu.memory_space<vmem>>, vector<1x20x28xf32>
    %64 = vector.shape_cast %63 : vector<1x20x28xf32> to vector<20x28xf32>
    %cst_57 = arith.constant dense<0.000000e+00> : vector<20x84xf32>
    %65 = tpu.matmul %64, %48, %cst_57 {dimension_numbers = #tpu.dot_dimension_numbers<[1], [0], [0], [1], [0, 0, 1, 1], [], []>} : vector<20x28xf32>, vector<28x84xf32>, vector<20x84xf32> -> vector<20x84xf32>
    %66 = tpu.concatenate %53, %56, %59, %62, %65 in 1 : vector<20x84xf32>, vector<20x84xf32>, vector<20x84xf32>, vector<20x84xf32>, vector<20x84xf32> -> vector<20x420xf32>
    %c0_58 = arith.constant 0 : index
    %c0_59 = arith.constant 0 : index
    %67 = vector.load %arg6[%c0_58, %c0_59] : memref<420x160xf32, #tpu.memory_space<vmem>>, vector<420x160xf32>
    %cst_60 = arith.constant dense<0.000000e+00> : vector<20x160xf32>
    %68 = tpu.matmul %66, %67, %cst_60 {dimension_numbers = #tpu.dot_dimension_numbers<[1], [0], [0], [1], [0, 0, 1, 1], [], []>} : vector<20x420xf32>, vector<420x160xf32>, vector<20x160xf32> -> vector<20x160xf32>
    %c0_61 = arith.constant 0 : index
    %c0_62 = arith.constant 0 : index
    %69 = vector.load %arg7[%c0_61, %c0_62] : memref<1x160xf32, #tpu.memory_space<vmem>>, vector<1x160xf32>
    %70 = vector.broadcast %69 : vector<1x160xf32> to vector<20x160xf32>
    %71 = arith.addf %68, %70 : vector<20x160xf32>
    %cst_63 = arith.constant 0.000000e+00 : f32
    %72 = vector.broadcast %cst_63 : f32 to vector<20x160xf32>
    %73 = arith.maximumf %71, %72 : vector<20x160xf32>
    %74 = vector.extract_strided_slice %73 {offsets = [0, 0], sizes = [20, 80], strides = [1, 1]} : vector<20x160xf32> to vector<20x80xf32>
    %75 = vector.extract_strided_slice %73 {offsets = [0, 80], sizes = [20, 80], strides = [1, 1]} : vector<20x160xf32> to vector<20x80xf32>
    %c0_64 = arith.constant 0 : index
    %c0_65 = arith.constant 0 : index
    %c0_66 = arith.constant 0 : index
    %76 = vector.load %arg8[%c0_64, %c0_65, %c0_66] : memref<2x10x20xf32, #tpu.memory_space<vmem>>, vector<1x10x20xf32>
    %77 = vector.shape_cast %76 : vector<1x10x20xf32> to vector<10x20xf32>
    %cst_67 = arith.constant dense<0.000000e+00> : vector<10x80xf32>
    %78 = tpu.matmul %77, %74, %cst_67 {dimension_numbers = #tpu.dot_dimension_numbers<[1], [0], [0], [1], [0, 0, 1, 1], [], []>} : vector<10x20xf32>, vector<20x80xf32>, vector<10x80xf32> -> vector<10x80xf32>
    %c0_68 = arith.constant 0 : index
    %c0_69 = arith.constant 0 : index
    %c0_70 = arith.constant 0 : index
    %79 = vector.load %arg8[%c0_68, %c0_69, %c0_70] : memref<2x10x20xf32, #tpu.memory_space<vmem>>, vector<1x10x20xf32>
    %80 = vector.shape_cast %79 : vector<1x10x20xf32> to vector<10x20xf32>
    %cst_71 = arith.constant dense<0.000000e+00> : vector<10x80xf32>
    %81 = tpu.matmul %80, %75, %cst_71 {dimension_numbers = #tpu.dot_dimension_numbers<[1], [0], [0], [1], [0, 0, 1, 1], [], []>} : vector<10x20xf32>, vector<20x80xf32>, vector<10x80xf32> -> vector<10x80xf32>
    %c1_72 = arith.constant 1 : index
    %c0_73 = arith.constant 0 : index
    %c0_74 = arith.constant 0 : index
    %82 = vector.load %arg8[%c1_72, %c0_73, %c0_74] : memref<2x10x20xf32, #tpu.memory_space<vmem>>, vector<1x10x20xf32>
    %83 = vector.shape_cast %82 : vector<1x10x20xf32> to vector<10x20xf32>
    %cst_75 = arith.constant dense<0.000000e+00> : vector<10x80xf32>
    %84 = tpu.matmul %83, %74, %cst_75 {dimension_numbers = #tpu.dot_dimension_numbers<[1], [0], [0], [1], [0, 0, 1, 1], [], []>} : vector<10x20xf32>, vector<20x80xf32>, vector<10x80xf32> -> vector<10x80xf32>
    %c1_76 = arith.constant 1 : index
    %c0_77 = arith.constant 0 : index
    %c0_78 = arith.constant 0 : index
    %85 = vector.load %arg8[%c1_76, %c0_77, %c0_78] : memref<2x10x20xf32, #tpu.memory_space<vmem>>, vector<1x10x20xf32>
    %86 = vector.shape_cast %85 : vector<1x10x20xf32> to vector<10x20xf32>
    %cst_79 = arith.constant dense<0.000000e+00> : vector<10x80xf32>
    %87 = tpu.matmul %86, %75, %cst_79 {dimension_numbers = #tpu.dot_dimension_numbers<[1], [0], [0], [1], [0, 0, 1, 1], [], []>} : vector<10x20xf32>, vector<20x80xf32>, vector<10x80xf32> -> vector<10x80xf32>
    %c0_i32_80 = arith.constant 0 : i32
    %88 = vector.broadcast %c0_i32_80 : i32 to vector<10x80xi32>
    %89 = arith.cmpf ogt, %81, %78 : vector<10x80xf32>
    %90 = arith.select %89, %81, %78 : vector<10x80xi1>, vector<10x80xf32>
    %c1_i32_81 = arith.constant 1 : i32
    %91 = vector.broadcast %c1_i32_81 : i32 to vector<10x80xi32>
    %92 = arith.select %89, %91, %88 : vector<10x80xi1>, vector<10x80xi32>
    %93 = arith.cmpf ogt, %84, %90 : vector<10x80xf32>
    %94 = arith.select %93, %84, %90 : vector<10x80xi1>, vector<10x80xf32>
    %c2_i32_82 = arith.constant 2 : i32
    %95 = vector.broadcast %c2_i32_82 : i32 to vector<10x80xi32>
    %96 = arith.select %93, %95, %92 : vector<10x80xi1>, vector<10x80xi32>
    %97 = arith.cmpf ogt, %87, %94 : vector<10x80xf32>
    %98 = arith.select %97, %87, %94 : vector<10x80xi1>, vector<10x80xf32>
    %c3_i32_83 = arith.constant 3 : i32
    %99 = vector.broadcast %c3_i32_83 : i32 to vector<10x80xi32>
    %100 = arith.select %97, %99, %96 : vector<10x80xi1>, vector<10x80xi32>
    %c0_84 = arith.constant 0 : index
    %c0_85 = arith.constant 0 : index
    %c0_86 = arith.constant 0 : index
    %101 = vector.load %arg9[%c0_84, %c0_85, %c0_86] : memref<5x2x10xf32, #tpu.memory_space<vmem>>, vector<1x2x10xf32>
    %102 = vector.shape_cast %101 : vector<1x2x10xf32> to vector<2x10xf32>
    %cst_87 = arith.constant dense<0.000000e+00> : vector<2x80xf32>
    %103 = tpu.matmul %102, %98, %cst_87 {dimension_numbers = #tpu.dot_dimension_numbers<[1], [0], [0], [1], [0, 0, 1, 1], [], []>} : vector<2x10xf32>, vector<10x80xf32>, vector<2x80xf32> -> vector<2x80xf32>
    %c1_88 = arith.constant 1 : index
    %c0_89 = arith.constant 0 : index
    %c0_90 = arith.constant 0 : index
    %104 = vector.load %arg9[%c1_88, %c0_89, %c0_90] : memref<5x2x10xf32, #tpu.memory_space<vmem>>, vector<1x2x10xf32>
    %105 = vector.shape_cast %104 : vector<1x2x10xf32> to vector<2x10xf32>
    %cst_91 = arith.constant dense<0.000000e+00> : vector<2x80xf32>
    %106 = tpu.matmul %105, %98, %cst_91 {dimension_numbers = #tpu.dot_dimension_numbers<[1], [0], [0], [1], [0, 0, 1, 1], [], []>} : vector<2x10xf32>, vector<10x80xf32>, vector<2x80xf32> -> vector<2x80xf32>
    %c2_92 = arith.constant 2 : index
    %c0_93 = arith.constant 0 : index
    %c0_94 = arith.constant 0 : index
    %107 = vector.load %arg9[%c2_92, %c0_93, %c0_94] : memref<5x2x10xf32, #tpu.memory_space<vmem>>, vector<1x2x10xf32>
    %108 = vector.shape_cast %107 : vector<1x2x10xf32> to vector<2x10xf32>
    %cst_95 = arith.constant dense<0.000000e+00> : vector<2x80xf32>
    %109 = tpu.matmul %108, %98, %cst_95 {dimension_numbers = #tpu.dot_dimension_numbers<[1], [0], [0], [1], [0, 0, 1, 1], [], []>} : vector<2x10xf32>, vector<10x80xf32>, vector<2x80xf32> -> vector<2x80xf32>
    %c3_96 = arith.constant 3 : index
    %c0_97 = arith.constant 0 : index
    %c0_98 = arith.constant 0 : index
    %110 = vector.load %arg9[%c3_96, %c0_97, %c0_98] : memref<5x2x10xf32, #tpu.memory_space<vmem>>, vector<1x2x10xf32>
    %111 = vector.shape_cast %110 : vector<1x2x10xf32> to vector<2x10xf32>
    %cst_99 = arith.constant dense<0.000000e+00> : vector<2x80xf32>
    %112 = tpu.matmul %111, %98, %cst_99 {dimension_numbers = #tpu.dot_dimension_numbers<[1], [0], [0], [1], [0, 0, 1, 1], [], []>} : vector<2x10xf32>, vector<10x80xf32>, vector<2x80xf32> -> vector<2x80xf32>
    %c4_100 = arith.constant 4 : index
    %c0_101 = arith.constant 0 : index
    %c0_102 = arith.constant 0 : index
    %113 = vector.load %arg9[%c4_100, %c0_101, %c0_102] : memref<5x2x10xf32, #tpu.memory_space<vmem>>, vector<1x2x10xf32>
    %114 = vector.shape_cast %113 : vector<1x2x10xf32> to vector<2x10xf32>
    %cst_103 = arith.constant dense<0.000000e+00> : vector<2x80xf32>
    %115 = tpu.matmul %114, %98, %cst_103 {dimension_numbers = #tpu.dot_dimension_numbers<[1], [0], [0], [1], [0, 0, 1, 1], [], []>} : vector<2x10xf32>, vector<10x80xf32>, vector<2x80xf32> -> vector<2x80xf32>
    %116 = tpu.concatenate %103, %106, %109, %112, %115 in 1 : vector<2x80xf32>, vector<2x80xf32>, vector<2x80xf32>, vector<2x80xf32>, vector<2x80xf32> -> vector<2x400xf32>
    %c0_104 = arith.constant 0 : index
    %c0_105 = arith.constant 0 : index
    %117 = vector.load %arg10[%c0_104, %c0_105] : memref<400x120xf32, #tpu.memory_space<vmem>>, vector<400x120xf32>
    %cst_106 = arith.constant dense<0.000000e+00> : vector<2x120xf32>
    %118 = tpu.matmul %116, %117, %cst_106 {dimension_numbers = #tpu.dot_dimension_numbers<[1], [0], [0], [1], [0, 0, 1, 1], [], []>} : vector<2x400xf32>, vector<400x120xf32>, vector<2x120xf32> -> vector<2x120xf32>
    %c0_107 = arith.constant 0 : index
    %c0_108 = arith.constant 0 : index
    %119 = vector.load %arg11[%c0_107, %c0_108] : memref<1x120xf32, #tpu.memory_space<vmem>>, vector<1x120xf32>
    %120 = vector.broadcast %119 : vector<1x120xf32> to vector<2x120xf32>
    %121 = arith.addf %118, %120 : vector<2x120xf32>
    %cst_109 = arith.constant 0.000000e+00 : f32
    %122 = vector.broadcast %cst_109 : f32 to vector<2x120xf32>
    %123 = arith.maximumf %121, %122 : vector<2x120xf32>
    %c0_110 = arith.constant 0 : index
    %c0_111 = arith.constant 0 : index
    %124 = vector.load %arg12[%c0_110, %c0_111] : memref<120x84xf32, #tpu.memory_space<vmem>>, vector<120x84xf32>
    %cst_112 = arith.constant dense<0.000000e+00> : vector<2x84xf32>
    %125 = tpu.matmul %123, %124, %cst_112 {dimension_numbers = #tpu.dot_dimension_numbers<[1], [0], [0], [1], [0, 0, 1, 1], [], []>} : vector<2x120xf32>, vector<120x84xf32>, vector<2x84xf32> -> vector<2x84xf32>
    %c0_113 = arith.constant 0 : index
    %c0_114 = arith.constant 0 : index
    %126 = vector.load %arg13[%c0_113, %c0_114] : memref<1x84xf32, #tpu.memory_space<vmem>>, vector<1x84xf32>
    %127 = vector.broadcast %126 : vector<1x84xf32> to vector<2x84xf32>
    %128 = arith.addf %125, %127 : vector<2x84xf32>
    %cst_115 = arith.constant 0.000000e+00 : f32
    %129 = vector.broadcast %cst_115 : f32 to vector<2x84xf32>
    %130 = arith.maximumf %128, %129 : vector<2x84xf32>
    %c0_116 = arith.constant 0 : index
    %c0_117 = arith.constant 0 : index
    %131 = vector.load %arg14[%c0_116, %c0_117] : memref<84x10xf32, #tpu.memory_space<vmem>>, vector<84x10xf32>
    %cst_118 = arith.constant dense<0.000000e+00> : vector<2x10xf32>
    %132 = tpu.matmul %130, %131, %cst_118 {dimension_numbers = #tpu.dot_dimension_numbers<[1], [0], [0], [1], [0, 0, 1, 1], [], []>} : vector<2x84xf32>, vector<84x10xf32>, vector<2x10xf32> -> vector<2x10xf32>
    %c0_119 = arith.constant 0 : index
    %c0_120 = arith.constant 0 : index
    %133 = vector.load %arg15[%c0_119, %c0_120] : memref<1x10xf32, #tpu.memory_space<vmem>>, vector<1x10xf32>
    %134 = vector.broadcast %133 : vector<1x10xf32> to vector<2x10xf32>
    %135 = arith.addf %132, %134 : vector<2x10xf32>
    %c0_121 = arith.constant 0 : index
    %c0_122 = arith.constant 0 : index
    %136 = vector.load %arg26[%c0_121, %c0_122] : memref<2x10xf32, #tpu.memory_space<vmem>>, vector<2x10xf32>
    tpu.vector_store %arg26[%c0_121, %c0_122], %135 {strides = array<i32>} : memref<2x10xf32, #tpu.memory_space<vmem>>, vector<2x10xf32>,
    %cst_123 = arith.constant 0.000000e+00 : f32
    %137 = vector.broadcast %cst_123 : f32 to vector<10x80xf32>
    %138 = arith.maximumf %98, %137 : vector<10x80xf32>
    %c0_i32_124 = arith.constant 0 : i32
    %139 = vector.broadcast %c0_i32_124 : i32 to vector<10x80xi32>
    %140 = arith.cmpi eq, %100, %139 : vector<10x80xi32>
    %cst_125 = arith.constant 0.000000e+00 : f32
    %141 = vector.broadcast %cst_125 : f32 to vector<10x80xf32>
    %142 = arith.select %140, %138, %141 : vector<10x80xi1>, vector<10x80xf32>
    %c1_i32_126 = arith.constant 1 : i32
    %143 = vector.broadcast %c1_i32_126 : i32 to vector<10x80xi32>
    %144 = arith.cmpi eq, %100, %143 : vector<10x80xi32>
    %cst_127 = arith.constant 0.000000e+00 : f32
    %145 = vector.broadcast %cst_127 : f32 to vector<10x80xf32>
    %146 = arith.select %144, %138, %145 : vector<10x80xi1>, vector<10x80xf32>
    %c2_i32_128 = arith.constant 2 : i32
    %147 = vector.broadcast %c2_i32_128 : i32 to vector<10x80xi32>
    %148 = arith.cmpi eq, %100, %147 : vector<10x80xi32>
    %cst_129 = arith.constant 0.000000e+00 : f32
    %149 = vector.broadcast %cst_129 : f32 to vector<10x80xf32>
    %150 = arith.select %148, %138, %149 : vector<10x80xi1>, vector<10x80xf32>
    %c3_i32_130 = arith.constant 3 : i32
    %151 = vector.broadcast %c3_i32_130 : i32 to vector<10x80xi32>
    %152 = arith.cmpi eq, %100, %151 : vector<10x80xi32>
    %cst_131 = arith.constant 0.000000e+00 : f32
    %153 = vector.broadcast %cst_131 : f32 to vector<10x80xf32>
    %154 = arith.select %152, %138, %153 : vector<10x80xi1>, vector<10x80xf32>
    %c0_132 = arith.constant 0 : index
    %c0_133 = arith.constant 0 : index
    %c0_134 = arith.constant 0 : index
    %155 = vector.load %arg17[%c0_132, %c0_133, %c0_134] : memref<2x80x160xf32, #tpu.memory_space<vmem>>, vector<1x80x160xf32>
    %156 = vector.shape_cast %155 : vector<1x80x160xf32> to vector<80x160xf32>
    %cst_135 = arith.constant dense<0.000000e+00> : vector<10x160xf32>
    %157 = tpu.matmul %142, %156, %cst_135 {dimension_numbers = #tpu.dot_dimension_numbers<[1], [0], [0], [1], [0, 0, 1, 1], [], []>} : vector<10x80xf32>, vector<80x160xf32>, vector<10x160xf32> -> vector<10x160xf32>
    %c1_136 = arith.constant 1 : index
    %c0_137 = arith.constant 0 : index
    %c0_138 = arith.constant 0 : index
    %158 = vector.load %arg17[%c1_136, %c0_137, %c0_138] : memref<2x80x160xf32, #tpu.memory_space<vmem>>, vector<1x80x160xf32>
    %159 = vector.shape_cast %158 : vector<1x80x160xf32> to vector<80x160xf32>
    %cst_139 = arith.constant dense<0.000000e+00> : vector<10x160xf32>
    %160 = tpu.matmul %146, %159, %cst_139 {dimension_numbers = #tpu.dot_dimension_numbers<[1], [0], [0], [1], [0, 0, 1, 1], [], []>} : vector<10x80xf32>, vector<80x160xf32>, vector<10x160xf32> -> vector<10x160xf32>
    %161 = arith.addf %157, %160 : vector<10x160xf32>
    %c0_140 = arith.constant 0 : index
    %c0_141 = arith.constant 0 : index
    %c0_142 = arith.constant 0 : index
    %162 = vector.load %arg17[%c0_140, %c0_141, %c0_142] : memref<2x80x160xf32, #tpu.memory_space<vmem>>, vector<1x80x160xf32>
    %163 = vector.shape_cast %162 : vector<1x80x160xf32> to vector<80x160xf32>
    %cst_143 = arith.constant dense<0.000000e+00> : vector<10x160xf32>
    %164 = tpu.matmul %150, %163, %cst_143 {dimension_numbers = #tpu.dot_dimension_numbers<[1], [0], [0], [1], [0, 0, 1, 1], [], []>} : vector<10x80xf32>, vector<80x160xf32>, vector<10x160xf32> -> vector<10x160xf32>
    %c1_144 = arith.constant 1 : index
    %c0_145 = arith.constant 0 : index
    %c0_146 = arith.constant 0 : index
    %165 = vector.load %arg17[%c1_144, %c0_145, %c0_146] : memref<2x80x160xf32, #tpu.memory_space<vmem>>, vector<1x80x160xf32>
    %166 = vector.shape_cast %165 : vector<1x80x160xf32> to vector<80x160xf32>
    %cst_147 = arith.constant dense<0.000000e+00> : vector<10x160xf32>
    %167 = tpu.matmul %154, %166, %cst_147 {dimension_numbers = #tpu.dot_dimension_numbers<[1], [0], [0], [1], [0, 0, 1, 1], [], []>} : vector<10x80xf32>, vector<80x160xf32>, vector<10x160xf32> -> vector<10x160xf32>
    %168 = arith.addf %164, %167 : vector<10x160xf32>
    %c0_148 = arith.constant 0 : index
    %c0_149 = arith.constant 0 : index
    %c0_150 = arith.constant 0 : index
    %169 = vector.load %arg16[%c0_148, %c0_149, %c0_150] : memref<2x20x10xf32, #tpu.memory_space<vmem>>, vector<1x20x10xf32>
    %170 = vector.shape_cast %169 : vector<1x20x10xf32> to vector<20x10xf32>
    %cst_151 = arith.constant dense<0.000000e+00> : vector<20x160xf32>
    %171 = tpu.matmul %170, %161, %cst_151 {dimension_numbers = #tpu.dot_dimension_numbers<[1], [0], [0], [1], [0, 0, 1, 1], [], []>} : vector<20x10xf32>, vector<10x160xf32>, vector<20x160xf32> -> vector<20x160xf32>
    %c1_152 = arith.constant 1 : index
    %c0_153 = arith.constant 0 : index
    %c0_154 = arith.constant 0 : index
    %172 = vector.load %arg16[%c1_152, %c0_153, %c0_154] : memref<2x20x10xf32, #tpu.memory_space<vmem>>, vector<1x20x10xf32>
    %173 = vector.shape_cast %172 : vector<1x20x10xf32> to vector<20x10xf32>
    %cst_155 = arith.constant dense<0.000000e+00> : vector<20x160xf32>
    %174 = tpu.matmul %173, %168, %cst_155 {dimension_numbers = #tpu.dot_dimension_numbers<[1], [0], [0], [1], [0, 0, 1, 1], [], []>} : vector<20x10xf32>, vector<10x160xf32>, vector<20x160xf32> -> vector<20x160xf32>
    %175 = arith.addf %171, %174 : vector<20x160xf32>
    %c0_156 = arith.constant 0 : index
    %c0_157 = arith.constant 0 : index
    %c0_158 = arith.constant 0 : index
    %176 = vector.load %arg18[%c0_156, %c0_157, %c0_158] : memref<5x28x20xf32, #tpu.memory_space<vmem>>, vector<1x28x20xf32>
    %177 = vector.shape_cast %176 : vector<1x28x20xf32> to vector<28x20xf32>
    %cst_159 = arith.constant dense<0.000000e+00> : vector<28x160xf32>
    %178 = tpu.matmul %177, %175, %cst_159 {dimension_numbers = #tpu.dot_dimension_numbers<[1], [0], [0], [1], [0, 0, 1, 1], [], []>} : vector<28x20xf32>, vector<20x160xf32>, vector<28x160xf32> -> vector<28x160xf32>
    %c1_160 = arith.constant 1 : index
    %c0_161 = arith.constant 0 : index
    %c0_162 = arith.constant 0 : index
    %179 = vector.load %arg18[%c1_160, %c0_161, %c0_162] : memref<5x28x20xf32, #tpu.memory_space<vmem>>, vector<1x28x20xf32>
    %180 = vector.shape_cast %179 : vector<1x28x20xf32> to vector<28x20xf32>
    %cst_163 = arith.constant dense<0.000000e+00> : vector<28x160xf32>
    %181 = tpu.matmul %180, %175, %cst_163 {dimension_numbers = #tpu.dot_dimension_numbers<[1], [0], [0], [1], [0, 0, 1, 1], [], []>} : vector<28x20xf32>, vector<20x160xf32>, vector<28x160xf32> -> vector<28x160xf32>
    %c2_164 = arith.constant 2 : index
    %c0_165 = arith.constant 0 : index
    %c0_166 = arith.constant 0 : index
    %182 = vector.load %arg18[%c2_164, %c0_165, %c0_166] : memref<5x28x20xf32, #tpu.memory_space<vmem>>, vector<1x28x20xf32>
    %183 = vector.shape_cast %182 : vector<1x28x20xf32> to vector<28x20xf32>
    %cst_167 = arith.constant dense<0.000000e+00> : vector<28x160xf32>
    %184 = tpu.matmul %183, %175, %cst_167 {dimension_numbers = #tpu.dot_dimension_numbers<[1], [0], [0], [1], [0, 0, 1, 1], [], []>} : vector<28x20xf32>, vector<20x160xf32>, vector<28x160xf32> -> vector<28x160xf32>
    %c3_168 = arith.constant 3 : index
    %c0_169 = arith.constant 0 : index
    %c0_170 = arith.constant 0 : index
    %185 = vector.load %arg18[%c3_168, %c0_169, %c0_170] : memref<5x28x20xf32, #tpu.memory_space<vmem>>, vector<1x28x20xf32>
    %186 = vector.shape_cast %185 : vector<1x28x20xf32> to vector<28x20xf32>
    %cst_171 = arith.constant dense<0.000000e+00> : vector<28x160xf32>
    %187 = tpu.matmul %186, %175, %cst_171 {dimension_numbers = #tpu.dot_dimension_numbers<[1], [0], [0], [1], [0, 0, 1, 1], [], []>} : vector<28x20xf32>, vector<20x160xf32>, vector<28x160xf32> -> vector<28x160xf32>
    %c4_172 = arith.constant 4 : index
    %c0_173 = arith.constant 0 : index
    %c0_174 = arith.constant 0 : index
    %188 = vector.load %arg18[%c4_172, %c0_173, %c0_174] : memref<5x28x20xf32, #tpu.memory_space<vmem>>, vector<1x28x20xf32>
    %189 = vector.shape_cast %188 : vector<1x28x20xf32> to vector<28x20xf32>
    %cst_175 = arith.constant dense<0.000000e+00> : vector<28x160xf32>
    %190 = tpu.matmul %189, %175, %cst_175 {dimension_numbers = #tpu.dot_dimension_numbers<[1], [0], [0], [1], [0, 0, 1, 1], [], []>} : vector<28x20xf32>, vector<20x160xf32>, vector<28x160xf32> -> vector<28x160xf32>
    %191 = tpu.concatenate %178, %181, %184, %187, %190 in 1 : vector<28x160xf32>, vector<28x160xf32>, vector<28x160xf32>, vector<28x160xf32>, vector<28x160xf32> -> vector<28x800xf32>
    %c0_176 = arith.constant 0 : index
    %c0_177 = arith.constant 0 : index
    %192 = vector.load %arg19[%c0_176, %c0_177] : memref<800x84xf32, #tpu.memory_space<vmem>>, vector<800x84xf32>
    %cst_178 = arith.constant dense<0.000000e+00> : vector<28x84xf32>
    %193 = tpu.matmul %191, %192, %cst_178 {dimension_numbers = #tpu.dot_dimension_numbers<[1], [0], [0], [1], [0, 0, 1, 1], [], []>} : vector<28x800xf32>, vector<800x84xf32>, vector<28x84xf32> -> vector<28x84xf32>
    %c0_179 = arith.constant 0 : index
    %c0_180 = arith.constant 0 : index
    %194 = vector.load %arg20[%c0_179, %c0_180] : memref<1x84xf32, #tpu.memory_space<vmem>>, vector<1x84xf32>
    %195 = vector.broadcast %194 : vector<1x84xf32> to vector<28x84xf32>
    %196 = arith.addf %193, %195 : vector<28x84xf32>
    %cst_181 = arith.constant 0.000000e+00 : f32
    %197 = vector.broadcast %cst_181 : f32 to vector<28x84xf32>
    %198 = arith.maximumf %196, %197 : vector<28x84xf32>
    %c0_i32_182 = arith.constant 0 : i32
    %199 = vector.broadcast %c0_i32_182 : i32 to vector<28x84xi32>
    %200 = arith.cmpi eq, %50, %199 : vector<28x84xi32>
    %cst_183 = arith.constant 0.000000e+00 : f32
    %201 = vector.broadcast %cst_183 : f32 to vector<28x84xf32>
    %202 = arith.select %200, %198, %201 : vector<28x84xi1>, vector<28x84xf32>
    %c1_i32_184 = arith.constant 1 : i32
    %203 = vector.broadcast %c1_i32_184 : i32 to vector<28x84xi32>
    %204 = arith.cmpi eq, %50, %203 : vector<28x84xi32>
    %cst_185 = arith.constant 0.000000e+00 : f32
    %205 = vector.broadcast %cst_185 : f32 to vector<28x84xf32>
    %206 = arith.select %204, %198, %205 : vector<28x84xi1>, vector<28x84xf32>
    %c2_i32_186 = arith.constant 2 : i32
    %207 = vector.broadcast %c2_i32_186 : i32 to vector<28x84xi32>
    %208 = arith.cmpi eq, %50, %207 : vector<28x84xi32>
    %cst_187 = arith.constant 0.000000e+00 : f32
    %209 = vector.broadcast %cst_187 : f32 to vector<28x84xf32>
    %210 = arith.select %208, %198, %209 : vector<28x84xi1>, vector<28x84xf32>
    %c3_i32_188 = arith.constant 3 : i32
    %211 = vector.broadcast %c3_i32_188 : i32 to vector<28x84xi32>
    %212 = arith.cmpi eq, %50, %211 : vector<28x84xi32>
    %cst_189 = arith.constant 0.000000e+00 : f32
    %213 = vector.broadcast %cst_189 : f32 to vector<28x84xf32>
    %214 = arith.select %212, %198, %213 : vector<28x84xi1>, vector<28x84xf32>
    %c0_190 = arith.constant 0 : index
    %c0_191 = arith.constant 0 : index
    %c0_192 = arith.constant 0 : index
    %215 = vector.load %arg22[%c0_190, %c0_191, %c0_192] : memref<2x84x168xf32, #tpu.memory_space<vmem>>, vector<1x84x168xf32>
    %216 = vector.shape_cast %215 : vector<1x84x168xf32> to vector<84x168xf32>
    %cst_193 = arith.constant dense<0.000000e+00> : vector<28x168xf32>
    %217 = tpu.matmul %202, %216, %cst_193 {dimension_numbers = #tpu.dot_dimension_numbers<[1], [0], [0], [1], [0, 0, 1, 1], [], []>} : vector<28x84xf32>, vector<84x168xf32>, vector<28x168xf32> -> vector<28x168xf32>
    %c1_194 = arith.constant 1 : index
    %c0_195 = arith.constant 0 : index
    %c0_196 = arith.constant 0 : index
    %218 = vector.load %arg22[%c1_194, %c0_195, %c0_196] : memref<2x84x168xf32, #tpu.memory_space<vmem>>, vector<1x84x168xf32>
    %219 = vector.shape_cast %218 : vector<1x84x168xf32> to vector<84x168xf32>
    %cst_197 = arith.constant dense<0.000000e+00> : vector<28x168xf32>
    %220 = tpu.matmul %206, %219, %cst_197 {dimension_numbers = #tpu.dot_dimension_numbers<[1], [0], [0], [1], [0, 0, 1, 1], [], []>} : vector<28x84xf32>, vector<84x168xf32>, vector<28x168xf32> -> vector<28x168xf32>
    %221 = arith.addf %217, %220 : vector<28x168xf32>
    %c0_198 = arith.constant 0 : index
    %c0_199 = arith.constant 0 : index
    %c0_200 = arith.constant 0 : index
    %222 = vector.load %arg22[%c0_198, %c0_199, %c0_200] : memref<2x84x168xf32, #tpu.memory_space<vmem>>, vector<1x84x168xf32>
    %223 = vector.shape_cast %222 : vector<1x84x168xf32> to vector<84x168xf32>
    %cst_201 = arith.constant dense<0.000000e+00> : vector<28x168xf32>
    %224 = tpu.matmul %210, %223, %cst_201 {dimension_numbers = #tpu.dot_dimension_numbers<[1], [0], [0], [1], [0, 0, 1, 1], [], []>} : vector<28x84xf32>, vector<84x168xf32>, vector<28x168xf32> -> vector<28x168xf32>
    %c1_202 = arith.constant 1 : index
    %c0_203 = arith.constant 0 : index
    %c0_204 = arith.constant 0 : index
    %225 = vector.load %arg22[%c1_202, %c0_203, %c0_204] : memref<2x84x168xf32, #tpu.memory_space<vmem>>, vector<1x84x168xf32>
    %226 = vector.shape_cast %225 : vector<1x84x168xf32> to vector<84x168xf32>
    %cst_205 = arith.constant dense<0.000000e+00> : vector<28x168xf32>
    %227 = tpu.matmul %214, %226, %cst_205 {dimension_numbers = #tpu.dot_dimension_numbers<[1], [0], [0], [1], [0, 0, 1, 1], [], []>} : vector<28x84xf32>, vector<84x168xf32>, vector<28x168xf32> -> vector<28x168xf32>
    %228 = arith.addf %224, %227 : vector<28x168xf32>
    %c0_206 = arith.constant 0 : index
    %c0_207 = arith.constant 0 : index
    %c0_208 = arith.constant 0 : index
    %229 = vector.load %arg21[%c0_206, %c0_207, %c0_208] : memref<2x56x28xf32, #tpu.memory_space<vmem>>, vector<1x56x28xf32>
    %230 = vector.shape_cast %229 : vector<1x56x28xf32> to vector<56x28xf32>
    %cst_209 = arith.constant dense<0.000000e+00> : vector<56x168xf32>
    %231 = tpu.matmul %230, %221, %cst_209 {dimension_numbers = #tpu.dot_dimension_numbers<[1], [0], [0], [1], [0, 0, 1, 1], [], []>} : vector<56x28xf32>, vector<28x168xf32>, vector<56x168xf32> -> vector<56x168xf32>
    %c1_210 = arith.constant 1 : index
    %c0_211 = arith.constant 0 : index
    %c0_212 = arith.constant 0 : index
    %232 = vector.load %arg21[%c1_210, %c0_211, %c0_212] : memref<2x56x28xf32, #tpu.memory_space<vmem>>, vector<1x56x28xf32>
    %233 = vector.shape_cast %232 : vector<1x56x28xf32> to vector<56x28xf32>
    %cst_213 = arith.constant dense<0.000000e+00> : vector<56x168xf32>
    %234 = tpu.matmul %233, %228, %cst_213 {dimension_numbers = #tpu.dot_dimension_numbers<[1], [0], [0], [1], [0, 0, 1, 1], [], []>} : vector<56x28xf32>, vector<28x168xf32>, vector<56x168xf32> -> vector<56x168xf32>
    %235 = arith.addf %231, %234 : vector<56x168xf32>
    %c0_214 = arith.constant 0 : index
    %c0_215 = arith.constant 0 : index
    %c0_216 = arith.constant 0 : index
    %236 = vector.load %arg23[%c0_214, %c0_215, %c0_216] : memref<5x64x56xf32, #tpu.memory_space<vmem>>, vector<1x64x56xf32>
    %237 = vector.shape_cast %236 : vector<1x64x56xf32> to vector<64x56xf32>
    %cst_217 = arith.constant dense<0.000000e+00> : vector<64x168xf32>
    %238 = tpu.matmul %237, %235, %cst_217 {dimension_numbers = #tpu.dot_dimension_numbers<[1], [0], [0], [1], [0, 0, 1, 1], [], []>} : vector<64x56xf32>, vector<56x168xf32>, vector<64x168xf32> -> vector<64x168xf32>
    %c1_218 = arith.constant 1 : index
    %c0_219 = arith.constant 0 : index
    %c0_220 = arith.constant 0 : index
    %239 = vector.load %arg23[%c1_218, %c0_219, %c0_220] : memref<5x64x56xf32, #tpu.memory_space<vmem>>, vector<1x64x56xf32>
    %240 = vector.shape_cast %239 : vector<1x64x56xf32> to vector<64x56xf32>
    %cst_221 = arith.constant dense<0.000000e+00> : vector<64x168xf32>
    %241 = tpu.matmul %240, %235, %cst_221 {dimension_numbers = #tpu.dot_dimension_numbers<[1], [0], [0], [1], [0, 0, 1, 1], [], []>} : vector<64x56xf32>, vector<56x168xf32>, vector<64x168xf32> -> vector<64x168xf32>
    %c2_222 = arith.constant 2 : index
    %c0_223 = arith.constant 0 : index
    %c0_224 = arith.constant 0 : index
    %242 = vector.load %arg23[%c2_222, %c0_223, %c0_224] : memref<5x64x56xf32, #tpu.memory_space<vmem>>, vector<1x64x56xf32>
    %243 = vector.shape_cast %242 : vector<1x64x56xf32> to vector<64x56xf32>
    %cst_225 = arith.constant dense<0.000000e+00> : vector<64x168xf32>
    %244 = tpu.matmul %243, %235, %cst_225 {dimension_numbers = #tpu.dot_dimension_numbers<[1], [0], [0], [1], [0, 0, 1, 1], [], []>} : vector<64x56xf32>, vector<56x168xf32>, vector<64x168xf32> -> vector<64x168xf32>
    %c3_226 = arith.constant 3 : index
    %c0_227 = arith.constant 0 : index
    %c0_228 = arith.constant 0 : index
    %245 = vector.load %arg23[%c3_226, %c0_227, %c0_228] : memref<5x64x56xf32, #tpu.memory_space<vmem>>, vector<1x64x56xf32>
    %246 = vector.shape_cast %245 : vector<1x64x56xf32> to vector<64x56xf32>
    %cst_229 = arith.constant dense<0.000000e+00> : vector<64x168xf32>
    %247 = tpu.matmul %246, %235, %cst_229 {dimension_numbers = #tpu.dot_dimension_numbers<[1], [0], [0], [1], [0, 0, 1, 1], [], []>} : vector<64x56xf32>, vector<56x168xf32>, vector<64x168xf32> -> vector<64x168xf32>
    %c4_230 = arith.constant 4 : index
    %c0_231 = arith.constant 0 : index
    %c0_232 = arith.constant 0 : index
    %248 = vector.load %arg23[%c4_230, %c0_231, %c0_232] : memref<5x64x56xf32, #tpu.memory_space<vmem>>, vector<1x64x56xf32>
    %249 = vector.shape_cast %248 : vector<1x64x56xf32> to vector<64x56xf32>
    %cst_233 = arith.constant dense<0.000000e+00> : vector<64x168xf32>
    %250 = tpu.matmul %249, %235, %cst_233 {dimension_numbers = #tpu.dot_dimension_numbers<[1], [0], [0], [1], [0, 0, 1, 1], [], []>} : vector<64x56xf32>, vector<56x168xf32>, vector<64x168xf32> -> vector<64x168xf32>
    %251 = tpu.concatenate %238, %241, %244, %247, %250 in 1 : vector<64x168xf32>, vector<64x168xf32>, vector<64x168xf32>, vector<64x168xf32>, vector<64x168xf32> -> vector<64x840xf32>
    %c0_234 = arith.constant 0 : index
    %c0_235 = arith.constant 0 : index
    %252 = vector.load %arg24[%c0_234, %c0_235] : memref<840x96xf32, #tpu.memory_space<vmem>>, vector<840x96xf32>
    %cst_236 = arith.constant dense<0.000000e+00> : vector<64x96xf32>
    %253 = tpu.matmul %251, %252, %cst_236 {dimension_numbers = #tpu.dot_dimension_numbers<[1], [0], [0], [1], [0, 0, 1, 1], [], []>} : vector<64x840xf32>, vector<840x96xf32>, vector<64x96xf32> -> vector<64x96xf32>
    %c0_237 = arith.constant 0 : index
    %c0_238 = arith.constant 0 : index
    %254 = vector.load %arg25[%c0_237, %c0_238] : memref<1x96xf32, #tpu.memory_space<vmem>>, vector<1x96xf32>
    %255 = vector.broadcast %254 : vector<1x96xf32> to vector<64x96xf32>
    %256 = arith.addf %253, %255 : vector<64x96xf32>
    %c0_239 = arith.constant 0 : index
    %c0_240 = arith.constant 0 : index
    %257 = vector.load %arg27[%c0_239, %c0_240] : memref<64x96xf32, #tpu.memory_space<vmem>>, vector<64x96xf32>
    tpu.vector_store %arg27[%c0_239, %c0_240], %256 {strides = array<i32>} : memref<64x96xf32, #tpu.memory_space<vmem>>, vector<64x96xf32>,
    return
  }
}

</mosaic_0001>

<llo_original>
// kernel: recon_net_forward.1
$region0: #{recon_net_forward.1}
  #allocation0 [shape = 'u32[]', space=smem, size = 0x4, offset = 0x4, fixed_abs, tag = 'smem constant byte address 0x4 - core index']
  #allocation1 [shape = 'u32[144,128]{1,0:T(1,128)}', space=vmem, size = 0x12000, scoped, tag = 'internal scratch']
  %s0 = inlined_call_operand.vmem [shape: f32[64,96], index: 0, kind: input, shape index: {}]
  %s1 = inlined_call_operand.vmem [shape: f32[5,56,64], index: 1, kind: input, shape index: {}]
  %s2 = inlined_call_operand.vmem [shape: f32[480,168], index: 2, kind: input, shape index: {}]
  %s3 = inlined_call_operand.vmem [shape: f32[1,168], index: 3, kind: input, shape index: {}]
  %s4 = inlined_call_operand.vmem [shape: f32[2,28,56], index: 4, kind: input, shape index: {}]
  %s5 = inlined_call_operand.vmem [shape: f32[5,20,28], index: 5, kind: input, shape index: {}]
  %s6 = inlined_call_operand.vmem [shape: f32[420,160], index: 6, kind: input, shape index: {}]
  %s7 = inlined_call_operand.vmem [shape: f32[1,160], index: 7, kind: input, shape index: {}]
  %s8 = inlined_call_operand.vmem [shape: f32[2,10,20], index: 8, kind: input, shape index: {}]
  %s9 = inlined_call_operand.vmem [shape: f32[5,2,10], index: 9, kind: input, shape index: {}]
  %s10 = inlined_call_operand.vmem [shape: f32[400,120], index: 10, kind: input, shape index: {}]
  %s11 = inlined_call_operand.vmem [shape: f32[1,120], index: 11, kind: input, shape index: {}]
  %s12 = inlined_call_operand.vmem [shape: f32[120,84], index: 12, kind: input, shape index: {}]
  %s13 = inlined_call_operand.vmem [shape: f32[1,84], index: 13, kind: input, shape index: {}]
  %s14 = inlined_call_operand.vmem [shape: f32[84,10], index: 14, kind: input, shape index: {}]
  %s15 = inlined_call_operand.vmem [shape: f32[1,10], index: 15, kind: input, shape index: {}]
  %s16 = inlined_call_operand.vmem [shape: f32[2,20,10], index: 16, kind: input, shape index: {}]
  %s17 = inlined_call_operand.vmem [shape: f32[2,80,160], index: 17, kind: input, shape index: {}]
  %s18 = inlined_call_operand.vmem [shape: f32[5,28,20], index: 18, kind: input, shape index: {}]
  %s19 = inlined_call_operand.vmem [shape: f32[800,84], index: 19, kind: input, shape index: {}]
  %s20 = inlined_call_operand.vmem [shape: f32[1,84], index: 20, kind: input, shape index: {}]
  %s21 = inlined_call_operand.vmem [shape: f32[2,56,28], index: 21, kind: input, shape index: {}]
  %s22 = inlined_call_operand.vmem [shape: f32[2,84,168], index: 22, kind: input, shape index: {}]
  %s23 = inlined_call_operand.vmem [shape: f32[5,64,56], index: 23, kind: input, shape index: {}]
  %s24 = inlined_call_operand.vmem [shape: f32[840,96], index: 24, kind: input, shape index: {}]
  %s25 = inlined_call_operand.vmem [shape: f32[1,96], index: 25, kind: input, shape index: {}]
  %s26 = inlined_call_operand.hbm [shape: f32[2,10], index: 26, kind: output, shape index: {0}]
  %s27 = inlined_call_operand.vmem [shape: f32[64,96], index: 27, kind: output, shape index: {1}]
  %28 = xla_tuple %s26, %s27
  %s29 = sld [smem:[#allocation0]]
  $region122: #{recon_net_forward.1} parent=0
    _
  %s31 = ssub.s32 1, %s29
  %s32 = scalar_select 0, %s31, %s29
  $region1: #{recon_net_forward.1} parent=0
    #allocation2 [shape = 'u8[1024]{0}', space=vmem, size = 0x400, scoped, tag = 'output window, operand 0, single buffered']
    #allocation3 [shape = 's32[1]{0}', space=sflag, size = 0x4, scoped, tag = 'scoped memory for recon_net_forward.1']
    %33 = vsyncpa [#allocation3], 0
    // Predicated region
    $region2: #{recon_net_forward.1} parent=1 // pred_check
      _
    $region3: #{recon_net_forward.1} parent=1 // pred_check_branch
      %35 = sbr.rel (0) target = $region5
    $region4: #{recon_net_forward.1} parent=1 // pred_region
      _
    $region5: #{recon_net_forward.1} parent=1 // pred_fallthru
      _
    // Predicated region
    $region6: #{recon_net_forward.1} parent=1 // pred_check
      _
    $region7: #{recon_net_forward.1} parent=1 // pred_check_branch
      %37 = sbr.rel (0) target = $region9
    $region8: #{recon_net_forward.1} parent=1 // pred_region
      _
    $region9: #{recon_net_forward.1} parent=1 // pred_fallthru
      _
    // Predicated region
    $region10: #{recon_net_forward.1} parent=1 // pred_check
      _
    $region11: #{recon_net_forward.1} parent=1 // pred_check_branch
      %39 = sbr.rel (0) target = $region13
    $region12: #{recon_net_forward.1} parent=1 // pred_region
      _
    $region13: #{recon_net_forward.1} parent=1 // pred_fallthru
      _
    // Predicated region
    $region14: #{recon_net_forward.1} parent=1 // pred_check
      _
    $region15: #{recon_net_forward.1} parent=1 // pred_check_branch
      %41 = sbr.rel (0) target = $region17
    $region16: #{recon_net_forward.1} parent=1 // pred_region
      _
    $region17: #{recon_net_forward.1} parent=1 // pred_fallthru
      _
    // Predicated region
    $region18: #{recon_net_forward.1} parent=1 // pred_check
      _
    $region19: #{recon_net_forward.1} parent=1 // pred_check_branch
      %43 = sbr.rel (0) target = $region21
    $region20: #{recon_net_forward.1} parent=1 // pred_region
      _
    $region21: #{recon_net_forward.1} parent=1 // pred_fallthru
      _
    // Predicated region
    $region22: #{recon_net_forward.1} parent=1 // pred_check
      _
    $region23: #{recon_net_forward.1} parent=1 // pred_check_branch
      %45 = sbr.rel (0) target = $region25
    $region24: #{recon_net_forward.1} parent=1 // pred_region
      _
    $region25: #{recon_net_forward.1} parent=1 // pred_fallthru
      _
    // Predicated region
    $region26: #{recon_net_forward.1} parent=1 // pred_check
      _
    $region27: #{recon_net_forward.1} parent=1 // pred_check_branch
      %47 = sbr.rel (0) target = $region29
    $region28: #{recon_net_forward.1} parent=1 // pred_region
      _
    $region29: #{recon_net_forward.1} parent=1 // pred_fallthru
      _
    // Predicated region
    $region30: #{recon_net_forward.1} parent=1 // pred_check
      _
    $region31: #{recon_net_forward.1} parent=1 // pred_check_branch
      %49 = sbr.rel (0) target = $region33
    $region32: #{recon_net_forward.1} parent=1 // pred_region
      _
    $region33: #{recon_net_forward.1} parent=1 // pred_fallthru
      _
    // Predicated region
    $region34: #{recon_net_forward.1} parent=1 // pred_check
      _
    $region35: #{recon_net_forward.1} parent=1 // pred_check_branch
      %51 = sbr.rel (0) target = $region37
    $region36: #{recon_net_forward.1} parent=1 // pred_region
      _
    $region37: #{recon_net_forward.1} parent=1 // pred_fallthru
      _
    // Predicated region
    $region38: #{recon_net_forward.1} parent=1 // pred_check
      _
    $region39: #{recon_net_forward.1} parent=1 // pred_check_branch
      %53 = sbr.rel (0) target = $region41
    $region40: #{recon_net_forward.1} parent=1 // pred_region
      _
    $region41: #{recon_net_forward.1} parent=1 // pred_fallthru
      _
    // Predicated region
    $region42: #{recon_net_forward.1} parent=1 // pred_check
      _
    $region43: #{recon_net_forward.1} parent=1 // pred_check_branch
      %55 = sbr.rel (0) target = $region45
    $region44: #{recon_net_forward.1} parent=1 // pred_region
      _
    $region45: #{recon_net_forward.1} parent=1 // pred_fallthru
      _
    // Predicated region
    $region46: #{recon_net_forward.1} parent=1 // pred_check
      _
    $region47: #{recon_net_forward.1} parent=1 // pred_check_branch
      %57 = sbr.rel (0) target = $region49
    $region48: #{recon_net_forward.1} parent=1 // pred_region
      _
    $region49: #{recon_net_forward.1} parent=1 // pred_fallthru
      _
    // Predicated region
    $region50: #{recon_net_forward.1} parent=1 // pred_check
      _
    $region51: #{recon_net_forward.1} parent=1 // pred_check_branch
      %59 = sbr.rel (0) target = $region53
    $region52: #{recon_net_forward.1} parent=1 // pred_region
      _
    $region53: #{recon_net_forward.1} parent=1 // pred_fallthru
      _
    // Predicated region
    $region54: #{recon_net_forward.1} parent=1 // pred_check
      _
    $region55: #{recon_net_forward.1} parent=1 // pred_check_branch
      %61 = sbr.rel (0) target = $region57
    $region56: #{recon_net_forward.1} parent=1 // pred_region
      _
    $region57: #{recon_net_forward.1} parent=1 // pred_fallthru
      _
    // Predicated region
    $region58: #{recon_net_forward.1} parent=1 // pred_check
      _
    $region59: #{recon_net_forward.1} parent=1 // pred_check_branch
      %63 = sbr.rel (0) target = $region61
    $region60: #{recon_net_forward.1} parent=1 // pred_region
      _
    $region61: #{recon_net_forward.1} parent=1 // pred_fallthru
      _
    // Predicated region
    $region62: #{recon_net_forward.1} parent=1 // pred_check
      _
    $region63: #{recon_net_forward.1} parent=1 // pred_check_branch
      %65 = sbr.rel (0) target = $region65
    $region64: #{recon_net_forward.1} parent=1 // pred_region
      _
    $region65: #{recon_net_forward.1} parent=1 // pred_fallthru
      _
    // Predicated region
    $region66: #{recon_net_forward.1} parent=1 // pred_check
      _
    $region67: #{recon_net_forward.1} parent=1 // pred_check_branch
      %67 = sbr.rel (0) target = $region69
    $region68: #{recon_net_forward.1} parent=1 // pred_region
      _
    $region69: #{recon_net_forward.1} parent=1 // pred_fallthru
      _
    // Predicated region
    $region70: #{recon_net_forward.1} parent=1 // pred_check
      _
    $region71: #{recon_net_forward.1} parent=1 // pred_check_branch
      %69 = sbr.rel (0) target = $region73
    $region72: #{recon_net_forward.1} parent=1 // pred_region
      _
    $region73: #{recon_net_forward.1} parent=1 // pred_fallthru
      _
    // Predicated region
    $region74: #{recon_net_forward.1} parent=1 // pred_check
      _
    $region75: #{recon_net_forward.1} parent=1 // pred_check_branch
      %71 = sbr.rel (0) target = $region77
    $region76: #{recon_net_forward.1} parent=1 // pred_region
      _
    $region77: #{recon_net_forward.1} parent=1 // pred_fallthru
      _
    // Predicated region
    $region78: #{recon_net_forward.1} parent=1 // pred_check
      _
    $region79: #{recon_net_forward.1} parent=1 // pred_check_branch
      %73 = sbr.rel (0) target = $region81
    $region80: #{recon_net_forward.1} parent=1 // pred_region
      _
    $region81: #{recon_net_forward.1} parent=1 // pred_fallthru
      _
    // Predicated region
    $region82: #{recon_net_forward.1} parent=1 // pred_check
      _
    $region83: #{recon_net_forward.1} parent=1 // pred_check_branch
      %75 = sbr.rel (0) target = $region85
    $region84: #{recon_net_forward.1} parent=1 // pred_region
      _
    $region85: #{recon_net_forward.1} parent=1 // pred_fallthru
      _
    // Predicated region
    $region86: #{recon_net_forward.1} parent=1 // pred_check
      _
    $region87: #{recon_net_forward.1} parent=1 // pred_check_branch
      %77 = sbr.rel (0) target = $region89
    $region88: #{recon_net_forward.1} parent=1 // pred_region
      _
    $region89: #{recon_net_forward.1} parent=1 // pred_fallthru
      _
    // Predicated region
    $region90: #{recon_net_forward.1} parent=1 // pred_check
      _
    $region91: #{recon_net_forward.1} parent=1 // pred_check_branch
      %79 = sbr.rel (0) target = $region93
    $region92: #{recon_net_forward.1} parent=1 // pred_region
      _
    $region93: #{recon_net_forward.1} parent=1 // pred_fallthru
      _
    // Predicated region
    $region94: #{recon_net_forward.1} parent=1 // pred_check
      _
    $region95: #{recon_net_forward.1} parent=1 // pred_check_branch
      %81 = sbr.rel (0) target = $region97
    $region96: #{recon_net_forward.1} parent=1 // pred_region
      _
    $region97: #{recon_net_forward.1} parent=1 // pred_fallthru
      _
    // Predicated region
    $region98: #{recon_net_forward.1} parent=1 // pred_check
      _
    $region99: #{recon_net_forward.1} parent=1 // pred_check_branch
      %83 = sbr.rel (0) target = $region101
    $region100: #{recon_net_forward.1} parent=1 // pred_region
      _
    $region101: #{recon_net_forward.1} parent=1 // pred_fallthru
      _
    // Predicated region
    $region102: #{recon_net_forward.1} parent=1 // pred_check
      _
    $region103: #{recon_net_forward.1} parent=1 // pred_check_branch
      %85 = sbr.rel (0) target = $region105
    $region104: #{recon_net_forward.1} parent=1 // pred_region
      _
    $region105: #{recon_net_forward.1} parent=1 // pred_fallthru
      _
    %v86 = vld [vmem:[%s0] sm:$0xff]
    %v87 = vld [vmem:[%s0 + $0x8] sm:$0xff]
    %v88 = vld [vmem:[%s0 + $0x10] sm:$0xff]
    %v89 = vld [vmem:[%s0 + $0x18] sm:$0xff]
    %v90 = vld [vmem:[%s0 + $0x20] sm:$0xff]
    %v91 = vld [vmem:[%s0 + $0x28] sm:$0xff]
    %v92 = vld [vmem:[%s0 + $0x30] sm:$0xff]
    %v93 = vld [vmem:[%s0 + $0x38] sm:$0xff]
    %v94 = vld [vmem:[%s1] sm:$0xff]
    %v95 = vld [vmem:[%s1 + $0x8] sm:$0xff]
    %v96 = vld [vmem:[%s1 + $0x10] sm:$0xff]
    %v97 = vld [vmem:[%s1 + $0x18] sm:$0xff]
    %v98 = vld [vmem:[%s1 + $0x20] sm:$0xff]
    %v99 = vld [vmem:[%s1 + $0x28] sm:$0xff]
    %v100 = vld [vmem:[%s1 + $0x30] sm:$0xff]
    %vm101 = vcmask 523264
    %v103 = vsel %vm101, %v94, 0
    %v106 = vsel %vm101, %v95, 0
    %v109 = vsel %vm101, %v96, 0
    %v112 = vsel %vm101, %v97, 0
    %v115 = vsel %vm101, %v98, 0
    %v118 = vsel %vm101, %v99, 0
    %v121 = vsel %vm101, %v100, 0
    %123 = vmatprep.subr.mxu0 0.0
    %124 = vmatpush1.msra.mxu0 %v86
    %125 = vmatprep.subr.mxu0 0.0
    %126 = vmatpush1.msra.mxu0 %v87
    %127 = vmatprep.subr.mxu0 0.0
    %128 = vmatpush1.msra.mxu0 %v88
    %129 = vmatprep.subr.mxu0 0.0
    %130 = vmatpush1.msra.mxu0 %v89
    %131 = vmatprep.subr.mxu0 0.0
    %132 = vmatpush1.msra.mxu0 %v90
    %133 = vmatprep.subr.mxu0 0.0
    %134 = vmatpush1.msra.mxu0 %v91
    %135 = vmatprep.subr.mxu0 0.0
    %136 = vmatpush1.msra.mxu0 %v92
    %137 = vmatprep.subr.mxu0 0.0
    %138 = vmatpush1.msra.mxu0 %v93
    %139 = vmatprep.subr.mxu0 0.0
    %140 = vmatpush1.msra.mxu0 0.0
    %141 = vmatprep.subr.mxu0 0.0
    %142 = vmatpush1.msra.mxu0 0.0
    %143 = vmatprep.subr.mxu0 0.0
    %144 = vmatpush1.msra.mxu0 0.0
    %145 = vmatprep.subr.mxu0 0.0
    %146 = vmatpush1.msra.mxu0 0.0
    %147 = vmatprep.subr.mxu0 0.0
    %148 = vmatpush1.msra.mxu0 0.0
    %149 = vmatprep.subr.mxu0 0.0
    %150 = vmatpush1.msra.mxu0 0.0
    %151 = vmatprep.subr.mxu0 0.0
    %152 = vmatpush1.msra.mxu0 0.0
    %153 = vmatprep.subr.mxu0 0.0
    %154 = vmatpush1.msra.mxu0 0.0
    %155 = vmatprep.subr.mxu0 0.0
    %156 = vmatpush1.msra.mxu0 0.0
    %157 = vmatprep.subr.mxu0 0.0
    %158 = vmatpush1.msra.mxu0 0.0
    %159 = vmatprep.subr.mxu0 0.0
    %160 = vmatpush1.msra.mxu0 0.0
    %161 = vmatprep.subr.mxu0 0.0
    %162 = vmatpush1.msra.mxu0 0.0
    %163 = vmatprep.subr.mxu0 0.0
    %164 = vmatpush1.msra.mxu0 0.0
    %165 = vmatprep.subr.mxu0 0.0
    %166 = vmatpush1.msra.mxu0 0.0
    %167 = vmatprep.subr.mxu0 0.0
    %168 = vmatpush1.msra.mxu0 0.0
    %169 = vmatprep.subr.mxu0 0.0
    %170 = vmatpush1.msra.mxu0 0.0
    %171 = vmatprep.subr.mxu0 0.0
    %172 = vmatpush1.msra.mxu0 0.0
    %173 = vmatprep.subr.mxu0 0.0
    %174 = vmatpush1.msra.mxu0 0.0
    %175 = vmatprep.subr.mxu0 0.0
    %176 = vmatpush1.msra.mxu0 0.0
    %177 = vmatprep.subr.mxu0 0.0
    %178 = vmatpush1.msra.mxu0 0.0
    %179 = vmatprep.subr.mxu0 0.0
    %180 = vmatpush1.msra.mxu0 0.0
    %181 = vmatprep.subr.mxu0 0.0
    %182 = vmatpush1.msra.mxu0 0.0
    %183 = vmatprep.subr.mxu0 0.0
    %184 = vmatpush1.msra.mxu0 0.0
    %185 = vmatprep.subr.mxu0 0.0
    %186 = vmatpush1.msra.mxu0 0.0
    %187 = vmatprep.mubr.f32.mxu0 0.0
    %188 = vmatmul.mubr.f32.gmra.mrb[0].mxu0 %v103
    %v189 = vpop.f32.mrb[0].mxu0
    %v190 = vadd.f32 0.0, %v189
    %v191 = vpop.f32.mrb[0].mxu0
    %192 = vmatprep.mubr.f32.mxu0 0.0
    %193 = vmatmul.mubr.f32.gmra.mrb[0].mxu0 %v106
    %v194 = vpop.f32.mrb[0].mxu0
    %v195 = vadd.f32 0.0, %v194
    %v196 = vpop.f32.mrb[0].mxu0
    %197 = vmatprep.mubr.f32.mxu0 0.0
    %198 = vmatmul.mubr.f32.gmra.mrb[0].mxu0 %v109
    %v199 = vpop.f32.mrb[0].mxu0
    %v200 = vadd.f32 0.0, %v199
    %v201 = vpop.f32.mrb[0].mxu0
    %202 = vmatprep.mubr.f32.mxu0 0.0
    %203 = vmatmul.mubr.f32.gmra.mrb[0].mxu0 %v112
    %v204 = vpop.f32.mrb[0].mxu0
    %v205 = vadd.f32 0.0, %v204
    %v206 = vpop.f32.mrb[0].mxu0
    %207 = vmatprep.mubr.f32.mxu0 0.0
    %208 = vmatmul.mubr.f32.gmra.mrb[0].mxu0 %v115
    %v209 = vpop.f32.mrb[0].mxu0
    %v210 = vadd.f32 0.0, %v209
    %v211 = vpop.f32.mrb[0].mxu0
    %212 = vmatprep.mubr.f32.mxu0 0.0
    %213 = vmatmul.mubr.f32.gmra.mrb[0].mxu0 %v118
    %v214 = vpop.f32.mrb[0].mxu0
    %v215 = vadd.f32 0.0, %v214
    %v216 = vpop.f32.mrb[0].mxu0
    %217 = vmatprep.mubr.f32.mxu0 0.0
    %218 = vmatmul.mubr.f32.gmra.mrb[0].mxu0 %v121
    %v219 = vpop.f32.mrb[0].mxu0
    %v220 = vadd.f32 0.0, %v219
    %v221 = vpop.f32.mrb[0].mxu0
    %222 = vdwg.mxu0
    %s223 = scalar_lea.vmem %s1, 56
    %v224 = vld [vmem:[%s223] sm:$0xff]
    %v225 = vld [vmem:[%s223 + $0x8] sm:$0xff]
    %v226 = vld [vmem:[%s223 + $0x10] sm:$0xff]
    %v227 = vld [vmem:[%s223 + $0x18] sm:$0xff]
    %v228 = vld [vmem:[%s223 + $0x20] sm:$0xff]
    %v229 = vld [vmem:[%s223 + $0x28] sm:$0xff]
    %v230 = vld [vmem:[%s223 + $0x30] sm:$0xff]
    %v232 = vsel %vm101, %v224, 0
    %v235 = vsel %vm101, %v225, 0
    %v238 = vsel %vm101, %v226, 0
    %v241 = vsel %vm101, %v227, 0
    %v244 = vsel %vm101, %v228, 0
    %v247 = vsel %vm101, %v229, 0
    %v250 = vsel %vm101, %v230, 0
    %252 = vmatprep.subr.mxu0 0.0
    %253 = vmatpush1.msra.mxu0 %v86
    %254 = vmatprep.subr.mxu0 0.0
    %255 = vmatpush1.msra.mxu0 %v87
    %256 = vmatprep.subr.mxu0 0.0
    %257 = vmatpush1.msra.mxu0 %v88
    %258 = vmatprep.subr.mxu0 0.0
    %259 = vmatpush1.msra.mxu0 %v89
    %260 = vmatprep.subr.mxu0 0.0
    %261 = vmatpush1.msra.mxu0 %v90
    %262 = vmatprep.subr.mxu0 0.0
    %263 = vmatpush1.msra.mxu0 %v91
    %264 = vmatprep.subr.mxu0 0.0
    %265 = vmatpush1.msra.mxu0 %v92
    %266 = vmatprep.subr.mxu0 0.0
    %267 = vmatpush1.msra.mxu0 %v93
    %268 = vmatprep.subr.mxu0 0.0
    %269 = vmatpush1.msra.mxu0 0.0
    %270 = vmatprep.subr.mxu0 0.0
    %271 = vmatpush1.msra.mxu0 0.0
    %272 = vmatprep.subr.mxu0 0.0
    %273 = vmatpush1.msra.mxu0 0.0
    %274 = vmatprep.subr.mxu0 0.0
    %275 = vmatpush1.msra.mxu0 0.0
    %276 = vmatprep.subr.mxu0 0.0
    %277 = vmatpush1.msra.mxu0 0.0
    %278 = vmatprep.subr.mxu0 0.0
    %279 = vmatpush1.msra.mxu0 0.0
    %280 = vmatprep.subr.mxu0 0.0
    %281 = vmatpush1.msra.mxu0 0.0
    %282 = vmatprep.subr.mxu0 0.0
    %283 = vmatpush1.msra.mxu0 0.0
    %284 = vmatprep.subr.mxu0 0.0
    %285 = vmatpush1.msra.mxu0 0.0
    %286 = vmatprep.subr.mxu0 0.0
    %287 = vmatpush1.msra.mxu0 0.0
    %288 = vmatprep.subr.mxu0 0.0
    %289 = vmatpush1.msra.mxu0 0.0
    %290 = vmatprep.subr.mxu0 0.0
    %291 = vmatpush1.msra.mxu0 0.0
    %292 = vmatprep.subr.mxu0 0.0
    %293 = vmatpush1.msra.mxu0 0.0
    %294 = vmatprep.subr.mxu0 0.0
    %295 = vmatpush1.msra.mxu0 0.0
    %296 = vmatprep.subr.mxu0 0.0
    %297 = vmatpush1.msra.mxu0 0.0
    %298 = vmatprep.subr.mxu0 0.0
    %299 = vmatpush1.msra.mxu0 0.0
    %300 = vmatprep.subr.mxu0 0.0
    %301 = vmatpush1.msra.mxu0 0.0
    %302 = vmatprep.subr.mxu0 0.0
    %303 = vmatpush1.msra.mxu0 0.0
    %304 = vmatprep.subr.mxu0 0.0
    %305 = vmatpush1.msra.mxu0 0.0
    %306 = vmatprep.subr.mxu0 0.0
    %307 = vmatpush1.msra.mxu0 0.0
    %308 = vmatprep.subr.mxu0 0.0
    %309 = vmatpush1.msra.mxu0 0.0
    %310 = vmatprep.subr.mxu0 0.0
    %311 = vmatpush1.msra.mxu0 0.0
    %312 = vmatprep.subr.mxu0 0.0
    %313 = vmatpush1.msra.mxu0 0.0
    %314 = vmatprep.subr.mxu0 0.0
    %315 = vmatpush1.msra.mxu0 0.0
    %316 = vmatprep.mubr.f32.mxu0 0.0
    %317 = vmatmul.mubr.f32.gmra.mrb[0].mxu0 %v232
    %v318 = vpop.f32.mrb[0].mxu0
    %v319 = vadd.f32 0.0, %v318
    %v320 = vpop.f32.mrb[0].mxu0
    %321 = vmatprep.mubr.f32.mxu0 0.0
    %322 = vmatmul.mubr.f32.gmra.mrb[0].mxu0 %v235
    %v323 = vpop.f32.mrb[0].mxu0
    %v324 = vadd.f32 0.0, %v323
    %v325 = vpop.f32.mrb[0].mxu0
    %326 = vmatprep.mubr.f32.mxu0 0.0
    %327 = vmatmul.mubr.f32.gmra.mrb[0].mxu0 %v238
    %v328 = vpop.f32.mrb[0].mxu0
    %v329 = vadd.f32 0.0, %v328
    %v330 = vpop.f32.mrb[0].mxu0
    %331 = vmatprep.mubr.f32.mxu0 0.0
    %332 = vmatmul.mubr.f32.gmra.mrb[0].mxu0 %v241
    %v333 = vpop.f32.mrb[0].mxu0
    %v334 = vadd.f32 0.0, %v333
    %v335 = vpop.f32.mrb[0].mxu0
    %336 = vmatprep.mubr.f32.mxu0 0.0
    %337 = vmatmul.mubr.f32.gmra.mrb[0].mxu0 %v244
    %v338 = vpop.f32.mrb[0].mxu0
    %v339 = vadd.f32 0.0, %v338
    %v340 = vpop.f32.mrb[0].mxu0
    %341 = vmatprep.mubr.f32.mxu0 0.0
    %342 = vmatmul.mubr.f32.gmra.mrb[0].mxu0 %v247
    %v343 = vpop.f32.mrb[0].mxu0
    %v344 = vadd.f32 0.0, %v343
    %v345 = vpop.f32.mrb[0].mxu0
    %346 = vmatprep.mubr.f32.mxu0 0.0
    %347 = vmatmul.mubr.f32.gmra.mrb[0].mxu0 %v250
    %v348 = vpop.f32.mrb[0].mxu0
    %v349 = vadd.f32 0.0, %v348
    %v350 = vpop.f32.mrb[0].mxu0
    %351 = vdwg.mxu0
    %s352 = scalar_lea.vmem %s1, 112
    %v353 = vld [vmem:[%s352] sm:$0xff]
    %v354 = vld [vmem:[%s352 + $0x8] sm:$0xff]
    %v355 = vld [vmem:[%s352 + $0x10] sm:$0xff]
    %v356 = vld [vmem:[%s352 + $0x18] sm:$0xff]
    %v357 = vld [vmem:[%s352 + $0x20] sm:$0xff]
    %v358 = vld [vmem:[%s352 + $0x28] sm:$0xff]
    %v359 = vld [vmem:[%s352 + $0x30] sm:$0xff]
    %v361 = vsel %vm101, %v353, 0
    %v364 = vsel %vm101, %v354, 0
    %v367 = vsel %vm101, %v355, 0
    %v370 = vsel %vm101, %v356, 0
    %v373 = vsel %vm101, %v357, 0
    %v376 = vsel %vm101, %v358, 0
    %v379 = vsel %vm101, %v359, 0
    %381 = vmatprep.subr.mxu0 0.0
    %382 = vmatpush1.msra.mxu0 %v86
    %383 = vmatprep.subr.mxu0 0.0
    %384 = vmatpush1.msra.mxu0 %v87
    %385 = vmatprep.subr.mxu0 0.0
    %386 = vmatpush1.msra.mxu0 %v88
    %387 = vmatprep.subr.mxu0 0.0
    %388 = vmatpush1.msra.mxu0 %v89
    %389 = vmatprep.subr.mxu0 0.0
    %390 = vmatpush1.msra.mxu0 %v90
    %391 = vmatprep.subr.mxu0 0.0
    %392 = vmatpush1.msra.mxu0 %v91
    %393 = vmatprep.subr.mxu0 0.0
    %394 = vmatpush1.msra.mxu0 %v92
    %395 = vmatprep.subr.mxu0 0.0
    %396 = vmatpush1.msra.mxu0 %v93
    %397 = vmatprep.subr.mxu0 0.0
    %398 = vmatpush1.msra.mxu0 0.0
    %399 = vmatprep.subr.mxu0 0.0
    %400 = vmatpush1.msra.mxu0 0.0
    %401 = vmatprep.subr.mxu0 0.0
    %402 = vmatpush1.msra.mxu0 0.0
    %403 = vmatprep.subr.mxu0 0.0
    %404 = vmatpush1.msra.mxu0 0.0
    %405 = vmatprep.subr.mxu0 0.0
    %406 = vmatpush1.msra.mxu0 0.0
    %407 = vmatprep.subr.mxu0 0.0
    %408 = vmatpush1.msra.mxu0 0.0
    %409 = vmatprep.subr.mxu0 0.0
    %410 = vmatpush1.msra.mxu0 0.0
    %411 = vmatprep.subr.mxu0 0.0
    %412 = vmatpush1.msra.mxu0 0.0
    %413 = vmatprep.subr.mxu0 0.0
    %414 = vmatpush1.msra.mxu0 0.0
    %415 = vmatprep.subr.mxu0 0.0
    %416 = vmatpush1.msra.mxu0 0.0
    %417 = vmatprep.subr.mxu0 0.0
    %418 = vmatpush1.msra.mxu0 0.0
    %419 = vmatprep.subr.mxu0 0.0
    %420 = vmatpush1.msra.mxu0 0.0
    %421 = vmatprep.subr.mxu0 0.0
    %422 = vmatpush1.msra.mxu0 0.0
    %423 = vmatprep.subr.mxu0 0.0
    %424 = vmatpush1.msra.mxu0 0.0
    %425 = vmatprep.subr.mxu0 0.0
    %426 = vmatpush1.msra.mxu0 0.0
    %427 = vmatprep.subr.mxu0 0.0
    %428 = vmatpush1.msra.mxu0 0.0
    %429 = vmatprep.subr.mxu0 0.0
    %430 = vmatpush1.msra.mxu0 0.0
    %431 = vmatprep.subr.mxu0 0.0
    %432 = vmatpush1.msra.mxu0 0.0
    %433 = vmatprep.subr.mxu0 0.0
    %434 = vmatpush1.msra.mxu0 0.0
    %435 = vmatprep.subr.mxu0 0.0
    %436 = vmatpush1.msra.mxu0 0.0
    %437 = vmatprep.subr.mxu0 0.0
    %438 = vmatpush1.msra.mxu0 0.0
    %439 = vmatprep.subr.mxu0 0.0
    %440 = vmatpush1.msra.mxu0 0.0
    %441 = vmatprep.subr.mxu0 0.0
    %442 = vmatpush1.msra.mxu0 0.0
    %443 = vmatprep.subr.mxu0 0.0
    %444 = vmatpush1.msra.mxu0 0.0
    %445 = vmatprep.mubr.f32.mxu0 0.0
    %446 = vmatmul.mubr.f32.gmra.mrb[0].mxu0 %v361
    %v447 = vpop.f32.mrb[0].mxu0
    %v448 = vadd.f32 0.0, %v447
    %v449 = vpop.f32.mrb[0].mxu0
    %450 = vmatprep.mubr.f32.mxu0 0.0
    %451 = vmatmul.mubr.f32.gmra.mrb[0].mxu0 %v364
    %v452 = vpop.f32.mrb[0].mxu0
    %v453 = vadd.f32 0.0, %v452
    %v454 = vpop.f32.mrb[0].mxu0
    %455 = vmatprep.mubr.f32.mxu0 0.0
    %456 = vmatmul.mubr.f32.gmra.mrb[0].mxu0 %v367
    %v457 = vpop.f32.mrb[0].mxu0
    %v458 = vadd.f32 0.0, %v457
    %v459 = vpop.f32.mrb[0].mxu0
    %460 = vmatprep.mubr.f32.mxu0 0.0
    %461 = vmatmul.mubr.f32.gmra.mrb[0].mxu0 %v370
    %v462 = vpop.f32.mrb[0].mxu0
    %v463 = vadd.f32 0.0, %v462
    %v464 = vpop.f32.mrb[0].mxu0
    %465 = vmatprep.mubr.f32.mxu0 0.0
    %466 = vmatmul.mubr.f32.gmra.mrb[0].mxu0 %v373
    %v467 = vpop.f32.mrb[0].mxu0
    %v468 = vadd.f32 0.0, %v467
    %v469 = vpop.f32.mrb[0].mxu0
    %470 = vmatprep.mubr.f32.mxu0 0.0
    %471 = vmatmul.mubr.f32.gmra.mrb[0].mxu0 %v376
    %v472 = vpop.f32.mrb[0].mxu0
    %v473 = vadd.f32 0.0, %v472
    %v474 = vpop.f32.mrb[0].mxu0
    %475 = vmatprep.mubr.f32.mxu0 0.0
    %476 = vmatmul.mubr.f32.gmra.mrb[0].mxu0 %v379
    %v477 = vpop.f32.mrb[0].mxu0
    %v478 = vadd.f32 0.0, %v477
    %v479 = vpop.f32.mrb[0].mxu0
    %480 = vdwg.mxu0
    %s481 = scalar_lea.vmem %s1, 168
    %v482 = vld [vmem:[%s481] sm:$0xff]
    %v483 = vld [vmem:[%s481 + $0x8] sm:$0xff]
    %v484 = vld [vmem:[%s481 + $0x10] sm:$0xff]
    %v485 = vld [vmem:[%s481 + $0x18] sm:$0xff]
    %v486 = vld [vmem:[%s481 + $0x20] sm:$0xff]
    %v487 = vld [vmem:[%s481 + $0x28] sm:$0xff]
    %v488 = vld [vmem:[%s481 + $0x30] sm:$0xff]
    %v490 = vsel %vm101, %v482, 0
    %v493 = vsel %vm101, %v483, 0
    %v496 = vsel %vm101, %v484, 0
    %v499 = vsel %vm101, %v485, 0
    %v502 = vsel %vm101, %v486, 0
    %v505 = vsel %vm101, %v487, 0
    %v508 = vsel %vm101, %v488, 0
    %510 = vmatprep.subr.mxu0 0.0
    %511 = vmatpush1.msra.mxu0 %v86
    %512 = vmatprep.subr.mxu0 0.0
    %513 = vmatpush1.msra.mxu0 %v87
    %514 = vmatprep.subr.mxu0 0.0
    %515 = vmatpush1.msra.mxu0 %v88
    %516 = vmatprep.subr.mxu0 0.0
    %517 = vmatpush1.msra.mxu0 %v89
    %518 = vmatprep.subr.mxu0 0.0
    %519 = vmatpush1.msra.mxu0 %v90
    %520 = vmatprep.subr.mxu0 0.0
    %521 = vmatpush1.msra.mxu0 %v91
    %522 = vmatprep.subr.mxu0 0.0
    %523 = vmatpush1.msra.mxu0 %v92
    %524 = vmatprep.subr.mxu0 0.0
    %525 = vmatpush1.msra.mxu0 %v93
    %526 = vmatprep.subr.mxu0 0.0
    %527 = vmatpush1.msra.mxu0 0.0
    %528 = vmatprep.subr.mxu0 0.0
    %529 = vmatpush1.msra.mxu0 0.0
    %530 = vmatprep.subr.mxu0 0.0
    %531 = vmatpush1.msra.mxu0 0.0
    %532 = vmatprep.subr.mxu0 0.0
    %533 = vmatpush1.msra.mxu0 0.0
    %534 = vmatprep.subr.mxu0 0.0
    %535 = vmatpush1.msra.mxu0 0.0
    %536 = vmatprep.subr.mxu0 0.0
    %537 = vmatpush1.msra.mxu0 0.0
    %538 = vmatprep.subr.mxu0 0.0
    %539 = vmatpush1.msra.mxu0 0.0
    %540 = vmatprep.subr.mxu0 0.0
    %541 = vmatpush1.msra.mxu0 0.0
    %542 = vmatprep.subr.mxu0 0.0
    %543 = vmatpush1.msra.mxu0 0.0
    %544 = vmatprep.subr.mxu0 0.0
    %545 = vmatpush1.msra.mxu0 0.0
    %546 = vmatprep.subr.mxu0 0.0
    %547 = vmatpush1.msra.mxu0 0.0
    %548 = vmatprep.subr.mxu0 0.0
    %549 = vmatpush1.msra.mxu0 0.0
    %550 = vmatprep.subr.mxu0 0.0
    %551 = vmatpush1.msra.mxu0 0.0
    %552 = vmatprep.subr.mxu0 0.0
    %553 = vmatpush1.msra.mxu0 0.0
    %554 = vmatprep.subr.mxu0 0.0
    %555 = vmatpush1.msra.mxu0 0.0
    %556 = vmatprep.subr.mxu0 0.0
    %557 = vmatpush1.msra.mxu0 0.0
    %558 = vmatprep.subr.mxu0 0.0
    %559 = vmatpush1.msra.mxu0 0.0
    %560 = vmatprep.subr.mxu0 0.0
    %561 = vmatpush1.msra.mxu0 0.0
    %562 = vmatprep.subr.mxu0 0.0
    %563 = vmatpush1.msra.mxu0 0.0
    %564 = vmatprep.subr.mxu0 0.0
    %565 = vmatpush1.msra.mxu0 0.0
    %566 = vmatprep.subr.mxu0 0.0
    %567 = vmatpush1.msra.mxu0 0.0
    %568 = vmatprep.subr.mxu0 0.0
    %569 = vmatpush1.msra.mxu0 0.0
    %570 = vmatprep.subr.mxu0 0.0
    %571 = vmatpush1.msra.mxu0 0.0
    %572 = vmatprep.subr.mxu0 0.0
    %573 = vmatpush1.msra.mxu0 0.0
    %574 = vmatprep.mubr.f32.mxu0 0.0
    %575 = vmatmul.mubr.f32.gmra.mrb[0].mxu0 %v490
    %v576 = vpop.f32.mrb[0].mxu0
    %v577 = vadd.f32 0.0, %v576
    %v578 = vpop.f32.mrb[0].mxu0
    %579 = vmatprep.mubr.f32.mxu0 0.0
    %580 = vmatmul.mubr.f32.gmra.mrb[0].mxu0 %v493
    %v581 = vpop.f32.mrb[0].mxu0
    %v582 = vadd.f32 0.0, %v581
    %v583 = vpop.f32.mrb[0].mxu0
    %584 = vmatprep.mubr.f32.mxu0 0.0
    %585 = vmatmul.mubr.f32.gmra.mrb[0].mxu0 %v496
    %v586 = vpop.f32.mrb[0].mxu0
    %v587 = vadd.f32 0.0, %v586
    %v588 = vpop.f32.mrb[0].mxu0
    %589 = vmatprep.mubr.f32.mxu0 0.0
    %590 = vmatmul.mubr.f32.gmra.mrb[0].mxu0 %v499
    %v591 = vpop.f32.mrb[0].mxu0
    %v592 = vadd.f32 0.0, %v591
    %v593 = vpop.f32.mrb[0].mxu0
    %594 = vmatprep.mubr.f32.mxu0 0.0
    %595 = vmatmul.mubr.f32.gmra.mrb[0].mxu0 %v502
    %v596 = vpop.f32.mrb[0].mxu0
    %v597 = vadd.f32 0.0, %v596
    %v598 = vpop.f32.mrb[0].mxu0
    %599 = vmatprep.mubr.f32.mxu0 0.0
    %600 = vmatmul.mubr.f32.gmra.mrb[0].mxu0 %v505
    %v601 = vpop.f32.mrb[0].mxu0
    %v602 = vadd.f32 0.0, %v601
    %v603 = vpop.f32.mrb[0].mxu0
    %604 = vmatprep.mubr.f32.mxu0 0.0
    %605 = vmatmul.mubr.f32.gmra.mrb[0].mxu0 %v508
    %v606 = vpop.f32.mrb[0].mxu0
    %v607 = vadd.f32 0.0, %v606
    %v608 = vpop.f32.mrb[0].mxu0
    %609 = vdwg.mxu0
    %s610 = scalar_lea.vmem %s1, 224
    %v611 = vld [vmem:[%s610] sm:$0xff]
    %v612 = vld [vmem:[%s610 + $0x8] sm:$0xff]
    %v613 = vld [vmem:[%s610 + $0x10] sm:$0xff]
    %v614 = vld [vmem:[%s610 + $0x18] sm:$0xff]
    %v615 = vld [vmem:[%s610 + $0x20] sm:$0xff]
    %v616 = vld [vmem:[%s610 + $0x28] sm:$0xff]
    %v617 = vld [vmem:[%s610 + $0x30] sm:$0xff]
    %v619 = vsel %vm101, %v611, 0
    %v622 = vsel %vm101, %v612, 0
    %v625 = vsel %vm101, %v613, 0
    %v628 = vsel %vm101, %v614, 0
    %v631 = vsel %vm101, %v615, 0
    %v634 = vsel %vm101, %v616, 0
    %v637 = vsel %vm101, %v617, 0
    %639 = vmatprep.subr.mxu0 0.0
    %640 = vmatpush1.msra.mxu0 %v86
    %641 = vmatprep.subr.mxu0 0.0
    %642 = vmatpush1.msra.mxu0 %v87
    %643 = vmatprep.subr.mxu0 0.0
    %644 = vmatpush1.msra.mxu0 %v88
    %645 = vmatprep.subr.mxu0 0.0
    %646 = vmatpush1.msra.mxu0 %v89
    %647 = vmatprep.subr.mxu0 0.0
    %648 = vmatpush1.msra.mxu0 %v90
    %649 = vmatprep.subr.mxu0 0.0
    %650 = vmatpush1.msra.mxu0 %v91
    %651 = vmatprep.subr.mxu0 0.0
    %652 = vmatpush1.msra.mxu0 %v92
    %653 = vmatprep.subr.mxu0 0.0
    %654 = vmatpush1.msra.mxu0 %v93
    %655 = vmatprep.subr.mxu0 0.0
    %656 = vmatpush1.msra.mxu0 0.0
    %657 = vmatprep.subr.mxu0 0.0
    %658 = vmatpush1.msra.mxu0 0.0
    %659 = vmatprep.subr.mxu0 0.0
    %660 = vmatpush1.msra.mxu0 0.0
    %661 = vmatprep.subr.mxu0 0.0
    %662 = vmatpush1.msra.mxu0 0.0
    %663 = vmatprep.subr.mxu0 0.0
    %664 = vmatpush1.msra.mxu0 0.0
    %665 = vmatprep.subr.mxu0 0.0
    %666 = vmatpush1.msra.mxu0 0.0
    %667 = vmatprep.subr.mxu0 0.0
    %668 = vmatpush1.msra.mxu0 0.0
    %669 = vmatprep.subr.mxu0 0.0
    %670 = vmatpush1.msra.mxu0 0.0
    %671 = vmatprep.subr.mxu0 0.0
    %672 = vmatpush1.msra.mxu0 0.0
    %673 = vmatprep.subr.mxu0 0.0
    %674 = vmatpush1.msra.mxu0 0.0
    %675 = vmatprep.subr.mxu0 0.0
    %676 = vmatpush1.msra.mxu0 0.0
    %677 = vmatprep.subr.mxu0 0.0
    %678 = vmatpush1.msra.mxu0 0.0
    %679 = vmatprep.subr.mxu0 0.0
    %680 = vmatpush1.msra.mxu0 0.0
    %681 = vmatprep.subr.mxu0 0.0
    %682 = vmatpush1.msra.mxu0 0.0
    %683 = vmatprep.subr.mxu0 0.0
    %684 = vmatpush1.msra.mxu0 0.0
    %685 = vmatprep.subr.mxu0 0.0
    %686 = vmatpush1.msra.mxu0 0.0
    %687 = vmatprep.subr.mxu0 0.0
    %688 = vmatpush1.msra.mxu0 0.0
    %689 = vmatprep.subr.mxu0 0.0
    %690 = vmatpush1.msra.mxu0 0.0
    %691 = vmatprep.subr.mxu0 0.0
    %692 = vmatpush1.msra.mxu0 0.0
    %693 = vmatprep.subr.mxu0 0.0
    %694 = vmatpush1.msra.mxu0 0.0
    %695 = vmatprep.subr.mxu0 0.0
    %696 = vmatpush1.msra.mxu0 0.0
    %697 = vmatprep.subr.mxu0 0.0
    %698 = vmatpush1.msra.mxu0 0.0
    %699 = vmatprep.subr.mxu0 0.0
    %700 = vmatpush1.msra.mxu0 0.0
    %701 = vmatprep.subr.mxu0 0.0
    %702 = vmatpush1.msra.mxu0 0.0
    %703 = vmatprep.mubr.f32.mxu0 0.0
    %704 = vmatmul.mubr.f32.gmra.mrb[0].mxu0 %v619
    %v705 = vpop.f32.mrb[0].mxu0
    %v706 = vadd.f32 0.0, %v705
    %v707 = vpop.f32.mrb[0].mxu0
    %708 = vmatprep.mubr.f32.mxu0 0.0
    %709 = vmatmul.mubr.f32.gmra.mrb[0].mxu0 %v622
    %v710 = vpop.f32.mrb[0].mxu0
    %v711 = vadd.f32 0.0, %v710
    %v712 = vpop.f32.mrb[0].mxu0
    %713 = vmatprep.mubr.f32.mxu0 0.0
    %714 = vmatmul.mubr.f32.gmra.mrb[0].mxu0 %v625
    %v715 = vpop.f32.mrb[0].mxu0
    %v716 = vadd.f32 0.0, %v715
    %v717 = vpop.f32.mrb[0].mxu0
    %718 = vmatprep.mubr.f32.mxu0 0.0
    %719 = vmatmul.mubr.f32.gmra.mrb[0].mxu0 %v628
    %v720 = vpop.f32.mrb[0].mxu0
    %v721 = vadd.f32 0.0, %v720
    %v722 = vpop.f32.mrb[0].mxu0
    %723 = vmatprep.mubr.f32.mxu0 0.0
    %724 = vmatmul.mubr.f32.gmra.mrb[0].mxu0 %v631
    %v725 = vpop.f32.mrb[0].mxu0
    %v726 = vadd.f32 0.0, %v725
    %v727 = vpop.f32.mrb[0].mxu0
    %728 = vmatprep.mubr.f32.mxu0 0.0
    %729 = vmatmul.mubr.f32.gmra.mrb[0].mxu0 %v634
    %v730 = vpop.f32.mrb[0].mxu0
    %v731 = vadd.f32 0.0, %v730
    %v732 = vpop.f32.mrb[0].mxu0
    %733 = vmatprep.mubr.f32.mxu0 0.0
    %734 = vmatmul.mubr.f32.gmra.mrb[0].mxu0 %v637
    %v735 = vpop.f32.mrb[0].mxu0
    %v736 = vadd.f32 0.0, %v735
    %v737 = vpop.f32.mrb[0].mxu0
    %738 = vdwg.mxu0
    %746 = vrot.lane.b32.xlu0 %v319, 96
    %v747 = vpop.permute.xlu0 %746
    %748 = vrot.lane.b32.xlu0 %v324, 96
    %v749 = vpop.permute.xlu0 %748
    %750 = vrot.lane.b32.xlu0 %v329, 96
    %v751 = vpop.permute.xlu0 %750
    %752 = vrot.lane.b32.xlu0 %v334, 96
    %v753 = vpop.permute.xlu0 %752
    %754 = vrot.lane.b32.xlu0 %v339, 96
    %v755 = vpop.permute.xlu0 %754
    %756 = vrot.lane.b32.xlu0 %v344, 96
    %v757 = vpop.permute.xlu0 %756
    %758 = vrot.lane.b32.xlu0 %v349, 96
    %v759 = vpop.permute.xlu0 %758
    %774 = vrot.lane.b32.xlu0 %v448, 64
    %v775 = vpop.permute.xlu0 %774
    %776 = vrot.lane.b32.xlu0 %v453, 64
    %v777 = vpop.permute.xlu0 %776
    %778 = vrot.lane.b32.xlu0 %v458, 64
    %v779 = vpop.permute.xlu0 %778
    %780 = vrot.lane.b32.xlu0 %v463, 64
    %v781 = vpop.permute.xlu0 %780
    %782 = vrot.lane.b32.xlu0 %v468, 64
    %v783 = vpop.permute.xlu0 %782
    %784 = vrot.lane.b32.xlu0 %v473, 64
    %v785 = vpop.permute.xlu0 %784
    %786 = vrot.lane.b32.xlu0 %v478, 64
    %v787 = vpop.permute.xlu0 %786
    %802 = vrot.lane.b32.xlu0 %v577, 32
    %v803 = vpop.permute.xlu0 %802
    %804 = vrot.lane.b32.xlu0 %v582, 32
    %v805 = vpop.permute.xlu0 %804
    %806 = vrot.lane.b32.xlu0 %v587, 32
    %v807 = vpop.permute.xlu0 %806
    %808 = vrot.lane.b32.xlu0 %v592, 32
    %v809 = vpop.permute.xlu0 %808
    %810 = vrot.lane.b32.xlu0 %v597, 32
    %v811 = vpop.permute.xlu0 %810
    %812 = vrot.lane.b32.xlu0 %v602, 32
    %v813 = vpop.permute.xlu0 %812
    %814 = vrot.lane.b32.xlu0 %v607, 32
    %v815 = vpop.permute.xlu0 %814
    %vm823 = vcmask 785408
    %v824 = vsel %vm823, %v190, %v747
    %v825 = vsel %vm823, %v195, %v749
    %v826 = vsel %vm823, %v200, %v751
    %v827 = vsel %vm823, %v205, %v753
    %v828 = vsel %vm823, %v210, %v755
    %v829 = vsel %vm823, %v215, %v757
    %v830 = vsel %vm823, %v220, %v759
    %v831 = vsel %vm101, %v747, %v775
    %v832 = vsel %vm101, %v749, %v777
    %v833 = vsel %vm101, %v751, %v779
    %v834 = vsel %vm101, %v753, %v781
    %v835 = vsel %vm101, %v755, %v783
    %v836 = vsel %vm101, %v757, %v785
    %v837 = vsel %vm101, %v759, %v787
    %vm838 = vcmask 261120
    %v839 = vsel %vm838, %v775, %v803
    %v840 = vsel %vm838, %v777, %v805
    %v841 = vsel %vm838, %v779, %v807
    %v842 = vsel %vm838, %v781, %v809
    %v843 = vsel %vm838, %v783, %v811
    %v844 = vsel %vm838, %v785, %v813
    %v845 = vsel %vm838, %v787, %v815
    %v846 = vld [vmem:[%s2] sm:$0xff]
    %v847 = vld [vmem:[%s2 + $0x8] sm:$0xff]
    %v848 = vld [vmem:[%s2 + $0x10] sm:$0xff]
    %v849 = vld [vmem:[%s2 + $0x18] sm:$0xff]
    %v850 = vld [vmem:[%s2 + $0x20] sm:$0xff]
    %v851 = vld [vmem:[%s2 + $0x28] sm:$0xff]
    %v852 = vld [vmem:[%s2 + $0x30] sm:$0xff]
    %v853 = vld [vmem:[%s2 + $0x38] sm:$0xff]
    %v854 = vld [vmem:[%s2 + $0x40] sm:$0xff]
    %v855 = vld [vmem:[%s2 + $0x48] sm:$0xff]
    %v856 = vld [vmem:[%s2 + $0x50] sm:$0xff]
    %v857 = vld [vmem:[%s2 + $0x58] sm:$0xff]
    %v858 = vld [vmem:[%s2 + $0x60] sm:$0xff]
    %v859 = vld [vmem:[%s2 + $0x68] sm:$0xff]
    %v860 = vld [vmem:[%s2 + $0x70] sm:$0xff]
    %v861 = vld [vmem:[%s2 + $0x78] sm:$0xff]
    %v862 = vld [vmem:[%s2 + $0x80] sm:$0xff]
    %v863 = vld [vmem:[%s2 + $0x88] sm:$0xff]
    %v864 = vld [vmem:[%s2 + $0x90] sm:$0xff]
    %v865 = vld [vmem:[%s2 + $0x98] sm:$0xff]
    %v866 = vld [vmem:[%s2 + $0xa0] sm:$0xff]
    %v867 = vld [vmem:[%s2 + $0xa8] sm:$0xff]
    %v868 = vld [vmem:[%s2 + $0xb0] sm:$0xff]
    %v869 = vld [vmem:[%s2 + $0xb8] sm:$0xff]
    %v870 = vld [vmem:[%s2 + $0xc0] sm:$0xff]
    %v871 = vld [vmem:[%s2 + $0xc8] sm:$0xff]
    %v872 = vld [vmem:[%s2 + $0xd0] sm:$0xff]
    %v873 = vld [vmem:[%s2 + $0xd8] sm:$0xff]
    %v874 = vld [vmem:[%s2 + $0xe0] sm:$0xff]
    %v875 = vld [vmem:[%s2 + $0xe8] sm:$0xff]
    %v876 = vld [vmem:[%s2 + $0xf0] sm:$0xff]
    %v877 = vld [vmem:[%s2 + $0xf8] sm:$0xff]
    %v878 = vld [vmem:[%s2 + $0x100] sm:$0xff]
    %v879 = vld [vmem:[%s2 + $0x108] sm:$0xff]
    %v880 = vld [vmem:[%s2 + $0x110] sm:$0xff]
    %v881 = vld [vmem:[%s2 + $0x118] sm:$0xff]
    %v882 = vld [vmem:[%s2 + $0x120] sm:$0xff]
    %v883 = vld [vmem:[%s2 + $0x128] sm:$0xff]
    %v884 = vld [vmem:[%s2 + $0x130] sm:$0xff]
    %v885 = vld [vmem:[%s2 + $0x138] sm:$0xff]
    %v886 = vld [vmem:[%s2 + $0x140] sm:$0xff]
    %v887 = vld [vmem:[%s2 + $0x148] sm:$0xff]
    %v888 = vld [vmem:[%s2 + $0x150] sm:$0xff]
    %v889 = vld [vmem:[%s2 + $0x158] sm:$0xff]
    %v890 = vld [vmem:[%s2 + $0x160] sm:$0xff]
    %v891 = vld [vmem:[%s2 + $0x168] sm:$0xff]
    %v892 = vld [vmem:[%s2 + $0x170] sm:$0xff]
    %v893 = vld [vmem:[%s2 + $0x178] sm:$0xff]
    %v894 = vld [vmem:[%s2 + $0x180] sm:$0xff]
    %v895 = vld [vmem:[%s2 + $0x188] sm:$0xff]
    %v896 = vld [vmem:[%s2 + $0x190] sm:$0xff]
    %v897 = vld [vmem:[%s2 + $0x198] sm:$0xff]
    %v898 = vld [vmem:[%s2 + $0x1a0] sm:$0xff]
    %v899 = vld [vmem:[%s2 + $0x1a8] sm:$0xff]
    %v900 = vld [vmem:[%s2 + $0x1b0] sm:$0xff]
    %v901 = vld [vmem:[%s2 + $0x1b8] sm:$0xff]
    %v902 = vld [vmem:[%s2 + $0x1c0] sm:$0xff]
    %v903 = vld [vmem:[%s2 + $0x1c8] sm:$0xff]
    %v904 = vld [vmem:[%s2 + $0x1d0] sm:$0xff]
    %v905 = vld [vmem:[%s2 + $0x1d8] sm:$0xff]
    %v906 = vld [vmem:[%s2 + $0x1e0] sm:$0xff]
    %v907 = vld [vmem:[%s2 + $0x1e8] sm:$0xff]
    %v908 = vld [vmem:[%s2 + $0x1f0] sm:$0xff]
    %v909 = vld [vmem:[%s2 + $0x1f8] sm:$0xff]
    %v910 = vld [vmem:[%s2 + $0x200] sm:$0xff]
    %v911 = vld [vmem:[%s2 + $0x208] sm:$0xff]
    %v912 = vld [vmem:[%s2 + $0x210] sm:$0xff]
    %v913 = vld [vmem:[%s2 + $0x218] sm:$0xff]
    %v914 = vld [vmem:[%s2 + $0x220] sm:$0xff]
    %v915 = vld [vmem:[%s2 + $0x228] sm:$0xff]
    %v916 = vld [vmem:[%s2 + $0x230] sm:$0xff]
    %v917 = vld [vmem:[%s2 + $0x238] sm:$0xff]
    %v918 = vld [vmem:[%s2 + $0x240] sm:$0xff]
    %v919 = vld [vmem:[%s2 + $0x248] sm:$0xff]
    %v920 = vld [vmem:[%s2 + $0x250] sm:$0xff]
    %v921 = vld [vmem:[%s2 + $0x258] sm:$0xff]
    %v922 = vld [vmem:[%s2 + $0x260] sm:$0xff]
    %v923 = vld [vmem:[%s2 + $0x268] sm:$0xff]
    %v924 = vld [vmem:[%s2 + $0x270] sm:$0xff]
    %v925 = vld [vmem:[%s2 + $0x278] sm:$0xff]
    %v926 = vld [vmem:[%s2 + $0x280] sm:$0xff]
    %v927 = vld [vmem:[%s2 + $0x288] sm:$0xff]
    %v928 = vld [vmem:[%s2 + $0x290] sm:$0xff]
    %v929 = vld [vmem:[%s2 + $0x298] sm:$0xff]
    %v930 = vld [vmem:[%s2 + $0x2a0] sm:$0xff]
    %v931 = vld [vmem:[%s2 + $0x2a8] sm:$0xff]
    %v932 = vld [vmem:[%s2 + $0x2b0] sm:$0xff]
    %v933 = vld [vmem:[%s2 + $0x2b8] sm:$0xff]
    %v934 = vld [vmem:[%s2 + $0x2c0] sm:$0xff]
    %v935 = vld [vmem:[%s2 + $0x2c8] sm:$0xff]
    %v936 = vld [vmem:[%s2 + $0x2d0] sm:$0xff]
    %v937 = vld [vmem:[%s2 + $0x2d8] sm:$0xff]
    %v938 = vld [vmem:[%s2 + $0x2e0] sm:$0xff]
    %v939 = vld [vmem:[%s2 + $0x2e8] sm:$0xff]
    %v940 = vld [vmem:[%s2 + $0x2f0] sm:$0xff]
    %v941 = vld [vmem:[%s2 + $0x2f8] sm:$0xff]
    %v942 = vld [vmem:[%s2 + $0x300] sm:$0xff]
    %v943 = vld [vmem:[%s2 + $0x308] sm:$0xff]
    %v944 = vld [vmem:[%s2 + $0x310] sm:$0xff]
    %v945 = vld [vmem:[%s2 + $0x318] sm:$0xff]
    %v946 = vld [vmem:[%s2 + $0x320] sm:$0xff]
    %v947 = vld [vmem:[%s2 + $0x328] sm:$0xff]
    %v948 = vld [vmem:[%s2 + $0x330] sm:$0xff]
    %v949 = vld [vmem:[%s2 + $0x338] sm:$0xff]
    %v950 = vld [vmem:[%s2 + $0x340] sm:$0xff]
    %v951 = vld [vmem:[%s2 + $0x348] sm:$0xff]
    %v952 = vld [vmem:[%s2 + $0x350] sm:$0xff]
    %v953 = vld [vmem:[%s2 + $0x358] sm:$0xff]
    %v954 = vld [vmem:[%s2 + $0x360] sm:$0xff]
    %v955 = vld [vmem:[%s2 + $0x368] sm:$0xff]
    %v956 = vld [vmem:[%s2 + $0x370] sm:$0xff]
    %v957 = vld [vmem:[%s2 + $0x378] sm:$0xff]
    %v958 = vld [vmem:[%s2 + $0x380] sm:$0xff]
    %v959 = vld [vmem:[%s2 + $0x388] sm:$0xff]
    %v960 = vld [vmem:[%s2 + $0x390] sm:$0xff]
    %v961 = vld [vmem:[%s2 + $0x398] sm:$0xff]
    %v962 = vld [vmem:[%s2 + $0x3a0] sm:$0xff]
    %v963 = vld [vmem:[%s2 + $0x3a8] sm:$0xff]
    %v964 = vld [vmem:[%s2 + $0x3b0] sm:$0xff]
    %v965 = vld [vmem:[%s2 + $0x3b8] sm:$0xff]
    %v966 = vld [vmem:[%s3] sm:$0x3]
    %v968 = vlaneseq
    %v969 = vshrl.u32 %v968, 7
    %v970 = vsub.s32 0, %v969
    %v971 = vrot.slane %v966, %v970
    %v972 = vlaneseq
    %v973 = vshrl.u32 %v972, 7
    %v974 = vsub.s32 1, %v973
    %v975 = vrot.slane %v966, %v974
    %v979 = vsel %vm823, %v706, 0
    %v982 = vsel %vm823, %v711, 0
    %v985 = vsel %vm823, %v716, 0
    %v988 = vsel %vm823, %v721, 0
    %v991 = vsel %vm823, %v726, 0
    %v994 = vsel %vm823, %v731, 0
    %v997 = vsel %vm823, %v736, 0
    %999 = vmatprep.subr.mxu0 %v847
    %1000 = vmatpush1.msra.mxu0 %v846
    %1001 = vmatprep.subr.mxu0 %v849
    %1002 = vmatpush1.msra.mxu0 %v848
    %1003 = vmatprep.subr.mxu0 %v851
    %1004 = vmatpush1.msra.mxu0 %v850
    %1005 = vmatprep.subr.mxu0 %v853
    %1006 = vmatpush1.msra.mxu0 %v852
    %1007 = vmatprep.subr.mxu0 %v855
    %1008 = vmatpush1.msra.mxu0 %v854
    %1009 = vmatprep.subr.mxu0 %v857
    %1010 = vmatpush1.msra.mxu0 %v856
    %1011 = vmatprep.subr.mxu0 %v859
    %1012 = vmatpush1.msra.mxu0 %v858
    %1013 = vmatprep.subr.mxu0 %v861
    %1014 = vmatpush1.msra.mxu0 %v860
    %1015 = vmatprep.subr.mxu0 %v863
    %1016 = vmatpush1.msra.mxu0 %v862
    %1017 = vmatprep.subr.mxu0 %v865
    %1018 = vmatpush1.msra.mxu0 %v864
    %1019 = vmatprep.subr.mxu0 %v867
    %1020 = vmatpush1.msra.mxu0 %v866
    %1021 = vmatprep.subr.mxu0 %v869
    %1022 = vmatpush1.msra.mxu0 %v868
    %1023 = vmatprep.subr.mxu0 %v871
    %1024 = vmatpush1.msra.mxu0 %v870
    %1025 = vmatprep.subr.mxu0 %v873
    %1026 = vmatpush1.msra.mxu0 %v872
    %1027 = vmatprep.subr.mxu0 %v875
    %1028 = vmatpush1.msra.mxu0 %v874
    %1029 = vmatprep.subr.mxu0 %v877
    %1030 = vmatpush1.msra.mxu0 %v876
    %1031 = vmatprep.subr.mxu0 %v879
    %1032 = vmatpush1.msra.mxu0 %v878
    %1033 = vmatprep.subr.mxu0 %v881
    %1034 = vmatpush1.msra.mxu0 %v880
    %1035 = vmatprep.subr.mxu0 %v883
    %1036 = vmatpush1.msra.mxu0 %v882
    %1037 = vmatprep.subr.mxu0 %v885
    %1038 = vmatpush1.msra.mxu0 %v884
    %1039 = vmatprep.subr.mxu0 %v887
    %1040 = vmatpush1.msra.mxu0 %v886
    %1041 = vmatprep.subr.mxu0 %v889
    %1042 = vmatpush1.msra.mxu0 %v888
    %1043 = vmatprep.subr.mxu0 %v891
    %1044 = vmatpush1.msra.mxu0 %v890
    %1045 = vmatprep.subr.mxu0 %v893
    %1046 = vmatpush1.msra.mxu0 %v892
    %1047 = vmatprep.subr.mxu0 %v895
    %1048 = vmatpush1.msra.mxu0 %v894
    %1049 = vmatprep.subr.mxu0 %v897
    %1050 = vmatpush1.msra.mxu0 %v896
    %1051 = vmatprep.subr.mxu0 %v899
    %1052 = vmatpush1.msra.mxu0 %v898
    %1053 = vmatprep.subr.mxu0 %v901
    %1054 = vmatpush1.msra.mxu0 %v900
    %1055 = vmatprep.subr.mxu0 %v903
    %1056 = vmatpush1.msra.mxu0 %v902
    %1057 = vmatprep.subr.mxu0 %v905
    %1058 = vmatpush1.msra.mxu0 %v904
    %1059 = vmatprep.subr.mxu0 %v907
    %1060 = vmatpush1.msra.mxu0 %v906
    %1061 = vmatprep.subr.mxu0 %v909
    %1062 = vmatpush1.msra.mxu0 %v908
    %1063 = vmatprep.mubr.f32.mxu0 %v831
    %1064 = vmatmul.mubr.f32.gmra.mrb[0].mxu0 %v824
    %v1065 = vpop.f32.mrb[0].mxu0
    %v1066 = vadd.f32 %v971, %v1065
    %v1067 = vpop.f32.mrb[0].mxu0
    %v1068 = vadd.f32 %v975, %v1067
    %1069 = vmatprep.mubr.f32.mxu0 %v832
    %1070 = vmatmul.mubr.f32.gmra.mrb[0].mxu0 %v825
    %v1071 = vpop.f32.mrb[0].mxu0
    %v1072 = vadd.f32 %v971, %v1071
    %v1073 = vpop.f32.mrb[0].mxu0
    %v1074 = vadd.f32 %v975, %v1073
    %1075 = vmatprep.mubr.f32.mxu0 %v833
    %1076 = vmatmul.mubr.f32.gmra.mrb[0].mxu0 %v826
    %v1077 = vpop.f32.mrb[0].mxu0
    %v1078 = vadd.f32 %v971, %v1077
    %v1079 = vpop.f32.mrb[0].mxu0
    %v1080 = vadd.f32 %v975, %v1079
    %1081 = vmatprep.mubr.f32.mxu0 %v834
    %1082 = vmatmul.mubr.f32.gmra.mrb[0].mxu0 %v827
    %v1083 = vpop.f32.mrb[0].mxu0
    %v1084 = vadd.f32 %v971, %v1083
    %v1085 = vpop.f32.mrb[0].mxu0
    %v1086 = vadd.f32 %v975, %v1085
    %1087 = vmatprep.mubr.f32.mxu0 %v835
    %1088 = vmatmul.mubr.f32.gmra.mrb[0].mxu0 %v828
    %v1089 = vpop.f32.mrb[0].mxu0
    %v1090 = vadd.f32 %v971, %v1089
    %v1091 = vpop.f32.mrb[0].mxu0
    %v1092 = vadd.f32 %v975, %v1091
    %1093 = vmatprep.mubr.f32.mxu0 %v836
    %1094 = vmatmul.mubr.f32.gmra.mrb[0].mxu0 %v829
    %v1095 = vpop.f32.mrb[0].mxu0
    %v1096 = vadd.f32 %v971, %v1095
    %v1097 = vpop.f32.mrb[0].mxu0
    %v1098 = vadd.f32 %v975, %v1097
    %1099 = vmatprep.mubr.f32.mxu0 %v837
    %1100 = vmatmul.mubr.f32.gmra.mrb[0].mxu0 %v830
    %v1101 = vpop.f32.mrb[0].mxu0
    %v1102 = vadd.f32 %v971, %v1101
    %v1103 = vpop.f32.mrb[0].mxu0
    %v1104 = vadd.f32 %v975, %v1103
    %1105 = vdwg.mxu0
    %1106 = vmatprep.subr.mxu0 %v911
    %1107 = vmatpush1.msra.mxu0 %v910
    %1108 = vmatprep.subr.mxu0 %v913
    %1109 = vmatpush1.msra.mxu0 %v912
    %1110 = vmatprep.subr.mxu0 %v915
    %1111 = vmatpush1.msra.mxu0 %v914
    %1112 = vmatprep.subr.mxu0 %v917
    %1113 = vmatpush1.msra.mxu0 %v916
    %1114 = vmatprep.subr.mxu0 %v919
    %1115 = vmatpush1.msra.mxu0 %v918
    %1116 = vmatprep.subr.mxu0 %v921
    %1117 = vmatpush1.msra.mxu0 %v920
    %1118 = vmatprep.subr.mxu0 %v923
    %1119 = vmatpush1.msra.mxu0 %v922
    %1120 = vmatprep.subr.mxu0 %v925
    %1121 = vmatpush1.msra.mxu0 %v924
    %1122 = vmatprep.subr.mxu0 %v927
    %1123 = vmatpush1.msra.mxu0 %v926
    %1124 = vmatprep.subr.mxu0 %v929
    %1125 = vmatpush1.msra.mxu0 %v928
    %1126 = vmatprep.subr.mxu0 %v931
    %1127 = vmatpush1.msra.mxu0 %v930
    %1128 = vmatprep.subr.mxu0 %v933
    %1129 = vmatpush1.msra.mxu0 %v932
    %1130 = vmatprep.subr.mxu0 %v935
    %1131 = vmatpush1.msra.mxu0 %v934
    %1132 = vmatprep.subr.mxu0 %v937
    %1133 = vmatpush1.msra.mxu0 %v936
    %1134 = vmatprep.subr.mxu0 %v939
    %1135 = vmatpush1.msra.mxu0 %v938
    %1136 = vmatprep.subr.mxu0 %v941
    %1137 = vmatpush1.msra.mxu0 %v940
    %1138 = vmatprep.subr.mxu0 %v943
    %1139 = vmatpush1.msra.mxu0 %v942
    %1140 = vmatprep.subr.mxu0 %v945
    %1141 = vmatpush1.msra.mxu0 %v944
    %1142 = vmatprep.subr.mxu0 %v947
    %1143 = vmatpush1.msra.mxu0 %v946
    %1144 = vmatprep.subr.mxu0 %v949
    %1145 = vmatpush1.msra.mxu0 %v948
    %1146 = vmatprep.subr.mxu0 %v951
    %1147 = vmatpush1.msra.mxu0 %v950
    %1148 = vmatprep.subr.mxu0 %v953
    %1149 = vmatpush1.msra.mxu0 %v952
    %1150 = vmatprep.subr.mxu0 %v955
    %1151 = vmatpush1.msra.mxu0 %v954
    %1152 = vmatprep.subr.mxu0 %v957
    %1153 = vmatpush1.msra.mxu0 %v956
    %1154 = vmatprep.subr.mxu0 %v959
    %1155 = vmatpush1.msra.mxu0 %v958
    %1156 = vmatprep.subr.mxu0 %v961
    %1157 = vmatpush1.msra.mxu0 %v960
    %1158 = vmatprep.subr.mxu0 %v963
    %1159 = vmatpush1.msra.mxu0 %v962
    %1160 = vmatprep.subr.mxu0 %v965
    %1161 = vmatpush1.msra.mxu0 %v964
    %1162 = vmatprep.subr.mxu0 0.0
    %1163 = vmatpush1.msra.mxu0 0.0
    %1164 = vmatprep.subr.mxu0 0.0
    %1165 = vmatpush1.msra.mxu0 0.0
    %1166 = vmatprep.subr.mxu0 0.0
    %1167 = vmatpush1.msra.mxu0 0.0
    %1168 = vmatprep.subr.mxu0 0.0
    %1169 = vmatpush1.msra.mxu0 0.0
    %1170 = vmatprep.mubr.f32.mxu0 %v979
    %1171 = vmatmul.mubr.f32.gmra.mrb[0].mxu0 %v839
    %v1172 = vpop.f32.mrb[0].mxu0
    %v1173 = vadd.f32 %v1066, %v1172
    %v1174 = vpop.f32.mrb[0].mxu0
    %v1175 = vadd.f32 %v1068, %v1174
    %1176 = vmatprep.mubr.f32.mxu0 %v982
    %1177 = vmatmul.mubr.f32.gmra.mrb[0].mxu0 %v840
    %v1178 = vpop.f32.mrb[0].mxu0
    %v1179 = vadd.f32 %v1072, %v1178
    %v1180 = vpop.f32.mrb[0].mxu0
    %v1181 = vadd.f32 %v1074, %v1180
    %1182 = vmatprep.mubr.f32.mxu0 %v985
    %1183 = vmatmul.mubr.f32.gmra.mrb[0].mxu0 %v841
    %v1184 = vpop.f32.mrb[0].mxu0
    %v1185 = vadd.f32 %v1078, %v1184
    %v1186 = vpop.f32.mrb[0].mxu0
    %v1187 = vadd.f32 %v1080, %v1186
    %1188 = vmatprep.mubr.f32.mxu0 %v988
    %1189 = vmatmul.mubr.f32.gmra.mrb[0].mxu0 %v842
    %v1190 = vpop.f32.mrb[0].mxu0
    %v1191 = vadd.f32 %v1084, %v1190
    %v1192 = vpop.f32.mrb[0].mxu0
    %v1193 = vadd.f32 %v1086, %v1192
    %1194 = vmatprep.mubr.f32.mxu0 %v991
    %1195 = vmatmul.mubr.f32.gmra.mrb[0].mxu0 %v843
    %v1196 = vpop.f32.mrb[0].mxu0
    %v1197 = vadd.f32 %v1090, %v1196
    %v1198 = vpop.f32.mrb[0].mxu0
    %v1199 = vadd.f32 %v1092, %v1198
    %1200 = vmatprep.mubr.f32.mxu0 %v994
    %1201 = vmatmul.mubr.f32.gmra.mrb[0].mxu0 %v844
    %v1202 = vpop.f32.mrb[0].mxu0
    %v1203 = vadd.f32 %v1096, %v1202
    %v1204 = vpop.f32.mrb[0].mxu0
    %v1205 = vadd.f32 %v1098, %v1204
    %1206 = vmatprep.mubr.f32.mxu0 %v997
    %1207 = vmatmul.mubr.f32.gmra.mrb[0].mxu0 %v845
    %v1208 = vpop.f32.mrb[0].mxu0
    %v1209 = vadd.f32 %v1102, %v1208
    %v1210 = vpop.f32.mrb[0].mxu0
    %v1211 = vadd.f32 %v1104, %v1210
    %1212 = vdwg.mxu0
    %v1213 = vmax.f32 %v1173, 0.0
    %v1214 = vmax.f32 %v1175, 0.0
    %v1215 = vmax.f32 %v1179, 0.0
    %v1216 = vmax.f32 %v1181, 0.0
    %v1217 = vmax.f32 %v1185, 0.0
    %v1218 = vmax.f32 %v1187, 0.0
    %v1219 = vmax.f32 %v1191, 0.0
    %v1220 = vmax.f32 %v1193, 0.0
    %v1221 = vmax.f32 %v1197, 0.0
    %v1222 = vmax.f32 %v1199, 0.0
    %v1223 = vmax.f32 %v1203, 0.0
    %v1224 = vmax.f32 %v1205, 0.0
    %v1225 = vmax.f32 %v1209, 0.0
    %v1226 = vmax.f32 %v1211, 0.0
    %v1227 = vld [vmem:[%s4] sm:$0xff]
    %v1228 = vld [vmem:[%s4 + $0x8] sm:$0xff]
    %v1229 = vld [vmem:[%s4 + $0x10] sm:$0xff]
    %v1230 = vld [vmem:[%s4 + $0x18] sm:$0xf]
    %vm1231 = vcmask 457728
    %v1233 = vsel %vm1231, %v1227, 0
    %v1236 = vsel %vm1231, %v1228, 0
    %v1239 = vsel %vm1231, %v1229, 0
    %v1242 = vsel %vm1231, %v1230, 0
    %1244 = vmatprep.subr.mxu0 0.0
    %1245 = vmatpush1.msra.mxu0 %v1213
    %1246 = vmatprep.subr.mxu0 0.0
    %1247 = vmatpush1.msra.mxu0 %v1215
    %1248 = vmatprep.subr.mxu0 0.0
    %1249 = vmatpush1.msra.mxu0 %v1217
    %1250 = vmatprep.subr.mxu0 0.0
    %1251 = vmatpush1.msra.mxu0 %v1219
    %1252 = vmatprep.subr.mxu0 0.0
    %1253 = vmatpush1.msra.mxu0 %v1221
    %1254 = vmatprep.subr.mxu0 0.0
    %1255 = vmatpush1.msra.mxu0 %v1223
    %1256 = vmatprep.subr.mxu0 0.0
    %1257 = vmatpush1.msra.mxu0 %v1225
    %1258 = vmatprep.subr.mxu0 0.0
    %1259 = vmatpush1.msra.mxu0 0.0
    %1260 = vmatprep.subr.mxu0 0.0
    %1261 = vmatpush1.msra.mxu0 0.0
    %1262 = vmatprep.subr.mxu0 0.0
    %1263 = vmatpush1.msra.mxu0 0.0
    %1264 = vmatprep.subr.mxu0 0.0
    %1265 = vmatpush1.msra.mxu0 0.0
    %1266 = vmatprep.subr.mxu0 0.0
    %1267 = vmatpush1.msra.mxu0 0.0
    %1268 = vmatprep.subr.mxu0 0.0
    %1269 = vmatpush1.msra.mxu0 0.0
    %1270 = vmatprep.subr.mxu0 0.0
    %1271 = vmatpush1.msra.mxu0 0.0
    %1272 = vmatprep.subr.mxu0 0.0
    %1273 = vmatpush1.msra.mxu0 0.0
    %1274 = vmatprep.subr.mxu0 0.0
    %1275 = vmatpush1.msra.mxu0 0.0
    %1276 = vmatprep.subr.mxu0 0.0
    %1277 = vmatpush1.msra.mxu0 0.0
    %1278 = vmatprep.subr.mxu0 0.0
    %1279 = vmatpush1.msra.mxu0 0.0
    %1280 = vmatprep.subr.mxu0 0.0
    %1281 = vmatpush1.msra.mxu0 0.0
    %1282 = vmatprep.subr.mxu0 0.0
    %1283 = vmatpush1.msra.mxu0 0.0
    %1284 = vmatprep.subr.mxu0 0.0
    %1285 = vmatpush1.msra.mxu0 0.0
    %1286 = vmatprep.subr.mxu0 0.0
    %1287 = vmatpush1.msra.mxu0 0.0
    %1288 = vmatprep.subr.mxu0 0.0
    %1289 = vmatpush1.msra.mxu0 0.0
    %1290 = vmatprep.subr.mxu0 0.0
    %1291 = vmatpush1.msra.mxu0 0.0
    %1292 = vmatprep.subr.mxu0 0.0
    %1293 = vmatpush1.msra.mxu0 0.0
    %1294 = vmatprep.subr.mxu0 0.0
    %1295 = vmatpush1.msra.mxu0 0.0
    %1296 = vmatprep.subr.mxu0 0.0
    %1297 = vmatpush1.msra.mxu0 0.0
    %1298 = vmatprep.subr.mxu0 0.0
    %1299 = vmatpush1.msra.mxu0 0.0
    %1300 = vmatprep.subr.mxu0 0.0
    %1301 = vmatpush1.msra.mxu0 0.0
    %1302 = vmatprep.subr.mxu0 0.0
    %1303 = vmatpush1.msra.mxu0 0.0
    %1304 = vmatprep.subr.mxu0 0.0
    %1305 = vmatpush1.msra.mxu0 0.0
    %1306 = vmatprep.subr.mxu0 0.0
    %1307 = vmatpush1.msra.mxu0 0.0
    %1308 = vmatprep.mubr.f32.mxu0 0.0
    %1309 = vmatmul.mubr.f32.gmra.mrb[0].mxu0 %v1233
    %v1310 = vpop.f32.mrb[0].mxu0
    %v1311 = vadd.f32 0.0, %v1310
    %v1312 = vpop.f32.mrb[0].mxu0
    %1313 = vmatprep.mubr.f32.mxu0 0.0
    %1314 = vmatmul.mubr.f32.gmra.mrb[0].mxu0 %v1236
    %v1315 = vpop.f32.mrb[0].mxu0
    %v1316 = vadd.f32 0.0, %v1315
    %v1317 = vpop.f32.mrb[0].mxu0
    %1318 = vmatprep.mubr.f32.mxu0 0.0
    %1319 = vmatmul.mubr.f32.gmra.mrb[0].mxu0 %v1239
    %v1320 = vpop.f32.mrb[0].mxu0
    %v1321 = vadd.f32 0.0, %v1320
    %v1322 = vpop.f32.mrb[0].mxu0
    %1323 = vmatprep.mubr.f32.mxu0 0.0
    %1324 = vmatmul.mubr.f32.gmra.mrb[0].mxu0 %v1242
    %v1325 = vpop.f32.mrb[0].mxu0
    %v1326 = vadd.f32 0.0, %v1325
    %v1327 = vpop.f32.mrb[0].mxu0
    %1328 = vdwg.mxu0
    %1343 = vrot.lane.b32.xlu0 %v1213, 44
    %v1344 = vpop.permute.xlu0 %1343
    %1345 = vrot.lane.b32.xlu0 %v1214, 44
    %v1346 = vpop.permute.xlu0 %1345
    %1347 = vrot.lane.b32.xlu0 %v1215, 44
    %v1348 = vpop.permute.xlu0 %1347
    %1349 = vrot.lane.b32.xlu0 %v1216, 44
    %v1350 = vpop.permute.xlu0 %1349
    %1351 = vrot.lane.b32.xlu0 %v1217, 44
    %v1352 = vpop.permute.xlu0 %1351
    %1353 = vrot.lane.b32.xlu0 %v1218, 44
    %v1354 = vpop.permute.xlu0 %1353
    %1355 = vrot.lane.b32.xlu0 %v1219, 44
    %v1356 = vpop.permute.xlu0 %1355
    %1357 = vrot.lane.b32.xlu0 %v1220, 44
    %v1358 = vpop.permute.xlu0 %1357
    %1359 = vrot.lane.b32.xlu0 %v1221, 44
    %v1360 = vpop.permute.xlu0 %1359
    %1361 = vrot.lane.b32.xlu0 %v1222, 44
    %v1362 = vpop.permute.xlu0 %1361
    %1363 = vrot.lane.b32.xlu0 %v1223, 44
    %v1364 = vpop.permute.xlu0 %1363
    %1365 = vrot.lane.b32.xlu0 %v1224, 44
    %v1366 = vpop.permute.xlu0 %1365
    %1367 = vrot.lane.b32.xlu0 %v1225, 44
    %v1368 = vpop.permute.xlu0 %1367
    %1369 = vrot.lane.b32.xlu0 %v1226, 44
    %v1370 = vpop.permute.xlu0 %1369
    %vm1371 = vcmask 359424
    %v1372 = vsel %vm1371, %v1344, %v1346
    %v1373 = vsel %vm1371, %v1348, %v1350
    %v1374 = vsel %vm1371, %v1352, %v1354
    %v1375 = vsel %vm1371, %v1356, %v1358
    %v1376 = vsel %vm1371, %v1360, %v1362
    %v1377 = vsel %vm1371, %v1364, %v1366
    %v1378 = vsel %vm1371, %v1368, %v1370
    %1386 = vmatprep.subr.mxu0 0.0
    %1387 = vmatpush1.msra.mxu0 %v1372
    %1388 = vmatprep.subr.mxu0 0.0
    %1389 = vmatpush1.msra.mxu0 %v1373
    %1390 = vmatprep.subr.mxu0 0.0
    %1391 = vmatpush1.msra.mxu0 %v1374
    %1392 = vmatprep.subr.mxu0 0.0
    %1393 = vmatpush1.msra.mxu0 %v1375
    %1394 = vmatprep.subr.mxu0 0.0
    %1395 = vmatpush1.msra.mxu0 %v1376
    %1396 = vmatprep.subr.mxu0 0.0
    %1397 = vmatpush1.msra.mxu0 %v1377
    %1398 = vmatprep.subr.mxu0 0.0
    %1399 = vmatpush1.msra.mxu0 %v1378
    %1400 = vmatprep.subr.mxu0 0.0
    %1401 = vmatpush1.msra.mxu0 0.0
    %1402 = vmatprep.subr.mxu0 0.0
    %1403 = vmatpush1.msra.mxu0 0.0
    %1404 = vmatprep.subr.mxu0 0.0
    %1405 = vmatpush1.msra.mxu0 0.0
    %1406 = vmatprep.subr.mxu0 0.0
    %1407 = vmatpush1.msra.mxu0 0.0
    %1408 = vmatprep.subr.mxu0 0.0
    %1409 = vmatpush1.msra.mxu0 0.0
    %1410 = vmatprep.subr.mxu0 0.0
    %1411 = vmatpush1.msra.mxu0 0.0
    %1412 = vmatprep.subr.mxu0 0.0
    %1413 = vmatpush1.msra.mxu0 0.0
    %1414 = vmatprep.subr.mxu0 0.0
    %1415 = vmatpush1.msra.mxu0 0.0
    %1416 = vmatprep.subr.mxu0 0.0
    %1417 = vmatpush1.msra.mxu0 0.0
    %1418 = vmatprep.subr.mxu0 0.0
    %1419 = vmatpush1.msra.mxu0 0.0
    %1420 = vmatprep.subr.mxu0 0.0
    %1421 = vmatpush1.msra.mxu0 0.0
    %1422 = vmatprep.subr.mxu0 0.0
    %1423 = vmatpush1.msra.mxu0 0.0
    %1424 = vmatprep.subr.mxu0 0.0
    %1425 = vmatpush1.msra.mxu0 0.0
    %1426 = vmatprep.subr.mxu0 0.0
    %1427 = vmatpush1.msra.mxu0 0.0
    %1428 = vmatprep.subr.mxu0 0.0
    %1429 = vmatpush1.msra.mxu0 0.0
    %1430 = vmatprep.subr.mxu0 0.0
    %1431 = vmatpush1.msra.mxu0 0.0
    %1432 = vmatprep.subr.mxu0 0.0
    %1433 = vmatpush1.msra.mxu0 0.0
    %1434 = vmatprep.subr.mxu0 0.0
    %1435 = vmatpush1.msra.mxu0 0.0
    %1436 = vmatprep.subr.mxu0 0.0
    %1437 = vmatpush1.msra.mxu0 0.0
    %1438 = vmatprep.subr.mxu0 0.0
    %1439 = vmatpush1.msra.mxu0 0.0
    %1440 = vmatprep.subr.mxu0 0.0
    %1441 = vmatpush1.msra.mxu0 0.0
    %1442 = vmatprep.subr.mxu0 0.0
    %1443 = vmatpush1.msra.mxu0 0.0
    %1444 = vmatprep.subr.mxu0 0.0
    %1445 = vmatpush1.msra.mxu0 0.0
    %1446 = vmatprep.subr.mxu0 0.0
    %1447 = vmatpush1.msra.mxu0 0.0
    %1448 = vmatprep.subr.mxu0 0.0
    %1449 = vmatpush1.msra.mxu0 0.0
    %1450 = vmatprep.mubr.f32.mxu0 0.0
    %1451 = vmatmul.mubr.f32.gmra.mrb[0].mxu0 %v1233
    %v1452 = vpop.f32.mrb[0].mxu0
    %v1453 = vadd.f32 0.0, %v1452
    %v1454 = vpop.f32.mrb[0].mxu0
    %1455 = vmatprep.mubr.f32.mxu0 0.0
    %1456 = vmatmul.mubr.f32.gmra.mrb[0].mxu0 %v1236
    %v1457 = vpop.f32.mrb[0].mxu0
    %v1458 = vadd.f32 0.0, %v1457
    %v1459 = vpop.f32.mrb[0].mxu0
    %1460 = vmatprep.mubr.f32.mxu0 0.0
    %1461 = vmatmul.mubr.f32.gmra.mrb[0].mxu0 %v1239
    %v1462 = vpop.f32.mrb[0].mxu0
    %v1463 = vadd.f32 0.0, %v1462
    %v1464 = vpop.f32.mrb[0].mxu0
    %1465 = vmatprep.mubr.f32.mxu0 0.0
    %1466 = vmatmul.mubr.f32.gmra.mrb[0].mxu0 %v1242
    %v1467 = vpop.f32.mrb[0].mxu0
    %v1468 = vadd.f32 0.0, %v1467
    %v1469 = vpop.f32.mrb[0].mxu0
    %1470 = vdwg.mxu0
    %s1471 = scalar_lea.vmem %s4, 32
    %v1472 = vld [vmem:[%s1471] sm:$0xff]
    %v1473 = vld [vmem:[%s1471 + $0x8] sm:$0xff]
    %v1474 = vld [vmem:[%s1471 + $0x10] sm:$0xff]
    %v1475 = vld [vmem:[%s1471 + $0x18] sm:$0xf]
    %v1477 = vsel %vm1231, %v1472, 0
    %v1480 = vsel %vm1231, %v1473, 0
    %v1483 = vsel %vm1231, %v1474, 0
    %v1486 = vsel %vm1231, %v1475, 0
    %1488 = vmatprep.subr.mxu0 0.0
    %1489 = vmatpush1.msra.mxu0 %v1213
    %1490 = vmatprep.subr.mxu0 0.0
    %1491 = vmatpush1.msra.mxu0 %v1215
    %1492 = vmatprep.subr.mxu0 0.0
    %1493 = vmatpush1.msra.mxu0 %v1217
    %1494 = vmatprep.subr.mxu0 0.0
    %1495 = vmatpush1.msra.mxu0 %v1219
    %1496 = vmatprep.subr.mxu0 0.0
    %1497 = vmatpush1.msra.mxu0 %v1221
    %1498 = vmatprep.subr.mxu0 0.0
    %1499 = vmatpush1.msra.mxu0 %v1223
    %1500 = vmatprep.subr.mxu0 0.0
    %1501 = vmatpush1.msra.mxu0 %v1225
    %1502 = vmatprep.subr.mxu0 0.0
    %1503 = vmatpush1.msra.mxu0 0.0
    %1504 = vmatprep.subr.mxu0 0.0
    %1505 = vmatpush1.msra.mxu0 0.0
    %1506 = vmatprep.subr.mxu0 0.0
    %1507 = vmatpush1.msra.mxu0 0.0
    %1508 = vmatprep.subr.mxu0 0.0
    %1509 = vmatpush1.msra.mxu0 0.0
    %1510 = vmatprep.subr.mxu0 0.0
    %1511 = vmatpush1.msra.mxu0 0.0
    %1512 = vmatprep.subr.mxu0 0.0
    %1513 = vmatpush1.msra.mxu0 0.0
    %1514 = vmatprep.subr.mxu0 0.0
    %1515 = vmatpush1.msra.mxu0 0.0
    %1516 = vmatprep.subr.mxu0 0.0
    %1517 = vmatpush1.msra.mxu0 0.0
    %1518 = vmatprep.subr.mxu0 0.0
    %1519 = vmatpush1.msra.mxu0 0.0
    %1520 = vmatprep.subr.mxu0 0.0
    %1521 = vmatpush1.msra.mxu0 0.0
    %1522 = vmatprep.subr.mxu0 0.0
    %1523 = vmatpush1.msra.mxu0 0.0
    %1524 = vmatprep.subr.mxu0 0.0
    %1525 = vmatpush1.msra.mxu0 0.0
    %1526 = vmatprep.subr.mxu0 0.0
    %1527 = vmatpush1.msra.mxu0 0.0
    %1528 = vmatprep.subr.mxu0 0.0
    %1529 = vmatpush1.msra.mxu0 0.0
    %1530 = vmatprep.subr.mxu0 0.0
    %1531 = vmatpush1.msra.mxu0 0.0
    %1532 = vmatprep.subr.mxu0 0.0
    %1533 = vmatpush1.msra.mxu0 0.0
    %1534 = vmatprep.subr.mxu0 0.0
    %1535 = vmatpush1.msra.mxu0 0.0
    %1536 = vmatprep.subr.mxu0 0.0
    %1537 = vmatpush1.msra.mxu0 0.0
    %1538 = vmatprep.subr.mxu0 0.0
    %1539 = vmatpush1.msra.mxu0 0.0
    %1540 = vmatprep.subr.mxu0 0.0
    %1541 = vmatpush1.msra.mxu0 0.0
    %1542 = vmatprep.subr.mxu0 0.0
    %1543 = vmatpush1.msra.mxu0 0.0
    %1544 = vmatprep.subr.mxu0 0.0
    %1545 = vmatpush1.msra.mxu0 0.0
    %1546 = vmatprep.subr.mxu0 0.0
    %1547 = vmatpush1.msra.mxu0 0.0
    %1548 = vmatprep.subr.mxu0 0.0
    %1549 = vmatpush1.msra.mxu0 0.0
    %1550 = vmatprep.subr.mxu0 0.0
    %1551 = vmatpush1.msra.mxu0 0.0
    %1552 = vmatprep.mubr.f32.mxu0 0.0
    %1553 = vmatmul.mubr.f32.gmra.mrb[0].mxu0 %v1477
    %v1554 = vpop.f32.mrb[0].mxu0
    %v1555 = vadd.f32 0.0, %v1554
    %v1556 = vpop.f32.mrb[0].mxu0
    %1557 = vmatprep.mubr.f32.mxu0 0.0
    %1558 = vmatmul.mubr.f32.gmra.mrb[0].mxu0 %v1480
    %v1559 = vpop.f32.mrb[0].mxu0
    %v1560 = vadd.f32 0.0, %v1559
    %v1561 = vpop.f32.mrb[0].mxu0
    %1562 = vmatprep.mubr.f32.mxu0 0.0
    %1563 = vmatmul.mubr.f32.gmra.mrb[0].mxu0 %v1483
    %v1564 = vpop.f32.mrb[0].mxu0
    %v1565 = vadd.f32 0.0, %v1564
    %v1566 = vpop.f32.mrb[0].mxu0
    %1567 = vmatprep.mubr.f32.mxu0 0.0
    %1568 = vmatmul.mubr.f32.gmra.mrb[0].mxu0 %v1486
    %v1569 = vpop.f32.mrb[0].mxu0
    %v1570 = vadd.f32 0.0, %v1569
    %v1571 = vpop.f32.mrb[0].mxu0
    %1572 = vdwg.mxu0
    %1573 = vmatprep.subr.mxu0 0.0
    %1574 = vmatpush1.msra.mxu0 %v1372
    %1575 = vmatprep.subr.mxu0 0.0
    %1576 = vmatpush1.msra.mxu0 %v1373
    %1577 = vmatprep.subr.mxu0 0.0
    %1578 = vmatpush1.msra.mxu0 %v1374
    %1579 = vmatprep.subr.mxu0 0.0
    %1580 = vmatpush1.msra.mxu0 %v1375
    %1581 = vmatprep.subr.mxu0 0.0
    %1582 = vmatpush1.msra.mxu0 %v1376
    %1583 = vmatprep.subr.mxu0 0.0
    %1584 = vmatpush1.msra.mxu0 %v1377
    %1585 = vmatprep.subr.mxu0 0.0
    %1586 = vmatpush1.msra.mxu0 %v1378
    %1587 = vmatprep.subr.mxu0 0.0
    %1588 = vmatpush1.msra.mxu0 0.0
    %1589 = vmatprep.subr.mxu0 0.0
    %1590 = vmatpush1.msra.mxu0 0.0
    %1591 = vmatprep.subr.mxu0 0.0
    %1592 = vmatpush1.msra.mxu0 0.0
    %1593 = vmatprep.subr.mxu0 0.0
    %1594 = vmatpush1.msra.mxu0 0.0
    %1595 = vmatprep.subr.mxu0 0.0
    %1596 = vmatpush1.msra.mxu0 0.0
    %1597 = vmatprep.subr.mxu0 0.0
    %1598 = vmatpush1.msra.mxu0 0.0
    %1599 = vmatprep.subr.mxu0 0.0
    %1600 = vmatpush1.msra.mxu0 0.0
    %1601 = vmatprep.subr.mxu0 0.0
    %1602 = vmatpush1.msra.mxu0 0.0
    %1603 = vmatprep.subr.mxu0 0.0
    %1604 = vmatpush1.msra.mxu0 0.0
    %1605 = vmatprep.subr.mxu0 0.0
    %1606 = vmatpush1.msra.mxu0 0.0
    %1607 = vmatprep.subr.mxu0 0.0
    %1608 = vmatpush1.msra.mxu0 0.0
    %1609 = vmatprep.subr.mxu0 0.0
    %1610 = vmatpush1.msra.mxu0 0.0
    %1611 = vmatprep.subr.mxu0 0.0
    %1612 = vmatpush1.msra.mxu0 0.0
    %1613 = vmatprep.subr.mxu0 0.0
    %1614 = vmatpush1.msra.mxu0 0.0
    %1615 = vmatprep.subr.mxu0 0.0
    %1616 = vmatpush1.msra.mxu0 0.0
    %1617 = vmatprep.subr.mxu0 0.0
    %1618 = vmatpush1.msra.mxu0 0.0
    %1619 = vmatprep.subr.mxu0 0.0
    %1620 = vmatpush1.msra.mxu0 0.0
    %1621 = vmatprep.subr.mxu0 0.0
    %1622 = vmatpush1.msra.mxu0 0.0
    %1623 = vmatprep.subr.mxu0 0.0
    %1624 = vmatpush1.msra.mxu0 0.0
    %1625 = vmatprep.subr.mxu0 0.0
    %1626 = vmatpush1.msra.mxu0 0.0
    %1627 = vmatprep.subr.mxu0 0.0
    %1628 = vmatpush1.msra.mxu0 0.0
    %1629 = vmatprep.subr.mxu0 0.0
    %1630 = vmatpush1.msra.mxu0 0.0
    %1631 = vmatprep.subr.mxu0 0.0
    %1632 = vmatpush1.msra.mxu0 0.0
    %1633 = vmatprep.subr.mxu0 0.0
    %1634 = vmatpush1.msra.mxu0 0.0
    %1635 = vmatprep.subr.mxu0 0.0
    %1636 = vmatpush1.msra.mxu0 0.0
    %1637 = vmatprep.mubr.f32.mxu0 0.0
    %1638 = vmatmul.mubr.f32.gmra.mrb[0].mxu0 %v1477
    %v1639 = vpop.f32.mrb[0].mxu0
    %v1640 = vadd.f32 0.0, %v1639
    %v1641 = vpop.f32.mrb[0].mxu0
    %1642 = vmatprep.mubr.f32.mxu0 0.0
    %1643 = vmatmul.mubr.f32.gmra.mrb[0].mxu0 %v1480
    %v1644 = vpop.f32.mrb[0].mxu0
    %v1645 = vadd.f32 0.0, %v1644
    %v1646 = vpop.f32.mrb[0].mxu0
    %1647 = vmatprep.mubr.f32.mxu0 0.0
    %1648 = vmatmul.mubr.f32.gmra.mrb[0].mxu0 %v1483
    %v1649 = vpop.f32.mrb[0].mxu0
    %v1650 = vadd.f32 0.0, %v1649
    %v1651 = vpop.f32.mrb[0].mxu0
    %1652 = vmatprep.mubr.f32.mxu0 0.0
    %1653 = vmatmul.mubr.f32.gmra.mrb[0].mxu0 %v1486
    %v1654 = vpop.f32.mrb[0].mxu0
    %v1655 = vadd.f32 0.0, %v1654
    %v1656 = vpop.f32.mrb[0].mxu0
    %1657 = vdwg.mxu0
    %vm1658 = vcmp.gt.f32.partialorder %v1453, %v1311
    %vm1659 = vcmp.gt.f32.partialorder %v1458, %v1316
    %vm1660 = vcmp.gt.f32.partialorder %v1463, %v1321
    %vm1661 = vcmp.gt.f32.partialorder %v1468, %v1326
    %v1662 = vsel %vm1658, %v1453, %v1311
    %v1663 = vsel %vm1659, %v1458, %v1316
    %v1664 = vsel %vm1660, %v1463, %v1321
    %v1665 = vsel %vm1661, %v1468, %v1326
    %v1666 = vsel %vm1658, 1, 0
    %v1667 = vsel %vm1659, 1, 0
    %v1668 = vsel %vm1660, 1, 0
    %v1669 = vsel %vm1661, 1, 0
    %vm1670 = vcmp.gt.f32.partialorder %v1555, %v1662
    %vm1671 = vcmp.gt.f32.partialorder %v1560, %v1663
    %vm1672 = vcmp.gt.f32.partialorder %v1565, %v1664
    %vm1673 = vcmp.gt.f32.partialorder %v1570, %v1665
    %v1674 = vsel %vm1670, %v1555, %v1662
    %v1675 = vsel %vm1671, %v1560, %v1663
    %v1676 = vsel %vm1672, %v1565, %v1664
    %v1677 = vsel %vm1673, %v1570, %v1665
    %v1678 = vsel %vm1670, 2, %v1666
    %v1679 = vsel %vm1671, 2, %v1667
    %v1680 = vsel %vm1672, 2, %v1668
    %v1681 = vsel %vm1673, 2, %v1669
    %vm1682 = vcmp.gt.f32.partialorder %v1640, %v1674
    %vm1683 = vcmp.gt.f32.partialorder %v1645, %v1675
    %vm1684 = vcmp.gt.f32.partialorder %v1650, %v1676
    %vm1685 = vcmp.gt.f32.partialorder %v1655, %v1677
    %v1686 = vsel %vm1682, %v1640, %v1674
    %v1687 = vsel %vm1683, %v1645, %v1675
    %v1688 = vsel %vm1684, %v1650, %v1676
    %v1689 = vsel %vm1685, %v1655, %v1677
    %v1690 = vsel %vm1682, 3, %v1678
    %v1691 = vsel %vm1683, 3, %v1679
    %v1692 = vsel %vm1684, 3, %v1680
    %v1693 = vsel %vm1685, 3, %v1681
    %v1694 = vld [vmem:[%s5] sm:$0xff]
    %v1695 = vld [vmem:[%s5 + $0x8] sm:$0xff]
    %v1696 = vld [vmem:[%s5 + $0x10] sm:$0xf]
    %vm1697 = vcmask 228352
    %v1699 = vsel %vm1697, %v1694, 0
    %v1702 = vsel %vm1697, %v1695, 0
    %v1705 = vsel %vm1697, %v1696, 0
    %vm1707 = vcmask 1043456
    %v1709 = vsel %vm1707, %v1689, 0
    %1711 = vmatprep.subr.mxu0 0.0
    %1712 = vmatpush1.msra.mxu0 %v1686
    %1713 = vmatprep.subr.mxu0 0.0
    %1714 = vmatpush1.msra.mxu0 %v1687
    %1715 = vmatprep.subr.mxu0 0.0
    %1716 = vmatpush1.msra.mxu0 %v1688
    %1717 = vmatprep.subr.mxu0 0.0
    %1718 = vmatpush1.msra.mxu0 %v1709
    %1719 = vmatprep.subr.mxu0 0.0
    %1720 = vmatpush1.msra.mxu0 0.0
    %1721 = vmatprep.subr.mxu0 0.0
    %1722 = vmatpush1.msra.mxu0 0.0
    %1723 = vmatprep.subr.mxu0 0.0
    %1724 = vmatpush1.msra.mxu0 0.0
    %1725 = vmatprep.subr.mxu0 0.0
    %1726 = vmatpush1.msra.mxu0 0.0
    %1727 = vmatprep.subr.mxu0 0.0
    %1728 = vmatpush1.msra.mxu0 0.0
    %1729 = vmatprep.subr.mxu0 0.0
    %1730 = vmatpush1.msra.mxu0 0.0
    %1731 = vmatprep.subr.mxu0 0.0
    %1732 = vmatpush1.msra.mxu0 0.0
    %1733 = vmatprep.subr.mxu0 0.0
    %1734 = vmatpush1.msra.mxu0 0.0
    %1735 = vmatprep.subr.mxu0 0.0
    %1736 = vmatpush1.msra.mxu0 0.0
    %1737 = vmatprep.subr.mxu0 0.0
    %1738 = vmatpush1.msra.mxu0 0.0
    %1739 = vmatprep.subr.mxu0 0.0
    %1740 = vmatpush1.msra.mxu0 0.0
    %1741 = vmatprep.subr.mxu0 0.0
    %1742 = vmatpush1.msra.mxu0 0.0
    %1743 = vmatprep.subr.mxu0 0.0
    %1744 = vmatpush1.msra.mxu0 0.0
    %1745 = vmatprep.subr.mxu0 0.0
    %1746 = vmatpush1.msra.mxu0 0.0
    %1747 = vmatprep.subr.mxu0 0.0
    %1748 = vmatpush1.msra.mxu0 0.0
    %1749 = vmatprep.subr.mxu0 0.0
    %1750 = vmatpush1.msra.mxu0 0.0
    %1751 = vmatprep.subr.mxu0 0.0
    %1752 = vmatpush1.msra.mxu0 0.0
    %1753 = vmatprep.subr.mxu0 0.0
    %1754 = vmatpush1.msra.mxu0 0.0
    %1755 = vmatprep.subr.mxu0 0.0
    %1756 = vmatpush1.msra.mxu0 0.0
    %1757 = vmatprep.subr.mxu0 0.0
    %1758 = vmatpush1.msra.mxu0 0.0
    %1759 = vmatprep.subr.mxu0 0.0
    %1760 = vmatpush1.msra.mxu0 0.0
    %1761 = vmatprep.subr.mxu0 0.0
    %1762 = vmatpush1.msra.mxu0 0.0
    %1763 = vmatprep.subr.mxu0 0.0
    %1764 = vmatpush1.msra.mxu0 0.0
    %1765 = vmatprep.subr.mxu0 0.0
    %1766 = vmatpush1.msra.mxu0 0.0
    %1767 = vmatprep.subr.mxu0 0.0
    %1768 = vmatpush1.msra.mxu0 0.0
    %1769 = vmatprep.subr.mxu0 0.0
    %1770 = vmatpush1.msra.mxu0 0.0
    %1771 = vmatprep.subr.mxu0 0.0
    %1772 = vmatpush1.msra.mxu0 0.0
    %1773 = vmatprep.subr.mxu0 0.0
    %1774 = vmatpush1.msra.mxu0 0.0
    %1775 = vmatprep.mubr.f32.mxu0 0.0
    %1776 = vmatmul.mubr.f32.gmra.mrb[0].mxu0 %v1699
    %v1777 = vpop.f32.mrb[0].mxu0
    %v1778 = vadd.f32 0.0, %v1777
    %v1779 = vpop.f32.mrb[0].mxu0
    %1780 = vmatprep.mubr.f32.mxu0 0.0
    %1781 = vmatmul.mubr.f32.gmra.mrb[0].mxu0 %v1702
    %v1782 = vpop.f32.mrb[0].mxu0
    %v1783 = vadd.f32 0.0, %v1782
    %v1784 = vpop.f32.mrb[0].mxu0
    %1785 = vmatprep.mubr.f32.mxu0 0.0
    %1786 = vmatmul.mubr.f32.gmra.mrb[0].mxu0 %v1705
    %v1787 = vpop.f32.mrb[0].mxu0
    %v1788 = vadd.f32 0.0, %v1787
    %v1789 = vpop.f32.mrb[0].mxu0
    %1790 = vdwg.mxu0
    %s1791 = scalar_lea.vmem %s5, 24
    %v1792 = vld [vmem:[%s1791] sm:$0xff]
    %v1793 = vld [vmem:[%s1791 + $0x8] sm:$0xff]
    %v1794 = vld [vmem:[%s1791 + $0x10] sm:$0xf]
    %v1796 = vsel %vm1697, %v1792, 0
    %v1799 = vsel %vm1697, %v1793, 0
    %v1802 = vsel %vm1697, %v1794, 0
    %1804 = vmatprep.subr.mxu0 0.0
    %1805 = vmatpush1.msra.mxu0 %v1686
    %1806 = vmatprep.subr.mxu0 0.0
    %1807 = vmatpush1.msra.mxu0 %v1687
    %1808 = vmatprep.subr.mxu0 0.0
    %1809 = vmatpush1.msra.mxu0 %v1688
    %1810 = vmatprep.subr.mxu0 0.0
    %1811 = vmatpush1.msra.mxu0 %v1709
    %1812 = vmatprep.subr.mxu0 0.0
    %1813 = vmatpush1.msra.mxu0 0.0
    %1814 = vmatprep.subr.mxu0 0.0
    %1815 = vmatpush1.msra.mxu0 0.0
    %1816 = vmatprep.subr.mxu0 0.0
    %1817 = vmatpush1.msra.mxu0 0.0
    %1818 = vmatprep.subr.mxu0 0.0
    %1819 = vmatpush1.msra.mxu0 0.0
    %1820 = vmatprep.subr.mxu0 0.0
    %1821 = vmatpush1.msra.mxu0 0.0
    %1822 = vmatprep.subr.mxu0 0.0
    %1823 = vmatpush1.msra.mxu0 0.0
    %1824 = vmatprep.subr.mxu0 0.0
    %1825 = vmatpush1.msra.mxu0 0.0
    %1826 = vmatprep.subr.mxu0 0.0
    %1827 = vmatpush1.msra.mxu0 0.0
    %1828 = vmatprep.subr.mxu0 0.0
    %1829 = vmatpush1.msra.mxu0 0.0
    %1830 = vmatprep.subr.mxu0 0.0
    %1831 = vmatpush1.msra.mxu0 0.0
    %1832 = vmatprep.subr.mxu0 0.0
    %1833 = vmatpush1.msra.mxu0 0.0
    %1834 = vmatprep.subr.mxu0 0.0
    %1835 = vmatpush1.msra.mxu0 0.0
    %1836 = vmatprep.subr.mxu0 0.0
    %1837 = vmatpush1.msra.mxu0 0.0
    %1838 = vmatprep.subr.mxu0 0.0
    %1839 = vmatpush1.msra.mxu0 0.0
    %1840 = vmatprep.subr.mxu0 0.0
    %1841 = vmatpush1.msra.mxu0 0.0
    %1842 = vmatprep.subr.mxu0 0.0
    %1843 = vmatpush1.msra.mxu0 0.0
    %1844 = vmatprep.subr.mxu0 0.0
    %1845 = vmatpush1.msra.mxu0 0.0
    %1846 = vmatprep.subr.mxu0 0.0
    %1847 = vmatpush1.msra.mxu0 0.0
    %1848 = vmatprep.subr.mxu0 0.0
    %1849 = vmatpush1.msra.mxu0 0.0
    %1850 = vmatprep.subr.mxu0 0.0
    %1851 = vmatpush1.msra.mxu0 0.0
    %1852 = vmatprep.subr.mxu0 0.0
    %1853 = vmatpush1.msra.mxu0 0.0
    %1854 = vmatprep.subr.mxu0 0.0
    %1855 = vmatpush1.msra.mxu0 0.0
    %1856 = vmatprep.subr.mxu0 0.0
    %1857 = vmatpush1.msra.mxu0 0.0
    %1858 = vmatprep.subr.mxu0 0.0
    %1859 = vmatpush1.msra.mxu0 0.0
    %1860 = vmatprep.subr.mxu0 0.0
    %1861 = vmatpush1.msra.mxu0 0.0
    %1862 = vmatprep.subr.mxu0 0.0
    %1863 = vmatpush1.msra.mxu0 0.0
    %1864 = vmatprep.subr.mxu0 0.0
    %1865 = vmatpush1.msra.mxu0 0.0
    %1866 = vmatprep.subr.mxu0 0.0
    %1867 = vmatpush1.msra.mxu0 0.0
    %1868 = vmatprep.mubr.f32.mxu0 0.0
    %1869 = vmatmul.mubr.f32.gmra.mrb[0].mxu0 %v1796
    %v1870 = vpop.f32.mrb[0].mxu0
    %v1871 = vadd.f32 0.0, %v1870
    %v1872 = vpop.f32.mrb[0].mxu0
    %1873 = vmatprep.mubr.f32.mxu0 0.0
    %1874 = vmatmul.mubr.f32.gmra.mrb[0].mxu0 %v1799
    %v1875 = vpop.f32.mrb[0].mxu0
    %v1876 = vadd.f32 0.0, %v1875
    %v1877 = vpop.f32.mrb[0].mxu0
    %1878 = vmatprep.mubr.f32.mxu0 0.0
    %1879 = vmatmul.mubr.f32.gmra.mrb[0].mxu0 %v1802
    %v1880 = vpop.f32.mrb[0].mxu0
    %v1881 = vadd.f32 0.0, %v1880
    %v1882 = vpop.f32.mrb[0].mxu0
    %1883 = vdwg.mxu0
    %s1884 = scalar_lea.vmem %s5, 48
    %v1885 = vld [vmem:[%s1884] sm:$0xff]
    %v1886 = vld [vmem:[%s1884 + $0x8] sm:$0xff]
    %v1887 = vld [vmem:[%s1884 + $0x10] sm:$0xf]
    %v1889 = vsel %vm1697, %v1885, 0
    %v1892 = vsel %vm1697, %v1886, 0
    %v1895 = vsel %vm1697, %v1887, 0
    %1897 = vmatprep.subr.mxu0 0.0
    %1898 = vmatpush1.msra.mxu0 %v1686
    %1899 = vmatprep.subr.mxu0 0.0
    %1900 = vmatpush1.msra.mxu0 %v1687
    %1901 = vmatprep.subr.mxu0 0.0
    %1902 = vmatpush1.msra.mxu0 %v1688
    %1903 = vmatprep.subr.mxu0 0.0
    %1904 = vmatpush1.msra.mxu0 %v1709
    %1905 = vmatprep.subr.mxu0 0.0
    %1906 = vmatpush1.msra.mxu0 0.0
    %1907 = vmatprep.subr.mxu0 0.0
    %1908 = vmatpush1.msra.mxu0 0.0
    %1909 = vmatprep.subr.mxu0 0.0
    %1910 = vmatpush1.msra.mxu0 0.0
    %1911 = vmatprep.subr.mxu0 0.0
    %1912 = vmatpush1.msra.mxu0 0.0
    %1913 = vmatprep.subr.mxu0 0.0
    %1914 = vmatpush1.msra.mxu0 0.0
    %1915 = vmatprep.subr.mxu0 0.0
    %1916 = vmatpush1.msra.mxu0 0.0
    %1917 = vmatprep.subr.mxu0 0.0
    %1918 = vmatpush1.msra.mxu0 0.0
    %1919 = vmatprep.subr.mxu0 0.0
    %1920 = vmatpush1.msra.mxu0 0.0
    %1921 = vmatprep.subr.mxu0 0.0
    %1922 = vmatpush1.msra.mxu0 0.0
    %1923 = vmatprep.subr.mxu0 0.0
    %1924 = vmatpush1.msra.mxu0 0.0
    %1925 = vmatprep.subr.mxu0 0.0
    %1926 = vmatpush1.msra.mxu0 0.0
    %1927 = vmatprep.subr.mxu0 0.0
    %1928 = vmatpush1.msra.mxu0 0.0
    %1929 = vmatprep.subr.mxu0 0.0
    %1930 = vmatpush1.msra.mxu0 0.0
    %1931 = vmatprep.subr.mxu0 0.0
    %1932 = vmatpush1.msra.mxu0 0.0
    %1933 = vmatprep.subr.mxu0 0.0
    %1934 = vmatpush1.msra.mxu0 0.0
    %1935 = vmatprep.subr.mxu0 0.0
    %1936 = vmatpush1.msra.mxu0 0.0
    %1937 = vmatprep.subr.mxu0 0.0
    %1938 = vmatpush1.msra.mxu0 0.0
    %1939 = vmatprep.subr.mxu0 0.0
    %1940 = vmatpush1.msra.mxu0 0.0
    %1941 = vmatprep.subr.mxu0 0.0
    %1942 = vmatpush1.msra.mxu0 0.0
    %1943 = vmatprep.subr.mxu0 0.0
    %1944 = vmatpush1.msra.mxu0 0.0
    %1945 = vmatprep.subr.mxu0 0.0
    %1946 = vmatpush1.msra.mxu0 0.0
    %1947 = vmatprep.subr.mxu0 0.0
    %1948 = vmatpush1.msra.mxu0 0.0
    %1949 = vmatprep.subr.mxu0 0.0
    %1950 = vmatpush1.msra.mxu0 0.0
    %1951 = vmatprep.subr.mxu0 0.0
    %1952 = vmatpush1.msra.mxu0 0.0
    %1953 = vmatprep.subr.mxu0 0.0
    %1954 = vmatpush1.msra.mxu0 0.0
    %1955 = vmatprep.subr.mxu0 0.0
    %1956 = vmatpush1.msra.mxu0 0.0
    %1957 = vmatprep.subr.mxu0 0.0
    %1958 = vmatpush1.msra.mxu0 0.0
    %1959 = vmatprep.subr.mxu0 0.0
    %1960 = vmatpush1.msra.mxu0 0.0
    %1961 = vmatprep.mubr.f32.mxu0 0.0
    %1962 = vmatmul.mubr.f32.gmra.mrb[0].mxu0 %v1889
    %v1963 = vpop.f32.mrb[0].mxu0
    %v1964 = vadd.f32 0.0, %v1963
    %v1965 = vpop.f32.mrb[0].mxu0
    %1966 = vmatprep.mubr.f32.mxu0 0.0
    %1967 = vmatmul.mubr.f32.gmra.mrb[0].mxu0 %v1892
    %v1968 = vpop.f32.mrb[0].mxu0
    %v1969 = vadd.f32 0.0, %v1968
    %v1970 = vpop.f32.mrb[0].mxu0
    %1971 = vmatprep.mubr.f32.mxu0 0.0
    %1972 = vmatmul.mubr.f32.gmra.mrb[0].mxu0 %v1895
    %v1973 = vpop.f32.mrb[0].mxu0
    %v1974 = vadd.f32 0.0, %v1973
    %v1975 = vpop.f32.mrb[0].mxu0
    %1976 = vdwg.mxu0
    %s1977 = scalar_lea.vmem %s5, 72
    %v1978 = vld [vmem:[%s1977] sm:$0xff]
    %v1979 = vld [vmem:[%s1977 + $0x8] sm:$0xff]
    %v1980 = vld [vmem:[%s1977 + $0x10] sm:$0xf]
    %v1982 = vsel %vm1697, %v1978, 0
    %v1985 = vsel %vm1697, %v1979, 0
    %v1988 = vsel %vm1697, %v1980, 0
    %1990 = vmatprep.subr.mxu0 0.0
    %1991 = vmatpush1.msra.mxu0 %v1686
    %1992 = vmatprep.subr.mxu0 0.0
    %1993 = vmatpush1.msra.mxu0 %v1687
    %1994 = vmatprep.subr.mxu0 0.0
    %1995 = vmatpush1.msra.mxu0 %v1688
    %1996 = vmatprep.subr.mxu0 0.0
    %1997 = vmatpush1.msra.mxu0 %v1709
    %1998 = vmatprep.subr.mxu0 0.0
    %1999 = vmatpush1.msra.mxu0 0.0
    %2000 = vmatprep.subr.mxu0 0.0
    %2001 = vmatpush1.msra.mxu0 0.0
    %2002 = vmatprep.subr.mxu0 0.0
    %2003 = vmatpush1.msra.mxu0 0.0
    %2004 = vmatprep.subr.mxu0 0.0
    %2005 = vmatpush1.msra.mxu0 0.0
    %2006 = vmatprep.subr.mxu0 0.0
    %2007 = vmatpush1.msra.mxu0 0.0
    %2008 = vmatprep.subr.mxu0 0.0
    %2009 = vmatpush1.msra.mxu0 0.0
    %2010 = vmatprep.subr.mxu0 0.0
    %2011 = vmatpush1.msra.mxu0 0.0
    %2012 = vmatprep.subr.mxu0 0.0
    %2013 = vmatpush1.msra.mxu0 0.0
    %2014 = vmatprep.subr.mxu0 0.0
    %2015 = vmatpush1.msra.mxu0 0.0
    %2016 = vmatprep.subr.mxu0 0.0
    %2017 = vmatpush1.msra.mxu0 0.0
    %2018 = vmatprep.subr.mxu0 0.0
    %2019 = vmatpush1.msra.mxu0 0.0
    %2020 = vmatprep.subr.mxu0 0.0
    %2021 = vmatpush1.msra.mxu0 0.0
    %2022 = vmatprep.subr.mxu0 0.0
    %2023 = vmatpush1.msra.mxu0 0.0
    %2024 = vmatprep.subr.mxu0 0.0
    %2025 = vmatpush1.msra.mxu0 0.0
    %2026 = vmatprep.subr.mxu0 0.0
    %2027 = vmatpush1.msra.mxu0 0.0
    %2028 = vmatprep.subr.mxu0 0.0
    %2029 = vmatpush1.msra.mxu0 0.0
    %2030 = vmatprep.subr.mxu0 0.0
    %2031 = vmatpush1.msra.mxu0 0.0
    %2032 = vmatprep.subr.mxu0 0.0
    %2033 = vmatpush1.msra.mxu0 0.0
    %2034 = vmatprep.subr.mxu0 0.0
    %2035 = vmatpush1.msra.mxu0 0.0
    %2036 = vmatprep.subr.mxu0 0.0
    %2037 = vmatpush1.msra.mxu0 0.0
    %2038 = vmatprep.subr.mxu0 0.0
    %2039 = vmatpush1.msra.mxu0 0.0
    %2040 = vmatprep.subr.mxu0 0.0
    %2041 = vmatpush1.msra.mxu0 0.0
    %2042 = vmatprep.subr.mxu0 0.0
    %2043 = vmatpush1.msra.mxu0 0.0
    %2044 = vmatprep.subr.mxu0 0.0
    %2045 = vmatpush1.msra.mxu0 0.0
    %2046 = vmatprep.subr.mxu0 0.0
    %2047 = vmatpush1.msra.mxu0 0.0
    %2048 = vmatprep.subr.mxu0 0.0
    %2049 = vmatpush1.msra.mxu0 0.0
    %2050 = vmatprep.subr.mxu0 0.0
    %2051 = vmatpush1.msra.mxu0 0.0
    %2052 = vmatprep.subr.mxu0 0.0
    %2053 = vmatpush1.msra.mxu0 0.0
    %2054 = vmatprep.mubr.f32.mxu0 0.0
    %2055 = vmatmul.mubr.f32.gmra.mrb[0].mxu0 %v1982
    %v2056 = vpop.f32.mrb[0].mxu0
    %v2057 = vadd.f32 0.0, %v2056
    %v2058 = vpop.f32.mrb[0].mxu0
    %2059 = vmatprep.mubr.f32.mxu0 0.0
    %2060 = vmatmul.mubr.f32.gmra.mrb[0].mxu0 %v1985
    %v2061 = vpop.f32.mrb[0].mxu0
    %v2062 = vadd.f32 0.0, %v2061
    %v2063 = vpop.f32.mrb[0].mxu0
    %2064 = vmatprep.mubr.f32.mxu0 0.0
    %2065 = vmatmul.mubr.f32.gmra.mrb[0].mxu0 %v1988
    %v2066 = vpop.f32.mrb[0].mxu0
    %v2067 = vadd.f32 0.0, %v2066
    %v2068 = vpop.f32.mrb[0].mxu0
    %2069 = vdwg.mxu0
    %s2070 = scalar_lea.vmem %s5, 96
    %v2071 = vld [vmem:[%s2070] sm:$0xff]
    %v2072 = vld [vmem:[%s2070 + $0x8] sm:$0xff]
    %v2073 = vld [vmem:[%s2070 + $0x10] sm:$0xf]
    %v2075 = vsel %vm1697, %v2071, 0
    %v2078 = vsel %vm1697, %v2072, 0
    %v2081 = vsel %vm1697, %v2073, 0
    %2083 = vmatprep.subr.mxu0 0.0
    %2084 = vmatpush1.msra.mxu0 %v1686
    %2085 = vmatprep.subr.mxu0 0.0
    %2086 = vmatpush1.msra.mxu0 %v1687
    %2087 = vmatprep.subr.mxu0 0.0
    %2088 = vmatpush1.msra.mxu0 %v1688
    %2089 = vmatprep.subr.mxu0 0.0
    %2090 = vmatpush1.msra.mxu0 %v1709
    %2091 = vmatprep.subr.mxu0 0.0
    %2092 = vmatpush1.msra.mxu0 0.0
    %2093 = vmatprep.subr.mxu0 0.0
    %2094 = vmatpush1.msra.mxu0 0.0
    %2095 = vmatprep.subr.mxu0 0.0
    %2096 = vmatpush1.msra.mxu0 0.0
    %2097 = vmatprep.subr.mxu0 0.0
    %2098 = vmatpush1.msra.mxu0 0.0
    %2099 = vmatprep.subr.mxu0 0.0
    %2100 = vmatpush1.msra.mxu0 0.0
    %2101 = vmatprep.subr.mxu0 0.0
    %2102 = vmatpush1.msra.mxu0 0.0
    %2103 = vmatprep.subr.mxu0 0.0
    %2104 = vmatpush1.msra.mxu0 0.0
    %2105 = vmatprep.subr.mxu0 0.0
    %2106 = vmatpush1.msra.mxu0 0.0
    %2107 = vmatprep.subr.mxu0 0.0
    %2108 = vmatpush1.msra.mxu0 0.0
    %2109 = vmatprep.subr.mxu0 0.0
    %2110 = vmatpush1.msra.mxu0 0.0
    %2111 = vmatprep.subr.mxu0 0.0
    %2112 = vmatpush1.msra.mxu0 0.0
    %2113 = vmatprep.subr.mxu0 0.0
    %2114 = vmatpush1.msra.mxu0 0.0
    %2115 = vmatprep.subr.mxu0 0.0
    %2116 = vmatpush1.msra.mxu0 0.0
    %2117 = vmatprep.subr.mxu0 0.0
    %2118 = vmatpush1.msra.mxu0 0.0
    %2119 = vmatprep.subr.mxu0 0.0
    %2120 = vmatpush1.msra.mxu0 0.0
    %2121 = vmatprep.subr.mxu0 0.0
    %2122 = vmatpush1.msra.mxu0 0.0
    %2123 = vmatprep.subr.mxu0 0.0
    %2124 = vmatpush1.msra.mxu0 0.0
    %2125 = vmatprep.subr.mxu0 0.0
    %2126 = vmatpush1.msra.mxu0 0.0
    %2127 = vmatprep.subr.mxu0 0.0
    %2128 = vmatpush1.msra.mxu0 0.0
    %2129 = vmatprep.subr.mxu0 0.0
    %2130 = vmatpush1.msra.mxu0 0.0
    %2131 = vmatprep.subr.mxu0 0.0
    %2132 = vmatpush1.msra.mxu0 0.0
    %2133 = vmatprep.subr.mxu0 0.0
    %2134 = vmatpush1.msra.mxu0 0.0
    %2135 = vmatprep.subr.mxu0 0.0
    %2136 = vmatpush1.msra.mxu0 0.0
    %2137 = vmatprep.subr.mxu0 0.0
    %2138 = vmatpush1.msra.mxu0 0.0
    %2139 = vmatprep.subr.mxu0 0.0
    %2140 = vmatpush1.msra.mxu0 0.0
    %2141 = vmatprep.subr.mxu0 0.0
    %2142 = vmatpush1.msra.mxu0 0.0
    %2143 = vmatprep.subr.mxu0 0.0
    %2144 = vmatpush1.msra.mxu0 0.0
    %2145 = vmatprep.subr.mxu0 0.0
    %2146 = vmatpush1.msra.mxu0 0.0
    %2147 = vmatprep.mubr.f32.mxu0 0.0
    %2148 = vmatmul.mubr.f32.gmra.mrb[0].mxu0 %v2075
    %v2149 = vpop.f32.mrb[0].mxu0
    %v2150 = vadd.f32 0.0, %v2149
    %v2151 = vpop.f32.mrb[0].mxu0
    %2152 = vmatprep.mubr.f32.mxu0 0.0
    %2153 = vmatmul.mubr.f32.gmra.mrb[0].mxu0 %v2078
    %v2154 = vpop.f32.mrb[0].mxu0
    %v2155 = vadd.f32 0.0, %v2154
    %v2156 = vpop.f32.mrb[0].mxu0
    %2157 = vmatprep.mubr.f32.mxu0 0.0
    %2158 = vmatmul.mubr.f32.gmra.mrb[0].mxu0 %v2081
    %v2159 = vpop.f32.mrb[0].mxu0
    %v2160 = vadd.f32 0.0, %v2159
    %v2161 = vpop.f32.mrb[0].mxu0
    %2162 = vdwg.mxu0
    %2166 = vrot.lane.b32.xlu0 %v1871, 84
    %v2167 = vpop.permute.xlu0 %2166
    %2168 = vrot.lane.b32.xlu0 %v1876, 84
    %v2169 = vpop.permute.xlu0 %2168
    %2170 = vrot.lane.b32.xlu0 %v1881, 84
    %v2171 = vpop.permute.xlu0 %2170
    %2178 = vrot.lane.b32.xlu0 %v1964, 40
    %v2179 = vpop.permute.xlu0 %2178
    %2180 = vrot.lane.b32.xlu0 %v1969, 40
    %v2181 = vpop.permute.xlu0 %2180
    %2182 = vrot.lane.b32.xlu0 %v1974, 40
    %v2183 = vpop.permute.xlu0 %2182
    %2190 = vrot.lane.b32.xlu0 %v2057, 124
    %v2191 = vpop.permute.xlu0 %2190
    %2192 = vrot.lane.b32.xlu0 %v2062, 124
    %v2193 = vpop.permute.xlu0 %2192
    %2194 = vrot.lane.b32.xlu0 %v2067, 124
    %v2195 = vpop.permute.xlu0 %2194
    %2202 = vrot.lane.b32.xlu0 %v2150, 80
    %v2203 = vpop.permute.xlu0 %2202
    %2204 = vrot.lane.b32.xlu0 %v2155, 80
    %v2205 = vpop.permute.xlu0 %2204
    %2206 = vrot.lane.b32.xlu0 %v2160, 80
    %v2207 = vpop.permute.xlu0 %2206
    %vm2211 = vcmask 687104
    %v2212 = vsel %vm2211, %v1778, %v2167
    %v2213 = vsel %vm2211, %v1783, %v2169
    %v2214 = vsel %vm2211, %v1788, %v2171
    %vm2215 = vcmask 326656
    %v2216 = vsel %vm2215, %v2167, %v2179
    %v2217 = vsel %vm2215, %v2169, %v2181
    %v2218 = vsel %vm2215, %v2171, %v2183
    %vm2219 = vcmask 1014784
    %v2220 = vsel %vm2219, %v2216, %v2191
    %v2221 = vsel %vm2219, %v2217, %v2193
    %v2222 = vsel %vm2219, %v2218, %v2195
    %vm2223 = vcmask 654336
    %v2224 = vsel %vm2223, %v2191, %v2203
    %v2225 = vsel %vm2223, %v2193, %v2205
    %v2226 = vsel %vm2223, %v2195, %v2207
    %v2227 = vld [vmem:[%s6] sm:$0xff]
    %v2228 = vld [vmem:[%s6 + $0x8] sm:$0xff]
    %v2229 = vld [vmem:[%s6 + $0x10] sm:$0xff]
    %v2230 = vld [vmem:[%s6 + $0x18] sm:$0xff]
    %v2231 = vld [vmem:[%s6 + $0x20] sm:$0xff]
    %v2232 = vld [vmem:[%s6 + $0x28] sm:$0xff]
    %v2233 = vld [vmem:[%s6 + $0x30] sm:$0xff]
    %v2234 = vld [vmem:[%s6 + $0x38] sm:$0xff]
    %v2235 = vld [vmem:[%s6 + $0x40] sm:$0xff]
    %v2236 = vld [vmem:[%s6 + $0x48] sm:$0xff]
    %v2237 = vld [vmem:[%s6 + $0x50] sm:$0xff]
    %v2238 = vld [vmem:[%s6 + $0x58] sm:$0xff]
    %v2239 = vld [vmem:[%s6 + $0x60] sm:$0xff]
    %v2240 = vld [vmem:[%s6 + $0x68] sm:$0xff]
    %v2241 = vld [vmem:[%s6 + $0x70] sm:$0xff]
    %v2242 = vld [vmem:[%s6 + $0x78] sm:$0xff]
    %v2243 = vld [vmem:[%s6 + $0x80] sm:$0xff]
    %v2244 = vld [vmem:[%s6 + $0x88] sm:$0xff]
    %v2245 = vld [vmem:[%s6 + $0x90] sm:$0xff]
    %v2246 = vld [vmem:[%s6 + $0x98] sm:$0xff]
    %v2247 = vld [vmem:[%s6 + $0xa0] sm:$0xff]
    %v2248 = vld [vmem:[%s6 + $0xa8] sm:$0xff]
    %v2249 = vld [vmem:[%s6 + $0xb0] sm:$0xff]
    %v2250 = vld [vmem:[%s6 + $0xb8] sm:$0xff]
    %v2251 = vld [vmem:[%s6 + $0xc0] sm:$0xff]
    %v2252 = vld [vmem:[%s6 + $0xc8] sm:$0xff]
    %v2253 = vld [vmem:[%s6 + $0xd0] sm:$0xff]
    %v2254 = vld [vmem:[%s6 + $0xd8] sm:$0xff]
    %v2255 = vld [vmem:[%s6 + $0xe0] sm:$0xff]
    %v2256 = vld [vmem:[%s6 + $0xe8] sm:$0xff]
    %v2257 = vld [vmem:[%s6 + $0xf0] sm:$0xff]
    %v2258 = vld [vmem:[%s6 + $0xf8] sm:$0xff]
    %v2259 = vld [vmem:[%s6 + $0x100] sm:$0xff]
    %v2260 = vld [vmem:[%s6 + $0x108] sm:$0xff]
    %v2261 = vld [vmem:[%s6 + $0x110] sm:$0xff]
    %v2262 = vld [vmem:[%s6 + $0x118] sm:$0xff]
    %v2263 = vld [vmem:[%s6 + $0x120] sm:$0xff]
    %v2264 = vld [vmem:[%s6 + $0x128] sm:$0xff]
    %v2265 = vld [vmem:[%s6 + $0x130] sm:$0xff]
    %v2266 = vld [vmem:[%s6 + $0x138] sm:$0xff]
    %v2267 = vld [vmem:[%s6 + $0x140] sm:$0xff]
    %v2268 = vld [vmem:[%s6 + $0x148] sm:$0xff]
    %v2269 = vld [vmem:[%s6 + $0x150] sm:$0xff]
    %v2270 = vld [vmem:[%s6 + $0x158] sm:$0xff]
    %v2271 = vld [vmem:[%s6 + $0x160] sm:$0xff]
    %v2272 = vld [vmem:[%s6 + $0x168] sm:$0xff]
    %v2273 = vld [vmem:[%s6 + $0x170] sm:$0xff]
    %v2274 = vld [vmem:[%s6 + $0x178] sm:$0xff]
    %v2275 = vld [vmem:[%s6 + $0x180] sm:$0xff]
    %v2276 = vld [vmem:[%s6 + $0x188] sm:$0xff]
    %v2277 = vld [vmem:[%s6 + $0x190] sm:$0xff]
    %v2278 = vld [vmem:[%s6 + $0x198] sm:$0xff]
    %v2279 = vld [vmem:[%s6 + $0x1a0] sm:$0xff]
    %v2280 = vld [vmem:[%s6 + $0x1a8] sm:$0xff]
    %v2281 = vld [vmem:[%s6 + $0x1b0] sm:$0xff]
    %v2282 = vld [vmem:[%s6 + $0x1b8] sm:$0xff]
    %v2283 = vld [vmem:[%s6 + $0x1c0] sm:$0xff]
    %v2284 = vld [vmem:[%s6 + $0x1c8] sm:$0xff]
    %v2285 = vld [vmem:[%s6 + $0x1d0] sm:$0xff]
    %v2286 = vld [vmem:[%s6 + $0x1d8] sm:$0xff]
    %v2287 = vld [vmem:[%s6 + $0x1e0] sm:$0xff]
    %v2288 = vld [vmem:[%s6 + $0x1e8] sm:$0xff]
    %v2289 = vld [vmem:[%s6 + $0x1f0] sm:$0xff]
    %v2290 = vld [vmem:[%s6 + $0x1f8] sm:$0xff]
    %v2291 = vld [vmem:[%s6 + $0x200] sm:$0xff]
    %v2292 = vld [vmem:[%s6 + $0x208] sm:$0xff]
    %v2293 = vld [vmem:[%s6 + $0x210] sm:$0xff]
    %v2294 = vld [vmem:[%s6 + $0x218] sm:$0xff]
    %v2295 = vld [vmem:[%s6 + $0x220] sm:$0xff]
    %v2296 = vld [vmem:[%s6 + $0x228] sm:$0xff]
    %v2297 = vld [vmem:[%s6 + $0x230] sm:$0xff]
    %v2298 = vld [vmem:[%s6 + $0x238] sm:$0xff]
    %v2299 = vld [vmem:[%s6 + $0x240] sm:$0xff]
    %v2300 = vld [vmem:[%s6 + $0x248] sm:$0xff]
    %v2301 = vld [vmem:[%s6 + $0x250] sm:$0xff]
    %v2302 = vld [vmem:[%s6 + $0x258] sm:$0xff]
    %v2303 = vld [vmem:[%s6 + $0x260] sm:$0xff]
    %v2304 = vld [vmem:[%s6 + $0x268] sm:$0xff]
    %v2305 = vld [vmem:[%s6 + $0x270] sm:$0xff]
    %v2306 = vld [vmem:[%s6 + $0x278] sm:$0xff]
    %v2307 = vld [vmem:[%s6 + $0x280] sm:$0xff]
    %v2308 = vld [vmem:[%s6 + $0x288] sm:$0xff]
    %v2309 = vld [vmem:[%s6 + $0x290] sm:$0xff]
    %v2310 = vld [vmem:[%s6 + $0x298] sm:$0xff]
    %v2311 = vld [vmem:[%s6 + $0x2a0] sm:$0xff]
    %v2312 = vld [vmem:[%s6 + $0x2a8] sm:$0xff]
    %v2313 = vld [vmem:[%s6 + $0x2b0] sm:$0xff]
    %v2314 = vld [vmem:[%s6 + $0x2b8] sm:$0xff]
    %v2315 = vld [vmem:[%s6 + $0x2c0] sm:$0xff]
    %v2316 = vld [vmem:[%s6 + $0x2c8] sm:$0xff]
    %v2317 = vld [vmem:[%s6 + $0x2d0] sm:$0xff]
    %v2318 = vld [vmem:[%s6 + $0x2d8] sm:$0xff]
    %v2319 = vld [vmem:[%s6 + $0x2e0] sm:$0xff]
    %v2320 = vld [vmem:[%s6 + $0x2e8] sm:$0xff]
    %v2321 = vld [vmem:[%s6 + $0x2f0] sm:$0xff]
    %v2322 = vld [vmem:[%s6 + $0x2f8] sm:$0xff]
    %v2323 = vld [vmem:[%s6 + $0x300] sm:$0xff]
    %v2324 = vld [vmem:[%s6 + $0x308] sm:$0xff]
    %v2325 = vld [vmem:[%s6 + $0x310] sm:$0xff]
    %v2326 = vld [vmem:[%s6 + $0x318] sm:$0xff]
    %v2327 = vld [vmem:[%s6 + $0x320] sm:$0xff]
    %v2328 = vld [vmem:[%s6 + $0x328] sm:$0xff]
    %v2329 = vld [vmem:[%s6 + $0x330] sm:$0xff]
    %v2330 = vld [vmem:[%s6 + $0x338] sm:$0xff]
    %v2331 = vld [vmem:[%s6 + $0x340] sm:$0xf]
    %v2332 = vld [vmem:[%s6 + $0x348] sm:$0xf]
    %v2333 = vld [vmem:[%s7] sm:$0x3]
    %v2335 = vlaneseq
    %v2336 = vshrl.u32 %v2335, 7
    %v2337 = vsub.s32 0, %v2336
    %v2338 = vrot.slane %v2333, %v2337
    %v2339 = vlaneseq
    %v2340 = vshrl.u32 %v2339, 7
    %v2341 = vsub.s32 1, %v2340
    %v2342 = vrot.slane %v2333, %v2341
    %vm2345 = vcmask 293888
    %v2346 = vsel %vm2345, %v2203, 0
    %v2348 = vsel %vm2345, %v2205, 0
    %v2350 = vsel %vm2345, %v2207, 0
    %v2353 = vsel %vm1707, %v2331, 0
    %v2356 = vsel %vm1707, %v2332, 0
    %2358 = vmatprep.subr.mxu0 %v2228
    %2359 = vmatpush1.msra.mxu0 %v2227
    %2360 = vmatprep.subr.mxu0 %v2230
    %2361 = vmatpush1.msra.mxu0 %v2229
    %2362 = vmatprep.subr.mxu0 %v2232
    %2363 = vmatpush1.msra.mxu0 %v2231
    %2364 = vmatprep.subr.mxu0 %v2234
    %2365 = vmatpush1.msra.mxu0 %v2233
    %2366 = vmatprep.subr.mxu0 %v2236
    %2367 = vmatpush1.msra.mxu0 %v2235
    %2368 = vmatprep.subr.mxu0 %v2238
    %2369 = vmatpush1.msra.mxu0 %v2237
    %2370 = vmatprep.subr.mxu0 %v2240
    %2371 = vmatpush1.msra.mxu0 %v2239
    %2372 = vmatprep.subr.mxu0 %v2242
    %2373 = vmatpush1.msra.mxu0 %v2241
    %2374 = vmatprep.subr.mxu0 %v2244
    %2375 = vmatpush1.msra.mxu0 %v2243
    %2376 = vmatprep.subr.mxu0 %v2246
    %2377 = vmatpush1.msra.mxu0 %v2245
    %2378 = vmatprep.subr.mxu0 %v2248
    %2379 = vmatpush1.msra.mxu0 %v2247
    %2380 = vmatprep.subr.mxu0 %v2250
    %2381 = vmatpush1.msra.mxu0 %v2249
    %2382 = vmatprep.subr.mxu0 %v2252
    %2383 = vmatpush1.msra.mxu0 %v2251
    %2384 = vmatprep.subr.mxu0 %v2254
    %2385 = vmatpush1.msra.mxu0 %v2253
    %2386 = vmatprep.subr.mxu0 %v2256
    %2387 = vmatpush1.msra.mxu0 %v2255
    %2388 = vmatprep.subr.mxu0 %v2258
    %2389 = vmatpush1.msra.mxu0 %v2257
    %2390 = vmatprep.subr.mxu0 %v2260
    %2391 = vmatpush1.msra.mxu0 %v2259
    %2392 = vmatprep.subr.mxu0 %v2262
    %2393 = vmatpush1.msra.mxu0 %v2261
    %2394 = vmatprep.subr.mxu0 %v2264
    %2395 = vmatpush1.msra.mxu0 %v2263
    %2396 = vmatprep.subr.mxu0 %v2266
    %2397 = vmatpush1.msra.mxu0 %v2265
    %2398 = vmatprep.subr.mxu0 %v2268
    %2399 = vmatpush1.msra.mxu0 %v2267
    %2400 = vmatprep.subr.mxu0 %v2270
    %2401 = vmatpush1.msra.mxu0 %v2269
    %2402 = vmatprep.subr.mxu0 %v2272
    %2403 = vmatpush1.msra.mxu0 %v2271
    %2404 = vmatprep.subr.mxu0 %v2274
    %2405 = vmatpush1.msra.mxu0 %v2273
    %2406 = vmatprep.subr.mxu0 %v2276
    %2407 = vmatpush1.msra.mxu0 %v2275
    %2408 = vmatprep.subr.mxu0 %v2278
    %2409 = vmatpush1.msra.mxu0 %v2277
    %2410 = vmatprep.subr.mxu0 %v2280
    %2411 = vmatpush1.msra.mxu0 %v2279
    %2412 = vmatprep.subr.mxu0 %v2282
    %2413 = vmatpush1.msra.mxu0 %v2281
    %2414 = vmatprep.subr.mxu0 %v2284
    %2415 = vmatpush1.msra.mxu0 %v2283
    %2416 = vmatprep.subr.mxu0 %v2286
    %2417 = vmatpush1.msra.mxu0 %v2285
    %2418 = vmatprep.subr.mxu0 %v2288
    %2419 = vmatpush1.msra.mxu0 %v2287
    %2420 = vmatprep.subr.mxu0 %v2290
    %2421 = vmatpush1.msra.mxu0 %v2289
    %2422 = vmatprep.mubr.f32.mxu0 %v2220
    %2423 = vmatmul.mubr.f32.gmra.mrb[0].mxu0 %v2212
    %v2424 = vpop.f32.mrb[0].mxu0
    %v2425 = vadd.f32 %v2338, %v2424
    %v2426 = vpop.f32.mrb[0].mxu0
    %v2427 = vadd.f32 %v2342, %v2426
    %2428 = vmatprep.mubr.f32.mxu0 %v2221
    %2429 = vmatmul.mubr.f32.gmra.mrb[0].mxu0 %v2213
    %v2430 = vpop.f32.mrb[0].mxu0
    %v2431 = vadd.f32 %v2338, %v2430
    %v2432 = vpop.f32.mrb[0].mxu0
    %v2433 = vadd.f32 %v2342, %v2432
    %2434 = vmatprep.mubr.f32.mxu0 %v2222
    %2435 = vmatmul.mubr.f32.gmra.mrb[0].mxu0 %v2214
    %v2436 = vpop.f32.mrb[0].mxu0
    %v2437 = vadd.f32 %v2338, %v2436
    %v2438 = vpop.f32.mrb[0].mxu0
    %v2439 = vadd.f32 %v2342, %v2438
    %2440 = vdwg.mxu0
    %2441 = vmatprep.subr.mxu0 %v2292
    %2442 = vmatpush1.msra.mxu0 %v2291
    %2443 = vmatprep.subr.mxu0 %v2294
    %2444 = vmatpush1.msra.mxu0 %v2293
    %2445 = vmatprep.subr.mxu0 %v2296
    %2446 = vmatpush1.msra.mxu0 %v2295
    %2447 = vmatprep.subr.mxu0 %v2298
    %2448 = vmatpush1.msra.mxu0 %v2297
    %2449 = vmatprep.subr.mxu0 %v2300
    %2450 = vmatpush1.msra.mxu0 %v2299
    %2451 = vmatprep.subr.mxu0 %v2302
    %2452 = vmatpush1.msra.mxu0 %v2301
    %2453 = vmatprep.subr.mxu0 %v2304
    %2454 = vmatpush1.msra.mxu0 %v2303
    %2455 = vmatprep.subr.mxu0 %v2306
    %2456 = vmatpush1.msra.mxu0 %v2305
    %2457 = vmatprep.subr.mxu0 %v2308
    %2458 = vmatpush1.msra.mxu0 %v2307
    %2459 = vmatprep.subr.mxu0 %v2310
    %2460 = vmatpush1.msra.mxu0 %v2309
    %2461 = vmatprep.subr.mxu0 %v2312
    %2462 = vmatpush1.msra.mxu0 %v2311
    %2463 = vmatprep.subr.mxu0 %v2314
    %2464 = vmatpush1.msra.mxu0 %v2313
    %2465 = vmatprep.subr.mxu0 %v2316
    %2466 = vmatpush1.msra.mxu0 %v2315
    %2467 = vmatprep.subr.mxu0 %v2318
    %2468 = vmatpush1.msra.mxu0 %v2317
    %2469 = vmatprep.subr.mxu0 %v2320
    %2470 = vmatpush1.msra.mxu0 %v2319
    %2471 = vmatprep.subr.mxu0 %v2322
    %2472 = vmatpush1.msra.mxu0 %v2321
    %2473 = vmatprep.subr.mxu0 %v2324
    %2474 = vmatpush1.msra.mxu0 %v2323
    %2475 = vmatprep.subr.mxu0 %v2326
    %2476 = vmatpush1.msra.mxu0 %v2325
    %2477 = vmatprep.subr.mxu0 %v2328
    %2478 = vmatpush1.msra.mxu0 %v2327
    %2479 = vmatprep.subr.mxu0 %v2330
    %2480 = vmatpush1.msra.mxu0 %v2329
    %2481 = vmatprep.subr.mxu0 %v2356
    %2482 = vmatpush1.msra.mxu0 %v2353
    %2483 = vmatprep.subr.mxu0 0.0
    %2484 = vmatpush1.msra.mxu0 0.0
    %2485 = vmatprep.subr.mxu0 0.0
    %2486 = vmatpush1.msra.mxu0 0.0
    %2487 = vmatprep.subr.mxu0 0.0
    %2488 = vmatpush1.msra.mxu0 0.0
    %2489 = vmatprep.subr.mxu0 0.0
    %2490 = vmatpush1.msra.mxu0 0.0
    %2491 = vmatprep.subr.mxu0 0.0
    %2492 = vmatpush1.msra.mxu0 0.0
    %2493 = vmatprep.subr.mxu0 0.0
    %2494 = vmatpush1.msra.mxu0 0.0
    %2495 = vmatprep.subr.mxu0 0.0
    %2496 = vmatpush1.msra.mxu0 0.0
    %2497 = vmatprep.subr.mxu0 0.0
    %2498 = vmatpush1.msra.mxu0 0.0
    %2499 = vmatprep.subr.mxu0 0.0
    %2500 = vmatpush1.msra.mxu0 0.0
    %2501 = vmatprep.subr.mxu0 0.0
    %2502 = vmatpush1.msra.mxu0 0.0
    %2503 = vmatprep.subr.mxu0 0.0
    %2504 = vmatpush1.msra.mxu0 0.0
    %2505 = vmatprep.mubr.f32.mxu0 %v2346
    %2506 = vmatmul.mubr.f32.gmra.mrb[0].mxu0 %v2224
    %v2507 = vpop.f32.mrb[0].mxu0
    %v2508 = vadd.f32 %v2425, %v2507
    %v2509 = vpop.f32.mrb[0].mxu0
    %v2510 = vadd.f32 %v2427, %v2509
    %2511 = vmatprep.mubr.f32.mxu0 %v2348
    %2512 = vmatmul.mubr.f32.gmra.mrb[0].mxu0 %v2225
    %v2513 = vpop.f32.mrb[0].mxu0
    %v2514 = vadd.f32 %v2431, %v2513
    %v2515 = vpop.f32.mrb[0].mxu0
    %v2516 = vadd.f32 %v2433, %v2515
    %2517 = vmatprep.mubr.f32.mxu0 %v2350
    %2518 = vmatmul.mubr.f32.gmra.mrb[0].mxu0 %v2226
    %v2519 = vpop.f32.mrb[0].mxu0
    %v2520 = vadd.f32 %v2437, %v2519
    %v2521 = vpop.f32.mrb[0].mxu0
    %v2522 = vadd.f32 %v2439, %v2521
    %2523 = vdwg.mxu0
    %v2524 = vmax.f32 %v2508, 0.0
    %v2525 = vmax.f32 %v2510, 0.0
    %v2526 = vmax.f32 %v2514, 0.0
    %v2527 = vmax.f32 %v2516, 0.0
    %v2528 = vmax.f32 %v2520, 0.0
    %v2529 = vmax.f32 %v2522, 0.0
    %v2530 = vld [vmem:[%s8] sm:$0xff]
    %v2531 = vld [vmem:[%s8 + $0x8] sm:$0x3]
    %vm2532 = vcmask 162816
    %v2534 = vsel %vm2532, %v2530, 0
    %v2537 = vsel %vm2532, %v2531, 0
    %v2540 = vsel %vm1707, %v2528, 0
    %2542 = vmatprep.subr.mxu0 0.0
    %2543 = vmatpush1.msra.mxu0 %v2524
    %2544 = vmatprep.subr.mxu0 0.0
    %2545 = vmatpush1.msra.mxu0 %v2526
    %2546 = vmatprep.subr.mxu0 0.0
    %2547 = vmatpush1.msra.mxu0 %v2540
    %2548 = vmatprep.subr.mxu0 0.0
    %2549 = vmatpush1.msra.mxu0 0.0
    %2550 = vmatprep.subr.mxu0 0.0
    %2551 = vmatpush1.msra.mxu0 0.0
    %2552 = vmatprep.subr.mxu0 0.0
    %2553 = vmatpush1.msra.mxu0 0.0
    %2554 = vmatprep.subr.mxu0 0.0
    %2555 = vmatpush1.msra.mxu0 0.0
    %2556 = vmatprep.subr.mxu0 0.0
    %2557 = vmatpush1.msra.mxu0 0.0
    %2558 = vmatprep.subr.mxu0 0.0
    %2559 = vmatpush1.msra.mxu0 0.0
    %2560 = vmatprep.subr.mxu0 0.0
    %2561 = vmatpush1.msra.mxu0 0.0
    %2562 = vmatprep.subr.mxu0 0.0
    %2563 = vmatpush1.msra.mxu0 0.0
    %2564 = vmatprep.subr.mxu0 0.0
    %2565 = vmatpush1.msra.mxu0 0.0
    %2566 = vmatprep.subr.mxu0 0.0
    %2567 = vmatpush1.msra.mxu0 0.0
    %2568 = vmatprep.subr.mxu0 0.0
    %2569 = vmatpush1.msra.mxu0 0.0
    %2570 = vmatprep.subr.mxu0 0.0
    %2571 = vmatpush1.msra.mxu0 0.0
    %2572 = vmatprep.subr.mxu0 0.0
    %2573 = vmatpush1.msra.mxu0 0.0
    %2574 = vmatprep.subr.mxu0 0.0
    %2575 = vmatpush1.msra.mxu0 0.0
    %2576 = vmatprep.subr.mxu0 0.0
    %2577 = vmatpush1.msra.mxu0 0.0
    %2578 = vmatprep.subr.mxu0 0.0
    %2579 = vmatpush1.msra.mxu0 0.0
    %2580 = vmatprep.subr.mxu0 0.0
    %2581 = vmatpush1.msra.mxu0 0.0
    %2582 = vmatprep.subr.mxu0 0.0
    %2583 = vmatpush1.msra.mxu0 0.0
    %2584 = vmatprep.subr.mxu0 0.0
    %2585 = vmatpush1.msra.mxu0 0.0
    %2586 = vmatprep.subr.mxu0 0.0
    %2587 = vmatpush1.msra.mxu0 0.0
    %2588 = vmatprep.subr.mxu0 0.0
    %2589 = vmatpush1.msra.mxu0 0.0
    %2590 = vmatprep.subr.mxu0 0.0
    %2591 = vmatpush1.msra.mxu0 0.0
    %2592 = vmatprep.subr.mxu0 0.0
    %2593 = vmatpush1.msra.mxu0 0.0
    %2594 = vmatprep.subr.mxu0 0.0
    %2595 = vmatpush1.msra.mxu0 0.0
    %2596 = vmatprep.subr.mxu0 0.0
    %2597 = vmatpush1.msra.mxu0 0.0
    %2598 = vmatprep.subr.mxu0 0.0
    %2599 = vmatpush1.msra.mxu0 0.0
    %2600 = vmatprep.subr.mxu0 0.0
    %2601 = vmatpush1.msra.mxu0 0.0
    %2602 = vmatprep.subr.mxu0 0.0
    %2603 = vmatpush1.msra.mxu0 0.0
    %2604 = vmatprep.subr.mxu0 0.0
    %2605 = vmatpush1.msra.mxu0 0.0
    %2606 = vmatprep.mubr.f32.mxu0 0.0
    %2607 = vmatmul.mubr.f32.gmra.mrb[0].mxu0 %v2534
    %v2608 = vpop.f32.mrb[0].mxu0
    %v2609 = vadd.f32 0.0, %v2608
    %v2610 = vpop.f32.mrb[0].mxu0
    %2611 = vmatprep.mubr.f32.mxu0 0.0
    %2612 = vmatmul.mubr.f32.gmra.mrb[0].mxu0 %v2537
    %v2613 = vpop.f32.mrb[0].mxu0
    %v2614 = vadd.f32 0.0, %v2613
    %v2615 = vpop.f32.mrb[0].mxu0
    %2616 = vdwg.mxu0
    %2622 = vrot.lane.b32.xlu0 %v2524, 48
    %v2623 = vpop.permute.xlu0 %2622
    %2624 = vrot.lane.b32.xlu0 %v2525, 48
    %v2625 = vpop.permute.xlu0 %2624
    %2626 = vrot.lane.b32.xlu0 %v2526, 48
    %v2627 = vpop.permute.xlu0 %2626
    %2628 = vrot.lane.b32.xlu0 %v2527, 48
    %v2629 = vpop.permute.xlu0 %2628
    %2630 = vrot.lane.b32.xlu0 %v2528, 48
    %v2631 = vpop.permute.xlu0 %2630
    %2632 = vrot.lane.b32.xlu0 %v2529, 48
    %v2633 = vpop.permute.xlu0 %2632
    %vm2634 = vcmask 392192
    %v2635 = vsel %vm2634, %v2623, %v2625
    %v2636 = vsel %vm2634, %v2627, %v2629
    %v2637 = vsel %vm2634, %v2631, %v2633
    %v2640 = vsel %vm1707, %v2637, 0
    %2642 = vmatprep.subr.mxu0 0.0
    %2643 = vmatpush1.msra.mxu0 %v2635
    %2644 = vmatprep.subr.mxu0 0.0
    %2645 = vmatpush1.msra.mxu0 %v2636
    %2646 = vmatprep.subr.mxu0 0.0
    %2647 = vmatpush1.msra.mxu0 %v2640
    %2648 = vmatprep.subr.mxu0 0.0
    %2649 = vmatpush1.msra.mxu0 0.0
    %2650 = vmatprep.subr.mxu0 0.0
    %2651 = vmatpush1.msra.mxu0 0.0
    %2652 = vmatprep.subr.mxu0 0.0
    %2653 = vmatpush1.msra.mxu0 0.0
    %2654 = vmatprep.subr.mxu0 0.0
    %2655 = vmatpush1.msra.mxu0 0.0
    %2656 = vmatprep.subr.mxu0 0.0
    %2657 = vmatpush1.msra.mxu0 0.0
    %2658 = vmatprep.subr.mxu0 0.0
    %2659 = vmatpush1.msra.mxu0 0.0
    %2660 = vmatprep.subr.mxu0 0.0
    %2661 = vmatpush1.msra.mxu0 0.0
    %2662 = vmatprep.subr.mxu0 0.0
    %2663 = vmatpush1.msra.mxu0 0.0
    %2664 = vmatprep.subr.mxu0 0.0
    %2665 = vmatpush1.msra.mxu0 0.0
    %2666 = vmatprep.subr.mxu0 0.0
    %2667 = vmatpush1.msra.mxu0 0.0
    %2668 = vmatprep.subr.mxu0 0.0
    %2669 = vmatpush1.msra.mxu0 0.0
    %2670 = vmatprep.subr.mxu0 0.0
    %2671 = vmatpush1.msra.mxu0 0.0
    %2672 = vmatprep.subr.mxu0 0.0
    %2673 = vmatpush1.msra.mxu0 0.0
    %2674 = vmatprep.subr.mxu0 0.0
    %2675 = vmatpush1.msra.mxu0 0.0
    %2676 = vmatprep.subr.mxu0 0.0
    %2677 = vmatpush1.msra.mxu0 0.0
    %2678 = vmatprep.subr.mxu0 0.0
    %2679 = vmatpush1.msra.mxu0 0.0
    %2680 = vmatprep.subr.mxu0 0.0
    %2681 = vmatpush1.msra.mxu0 0.0
    %2682 = vmatprep.subr.mxu0 0.0
    %2683 = vmatpush1.msra.mxu0 0.0
    %2684 = vmatprep.subr.mxu0 0.0
    %2685 = vmatpush1.msra.mxu0 0.0
    %2686 = vmatprep.subr.mxu0 0.0
    %2687 = vmatpush1.msra.mxu0 0.0
    %2688 = vmatprep.subr.mxu0 0.0
    %2689 = vmatpush1.msra.mxu0 0.0
    %2690 = vmatprep.subr.mxu0 0.0
    %2691 = vmatpush1.msra.mxu0 0.0
    %2692 = vmatprep.subr.mxu0 0.0
    %2693 = vmatpush1.msra.mxu0 0.0
    %2694 = vmatprep.subr.mxu0 0.0
    %2695 = vmatpush1.msra.mxu0 0.0
    %2696 = vmatprep.subr.mxu0 0.0
    %2697 = vmatpush1.msra.mxu0 0.0
    %2698 = vmatprep.subr.mxu0 0.0
    %2699 = vmatpush1.msra.mxu0 0.0
    %2700 = vmatprep.subr.mxu0 0.0
    %2701 = vmatpush1.msra.mxu0 0.0
    %2702 = vmatprep.subr.mxu0 0.0
    %2703 = vmatpush1.msra.mxu0 0.0
    %2704 = vmatprep.subr.mxu0 0.0
    %2705 = vmatpush1.msra.mxu0 0.0
    %2706 = vmatprep.mubr.f32.mxu0 0.0
    %2707 = vmatmul.mubr.f32.gmra.mrb[0].mxu0 %v2534
    %v2708 = vpop.f32.mrb[0].mxu0
    %v2709 = vadd.f32 0.0, %v2708
    %v2710 = vpop.f32.mrb[0].mxu0
    %2711 = vmatprep.mubr.f32.mxu0 0.0
    %2712 = vmatmul.mubr.f32.gmra.mrb[0].mxu0 %v2537
    %v2713 = vpop.f32.mrb[0].mxu0
    %v2714 = vadd.f32 0.0, %v2713
    %v2715 = vpop.f32.mrb[0].mxu0
    %2716 = vdwg.mxu0
    %s2717 = scalar_lea.vmem %s8, 16
    %v2718 = vld [vmem:[%s2717] sm:$0xff]
    %v2719 = vld [vmem:[%s2717 + $0x8] sm:$0x3]
    %v2721 = vsel %vm2532, %v2718, 0
    %v2724 = vsel %vm2532, %v2719, 0
    %2726 = vmatprep.subr.mxu0 0.0
    %2727 = vmatpush1.msra.mxu0 %v2524
    %2728 = vmatprep.subr.mxu0 0.0
    %2729 = vmatpush1.msra.mxu0 %v2526
    %2730 = vmatprep.subr.mxu0 0.0
    %2731 = vmatpush1.msra.mxu0 %v2540
    %2732 = vmatprep.subr.mxu0 0.0
    %2733 = vmatpush1.msra.mxu0 0.0
    %2734 = vmatprep.subr.mxu0 0.0
    %2735 = vmatpush1.msra.mxu0 0.0
    %2736 = vmatprep.subr.mxu0 0.0
    %2737 = vmatpush1.msra.mxu0 0.0
    %2738 = vmatprep.subr.mxu0 0.0
    %2739 = vmatpush1.msra.mxu0 0.0
    %2740 = vmatprep.subr.mxu0 0.0
    %2741 = vmatpush1.msra.mxu0 0.0
    %2742 = vmatprep.subr.mxu0 0.0
    %2743 = vmatpush1.msra.mxu0 0.0
    %2744 = vmatprep.subr.mxu0 0.0
    %2745 = vmatpush1.msra.mxu0 0.0
    %2746 = vmatprep.subr.mxu0 0.0
    %2747 = vmatpush1.msra.mxu0 0.0
    %2748 = vmatprep.subr.mxu0 0.0
    %2749 = vmatpush1.msra.mxu0 0.0
    %2750 = vmatprep.subr.mxu0 0.0
    %2751 = vmatpush1.msra.mxu0 0.0
    %2752 = vmatprep.subr.mxu0 0.0
    %2753 = vmatpush1.msra.mxu0 0.0
    %2754 = vmatprep.subr.mxu0 0.0
    %2755 = vmatpush1.msra.mxu0 0.0
    %2756 = vmatprep.subr.mxu0 0.0
    %2757 = vmatpush1.msra.mxu0 0.0
    %2758 = vmatprep.subr.mxu0 0.0
    %2759 = vmatpush1.msra.mxu0 0.0
    %2760 = vmatprep.subr.mxu0 0.0
    %2761 = vmatpush1.msra.mxu0 0.0
    %2762 = vmatprep.subr.mxu0 0.0
    %2763 = vmatpush1.msra.mxu0 0.0
    %2764 = vmatprep.subr.mxu0 0.0
    %2765 = vmatpush1.msra.mxu0 0.0
    %2766 = vmatprep.subr.mxu0 0.0
    %2767 = vmatpush1.msra.mxu0 0.0
    %2768 = vmatprep.subr.mxu0 0.0
    %2769 = vmatpush1.msra.mxu0 0.0
    %2770 = vmatprep.subr.mxu0 0.0
    %2771 = vmatpush1.msra.mxu0 0.0
    %2772 = vmatprep.subr.mxu0 0.0
    %2773 = vmatpush1.msra.mxu0 0.0
    %2774 = vmatprep.subr.mxu0 0.0
    %2775 = vmatpush1.msra.mxu0 0.0
    %2776 = vmatprep.subr.mxu0 0.0
    %2777 = vmatpush1.msra.mxu0 0.0
    %2778 = vmatprep.subr.mxu0 0.0
    %2779 = vmatpush1.msra.mxu0 0.0
    %2780 = vmatprep.subr.mxu0 0.0
    %2781 = vmatpush1.msra.mxu0 0.0
    %2782 = vmatprep.subr.mxu0 0.0
    %2783 = vmatpush1.msra.mxu0 0.0
    %2784 = vmatprep.subr.mxu0 0.0
    %2785 = vmatpush1.msra.mxu0 0.0
    %2786 = vmatprep.subr.mxu0 0.0
    %2787 = vmatpush1.msra.mxu0 0.0
    %2788 = vmatprep.subr.mxu0 0.0
    %2789 = vmatpush1.msra.mxu0 0.0
    %2790 = vmatprep.mubr.f32.mxu0 0.0
    %2791 = vmatmul.mubr.f32.gmra.mrb[0].mxu0 %v2721
    %v2792 = vpop.f32.mrb[0].mxu0
    %v2793 = vadd.f32 0.0, %v2792
    %v2794 = vpop.f32.mrb[0].mxu0
    %2795 = vmatprep.mubr.f32.mxu0 0.0
    %2796 = vmatmul.mubr.f32.gmra.mrb[0].mxu0 %v2724
    %v2797 = vpop.f32.mrb[0].mxu0
    %v2798 = vadd.f32 0.0, %v2797
    %v2799 = vpop.f32.mrb[0].mxu0
    %2800 = vdwg.mxu0
    %2801 = vmatprep.subr.mxu0 0.0
    %2802 = vmatpush1.msra.mxu0 %v2635
    %2803 = vmatprep.subr.mxu0 0.0
    %2804 = vmatpush1.msra.mxu0 %v2636
    %2805 = vmatprep.subr.mxu0 0.0
    %2806 = vmatpush1.msra.mxu0 %v2640
    %2807 = vmatprep.subr.mxu0 0.0
    %2808 = vmatpush1.msra.mxu0 0.0
    %2809 = vmatprep.subr.mxu0 0.0
    %2810 = vmatpush1.msra.mxu0 0.0
    %2811 = vmatprep.subr.mxu0 0.0
    %2812 = vmatpush1.msra.mxu0 0.0
    %2813 = vmatprep.subr.mxu0 0.0
    %2814 = vmatpush1.msra.mxu0 0.0
    %2815 = vmatprep.subr.mxu0 0.0
    %2816 = vmatpush1.msra.mxu0 0.0
    %2817 = vmatprep.subr.mxu0 0.0
    %2818 = vmatpush1.msra.mxu0 0.0
    %2819 = vmatprep.subr.mxu0 0.0
    %2820 = vmatpush1.msra.mxu0 0.0
    %2821 = vmatprep.subr.mxu0 0.0
    %2822 = vmatpush1.msra.mxu0 0.0
    %2823 = vmatprep.subr.mxu0 0.0
    %2824 = vmatpush1.msra.mxu0 0.0
    %2825 = vmatprep.subr.mxu0 0.0
    %2826 = vmatpush1.msra.mxu0 0.0
    %2827 = vmatprep.subr.mxu0 0.0
    %2828 = vmatpush1.msra.mxu0 0.0
    %2829 = vmatprep.subr.mxu0 0.0
    %2830 = vmatpush1.msra.mxu0 0.0
    %2831 = vmatprep.subr.mxu0 0.0
    %2832 = vmatpush1.msra.mxu0 0.0
    %2833 = vmatprep.subr.mxu0 0.0
    %2834 = vmatpush1.msra.mxu0 0.0
    %2835 = vmatprep.subr.mxu0 0.0
    %2836 = vmatpush1.msra.mxu0 0.0
    %2837 = vmatprep.subr.mxu0 0.0
    %2838 = vmatpush1.msra.mxu0 0.0
    %2839 = vmatprep.subr.mxu0 0.0
    %2840 = vmatpush1.msra.mxu0 0.0
    %2841 = vmatprep.subr.mxu0 0.0
    %2842 = vmatpush1.msra.mxu0 0.0
    %2843 = vmatprep.subr.mxu0 0.0
    %2844 = vmatpush1.msra.mxu0 0.0
    %2845 = vmatprep.subr.mxu0 0.0
    %2846 = vmatpush1.msra.mxu0 0.0
    %2847 = vmatprep.subr.mxu0 0.0
    %2848 = vmatpush1.msra.mxu0 0.0
    %2849 = vmatprep.subr.mxu0 0.0
    %2850 = vmatpush1.msra.mxu0 0.0
    %2851 = vmatprep.subr.mxu0 0.0
    %2852 = vmatpush1.msra.mxu0 0.0
    %2853 = vmatprep.subr.mxu0 0.0
    %2854 = vmatpush1.msra.mxu0 0.0
    %2855 = vmatprep.subr.mxu0 0.0
    %2856 = vmatpush1.msra.mxu0 0.0
    %2857 = vmatprep.subr.mxu0 0.0
    %2858 = vmatpush1.msra.mxu0 0.0
    %2859 = vmatprep.subr.mxu0 0.0
    %2860 = vmatpush1.msra.mxu0 0.0
    %2861 = vmatprep.subr.mxu0 0.0
    %2862 = vmatpush1.msra.mxu0 0.0
    %2863 = vmatprep.subr.mxu0 0.0
    %2864 = vmatpush1.msra.mxu0 0.0
    %2865 = vmatprep.mubr.f32.mxu0 0.0
    %2866 = vmatmul.mubr.f32.gmra.mrb[0].mxu0 %v2721
    %v2867 = vpop.f32.mrb[0].mxu0
    %v2868 = vadd.f32 0.0, %v2867
    %v2869 = vpop.f32.mrb[0].mxu0
    %2870 = vmatprep.mubr.f32.mxu0 0.0
    %2871 = vmatmul.mubr.f32.gmra.mrb[0].mxu0 %v2724
    %v2872 = vpop.f32.mrb[0].mxu0
    %v2873 = vadd.f32 0.0, %v2872
    %v2874 = vpop.f32.mrb[0].mxu0
    %2875 = vdwg.mxu0
    %vm2876 = vcmp.gt.f32.partialorder %v2709, %v2609
    %vm2877 = vcmp.gt.f32.partialorder %v2714, %v2614
    %v2878 = vsel %vm2876, %v2709, %v2609
    %v2879 = vsel %vm2877, %v2714, %v2614
    %v2880 = vsel %vm2876, 1, 0
    %v2881 = vsel %vm2877, 1, 0
    %vm2882 = vcmp.gt.f32.partialorder %v2793, %v2878
    %vm2883 = vcmp.gt.f32.partialorder %v2798, %v2879
    %v2884 = vsel %vm2882, %v2793, %v2878
    %v2885 = vsel %vm2883, %v2798, %v2879
    %v2886 = vsel %vm2882, 2, %v2880
    %v2887 = vsel %vm2883, 2, %v2881
    %vm2888 = vcmp.gt.f32.partialorder %v2868, %v2884
    %vm2889 = vcmp.gt.f32.partialorder %v2873, %v2885
    %v2890 = vsel %vm2888, %v2868, %v2884
    %v2891 = vsel %vm2889, %v2873, %v2885
    %v2892 = vsel %vm2888, 3, %v2886
    %v2893 = vsel %vm2889, 3, %v2887
    %v2894 = vld [vmem:[%s9] sm:$0x3]
    %vm2895 = vcmask 80896
    %v2897 = vsel %vm2895, %v2894, 0
    %vm2899 = vcmask 1041408
    %v2901 = vsel %vm2899, %v2891, 0
    %2903 = vmatprep.subr.mxu0 0.0
    %2904 = vmatpush1.msra.mxu0 %v2890
    %2905 = vmatprep.subr.mxu0 0.0
    %2906 = vmatpush1.msra.mxu0 %v2901
    %2907 = vmatprep.subr.mxu0 0.0
    %2908 = vmatpush1.msra.mxu0 0.0
    %2909 = vmatprep.subr.mxu0 0.0
    %2910 = vmatpush1.msra.mxu0 0.0
    %2911 = vmatprep.subr.mxu0 0.0
    %2912 = vmatpush1.msra.mxu0 0.0
    %2913 = vmatprep.subr.mxu0 0.0
    %2914 = vmatpush1.msra.mxu0 0.0
    %2915 = vmatprep.subr.mxu0 0.0
    %2916 = vmatpush1.msra.mxu0 0.0
    %2917 = vmatprep.subr.mxu0 0.0
    %2918 = vmatpush1.msra.mxu0 0.0
    %2919 = vmatprep.subr.mxu0 0.0
    %2920 = vmatpush1.msra.mxu0 0.0
    %2921 = vmatprep.subr.mxu0 0.0
    %2922 = vmatpush1.msra.mxu0 0.0
    %2923 = vmatprep.subr.mxu0 0.0
    %2924 = vmatpush1.msra.mxu0 0.0
    %2925 = vmatprep.subr.mxu0 0.0
    %2926 = vmatpush1.msra.mxu0 0.0
    %2927 = vmatprep.subr.mxu0 0.0
    %2928 = vmatpush1.msra.mxu0 0.0
    %2929 = vmatprep.subr.mxu0 0.0
    %2930 = vmatpush1.msra.mxu0 0.0
    %2931 = vmatprep.subr.mxu0 0.0
    %2932 = vmatpush1.msra.mxu0 0.0
    %2933 = vmatprep.subr.mxu0 0.0
    %2934 = vmatpush1.msra.mxu0 0.0
    %2935 = vmatprep.subr.mxu0 0.0
    %2936 = vmatpush1.msra.mxu0 0.0
    %2937 = vmatprep.subr.mxu0 0.0
    %2938 = vmatpush1.msra.mxu0 0.0
    %2939 = vmatprep.subr.mxu0 0.0
    %2940 = vmatpush1.msra.mxu0 0.0
    %2941 = vmatprep.subr.mxu0 0.0
    %2942 = vmatpush1.msra.mxu0 0.0
    %2943 = vmatprep.subr.mxu0 0.0
    %2944 = vmatpush1.msra.mxu0 0.0
    %2945 = vmatprep.subr.mxu0 0.0
    %2946 = vmatpush1.msra.mxu0 0.0
    %2947 = vmatprep.subr.mxu0 0.0
    %2948 = vmatpush1.msra.mxu0 0.0
    %2949 = vmatprep.subr.mxu0 0.0
    %2950 = vmatpush1.msra.mxu0 0.0
    %2951 = vmatprep.subr.mxu0 0.0
    %2952 = vmatpush1.msra.mxu0 0.0
    %2953 = vmatprep.subr.mxu0 0.0
    %2954 = vmatpush1.msra.mxu0 0.0
    %2955 = vmatprep.subr.mxu0 0.0
    %2956 = vmatpush1.msra.mxu0 0.0
    %2957 = vmatprep.subr.mxu0 0.0
    %2958 = vmatpush1.msra.mxu0 0.0
    %2959 = vmatprep.subr.mxu0 0.0
    %2960 = vmatpush1.msra.mxu0 0.0
    %2961 = vmatprep.subr.mxu0 0.0
    %2962 = vmatpush1.msra.mxu0 0.0
    %2963 = vmatprep.subr.mxu0 0.0
    %2964 = vmatpush1.msra.mxu0 0.0
    %2965 = vmatprep.subr.mxu0 0.0
    %2966 = vmatpush1.msra.mxu0 0.0
    %2967 = vmatprep.mubr.f32.mxu0 0.0
    %2968 = vmatmul.mubr.f32.gmra.mrb[0].mxu0 %v2897
    %v2969 = vpop.f32.mrb[0].mxu0
    %v2970 = vadd.f32 0.0, %v2969
    %v2971 = vpop.f32.mrb[0].mxu0
    %2972 = vdwg.mxu0
    %s2973 = scalar_lea.vmem %s9, 2
    %v2974 = vld [vmem:[%s2973] sm:$0x3]
    %v2976 = vsel %vm2895, %v2974, 0
    %2978 = vmatprep.subr.mxu0 0.0
    %2979 = vmatpush1.msra.mxu0 %v2890
    %2980 = vmatprep.subr.mxu0 0.0
    %2981 = vmatpush1.msra.mxu0 %v2901
    %2982 = vmatprep.subr.mxu0 0.0
    %2983 = vmatpush1.msra.mxu0 0.0
    %2984 = vmatprep.subr.mxu0 0.0
    %2985 = vmatpush1.msra.mxu0 0.0
    %2986 = vmatprep.subr.mxu0 0.0
    %2987 = vmatpush1.msra.mxu0 0.0
    %2988 = vmatprep.subr.mxu0 0.0
    %2989 = vmatpush1.msra.mxu0 0.0
    %2990 = vmatprep.subr.mxu0 0.0
    %2991 = vmatpush1.msra.mxu0 0.0
    %2992 = vmatprep.subr.mxu0 0.0
    %2993 = vmatpush1.msra.mxu0 0.0
    %2994 = vmatprep.subr.mxu0 0.0
    %2995 = vmatpush1.msra.mxu0 0.0
    %2996 = vmatprep.subr.mxu0 0.0
    %2997 = vmatpush1.msra.mxu0 0.0
    %2998 = vmatprep.subr.mxu0 0.0
    %2999 = vmatpush1.msra.mxu0 0.0
    %3000 = vmatprep.subr.mxu0 0.0
    %3001 = vmatpush1.msra.mxu0 0.0
    %3002 = vmatprep.subr.mxu0 0.0
    %3003 = vmatpush1.msra.mxu0 0.0
    %3004 = vmatprep.subr.mxu0 0.0
    %3005 = vmatpush1.msra.mxu0 0.0
    %3006 = vmatprep.subr.mxu0 0.0
    %3007 = vmatpush1.msra.mxu0 0.0
    %3008 = vmatprep.subr.mxu0 0.0
    %3009 = vmatpush1.msra.mxu0 0.0
    %3010 = vmatprep.subr.mxu0 0.0
    %3011 = vmatpush1.msra.mxu0 0.0
    %3012 = vmatprep.subr.mxu0 0.0
    %3013 = vmatpush1.msra.mxu0 0.0
    %3014 = vmatprep.subr.mxu0 0.0
    %3015 = vmatpush1.msra.mxu0 0.0
    %3016 = vmatprep.subr.mxu0 0.0
    %3017 = vmatpush1.msra.mxu0 0.0
    %3018 = vmatprep.subr.mxu0 0.0
    %3019 = vmatpush1.msra.mxu0 0.0
    %3020 = vmatprep.subr.mxu0 0.0
    %3021 = vmatpush1.msra.mxu0 0.0
    %3022 = vmatprep.subr.mxu0 0.0
    %3023 = vmatpush1.msra.mxu0 0.0
    %3024 = vmatprep.subr.mxu0 0.0
    %3025 = vmatpush1.msra.mxu0 0.0
    %3026 = vmatprep.subr.mxu0 0.0
    %3027 = vmatpush1.msra.mxu0 0.0
    %3028 = vmatprep.subr.mxu0 0.0
    %3029 = vmatpush1.msra.mxu0 0.0
    %3030 = vmatprep.subr.mxu0 0.0
    %3031 = vmatpush1.msra.mxu0 0.0
    %3032 = vmatprep.subr.mxu0 0.0
    %3033 = vmatpush1.msra.mxu0 0.0
    %3034 = vmatprep.subr.mxu0 0.0
    %3035 = vmatpush1.msra.mxu0 0.0
    %3036 = vmatprep.subr.mxu0 0.0
    %3037 = vmatpush1.msra.mxu0 0.0
    %3038 = vmatprep.subr.mxu0 0.0
    %3039 = vmatpush1.msra.mxu0 0.0
    %3040 = vmatprep.subr.mxu0 0.0
    %3041 = vmatpush1.msra.mxu0 0.0
    %3042 = vmatprep.mubr.f32.mxu0 0.0
    %3043 = vmatmul.mubr.f32.gmra.mrb[0].mxu0 %v2976
    %v3044 = vpop.f32.mrb[0].mxu0
    %v3045 = vadd.f32 0.0, %v3044
    %v3046 = vpop.f32.mrb[0].mxu0
    %3047 = vdwg.mxu0
    %s3048 = scalar_lea.vmem %s9, 4
    %v3049 = vld [vmem:[%s3048] sm:$0x3]
    %v3051 = vsel %vm2895, %v3049, 0
    %3053 = vmatprep.subr.mxu0 0.0
    %3054 = vmatpush1.msra.mxu0 %v2890
    %3055 = vmatprep.subr.mxu0 0.0
    %3056 = vmatpush1.msra.mxu0 %v2901
    %3057 = vmatprep.subr.mxu0 0.0
    %3058 = vmatpush1.msra.mxu0 0.0
    %3059 = vmatprep.subr.mxu0 0.0
    %3060 = vmatpush1.msra.mxu0 0.0
    %3061 = vmatprep.subr.mxu0 0.0
    %3062 = vmatpush1.msra.mxu0 0.0
    %3063 = vmatprep.subr.mxu0 0.0
    %3064 = vmatpush1.msra.mxu0 0.0
    %3065 = vmatprep.subr.mxu0 0.0
    %3066 = vmatpush1.msra.mxu0 0.0
    %3067 = vmatprep.subr.mxu0 0.0
    %3068 = vmatpush1.msra.mxu0 0.0
    %3069 = vmatprep.subr.mxu0 0.0
    %3070 = vmatpush1.msra.mxu0 0.0
    %3071 = vmatprep.subr.mxu0 0.0
    %3072 = vmatpush1.msra.mxu0 0.0
    %3073 = vmatprep.subr.mxu0 0.0
    %3074 = vmatpush1.msra.mxu0 0.0
    %3075 = vmatprep.subr.mxu0 0.0
    %3076 = vmatpush1.msra.mxu0 0.0
    %3077 = vmatprep.subr.mxu0 0.0
    %3078 = vmatpush1.msra.mxu0 0.0
    %3079 = vmatprep.subr.mxu0 0.0
    %3080 = vmatpush1.msra.mxu0 0.0
    %3081 = vmatprep.subr.mxu0 0.0
    %3082 = vmatpush1.msra.mxu0 0.0
    %3083 = vmatprep.subr.mxu0 0.0
    %3084 = vmatpush1.msra.mxu0 0.0
    %3085 = vmatprep.subr.mxu0 0.0
    %3086 = vmatpush1.msra.mxu0 0.0
    %3087 = vmatprep.subr.mxu0 0.0
    %3088 = vmatpush1.msra.mxu0 0.0
    %3089 = vmatprep.subr.mxu0 0.0
    %3090 = vmatpush1.msra.mxu0 0.0
    %3091 = vmatprep.subr.mxu0 0.0
    %3092 = vmatpush1.msra.mxu0 0.0
    %3093 = vmatprep.subr.mxu0 0.0
    %3094 = vmatpush1.msra.mxu0 0.0
    %3095 = vmatprep.subr.mxu0 0.0
    %3096 = vmatpush1.msra.mxu0 0.0
    %3097 = vmatprep.subr.mxu0 0.0
    %3098 = vmatpush1.msra.mxu0 0.0
    %3099 = vmatprep.subr.mxu0 0.0
    %3100 = vmatpush1.msra.mxu0 0.0
    %3101 = vmatprep.subr.mxu0 0.0
    %3102 = vmatpush1.msra.mxu0 0.0
    %3103 = vmatprep.subr.mxu0 0.0
    %3104 = vmatpush1.msra.mxu0 0.0
    %3105 = vmatprep.subr.mxu0 0.0
    %3106 = vmatpush1.msra.mxu0 0.0
    %3107 = vmatprep.subr.mxu0 0.0
    %3108 = vmatpush1.msra.mxu0 0.0
    %3109 = vmatprep.subr.mxu0 0.0
    %3110 = vmatpush1.msra.mxu0 0.0
    %3111 = vmatprep.subr.mxu0 0.0
    %3112 = vmatpush1.msra.mxu0 0.0
    %3113 = vmatprep.subr.mxu0 0.0
    %3114 = vmatpush1.msra.mxu0 0.0
    %3115 = vmatprep.subr.mxu0 0.0
    %3116 = vmatpush1.msra.mxu0 0.0
    %3117 = vmatprep.mubr.f32.mxu0 0.0
    %3118 = vmatmul.mubr.f32.gmra.mrb[0].mxu0 %v3051
    %v3119 = vpop.f32.mrb[0].mxu0
    %v3120 = vadd.f32 0.0, %v3119
    %v3121 = vpop.f32.mrb[0].mxu0
    %3122 = vdwg.mxu0
    %s3123 = scalar_lea.vmem %s9, 6
    %v3124 = vld [vmem:[%s3123] sm:$0x3]
    %v3126 = vsel %vm2895, %v3124, 0
    %3128 = vmatprep.subr.mxu0 0.0
    %3129 = vmatpush1.msra.mxu0 %v2890
    %3130 = vmatprep.subr.mxu0 0.0
    %3131 = vmatpush1.msra.mxu0 %v2901
    %3132 = vmatprep.subr.mxu0 0.0
    %3133 = vmatpush1.msra.mxu0 0.0
    %3134 = vmatprep.subr.mxu0 0.0
    %3135 = vmatpush1.msra.mxu0 0.0
    %3136 = vmatprep.subr.mxu0 0.0
    %3137 = vmatpush1.msra.mxu0 0.0
    %3138 = vmatprep.subr.mxu0 0.0
    %3139 = vmatpush1.msra.mxu0 0.0
    %3140 = vmatprep.subr.mxu0 0.0
    %3141 = vmatpush1.msra.mxu0 0.0
    %3142 = vmatprep.subr.mxu0 0.0
    %3143 = vmatpush1.msra.mxu0 0.0
    %3144 = vmatprep.subr.mxu0 0.0
    %3145 = vmatpush1.msra.mxu0 0.0
    %3146 = vmatprep.subr.mxu0 0.0
    %3147 = vmatpush1.msra.mxu0 0.0
    %3148 = vmatprep.subr.mxu0 0.0
    %3149 = vmatpush1.msra.mxu0 0.0
    %3150 = vmatprep.subr.mxu0 0.0
    %3151 = vmatpush1.msra.mxu0 0.0
    %3152 = vmatprep.subr.mxu0 0.0
    %3153 = vmatpush1.msra.mxu0 0.0
    %3154 = vmatprep.subr.mxu0 0.0
    %3155 = vmatpush1.msra.mxu0 0.0
    %3156 = vmatprep.subr.mxu0 0.0
    %3157 = vmatpush1.msra.mxu0 0.0
    %3158 = vmatprep.subr.mxu0 0.0
    %3159 = vmatpush1.msra.mxu0 0.0
    %3160 = vmatprep.subr.mxu0 0.0
    %3161 = vmatpush1.msra.mxu0 0.0
    %3162 = vmatprep.subr.mxu0 0.0
    %3163 = vmatpush1.msra.mxu0 0.0
    %3164 = vmatprep.subr.mxu0 0.0
    %3165 = vmatpush1.msra.mxu0 0.0
    %3166 = vmatprep.subr.mxu0 0.0
    %3167 = vmatpush1.msra.mxu0 0.0
    %3168 = vmatprep.subr.mxu0 0.0
    %3169 = vmatpush1.msra.mxu0 0.0
    %3170 = vmatprep.subr.mxu0 0.0
    %3171 = vmatpush1.msra.mxu0 0.0
    %3172 = vmatprep.subr.mxu0 0.0
    %3173 = vmatpush1.msra.mxu0 0.0
    %3174 = vmatprep.subr.mxu0 0.0
    %3175 = vmatpush1.msra.mxu0 0.0
    %3176 = vmatprep.subr.mxu0 0.0
    %3177 = vmatpush1.msra.mxu0 0.0
    %3178 = vmatprep.subr.mxu0 0.0
    %3179 = vmatpush1.msra.mxu0 0.0
    %3180 = vmatprep.subr.mxu0 0.0
    %3181 = vmatpush1.msra.mxu0 0.0
    %3182 = vmatprep.subr.mxu0 0.0
    %3183 = vmatpush1.msra.mxu0 0.0
    %3184 = vmatprep.subr.mxu0 0.0
    %3185 = vmatpush1.msra.mxu0 0.0
    %3186 = vmatprep.subr.mxu0 0.0
    %3187 = vmatpush1.msra.mxu0 0.0
    %3188 = vmatprep.subr.mxu0 0.0
    %3189 = vmatpush1.msra.mxu0 0.0
    %3190 = vmatprep.subr.mxu0 0.0
    %3191 = vmatpush1.msra.mxu0 0.0
    %3192 = vmatprep.mubr.f32.mxu0 0.0
    %3193 = vmatmul.mubr.f32.gmra.mrb[0].mxu0 %v3126
    %v3194 = vpop.f32.mrb[0].mxu0
    %v3195 = vadd.f32 0.0, %v3194
    %v3196 = vpop.f32.mrb[0].mxu0
    %3197 = vdwg.mxu0
    %s3198 = scalar_lea.vmem %s9, 8
    %v3199 = vld [vmem:[%s3198] sm:$0x3]
    %v3201 = vsel %vm2895, %v3199, 0
    %3203 = vmatprep.subr.mxu0 0.0
    %3204 = vmatpush1.msra.mxu0 %v2890
    %3205 = vmatprep.subr.mxu0 0.0
    %3206 = vmatpush1.msra.mxu0 %v2901
    %3207 = vmatprep.subr.mxu0 0.0
    %3208 = vmatpush1.msra.mxu0 0.0
    %3209 = vmatprep.subr.mxu0 0.0
    %3210 = vmatpush1.msra.mxu0 0.0
    %3211 = vmatprep.subr.mxu0 0.0
    %3212 = vmatpush1.msra.mxu0 0.0
    %3213 = vmatprep.subr.mxu0 0.0
    %3214 = vmatpush1.msra.mxu0 0.0
    %3215 = vmatprep.subr.mxu0 0.0
    %3216 = vmatpush1.msra.mxu0 0.0
    %3217 = vmatprep.subr.mxu0 0.0
    %3218 = vmatpush1.msra.mxu0 0.0
    %3219 = vmatprep.subr.mxu0 0.0
    %3220 = vmatpush1.msra.mxu0 0.0
    %3221 = vmatprep.subr.mxu0 0.0
    %3222 = vmatpush1.msra.mxu0 0.0
    %3223 = vmatprep.subr.mxu0 0.0
    %3224 = vmatpush1.msra.mxu0 0.0
    %3225 = vmatprep.subr.mxu0 0.0
    %3226 = vmatpush1.msra.mxu0 0.0
    %3227 = vmatprep.subr.mxu0 0.0
    %3228 = vmatpush1.msra.mxu0 0.0
    %3229 = vmatprep.subr.mxu0 0.0
    %3230 = vmatpush1.msra.mxu0 0.0
    %3231 = vmatprep.subr.mxu0 0.0
    %3232 = vmatpush1.msra.mxu0 0.0
    %3233 = vmatprep.subr.mxu0 0.0
    %3234 = vmatpush1.msra.mxu0 0.0
    %3235 = vmatprep.subr.mxu0 0.0
    %3236 = vmatpush1.msra.mxu0 0.0
    %3237 = vmatprep.subr.mxu0 0.0
    %3238 = vmatpush1.msra.mxu0 0.0
    %3239 = vmatprep.subr.mxu0 0.0
    %3240 = vmatpush1.msra.mxu0 0.0
    %3241 = vmatprep.subr.mxu0 0.0
    %3242 = vmatpush1.msra.mxu0 0.0
    %3243 = vmatprep.subr.mxu0 0.0
    %3244 = vmatpush1.msra.mxu0 0.0
    %3245 = vmatprep.subr.mxu0 0.0
    %3246 = vmatpush1.msra.mxu0 0.0
    %3247 = vmatprep.subr.mxu0 0.0
    %3248 = vmatpush1.msra.mxu0 0.0
    %3249 = vmatprep.subr.mxu0 0.0
    %3250 = vmatpush1.msra.mxu0 0.0
    %3251 = vmatprep.subr.mxu0 0.0
    %3252 = vmatpush1.msra.mxu0 0.0
    %3253 = vmatprep.subr.mxu0 0.0
    %3254 = vmatpush1.msra.mxu0 0.0
    %3255 = vmatprep.subr.mxu0 0.0
    %3256 = vmatpush1.msra.mxu0 0.0
    %3257 = vmatprep.subr.mxu0 0.0
    %3258 = vmatpush1.msra.mxu0 0.0
    %3259 = vmatprep.subr.mxu0 0.0
    %3260 = vmatpush1.msra.mxu0 0.0
    %3261 = vmatprep.subr.mxu0 0.0
    %3262 = vmatpush1.msra.mxu0 0.0
    %3263 = vmatprep.subr.mxu0 0.0
    %3264 = vmatpush1.msra.mxu0 0.0
    %3265 = vmatprep.subr.mxu0 0.0
    %3266 = vmatpush1.msra.mxu0 0.0
    %3267 = vmatprep.mubr.f32.mxu0 0.0
    %3268 = vmatmul.mubr.f32.gmra.mrb[0].mxu0 %v3201
    %v3269 = vpop.f32.mrb[0].mxu0
    %v3270 = vadd.f32 0.0, %v3269
    %v3271 = vpop.f32.mrb[0].mxu0
    %3272 = vdwg.mxu0
    %3274 = vrot.lane.b32.xlu0 %v3045, 80
    %v3275 = vpop.permute.xlu0 %3274
    %3278 = vrot.lane.b32.xlu0 %v3120, 32
    %v3279 = vpop.permute.xlu0 %3278
    %3282 = vrot.lane.b32.xlu0 %v3195, 112
    %v3283 = vpop.permute.xlu0 %3282
    %3286 = vrot.lane.b32.xlu0 %v3270, 64
    %v3287 = vpop.permute.xlu0 %3286
    %v3289 = vsel %vm2223, %v2970, %v3275
    %v3290 = vsel %vm838, %v3275, %v3279
    %vm3291 = vcmask 916480
    %v3292 = vsel %vm3291, %v3290, %v3283
    %v3293 = vsel %vm101, %v3283, %v3287
    %v3294 = vld [vmem:[%s10] sm:$0xff]
    %v3295 = vld [vmem:[%s10 + $0x8] sm:$0xff]
    %v3296 = vld [vmem:[%s10 + $0x10] sm:$0xff]
    %v3297 = vld [vmem:[%s10 + $0x18] sm:$0xff]
    %v3298 = vld [vmem:[%s10 + $0x20] sm:$0xff]
    %v3299 = vld [vmem:[%s10 + $0x28] sm:$0xff]
    %v3300 = vld [vmem:[%s10 + $0x30] sm:$0xff]
    %v3301 = vld [vmem:[%s10 + $0x38] sm:$0xff]
    %v3302 = vld [vmem:[%s10 + $0x40] sm:$0xff]
    %v3303 = vld [vmem:[%s10 + $0x48] sm:$0xff]
    %v3304 = vld [vmem:[%s10 + $0x50] sm:$0xff]
    %v3305 = vld [vmem:[%s10 + $0x58] sm:$0xff]
    %v3306 = vld [vmem:[%s10 + $0x60] sm:$0xff]
    %v3307 = vld [vmem:[%s10 + $0x68] sm:$0xff]
    %v3308 = vld [vmem:[%s10 + $0x70] sm:$0xff]
    %v3309 = vld [vmem:[%s10 + $0x78] sm:$0xff]
    %v3310 = vld [vmem:[%s10 + $0x80] sm:$0xff]
    %v3311 = vld [vmem:[%s10 + $0x88] sm:$0xff]
    %v3312 = vld [vmem:[%s10 + $0x90] sm:$0xff]
    %v3313 = vld [vmem:[%s10 + $0x98] sm:$0xff]
    %v3314 = vld [vmem:[%s10 + $0xa0] sm:$0xff]
    %v3315 = vld [vmem:[%s10 + $0xa8] sm:$0xff]
    %v3316 = vld [vmem:[%s10 + $0xb0] sm:$0xff]
    %v3317 = vld [vmem:[%s10 + $0xb8] sm:$0xff]
    %v3318 = vld [vmem:[%s10 + $0xc0] sm:$0xff]
    %v3319 = vld [vmem:[%s10 + $0xc8] sm:$0xff]
    %v3320 = vld [vmem:[%s10 + $0xd0] sm:$0xff]
    %v3321 = vld [vmem:[%s10 + $0xd8] sm:$0xff]
    %v3322 = vld [vmem:[%s10 + $0xe0] sm:$0xff]
    %v3323 = vld [vmem:[%s10 + $0xe8] sm:$0xff]
    %v3324 = vld [vmem:[%s10 + $0xf0] sm:$0xff]
    %v3325 = vld [vmem:[%s10 + $0xf8] sm:$0xff]
    %v3326 = vld [vmem:[%s10 + $0x100] sm:$0xff]
    %v3327 = vld [vmem:[%s10 + $0x108] sm:$0xff]
    %v3328 = vld [vmem:[%s10 + $0x110] sm:$0xff]
    %v3329 = vld [vmem:[%s10 + $0x118] sm:$0xff]
    %v3330 = vld [vmem:[%s10 + $0x120] sm:$0xff]
    %v3331 = vld [vmem:[%s10 + $0x128] sm:$0xff]
    %v3332 = vld [vmem:[%s10 + $0x130] sm:$0xff]
    %v3333 = vld [vmem:[%s10 + $0x138] sm:$0xff]
    %v3334 = vld [vmem:[%s10 + $0x140] sm:$0xff]
    %v3335 = vld [vmem:[%s10 + $0x148] sm:$0xff]
    %v3336 = vld [vmem:[%s10 + $0x150] sm:$0xff]
    %v3337 = vld [vmem:[%s10 + $0x158] sm:$0xff]
    %v3338 = vld [vmem:[%s10 + $0x160] sm:$0xff]
    %v3339 = vld [vmem:[%s10 + $0x168] sm:$0xff]
    %v3340 = vld [vmem:[%s10 + $0x170] sm:$0xff]
    %v3341 = vld [vmem:[%s10 + $0x178] sm:$0xff]
    %v3342 = vld [vmem:[%s10 + $0x180] sm:$0xff]
    %v3343 = vld [vmem:[%s10 + $0x188] sm:$0xff]
    %v3344 = vld [vmem:[%s11] sm:$0x1]
    %v3346 = vlaneseq
    %v3347 = vshrl.u32 %v3346, 7
    %v3348 = vsub.s32 0, %v3347
    %v3349 = vrot.slane %v3344, %v3348
    %vm3351 = vcmask 130048
    %v3352 = vsel %vm3351, %v3287, 0
    %3354 = vmatprep.subr.mxu0 0.0
    %3355 = vmatpush1.msra.mxu0 %v3294
    %3356 = vmatprep.subr.mxu0 0.0
    %3357 = vmatpush1.msra.mxu0 %v3295
    %3358 = vmatprep.subr.mxu0 0.0
    %3359 = vmatpush1.msra.mxu0 %v3296
    %3360 = vmatprep.subr.mxu0 0.0
    %3361 = vmatpush1.msra.mxu0 %v3297
    %3362 = vmatprep.subr.mxu0 0.0
    %3363 = vmatpush1.msra.mxu0 %v3298
    %3364 = vmatprep.subr.mxu0 0.0
    %3365 = vmatpush1.msra.mxu0 %v3299
    %3366 = vmatprep.subr.mxu0 0.0
    %3367 = vmatpush1.msra.mxu0 %v3300
    %3368 = vmatprep.subr.mxu0 0.0
    %3369 = vmatpush1.msra.mxu0 %v3301
    %3370 = vmatprep.subr.mxu0 0.0
    %3371 = vmatpush1.msra.mxu0 %v3302
    %3372 = vmatprep.subr.mxu0 0.0
    %3373 = vmatpush1.msra.mxu0 %v3303
    %3374 = vmatprep.subr.mxu0 0.0
    %3375 = vmatpush1.msra.mxu0 %v3304
    %3376 = vmatprep.subr.mxu0 0.0
    %3377 = vmatpush1.msra.mxu0 %v3305
    %3378 = vmatprep.subr.mxu0 0.0
    %3379 = vmatpush1.msra.mxu0 %v3306
    %3380 = vmatprep.subr.mxu0 0.0
    %3381 = vmatpush1.msra.mxu0 %v3307
    %3382 = vmatprep.subr.mxu0 0.0
    %3383 = vmatpush1.msra.mxu0 %v3308
    %3384 = vmatprep.subr.mxu0 0.0
    %3385 = vmatpush1.msra.mxu0 %v3309
    %3386 = vmatprep.subr.mxu0 0.0
    %3387 = vmatpush1.msra.mxu0 %v3310
    %3388 = vmatprep.subr.mxu0 0.0
    %3389 = vmatpush1.msra.mxu0 %v3311
    %3390 = vmatprep.subr.mxu0 0.0
    %3391 = vmatpush1.msra.mxu0 %v3312
    %3392 = vmatprep.subr.mxu0 0.0
    %3393 = vmatpush1.msra.mxu0 %v3313
    %3394 = vmatprep.subr.mxu0 0.0
    %3395 = vmatpush1.msra.mxu0 %v3314
    %3396 = vmatprep.subr.mxu0 0.0
    %3397 = vmatpush1.msra.mxu0 %v3315
    %3398 = vmatprep.subr.mxu0 0.0
    %3399 = vmatpush1.msra.mxu0 %v3316
    %3400 = vmatprep.subr.mxu0 0.0
    %3401 = vmatpush1.msra.mxu0 %v3317
    %3402 = vmatprep.subr.mxu0 0.0
    %3403 = vmatpush1.msra.mxu0 %v3318
    %3404 = vmatprep.subr.mxu0 0.0
    %3405 = vmatpush1.msra.mxu0 %v3319
    %3406 = vmatprep.subr.mxu0 0.0
    %3407 = vmatpush1.msra.mxu0 %v3320
    %3408 = vmatprep.subr.mxu0 0.0
    %3409 = vmatpush1.msra.mxu0 %v3321
    %3410 = vmatprep.subr.mxu0 0.0
    %3411 = vmatpush1.msra.mxu0 %v3322
    %3412 = vmatprep.subr.mxu0 0.0
    %3413 = vmatpush1.msra.mxu0 %v3323
    %3414 = vmatprep.subr.mxu0 0.0
    %3415 = vmatpush1.msra.mxu0 %v3324
    %3416 = vmatprep.subr.mxu0 0.0
    %3417 = vmatpush1.msra.mxu0 %v3325
    %3418 = vmatprep.mubr.f32.mxu0 %v3292
    %3419 = vmatmul.mubr.f32.gmra.mrb[0].mxu0 %v3289
    %v3420 = vpop.f32.mrb[0].mxu0
    %v3421 = vadd.f32 %v3349, %v3420
    %v3422 = vpop.f32.mrb[0].mxu0
    %3423 = vdwg.mxu0
    %3424 = vmatprep.subr.mxu0 0.0
    %3425 = vmatpush1.msra.mxu0 %v3326
    %3426 = vmatprep.subr.mxu0 0.0
    %3427 = vmatpush1.msra.mxu0 %v3327
    %3428 = vmatprep.subr.mxu0 0.0
    %3429 = vmatpush1.msra.mxu0 %v3328
    %3430 = vmatprep.subr.mxu0 0.0
    %3431 = vmatpush1.msra.mxu0 %v3329
    %3432 = vmatprep.subr.mxu0 0.0
    %3433 = vmatpush1.msra.mxu0 %v3330
    %3434 = vmatprep.subr.mxu0 0.0
    %3435 = vmatpush1.msra.mxu0 %v3331
    %3436 = vmatprep.subr.mxu0 0.0
    %3437 = vmatpush1.msra.mxu0 %v3332
    %3438 = vmatprep.subr.mxu0 0.0
    %3439 = vmatpush1.msra.mxu0 %v3333
    %3440 = vmatprep.subr.mxu0 0.0
    %3441 = vmatpush1.msra.mxu0 %v3334
    %3442 = vmatprep.subr.mxu0 0.0
    %3443 = vmatpush1.msra.mxu0 %v3335
    %3444 = vmatprep.subr.mxu0 0.0
    %3445 = vmatpush1.msra.mxu0 %v3336
    %3446 = vmatprep.subr.mxu0 0.0
    %3447 = vmatpush1.msra.mxu0 %v3337
    %3448 = vmatprep.subr.mxu0 0.0
    %3449 = vmatpush1.msra.mxu0 %v3338
    %3450 = vmatprep.subr.mxu0 0.0
    %3451 = vmatpush1.msra.mxu0 %v3339
    %3452 = vmatprep.subr.mxu0 0.0
    %3453 = vmatpush1.msra.mxu0 %v3340
    %3454 = vmatprep.subr.mxu0 0.0
    %3455 = vmatpush1.msra.mxu0 %v3341
    %3456 = vmatprep.subr.mxu0 0.0
    %3457 = vmatpush1.msra.mxu0 %v3342
    %3458 = vmatprep.subr.mxu0 0.0
    %3459 = vmatpush1.msra.mxu0 %v3343
    %3460 = vmatprep.subr.mxu0 0.0
    %3461 = vmatpush1.msra.mxu0 0.0
    %3462 = vmatprep.subr.mxu0 0.0
    %3463 = vmatpush1.msra.mxu0 0.0
    %3464 = vmatprep.subr.mxu0 0.0
    %3465 = vmatpush1.msra.mxu0 0.0
    %3466 = vmatprep.subr.mxu0 0.0
    %3467 = vmatpush1.msra.mxu0 0.0
    %3468 = vmatprep.subr.mxu0 0.0
    %3469 = vmatpush1.msra.mxu0 0.0
    %3470 = vmatprep.subr.mxu0 0.0
    %3471 = vmatpush1.msra.mxu0 0.0
    %3472 = vmatprep.subr.mxu0 0.0
    %3473 = vmatpush1.msra.mxu0 0.0
    %3474 = vmatprep.subr.mxu0 0.0
    %3475 = vmatpush1.msra.mxu0 0.0
    %3476 = vmatprep.subr.mxu0 0.0
    %3477 = vmatpush1.msra.mxu0 0.0
    %3478 = vmatprep.subr.mxu0 0.0
    %3479 = vmatpush1.msra.mxu0 0.0
    %3480 = vmatprep.subr.mxu0 0.0
    %3481 = vmatpush1.msra.mxu0 0.0
    %3482 = vmatprep.subr.mxu0 0.0
    %3483 = vmatpush1.msra.mxu0 0.0
    %3484 = vmatprep.subr.mxu0 0.0
    %3485 = vmatpush1.msra.mxu0 0.0
    %3486 = vmatprep.subr.mxu0 0.0
    %3487 = vmatpush1.msra.mxu0 0.0
    %3488 = vmatprep.mubr.f32.mxu0 %v3352
    %3489 = vmatmul.mubr.f32.gmra.mrb[0].mxu0 %v3293
    %v3490 = vpop.f32.mrb[0].mxu0
    %v3491 = vadd.f32 %v3421, %v3490
    %v3492 = vpop.f32.mrb[0].mxu0
    %3493 = vdwg.mxu0
    %v3494 = vmax.f32 %v3491, 0.0
    %v3495 = vld [vmem:[%s12] sm:$0xff]
    %v3496 = vld [vmem:[%s12 + $0x8] sm:$0xff]
    %v3497 = vld [vmem:[%s12 + $0x10] sm:$0xff]
    %v3498 = vld [vmem:[%s12 + $0x18] sm:$0xff]
    %v3499 = vld [vmem:[%s12 + $0x20] sm:$0xff]
    %v3500 = vld [vmem:[%s12 + $0x28] sm:$0xff]
    %v3501 = vld [vmem:[%s12 + $0x30] sm:$0xff]
    %v3502 = vld [vmem:[%s12 + $0x38] sm:$0xff]
    %v3503 = vld [vmem:[%s12 + $0x40] sm:$0xff]
    %v3504 = vld [vmem:[%s12 + $0x48] sm:$0xff]
    %v3505 = vld [vmem:[%s12 + $0x50] sm:$0xff]
    %v3506 = vld [vmem:[%s12 + $0x58] sm:$0xff]
    %v3507 = vld [vmem:[%s12 + $0x60] sm:$0xff]
    %v3508 = vld [vmem:[%s12 + $0x68] sm:$0xff]
    %v3509 = vld [vmem:[%s12 + $0x70] sm:$0xff]
    %v3510 = vld [vmem:[%s13] sm:$0x1]
    %v3512 = vlaneseq
    %v3513 = vshrl.u32 %v3512, 7
    %v3514 = vsub.s32 0, %v3513
    %v3515 = vrot.slane %v3510, %v3514
    %vm3517 = vcmask 982016
    %v3519 = vsel %vm3517, %v3494, 0
    %3521 = vmatprep.subr.mxu0 0.0
    %3522 = vmatpush1.msra.mxu0 %v3495
    %3523 = vmatprep.subr.mxu0 0.0
    %3524 = vmatpush1.msra.mxu0 %v3496
    %3525 = vmatprep.subr.mxu0 0.0
    %3526 = vmatpush1.msra.mxu0 %v3497
    %3527 = vmatprep.subr.mxu0 0.0
    %3528 = vmatpush1.msra.mxu0 %v3498
    %3529 = vmatprep.subr.mxu0 0.0
    %3530 = vmatpush1.msra.mxu0 %v3499
    %3531 = vmatprep.subr.mxu0 0.0
    %3532 = vmatpush1.msra.mxu0 %v3500
    %3533 = vmatprep.subr.mxu0 0.0
    %3534 = vmatpush1.msra.mxu0 %v3501
    %3535 = vmatprep.subr.mxu0 0.0
    %3536 = vmatpush1.msra.mxu0 %v3502
    %3537 = vmatprep.subr.mxu0 0.0
    %3538 = vmatpush1.msra.mxu0 %v3503
    %3539 = vmatprep.subr.mxu0 0.0
    %3540 = vmatpush1.msra.mxu0 %v3504
    %3541 = vmatprep.subr.mxu0 0.0
    %3542 = vmatpush1.msra.mxu0 %v3505
    %3543 = vmatprep.subr.mxu0 0.0
    %3544 = vmatpush1.msra.mxu0 %v3506
    %3545 = vmatprep.subr.mxu0 0.0
    %3546 = vmatpush1.msra.mxu0 %v3507
    %3547 = vmatprep.subr.mxu0 0.0
    %3548 = vmatpush1.msra.mxu0 %v3508
    %3549 = vmatprep.subr.mxu0 0.0
    %3550 = vmatpush1.msra.mxu0 %v3509
    %3551 = vmatprep.subr.mxu0 0.0
    %3552 = vmatpush1.msra.mxu0 0.0
    %3553 = vmatprep.subr.mxu0 0.0
    %3554 = vmatpush1.msra.mxu0 0.0
    %3555 = vmatprep.subr.mxu0 0.0
    %3556 = vmatpush1.msra.mxu0 0.0
    %3557 = vmatprep.subr.mxu0 0.0
    %3558 = vmatpush1.msra.mxu0 0.0
    %3559 = vmatprep.subr.mxu0 0.0
    %3560 = vmatpush1.msra.mxu0 0.0
    %3561 = vmatprep.subr.mxu0 0.0
    %3562 = vmatpush1.msra.mxu0 0.0
    %3563 = vmatprep.subr.mxu0 0.0
    %3564 = vmatpush1.msra.mxu0 0.0
    %3565 = vmatprep.subr.mxu0 0.0
    %3566 = vmatpush1.msra.mxu0 0.0
    %3567 = vmatprep.subr.mxu0 0.0
    %3568 = vmatpush1.msra.mxu0 0.0
    %3569 = vmatprep.subr.mxu0 0.0
    %3570 = vmatpush1.msra.mxu0 0.0
    %3571 = vmatprep.subr.mxu0 0.0
    %3572 = vmatpush1.msra.mxu0 0.0
    %3573 = vmatprep.subr.mxu0 0.0
    %3574 = vmatpush1.msra.mxu0 0.0
    %3575 = vmatprep.subr.mxu0 0.0
    %3576 = vmatpush1.msra.mxu0 0.0
    %3577 = vmatprep.subr.mxu0 0.0
    %3578 = vmatpush1.msra.mxu0 0.0
    %3579 = vmatprep.subr.mxu0 0.0
    %3580 = vmatpush1.msra.mxu0 0.0
    %3581 = vmatprep.subr.mxu0 0.0
    %3582 = vmatpush1.msra.mxu0 0.0
    %3583 = vmatprep.subr.mxu0 0.0
    %3584 = vmatpush1.msra.mxu0 0.0
    %3585 = vmatprep.mubr.f32.mxu0 0.0
    %3586 = vmatmul.mubr.f32.gmra.mrb[0].mxu0 %v3519
    %v3587 = vpop.f32.mrb[0].mxu0
    %v3588 = vadd.f32 %v3515, %v3587
    %v3589 = vpop.f32.mrb[0].mxu0
    %3590 = vdwg.mxu0
    %v3591 = vmax.f32 %v3588, 0.0
    %v3592 = vld [vmem:[%s14] sm:$0xff]
    %v3593 = vld [vmem:[%s14 + $0x8] sm:$0xff]
    %v3594 = vld [vmem:[%s14 + $0x10] sm:$0xff]
    %v3595 = vld [vmem:[%s14 + $0x18] sm:$0xff]
    %v3596 = vld [vmem:[%s14 + $0x20] sm:$0xff]
    %v3597 = vld [vmem:[%s14 + $0x28] sm:$0xff]
    %v3598 = vld [vmem:[%s14 + $0x30] sm:$0xff]
    %v3599 = vld [vmem:[%s14 + $0x38] sm:$0xff]
    %v3600 = vld [vmem:[%s14 + $0x40] sm:$0xff]
    %v3601 = vld [vmem:[%s14 + $0x48] sm:$0xff]
    %v3602 = vld [vmem:[%s14 + $0x50] sm:$0xf]
    %v3603 = vld [vmem:[%s15] sm:$0x1]
    %v3605 = vlaneseq
    %v3606 = vshrl.u32 %v3605, 7
    %v3607 = vsub.s32 0, %v3606
    %v3608 = vrot.slane %v3603, %v3607
    %v3611 = vsel %vm2211, %v3591, 0
    %v3614 = vsel %vm1707, %v3602, 0
    %3616 = vmatprep.subr.mxu0 0.0
    %3617 = vmatpush1.msra.mxu0 %v3592
    %3618 = vmatprep.subr.mxu0 0.0
    %3619 = vmatpush1.msra.mxu0 %v3593
    %3620 = vmatprep.subr.mxu0 0.0
    %3621 = vmatpush1.msra.mxu0 %v3594
    %3622 = vmatprep.subr.mxu0 0.0
    %3623 = vmatpush1.msra.mxu0 %v3595
    %3624 = vmatprep.subr.mxu0 0.0
    %3625 = vmatpush1.msra.mxu0 %v3596
    %3626 = vmatprep.subr.mxu0 0.0
    %3627 = vmatpush1.msra.mxu0 %v3597
    %3628 = vmatprep.subr.mxu0 0.0
    %3629 = vmatpush1.msra.mxu0 %v3598
    %3630 = vmatprep.subr.mxu0 0.0
    %3631 = vmatpush1.msra.mxu0 %v3599
    %3632 = vmatprep.subr.mxu0 0.0
    %3633 = vmatpush1.msra.mxu0 %v3600
    %3634 = vmatprep.subr.mxu0 0.0
    %3635 = vmatpush1.msra.mxu0 %v3601
    %3636 = vmatprep.subr.mxu0 0.0
    %3637 = vmatpush1.msra.mxu0 %v3614
    %3638 = vmatprep.subr.mxu0 0.0
    %3639 = vmatpush1.msra.mxu0 0.0
    %3640 = vmatprep.subr.mxu0 0.0
    %3641 = vmatpush1.msra.mxu0 0.0
    %3642 = vmatprep.subr.mxu0 0.0
    %3643 = vmatpush1.msra.mxu0 0.0
    %3644 = vmatprep.subr.mxu0 0.0
    %3645 = vmatpush1.msra.mxu0 0.0
    %3646 = vmatprep.subr.mxu0 0.0
    %3647 = vmatpush1.msra.mxu0 0.0
    %3648 = vmatprep.subr.mxu0 0.0
    %3649 = vmatpush1.msra.mxu0 0.0
    %3650 = vmatprep.subr.mxu0 0.0
    %3651 = vmatpush1.msra.mxu0 0.0
    %3652 = vmatprep.subr.mxu0 0.0
    %3653 = vmatpush1.msra.mxu0 0.0
    %3654 = vmatprep.subr.mxu0 0.0
    %3655 = vmatpush1.msra.mxu0 0.0
    %3656 = vmatprep.subr.mxu0 0.0
    %3657 = vmatpush1.msra.mxu0 0.0
    %3658 = vmatprep.subr.mxu0 0.0
    %3659 = vmatpush1.msra.mxu0 0.0
    %3660 = vmatprep.subr.mxu0 0.0
    %3661 = vmatpush1.msra.mxu0 0.0
    %3662 = vmatprep.subr.mxu0 0.0
    %3663 = vmatpush1.msra.mxu0 0.0
    %3664 = vmatprep.subr.mxu0 0.0
    %3665 = vmatpush1.msra.mxu0 0.0
    %3666 = vmatprep.subr.mxu0 0.0
    %3667 = vmatpush1.msra.mxu0 0.0
    %3668 = vmatprep.subr.mxu0 0.0
    %3669 = vmatpush1.msra.mxu0 0.0
    %3670 = vmatprep.subr.mxu0 0.0
    %3671 = vmatpush1.msra.mxu0 0.0
    %3672 = vmatprep.subr.mxu0 0.0
    %3673 = vmatpush1.msra.mxu0 0.0
    %3674 = vmatprep.subr.mxu0 0.0
    %3675 = vmatpush1.msra.mxu0 0.0
    %3676 = vmatprep.subr.mxu0 0.0
    %3677 = vmatpush1.msra.mxu0 0.0
    %3678 = vmatprep.subr.mxu0 0.0
    %3679 = vmatpush1.msra.mxu0 0.0
    %3680 = vmatprep.mubr.f32.mxu0 0.0
    %3681 = vmatmul.mubr.f32.gmra.mrb[0].mxu0 %v3611
    %v3682 = vpop.f32.mrb[0].mxu0
    %v3683 = vadd.f32 %v3608, %v3682
    %v3684 = vpop.f32.mrb[0].mxu0
    %3685 = vdwg.mxu0
    %vm3686 = vcmask 74752
    %3687 = vst.msk [vmem:[#allocation2] sm:$0x3] %vm3686, %v3683
    %v3688 = vmax.f32 %v2890, 0.0
    %v3689 = vmax.f32 %v2891, 0.0
    %vm3690 = vcmp.eq.s32.totalorder %v2892, 0
    %vm3691 = vcmp.eq.s32.totalorder %v2893, 0
    %v3692 = vsel %vm3690, %v3688, 0.0
    %v3693 = vsel %vm3691, %v3689, 0.0
    %vm3694 = vcmp.eq.s32.totalorder %v2892, 1
    %vm3695 = vcmp.eq.s32.totalorder %v2893, 1
    %v3696 = vsel %vm3694, %v3688, 0.0
    %v3697 = vsel %vm3695, %v3689, 0.0
    %vm3698 = vcmp.eq.s32.totalorder %v2892, 2
    %vm3699 = vcmp.eq.s32.totalorder %v2893, 2
    %v3700 = vsel %vm3698, %v3688, 0.0
    %v3701 = vsel %vm3699, %v3689, 0.0
    %vm3702 = vcmp.eq.s32.totalorder %v2892, 3
    %vm3703 = vcmp.eq.s32.totalorder %v2893, 3
    %v3704 = vsel %vm3702, %v3688, 0.0
    %v3705 = vsel %vm3703, %v3689, 0.0
    %v3706 = vld [vmem:[%s17] sm:$0xff]
    %v3707 = vld [vmem:[%s17 + $0x8] sm:$0xff]
    %v3708 = vld [vmem:[%s17 + $0x10] sm:$0xff]
    %v3709 = vld [vmem:[%s17 + $0x18] sm:$0xff]
    %v3710 = vld [vmem:[%s17 + $0x20] sm:$0xff]
    %v3711 = vld [vmem:[%s17 + $0x28] sm:$0xff]
    %v3712 = vld [vmem:[%s17 + $0x30] sm:$0xff]
    %v3713 = vld [vmem:[%s17 + $0x38] sm:$0xff]
    %v3714 = vld [vmem:[%s17 + $0x40] sm:$0xff]
    %v3715 = vld [vmem:[%s17 + $0x48] sm:$0xff]
    %v3716 = vld [vmem:[%s17 + $0x50] sm:$0xff]
    %v3717 = vld [vmem:[%s17 + $0x58] sm:$0xff]
    %v3718 = vld [vmem:[%s17 + $0x60] sm:$0xff]
    %v3719 = vld [vmem:[%s17 + $0x68] sm:$0xff]
    %v3720 = vld [vmem:[%s17 + $0x70] sm:$0xff]
    %v3721 = vld [vmem:[%s17 + $0x78] sm:$0xff]
    %v3722 = vld [vmem:[%s17 + $0x80] sm:$0xff]
    %v3723 = vld [vmem:[%s17 + $0x88] sm:$0xff]
    %v3724 = vld [vmem:[%s17 + $0x90] sm:$0xff]
    %v3725 = vld [vmem:[%s17 + $0x98] sm:$0xff]
    %s3726 = scalar_lea.vmem %s17, 160
    %v3727 = vld [vmem:[%s3726] sm:$0xff]
    %v3728 = vld [vmem:[%s3726 + $0x8] sm:$0xff]
    %v3729 = vld [vmem:[%s3726 + $0x10] sm:$0xff]
    %v3730 = vld [vmem:[%s3726 + $0x18] sm:$0xff]
    %v3731 = vld [vmem:[%s3726 + $0x20] sm:$0xff]
    %v3732 = vld [vmem:[%s3726 + $0x28] sm:$0xff]
    %v3733 = vld [vmem:[%s3726 + $0x30] sm:$0xff]
    %v3734 = vld [vmem:[%s3726 + $0x38] sm:$0xff]
    %v3735 = vld [vmem:[%s3726 + $0x40] sm:$0xff]
    %v3736 = vld [vmem:[%s3726 + $0x48] sm:$0xff]
    %v3737 = vld [vmem:[%s3726 + $0x50] sm:$0xff]
    %v3738 = vld [vmem:[%s3726 + $0x58] sm:$0xff]
    %v3739 = vld [vmem:[%s3726 + $0x60] sm:$0xff]
    %v3740 = vld [vmem:[%s3726 + $0x68] sm:$0xff]
    %v3741 = vld [vmem:[%s3726 + $0x70] sm:$0xff]
    %v3742 = vld [vmem:[%s3726 + $0x78] sm:$0xff]
    %v3743 = vld [vmem:[%s3726 + $0x80] sm:$0xff]
    %v3744 = vld [vmem:[%s3726 + $0x88] sm:$0xff]
    %v3745 = vld [vmem:[%s3726 + $0x90] sm:$0xff]
    %v3746 = vld [vmem:[%s3726 + $0x98] sm:$0xff]
    %v3748 = vsel %vm2223, %v3696, 0
    %v3751 = vsel %vm2223, %v3697, 0
    %3753 = vmatprep.subr.mxu0 %v3728
    %3754 = vmatpush1.msra.mxu0 %v3727
    %3755 = vmatprep.subr.mxu0 %v3730
    %3756 = vmatpush1.msra.mxu0 %v3729
    %3757 = vmatprep.subr.mxu0 %v3732
    %3758 = vmatpush1.msra.mxu0 %v3731
    %3759 = vmatprep.subr.mxu0 %v3734
    %3760 = vmatpush1.msra.mxu0 %v3733
    %3761 = vmatprep.subr.mxu0 %v3736
    %3762 = vmatpush1.msra.mxu0 %v3735
    %3763 = vmatprep.subr.mxu0 %v3738
    %3764 = vmatpush1.msra.mxu0 %v3737
    %3765 = vmatprep.subr.mxu0 %v3740
    %3766 = vmatpush1.msra.mxu0 %v3739
    %3767 = vmatprep.subr.mxu0 %v3742
    %3768 = vmatpush1.msra.mxu0 %v3741
    %3769 = vmatprep.subr.mxu0 %v3744
    %3770 = vmatpush1.msra.mxu0 %v3743
    %3771 = vmatprep.subr.mxu0 %v3746
    %3772 = vmatpush1.msra.mxu0 %v3745
    %3773 = vmatprep.subr.mxu0 0.0
    %3774 = vmatpush1.msra.mxu0 0.0
    %3775 = vmatprep.subr.mxu0 0.0
    %3776 = vmatpush1.msra.mxu0 0.0
    %3777 = vmatprep.subr.mxu0 0.0
    %3778 = vmatpush1.msra.mxu0 0.0
    %3779 = vmatprep.subr.mxu0 0.0
    %3780 = vmatpush1.msra.mxu0 0.0
    %3781 = vmatprep.subr.mxu0 0.0
    %3782 = vmatpush1.msra.mxu0 0.0
    %3783 = vmatprep.subr.mxu0 0.0
    %3784 = vmatpush1.msra.mxu0 0.0
    %3785 = vmatprep.subr.mxu0 0.0
    %3786 = vmatpush1.msra.mxu0 0.0
    %3787 = vmatprep.subr.mxu0 0.0
    %3788 = vmatpush1.msra.mxu0 0.0
    %3789 = vmatprep.subr.mxu0 0.0
    %3790 = vmatpush1.msra.mxu0 0.0
    %3791 = vmatprep.subr.mxu0 0.0
    %3792 = vmatpush1.msra.mxu0 0.0
    %3793 = vmatprep.subr.mxu0 0.0
    %3794 = vmatpush1.msra.mxu0 0.0
    %3795 = vmatprep.subr.mxu0 0.0
    %3796 = vmatpush1.msra.mxu0 0.0
    %3797 = vmatprep.subr.mxu0 0.0
    %3798 = vmatpush1.msra.mxu0 0.0
    %3799 = vmatprep.subr.mxu0 0.0
    %3800 = vmatpush1.msra.mxu0 0.0
    %3801 = vmatprep.subr.mxu0 0.0
    %3802 = vmatpush1.msra.mxu0 0.0
    %3803 = vmatprep.subr.mxu0 0.0
    %3804 = vmatpush1.msra.mxu0 0.0
    %3805 = vmatprep.subr.mxu0 0.0
    %3806 = vmatpush1.msra.mxu0 0.0
    %3807 = vmatprep.subr.mxu0 0.0
    %3808 = vmatpush1.msra.mxu0 0.0
    %3809 = vmatprep.subr.mxu0 0.0
    %3810 = vmatpush1.msra.mxu0 0.0
    %3811 = vmatprep.subr.mxu0 0.0
    %3812 = vmatpush1.msra.mxu0 0.0
    %3813 = vmatprep.subr.mxu0 0.0
    %3814 = vmatpush1.msra.mxu0 0.0
    %3815 = vmatprep.subr.mxu0 0.0
    %3816 = vmatpush1.msra.mxu0 0.0
    %3817 = vmatprep.mubr.f32.mxu0 0.0
    %3818 = vmatmul.mubr.f32.gmra.mrb[0].mxu0 %v3748
    %v3819 = vpop.f32.mrb[0].mxu0
    %v3820 = vadd.f32 0.0, %v3819
    %v3821 = vpop.f32.mrb[0].mxu0
    %v3822 = vadd.f32 0.0, %v3821
    %3823 = vmatprep.mubr.f32.mxu0 0.0
    %3824 = vmatmul.mubr.f32.gmra.mrb[0].mxu0 %v3751
    %v3825 = vpop.f32.mrb[0].mxu0
    %v3826 = vadd.f32 0.0, %v3825
    %v3827 = vpop.f32.mrb[0].mxu0
    %v3828 = vadd.f32 0.0, %v3827
    %3829 = vdwg.mxu0
    %v3831 = vsel %vm2223, %v3692, 0
    %v3834 = vsel %vm2223, %v3693, 0
    %3836 = vmatprep.subr.mxu0 %v3707
    %3837 = vmatpush1.msra.mxu0 %v3706
    %3838 = vmatprep.subr.mxu0 %v3709
    %3839 = vmatpush1.msra.mxu0 %v3708
    %3840 = vmatprep.subr.mxu0 %v3711
    %3841 = vmatpush1.msra.mxu0 %v3710
    %3842 = vmatprep.subr.mxu0 %v3713
    %3843 = vmatpush1.msra.mxu0 %v3712
    %3844 = vmatprep.subr.mxu0 %v3715
    %3845 = vmatpush1.msra.mxu0 %v3714
    %3846 = vmatprep.subr.mxu0 %v3717
    %3847 = vmatpush1.msra.mxu0 %v3716
    %3848 = vmatprep.subr.mxu0 %v3719
    %3849 = vmatpush1.msra.mxu0 %v3718
    %3850 = vmatprep.subr.mxu0 %v3721
    %3851 = vmatpush1.msra.mxu0 %v3720
    %3852 = vmatprep.subr.mxu0 %v3723
    %3853 = vmatpush1.msra.mxu0 %v3722
    %3854 = vmatprep.subr.mxu0 %v3725
    %3855 = vmatpush1.msra.mxu0 %v3724
    %3856 = vmatprep.subr.mxu0 0.0
    %3857 = vmatpush1.msra.mxu0 0.0
    %3858 = vmatprep.subr.mxu0 0.0
    %3859 = vmatpush1.msra.mxu0 0.0
    %3860 = vmatprep.subr.mxu0 0.0
    %3861 = vmatpush1.msra.mxu0 0.0
    %3862 = vmatprep.subr.mxu0 0.0
    %3863 = vmatpush1.msra.mxu0 0.0
    %3864 = vmatprep.subr.mxu0 0.0
    %3865 = vmatpush1.msra.mxu0 0.0
    %3866 = vmatprep.subr.mxu0 0.0
    %3867 = vmatpush1.msra.mxu0 0.0
    %3868 = vmatprep.subr.mxu0 0.0
    %3869 = vmatpush1.msra.mxu0 0.0
    %3870 = vmatprep.subr.mxu0 0.0
    %3871 = vmatpush1.msra.mxu0 0.0
    %3872 = vmatprep.subr.mxu0 0.0
    %3873 = vmatpush1.msra.mxu0 0.0
    %3874 = vmatprep.subr.mxu0 0.0
    %3875 = vmatpush1.msra.mxu0 0.0
    %3876 = vmatprep.subr.mxu0 0.0
    %3877 = vmatpush1.msra.mxu0 0.0
    %3878 = vmatprep.subr.mxu0 0.0
    %3879 = vmatpush1.msra.mxu0 0.0
    %3880 = vmatprep.subr.mxu0 0.0
    %3881 = vmatpush1.msra.mxu0 0.0
    %3882 = vmatprep.subr.mxu0 0.0
    %3883 = vmatpush1.msra.mxu0 0.0
    %3884 = vmatprep.subr.mxu0 0.0
    %3885 = vmatpush1.msra.mxu0 0.0
    %3886 = vmatprep.subr.mxu0 0.0
    %3887 = vmatpush1.msra.mxu0 0.0
    %3888 = vmatprep.subr.mxu0 0.0
    %3889 = vmatpush1.msra.mxu0 0.0
    %3890 = vmatprep.subr.mxu0 0.0
    %3891 = vmatpush1.msra.mxu0 0.0
    %3892 = vmatprep.subr.mxu0 0.0
    %3893 = vmatpush1.msra.mxu0 0.0
    %3894 = vmatprep.subr.mxu0 0.0
    %3895 = vmatpush1.msra.mxu0 0.0
    %3896 = vmatprep.subr.mxu0 0.0
    %3897 = vmatpush1.msra.mxu0 0.0
    %3898 = vmatprep.subr.mxu0 0.0
    %3899 = vmatpush1.msra.mxu0 0.0
    %3900 = vmatprep.mubr.f32.mxu0 0.0
    %3901 = vmatmul.mubr.f32.gmra.mrb[0].mxu0 %v3831
    %v3902 = vpop.f32.mrb[0].mxu0
    %v3903 = vadd.f32 %v3820, %v3902
    %v3904 = vpop.f32.mrb[0].mxu0
    %v3905 = vadd.f32 %v3822, %v3904
    %3906 = vmatprep.mubr.f32.mxu0 0.0
    %3907 = vmatmul.mubr.f32.gmra.mrb[0].mxu0 %v3834
    %v3908 = vpop.f32.mrb[0].mxu0
    %v3909 = vadd.f32 %v3826, %v3908
    %v3910 = vpop.f32.mrb[0].mxu0
    %v3911 = vadd.f32 %v3828, %v3910
    %3912 = vdwg.mxu0
    %v3914 = vsel %vm2223, %v3704, 0
    %v3917 = vsel %vm2223, %v3705, 0
    %3919 = vmatprep.subr.mxu0 %v3728
    %3920 = vmatpush1.msra.mxu0 %v3727
    %3921 = vmatprep.subr.mxu0 %v3730
    %3922 = vmatpush1.msra.mxu0 %v3729
    %3923 = vmatprep.subr.mxu0 %v3732
    %3924 = vmatpush1.msra.mxu0 %v3731
    %3925 = vmatprep.subr.mxu0 %v3734
    %3926 = vmatpush1.msra.mxu0 %v3733
    %3927 = vmatprep.subr.mxu0 %v3736
    %3928 = vmatpush1.msra.mxu0 %v3735
    %3929 = vmatprep.subr.mxu0 %v3738
    %3930 = vmatpush1.msra.mxu0 %v3737
    %3931 = vmatprep.subr.mxu0 %v3740
    %3932 = vmatpush1.msra.mxu0 %v3739
    %3933 = vmatprep.subr.mxu0 %v3742
    %3934 = vmatpush1.msra.mxu0 %v3741
    %3935 = vmatprep.subr.mxu0 %v3744
    %3936 = vmatpush1.msra.mxu0 %v3743
    %3937 = vmatprep.subr.mxu0 %v3746
    %3938 = vmatpush1.msra.mxu0 %v3745
    %3939 = vmatprep.subr.mxu0 0.0
    %3940 = vmatpush1.msra.mxu0 0.0
    %3941 = vmatprep.subr.mxu0 0.0
    %3942 = vmatpush1.msra.mxu0 0.0
    %3943 = vmatprep.subr.mxu0 0.0
    %3944 = vmatpush1.msra.mxu0 0.0
    %3945 = vmatprep.subr.mxu0 0.0
    %3946 = vmatpush1.msra.mxu0 0.0
    %3947 = vmatprep.subr.mxu0 0.0
    %3948 = vmatpush1.msra.mxu0 0.0
    %3949 = vmatprep.subr.mxu0 0.0
    %3950 = vmatpush1.msra.mxu0 0.0
    %3951 = vmatprep.subr.mxu0 0.0
    %3952 = vmatpush1.msra.mxu0 0.0
    %3953 = vmatprep.subr.mxu0 0.0
    %3954 = vmatpush1.msra.mxu0 0.0
    %3955 = vmatprep.subr.mxu0 0.0
    %3956 = vmatpush1.msra.mxu0 0.0
    %3957 = vmatprep.subr.mxu0 0.0
    %3958 = vmatpush1.msra.mxu0 0.0
    %3959 = vmatprep.subr.mxu0 0.0
    %3960 = vmatpush1.msra.mxu0 0.0
    %3961 = vmatprep.subr.mxu0 0.0
    %3962 = vmatpush1.msra.mxu0 0.0
    %3963 = vmatprep.subr.mxu0 0.0
    %3964 = vmatpush1.msra.mxu0 0.0
    %3965 = vmatprep.subr.mxu0 0.0
    %3966 = vmatpush1.msra.mxu0 0.0
    %3967 = vmatprep.subr.mxu0 0.0
    %3968 = vmatpush1.msra.mxu0 0.0
    %3969 = vmatprep.subr.mxu0 0.0
    %3970 = vmatpush1.msra.mxu0 0.0
    %3971 = vmatprep.subr.mxu0 0.0
    %3972 = vmatpush1.msra.mxu0 0.0
    %3973 = vmatprep.subr.mxu0 0.0
    %3974 = vmatpush1.msra.mxu0 0.0
    %3975 = vmatprep.subr.mxu0 0.0
    %3976 = vmatpush1.msra.mxu0 0.0
    %3977 = vmatprep.subr.mxu0 0.0
    %3978 = vmatpush1.msra.mxu0 0.0
    %3979 = vmatprep.subr.mxu0 0.0
    %3980 = vmatpush1.msra.mxu0 0.0
    %3981 = vmatprep.subr.mxu0 0.0
    %3982 = vmatpush1.msra.mxu0 0.0
    %3983 = vmatprep.mubr.f32.mxu0 0.0
    %3984 = vmatmul.mubr.f32.gmra.mrb[0].mxu0 %v3914
    %v3985 = vpop.f32.mrb[0].mxu0
    %v3986 = vadd.f32 0.0, %v3985
    %v3987 = vpop.f32.mrb[0].mxu0
    %v3988 = vadd.f32 0.0, %v3987
    %3989 = vmatprep.mubr.f32.mxu0 0.0
    %3990 = vmatmul.mubr.f32.gmra.mrb[0].mxu0 %v3917
    %v3991 = vpop.f32.mrb[0].mxu0
    %v3992 = vadd.f32 0.0, %v3991
    %v3993 = vpop.f32.mrb[0].mxu0
    %v3994 = vadd.f32 0.0, %v3993
    %3995 = vdwg.mxu0
    %v3997 = vsel %vm2223, %v3700, 0
    %v4000 = vsel %vm2223, %v3701, 0
    %4002 = vmatprep.subr.mxu0 %v3707
    %4003 = vmatpush1.msra.mxu0 %v3706
    %4004 = vmatprep.subr.mxu0 %v3709
    %4005 = vmatpush1.msra.mxu0 %v3708
    %4006 = vmatprep.subr.mxu0 %v3711
    %4007 = vmatpush1.msra.mxu0 %v3710
    %4008 = vmatprep.subr.mxu0 %v3713
    %4009 = vmatpush1.msra.mxu0 %v3712
    %4010 = vmatprep.subr.mxu0 %v3715
    %4011 = vmatpush1.msra.mxu0 %v3714
    %4012 = vmatprep.subr.mxu0 %v3717
    %4013 = vmatpush1.msra.mxu0 %v3716
    %4014 = vmatprep.subr.mxu0 %v3719
    %4015 = vmatpush1.msra.mxu0 %v3718
    %4016 = vmatprep.subr.mxu0 %v3721
    %4017 = vmatpush1.msra.mxu0 %v3720
    %4018 = vmatprep.subr.mxu0 %v3723
    %4019 = vmatpush1.msra.mxu0 %v3722
    %4020 = vmatprep.subr.mxu0 %v3725
    %4021 = vmatpush1.msra.mxu0 %v3724
    %4022 = vmatprep.subr.mxu0 0.0
    %4023 = vmatpush1.msra.mxu0 0.0
    %4024 = vmatprep.subr.mxu0 0.0
    %4025 = vmatpush1.msra.mxu0 0.0
    %4026 = vmatprep.subr.mxu0 0.0
    %4027 = vmatpush1.msra.mxu0 0.0
    %4028 = vmatprep.subr.mxu0 0.0
    %4029 = vmatpush1.msra.mxu0 0.0
    %4030 = vmatprep.subr.mxu0 0.0
    %4031 = vmatpush1.msra.mxu0 0.0
    %4032 = vmatprep.subr.mxu0 0.0
    %4033 = vmatpush1.msra.mxu0 0.0
    %4034 = vmatprep.subr.mxu0 0.0
    %4035 = vmatpush1.msra.mxu0 0.0
    %4036 = vmatprep.subr.mxu0 0.0
    %4037 = vmatpush1.msra.mxu0 0.0
    %4038 = vmatprep.subr.mxu0 0.0
    %4039 = vmatpush1.msra.mxu0 0.0
    %4040 = vmatprep.subr.mxu0 0.0
    %4041 = vmatpush1.msra.mxu0 0.0
    %4042 = vmatprep.subr.mxu0 0.0
    %4043 = vmatpush1.msra.mxu0 0.0
    %4044 = vmatprep.subr.mxu0 0.0
    %4045 = vmatpush1.msra.mxu0 0.0
    %4046 = vmatprep.subr.mxu0 0.0
    %4047 = vmatpush1.msra.mxu0 0.0
    %4048 = vmatprep.subr.mxu0 0.0
    %4049 = vmatpush1.msra.mxu0 0.0
    %4050 = vmatprep.subr.mxu0 0.0
    %4051 = vmatpush1.msra.mxu0 0.0
    %4052 = vmatprep.subr.mxu0 0.0
    %4053 = vmatpush1.msra.mxu0 0.0
    %4054 = vmatprep.subr.mxu0 0.0
    %4055 = vmatpush1.msra.mxu0 0.0
    %4056 = vmatprep.subr.mxu0 0.0
    %4057 = vmatpush1.msra.mxu0 0.0
    %4058 = vmatprep.subr.mxu0 0.0
    %4059 = vmatpush1.msra.mxu0 0.0
    %4060 = vmatprep.subr.mxu0 0.0
    %4061 = vmatpush1.msra.mxu0 0.0
    %4062 = vmatprep.subr.mxu0 0.0
    %4063 = vmatpush1.msra.mxu0 0.0
    %4064 = vmatprep.subr.mxu0 0.0
    %4065 = vmatpush1.msra.mxu0 0.0
    %4066 = vmatprep.mubr.f32.mxu0 0.0
    %4067 = vmatmul.mubr.f32.gmra.mrb[0].mxu0 %v3997
    %v4068 = vpop.f32.mrb[0].mxu0
    %v4069 = vadd.f32 %v3986, %v4068
    %v4070 = vpop.f32.mrb[0].mxu0
    %v4071 = vadd.f32 %v3988, %v4070
    %4072 = vmatprep.mubr.f32.mxu0 0.0
    %4073 = vmatmul.mubr.f32.gmra.mrb[0].mxu0 %v4000
    %v4074 = vpop.f32.mrb[0].mxu0
    %v4075 = vadd.f32 %v3992, %v4074
    %v4076 = vpop.f32.mrb[0].mxu0
    %v4077 = vadd.f32 %v3994, %v4076
    %4078 = vdwg.mxu0
    %v4079 = vld [vmem:[%s16] sm:$0xff]
    %v4080 = vld [vmem:[%s16 + $0x8] sm:$0xff]
    %v4081 = vld [vmem:[%s16 + $0x10] sm:$0xf]
    %s4082 = scalar_lea.vmem %s16, 24
    %v4083 = vld [vmem:[%s4082] sm:$0xff]
    %v4084 = vld [vmem:[%s4082 + $0x8] sm:$0xff]
    %v4085 = vld [vmem:[%s4082 + $0x10] sm:$0xf]
    %v4087 = vsel %vm2895, %v4083, 0
    %v4090 = vsel %vm2895, %v4084, 0
    %v4093 = vsel %vm2895, %v4085, 0
    %v4096 = vsel %vm2899, %v4075, 0
    %v4099 = vsel %vm2899, %v4077, 0
    %4101 = vmatprep.subr.mxu0 %v4071
    %4102 = vmatpush1.msra.mxu0 %v4069
    %4103 = vmatprep.subr.mxu0 %v4099
    %4104 = vmatpush1.msra.mxu0 %v4096
    %4105 = vmatprep.subr.mxu0 0.0
    %4106 = vmatpush1.msra.mxu0 0.0
    %4107 = vmatprep.subr.mxu0 0.0
    %4108 = vmatpush1.msra.mxu0 0.0
    %4109 = vmatprep.subr.mxu0 0.0
    %4110 = vmatpush1.msra.mxu0 0.0
    %4111 = vmatprep.subr.mxu0 0.0
    %4112 = vmatpush1.msra.mxu0 0.0
    %4113 = vmatprep.subr.mxu0 0.0
    %4114 = vmatpush1.msra.mxu0 0.0
    %4115 = vmatprep.subr.mxu0 0.0
    %4116 = vmatpush1.msra.mxu0 0.0
    %4117 = vmatprep.subr.mxu0 0.0
    %4118 = vmatpush1.msra.mxu0 0.0
    %4119 = vmatprep.subr.mxu0 0.0
    %4120 = vmatpush1.msra.mxu0 0.0
    %4121 = vmatprep.subr.mxu0 0.0
    %4122 = vmatpush1.msra.mxu0 0.0
    %4123 = vmatprep.subr.mxu0 0.0
    %4124 = vmatpush1.msra.mxu0 0.0
    %4125 = vmatprep.subr.mxu0 0.0
    %4126 = vmatpush1.msra.mxu0 0.0
    %4127 = vmatprep.subr.mxu0 0.0
    %4128 = vmatpush1.msra.mxu0 0.0
    %4129 = vmatprep.subr.mxu0 0.0
    %4130 = vmatpush1.msra.mxu0 0.0
    %4131 = vmatprep.subr.mxu0 0.0
    %4132 = vmatpush1.msra.mxu0 0.0
    %4133 = vmatprep.subr.mxu0 0.0
    %4134 = vmatpush1.msra.mxu0 0.0
    %4135 = vmatprep.subr.mxu0 0.0
    %4136 = vmatpush1.msra.mxu0 0.0
    %4137 = vmatprep.subr.mxu0 0.0
    %4138 = vmatpush1.msra.mxu0 0.0
    %4139 = vmatprep.subr.mxu0 0.0
    %4140 = vmatpush1.msra.mxu0 0.0
    %4141 = vmatprep.subr.mxu0 0.0
    %4142 = vmatpush1.msra.mxu0 0.0
    %4143 = vmatprep.subr.mxu0 0.0
    %4144 = vmatpush1.msra.mxu0 0.0
    %4145 = vmatprep.subr.mxu0 0.0
    %4146 = vmatpush1.msra.mxu0 0.0
    %4147 = vmatprep.subr.mxu0 0.0
    %4148 = vmatpush1.msra.mxu0 0.0
    %4149 = vmatprep.subr.mxu0 0.0
    %4150 = vmatpush1.msra.mxu0 0.0
    %4151 = vmatprep.subr.mxu0 0.0
    %4152 = vmatpush1.msra.mxu0 0.0
    %4153 = vmatprep.subr.mxu0 0.0
    %4154 = vmatpush1.msra.mxu0 0.0
    %4155 = vmatprep.subr.mxu0 0.0
    %4156 = vmatpush1.msra.mxu0 0.0
    %4157 = vmatprep.subr.mxu0 0.0
    %4158 = vmatpush1.msra.mxu0 0.0
    %4159 = vmatprep.subr.mxu0 0.0
    %4160 = vmatpush1.msra.mxu0 0.0
    %4161 = vmatprep.subr.mxu0 0.0
    %4162 = vmatpush1.msra.mxu0 0.0
    %4163 = vmatprep.subr.mxu0 0.0
    %4164 = vmatpush1.msra.mxu0 0.0
    %4165 = vmatprep.mubr.f32.mxu0 0.0
    %4166 = vmatmul.mubr.f32.gmra.mrb[0].mxu0 %v4087
    %v4167 = vpop.f32.mrb[0].mxu0
    %v4168 = vadd.f32 0.0, %v4167
    %v4169 = vpop.f32.mrb[0].mxu0
    %v4170 = vadd.f32 0.0, %v4169
    %4171 = vmatprep.mubr.f32.mxu0 0.0
    %4172 = vmatmul.mubr.f32.gmra.mrb[0].mxu0 %v4090
    %v4173 = vpop.f32.mrb[0].mxu0
    %v4174 = vadd.f32 0.0, %v4173
    %v4175 = vpop.f32.mrb[0].mxu0
    %v4176 = vadd.f32 0.0, %v4175
    %4177 = vmatprep.mubr.f32.mxu0 0.0
    %4178 = vmatmul.mubr.f32.gmra.mrb[0].mxu0 %v4093
    %v4179 = vpop.f32.mrb[0].mxu0
    %v4180 = vadd.f32 0.0, %v4179
    %v4181 = vpop.f32.mrb[0].mxu0
    %v4182 = vadd.f32 0.0, %v4181
    %4183 = vdwg.mxu0
    %v4185 = vsel %vm2895, %v4079, 0
    %v4188 = vsel %vm2895, %v4080, 0
    %v4191 = vsel %vm2895, %v4081, 0
    %v4194 = vsel %vm2899, %v3909, 0
    %v4197 = vsel %vm2899, %v3911, 0
    %4199 = vmatprep.subr.mxu0 %v3905
    %4200 = vmatpush1.msra.mxu0 %v3903
    %4201 = vmatprep.subr.mxu0 %v4197
    %4202 = vmatpush1.msra.mxu0 %v4194
    %4203 = vmatprep.subr.mxu0 0.0
    %4204 = vmatpush1.msra.mxu0 0.0
    %4205 = vmatprep.subr.mxu0 0.0
    %4206 = vmatpush1.msra.mxu0 0.0
    %4207 = vmatprep.subr.mxu0 0.0
    %4208 = vmatpush1.msra.mxu0 0.0
    %4209 = vmatprep.subr.mxu0 0.0
    %4210 = vmatpush1.msra.mxu0 0.0
    %4211 = vmatprep.subr.mxu0 0.0
    %4212 = vmatpush1.msra.mxu0 0.0
    %4213 = vmatprep.subr.mxu0 0.0
    %4214 = vmatpush1.msra.mxu0 0.0
    %4215 = vmatprep.subr.mxu0 0.0
    %4216 = vmatpush1.msra.mxu0 0.0
    %4217 = vmatprep.subr.mxu0 0.0
    %4218 = vmatpush1.msra.mxu0 0.0
    %4219 = vmatprep.subr.mxu0 0.0
    %4220 = vmatpush1.msra.mxu0 0.0
    %4221 = vmatprep.subr.mxu0 0.0
    %4222 = vmatpush1.msra.mxu0 0.0
    %4223 = vmatprep.subr.mxu0 0.0
    %4224 = vmatpush1.msra.mxu0 0.0
    %4225 = vmatprep.subr.mxu0 0.0
    %4226 = vmatpush1.msra.mxu0 0.0
    %4227 = vmatprep.subr.mxu0 0.0
    %4228 = vmatpush1.msra.mxu0 0.0
    %4229 = vmatprep.subr.mxu0 0.0
    %4230 = vmatpush1.msra.mxu0 0.0
    %4231 = vmatprep.subr.mxu0 0.0
    %4232 = vmatpush1.msra.mxu0 0.0
    %4233 = vmatprep.subr.mxu0 0.0
    %4234 = vmatpush1.msra.mxu0 0.0
    %4235 = vmatprep.subr.mxu0 0.0
    %4236 = vmatpush1.msra.mxu0 0.0
    %4237 = vmatprep.subr.mxu0 0.0
    %4238 = vmatpush1.msra.mxu0 0.0
    %4239 = vmatprep.subr.mxu0 0.0
    %4240 = vmatpush1.msra.mxu0 0.0
    %4241 = vmatprep.subr.mxu0 0.0
    %4242 = vmatpush1.msra.mxu0 0.0
    %4243 = vmatprep.subr.mxu0 0.0
    %4244 = vmatpush1.msra.mxu0 0.0
    %4245 = vmatprep.subr.mxu0 0.0
    %4246 = vmatpush1.msra.mxu0 0.0
    %4247 = vmatprep.subr.mxu0 0.0
    %4248 = vmatpush1.msra.mxu0 0.0
    %4249 = vmatprep.subr.mxu0 0.0
    %4250 = vmatpush1.msra.mxu0 0.0
    %4251 = vmatprep.subr.mxu0 0.0
    %4252 = vmatpush1.msra.mxu0 0.0
    %4253 = vmatprep.subr.mxu0 0.0
    %4254 = vmatpush1.msra.mxu0 0.0
    %4255 = vmatprep.subr.mxu0 0.0
    %4256 = vmatpush1.msra.mxu0 0.0
    %4257 = vmatprep.subr.mxu0 0.0
    %4258 = vmatpush1.msra.mxu0 0.0
    %4259 = vmatprep.subr.mxu0 0.0
    %4260 = vmatpush1.msra.mxu0 0.0
    %4261 = vmatprep.subr.mxu0 0.0
    %4262 = vmatpush1.msra.mxu0 0.0
    %4263 = vmatprep.mubr.f32.mxu0 0.0
    %4264 = vmatmul.mubr.f32.gmra.mrb[0].mxu0 %v4185
    %v4265 = vpop.f32.mrb[0].mxu0
    %v4266 = vadd.f32 %v4168, %v4265
    %v4267 = vpop.f32.mrb[0].mxu0
    %v4268 = vadd.f32 %v4170, %v4267
    %4269 = vmatprep.mubr.f32.mxu0 0.0
    %4270 = vmatmul.mubr.f32.gmra.mrb[0].mxu0 %v4188
    %v4271 = vpop.f32.mrb[0].mxu0
    %v4272 = vadd.f32 %v4174, %v4271
    %v4273 = vpop.f32.mrb[0].mxu0
    %v4274 = vadd.f32 %v4176, %v4273
    %4275 = vmatprep.mubr.f32.mxu0 0.0
    %4276 = vmatmul.mubr.f32.gmra.mrb[0].mxu0 %v4191
    %v4277 = vpop.f32.mrb[0].mxu0
    %v4278 = vadd.f32 %v4180, %v4277
    %v4279 = vpop.f32.mrb[0].mxu0
    %v4280 = vadd.f32 %v4182, %v4279
    %4281 = vdwg.mxu0
    %v4282 = vld [vmem:[%s18] sm:$0xff]
    %v4283 = vld [vmem:[%s18 + $0x8] sm:$0xff]
    %v4284 = vld [vmem:[%s18 + $0x10] sm:$0xff]
    %v4285 = vld [vmem:[%s18 + $0x18] sm:$0xf]
    %v4287 = vsel %vm2532, %v4282, 0
    %v4290 = vsel %vm2532, %v4283, 0
    %v4293 = vsel %vm2532, %v4284, 0
    %v4296 = vsel %vm2532, %v4285, 0
    %v4299 = vsel %vm1707, %v4278, 0
    %v4302 = vsel %vm1707, %v4280, 0
    %4304 = vmatprep.subr.mxu0 %v4268
    %4305 = vmatpush1.msra.mxu0 %v4266
    %4306 = vmatprep.subr.mxu0 %v4274
    %4307 = vmatpush1.msra.mxu0 %v4272
    %4308 = vmatprep.subr.mxu0 %v4302
    %4309 = vmatpush1.msra.mxu0 %v4299
    %4310 = vmatprep.subr.mxu0 0.0
    %4311 = vmatpush1.msra.mxu0 0.0
    %4312 = vmatprep.subr.mxu0 0.0
    %4313 = vmatpush1.msra.mxu0 0.0
    %4314 = vmatprep.subr.mxu0 0.0
    %4315 = vmatpush1.msra.mxu0 0.0
    %4316 = vmatprep.subr.mxu0 0.0
    %4317 = vmatpush1.msra.mxu0 0.0
    %4318 = vmatprep.subr.mxu0 0.0
    %4319 = vmatpush1.msra.mxu0 0.0
    %4320 = vmatprep.subr.mxu0 0.0
    %4321 = vmatpush1.msra.mxu0 0.0
    %4322 = vmatprep.subr.mxu0 0.0
    %4323 = vmatpush1.msra.mxu0 0.0
    %4324 = vmatprep.subr.mxu0 0.0
    %4325 = vmatpush1.msra.mxu0 0.0
    %4326 = vmatprep.subr.mxu0 0.0
    %4327 = vmatpush1.msra.mxu0 0.0
    %4328 = vmatprep.subr.mxu0 0.0
    %4329 = vmatpush1.msra.mxu0 0.0
    %4330 = vmatprep.subr.mxu0 0.0
    %4331 = vmatpush1.msra.mxu0 0.0
    %4332 = vmatprep.subr.mxu0 0.0
    %4333 = vmatpush1.msra.mxu0 0.0
    %4334 = vmatprep.subr.mxu0 0.0
    %4335 = vmatpush1.msra.mxu0 0.0
    %4336 = vmatprep.subr.mxu0 0.0
    %4337 = vmatpush1.msra.mxu0 0.0
    %4338 = vmatprep.subr.mxu0 0.0
    %4339 = vmatpush1.msra.mxu0 0.0
    %4340 = vmatprep.subr.mxu0 0.0
    %4341 = vmatpush1.msra.mxu0 0.0
    %4342 = vmatprep.subr.mxu0 0.0
    %4343 = vmatpush1.msra.mxu0 0.0
    %4344 = vmatprep.subr.mxu0 0.0
    %4345 = vmatpush1.msra.mxu0 0.0
    %4346 = vmatprep.subr.mxu0 0.0
    %4347 = vmatpush1.msra.mxu0 0.0
    %4348 = vmatprep.subr.mxu0 0.0
    %4349 = vmatpush1.msra.mxu0 0.0
    %4350 = vmatprep.subr.mxu0 0.0
    %4351 = vmatpush1.msra.mxu0 0.0
    %4352 = vmatprep.subr.mxu0 0.0
    %4353 = vmatpush1.msra.mxu0 0.0
    %4354 = vmatprep.subr.mxu0 0.0
    %4355 = vmatpush1.msra.mxu0 0.0
    %4356 = vmatprep.subr.mxu0 0.0
    %4357 = vmatpush1.msra.mxu0 0.0
    %4358 = vmatprep.subr.mxu0 0.0
    %4359 = vmatpush1.msra.mxu0 0.0
    %4360 = vmatprep.subr.mxu0 0.0
    %4361 = vmatpush1.msra.mxu0 0.0
    %4362 = vmatprep.subr.mxu0 0.0
    %4363 = vmatpush1.msra.mxu0 0.0
    %4364 = vmatprep.subr.mxu0 0.0
    %4365 = vmatpush1.msra.mxu0 0.0
    %4366 = vmatprep.subr.mxu0 0.0
    %4367 = vmatpush1.msra.mxu0 0.0
    %4368 = vmatprep.mubr.f32.mxu0 0.0
    %4369 = vmatmul.mubr.f32.gmra.mrb[0].mxu0 %v4287
    %v4370 = vpop.f32.mrb[0].mxu0
    %v4371 = vadd.f32 0.0, %v4370
    %v4372 = vpop.f32.mrb[0].mxu0
    %v4373 = vadd.f32 0.0, %v4372
    %4374 = vmatprep.mubr.f32.mxu0 0.0
    %4375 = vmatmul.mubr.f32.gmra.mrb[0].mxu0 %v4290
    %v4376 = vpop.f32.mrb[0].mxu0
    %v4377 = vadd.f32 0.0, %v4376
    %v4378 = vpop.f32.mrb[0].mxu0
    %v4379 = vadd.f32 0.0, %v4378
    %4380 = vmatprep.mubr.f32.mxu0 0.0
    %4381 = vmatmul.mubr.f32.gmra.mrb[0].mxu0 %v4293
    %v4382 = vpop.f32.mrb[0].mxu0
    %v4383 = vadd.f32 0.0, %v4382
    %v4384 = vpop.f32.mrb[0].mxu0
    %v4385 = vadd.f32 0.0, %v4384
    %4386 = vmatprep.mubr.f32.mxu0 0.0
    %4387 = vmatmul.mubr.f32.gmra.mrb[0].mxu0 %v4296
    %v4388 = vpop.f32.mrb[0].mxu0
    %v4389 = vadd.f32 0.0, %v4388
    %v4390 = vpop.f32.mrb[0].mxu0
    %v4391 = vadd.f32 0.0, %v4390
    %4392 = vdwg.mxu0
    %s4393 = scalar_lea.vmem %s18, 32
    %v4394 = vld [vmem:[%s4393] sm:$0xff]
    %v4395 = vld [vmem:[%s4393 + $0x8] sm:$0xff]
    %v4396 = vld [vmem:[%s4393 + $0x10] sm:$0xff]
    %v4397 = vld [vmem:[%s4393 + $0x18] sm:$0xf]
    %v4399 = vsel %vm2532, %v4394, 0
    %v4402 = vsel %vm2532, %v4395, 0
    %v4405 = vsel %vm2532, %v4396, 0
    %v4408 = vsel %vm2532, %v4397, 0
    %4410 = vmatprep.subr.mxu0 %v4268
    %4411 = vmatpush1.msra.mxu0 %v4266
    %4412 = vmatprep.subr.mxu0 %v4274
    %4413 = vmatpush1.msra.mxu0 %v4272
    %4414 = vmatprep.subr.mxu0 %v4302
    %4415 = vmatpush1.msra.mxu0 %v4299
    %4416 = vmatprep.subr.mxu0 0.0
    %4417 = vmatpush1.msra.mxu0 0.0
    %4418 = vmatprep.subr.mxu0 0.0
    %4419 = vmatpush1.msra.mxu0 0.0
    %4420 = vmatprep.subr.mxu0 0.0
    %4421 = vmatpush1.msra.mxu0 0.0
    %4422 = vmatprep.subr.mxu0 0.0
    %4423 = vmatpush1.msra.mxu0 0.0
    %4424 = vmatprep.subr.mxu0 0.0
    %4425 = vmatpush1.msra.mxu0 0.0
    %4426 = vmatprep.subr.mxu0 0.0
    %4427 = vmatpush1.msra.mxu0 0.0
    %4428 = vmatprep.subr.mxu0 0.0
    %4429 = vmatpush1.msra.mxu0 0.0
    %4430 = vmatprep.subr.mxu0 0.0
    %4431 = vmatpush1.msra.mxu0 0.0
    %4432 = vmatprep.subr.mxu0 0.0
    %4433 = vmatpush1.msra.mxu0 0.0
    %4434 = vmatprep.subr.mxu0 0.0
    %4435 = vmatpush1.msra.mxu0 0.0
    %4436 = vmatprep.subr.mxu0 0.0
    %4437 = vmatpush1.msra.mxu0 0.0
    %4438 = vmatprep.subr.mxu0 0.0
    %4439 = vmatpush1.msra.mxu0 0.0
    %4440 = vmatprep.subr.mxu0 0.0
    %4441 = vmatpush1.msra.mxu0 0.0
    %4442 = vmatprep.subr.mxu0 0.0
    %4443 = vmatpush1.msra.mxu0 0.0
    %4444 = vmatprep.subr.mxu0 0.0
    %4445 = vmatpush1.msra.mxu0 0.0
    %4446 = vmatprep.subr.mxu0 0.0
    %4447 = vmatpush1.msra.mxu0 0.0
    %4448 = vmatprep.subr.mxu0 0.0
    %4449 = vmatpush1.msra.mxu0 0.0
    %4450 = vmatprep.subr.mxu0 0.0
    %4451 = vmatpush1.msra.mxu0 0.0
    %4452 = vmatprep.subr.mxu0 0.0
    %4453 = vmatpush1.msra.mxu0 0.0
    %4454 = vmatprep.subr.mxu0 0.0
    %4455 = vmatpush1.msra.mxu0 0.0
    %4456 = vmatprep.subr.mxu0 0.0
    %4457 = vmatpush1.msra.mxu0 0.0
    %4458 = vmatprep.subr.mxu0 0.0
    %4459 = vmatpush1.msra.mxu0 0.0
    %4460 = vmatprep.subr.mxu0 0.0
    %4461 = vmatpush1.msra.mxu0 0.0
    %4462 = vmatprep.subr.mxu0 0.0
    %4463 = vmatpush1.msra.mxu0 0.0
    %4464 = vmatprep.subr.mxu0 0.0
    %4465 = vmatpush1.msra.mxu0 0.0
    %4466 = vmatprep.subr.mxu0 0.0
    %4467 = vmatpush1.msra.mxu0 0.0
    %4468 = vmatprep.subr.mxu0 0.0
    %4469 = vmatpush1.msra.mxu0 0.0
    %4470 = vmatprep.subr.mxu0 0.0
    %4471 = vmatpush1.msra.mxu0 0.0
    %4472 = vmatprep.subr.mxu0 0.0
    %4473 = vmatpush1.msra.mxu0 0.0
    %4474 = vmatprep.mubr.f32.mxu0 0.0
    %4475 = vmatmul.mubr.f32.gmra.mrb[0].mxu0 %v4399
    %v4476 = vpop.f32.mrb[0].mxu0
    %v4477 = vadd.f32 0.0, %v4476
    %v4478 = vpop.f32.mrb[0].mxu0
    %v4479 = vadd.f32 0.0, %v4478
    %4480 = vmatprep.mubr.f32.mxu0 0.0
    %4481 = vmatmul.mubr.f32.gmra.mrb[0].mxu0 %v4402
    %v4482 = vpop.f32.mrb[0].mxu0
    %v4483 = vadd.f32 0.0, %v4482
    %v4484 = vpop.f32.mrb[0].mxu0
    %v4485 = vadd.f32 0.0, %v4484
    %4486 = vmatprep.mubr.f32.mxu0 0.0
    %4487 = vmatmul.mubr.f32.gmra.mrb[0].mxu0 %v4405
    %v4488 = vpop.f32.mrb[0].mxu0
    %v4489 = vadd.f32 0.0, %v4488
    %v4490 = vpop.f32.mrb[0].mxu0
    %v4491 = vadd.f32 0.0, %v4490
    %4492 = vmatprep.mubr.f32.mxu0 0.0
    %4493 = vmatmul.mubr.f32.gmra.mrb[0].mxu0 %v4408
    %v4494 = vpop.f32.mrb[0].mxu0
    %v4495 = vadd.f32 0.0, %v4494
    %v4496 = vpop.f32.mrb[0].mxu0
    %v4497 = vadd.f32 0.0, %v4496
    %4498 = vdwg.mxu0
    %s4499 = scalar_lea.vmem %s18, 64
    %v4500 = vld [vmem:[%s4499] sm:$0xff]
    %v4501 = vld [vmem:[%s4499 + $0x8] sm:$0xff]
    %v4502 = vld [vmem:[%s4499 + $0x10] sm:$0xff]
    %v4503 = vld [vmem:[%s4499 + $0x18] sm:$0xf]
    %v4505 = vsel %vm2532, %v4500, 0
    %v4508 = vsel %vm2532, %v4501, 0
    %v4511 = vsel %vm2532, %v4502, 0
    %v4514 = vsel %vm2532, %v4503, 0
    %4516 = vmatprep.subr.mxu0 %v4268
    %4517 = vmatpush1.msra.mxu0 %v4266
    %4518 = vmatprep.subr.mxu0 %v4274
    %4519 = vmatpush1.msra.mxu0 %v4272
    %4520 = vmatprep.subr.mxu0 %v4302
    %4521 = vmatpush1.msra.mxu0 %v4299
    %4522 = vmatprep.subr.mxu0 0.0
    %4523 = vmatpush1.msra.mxu0 0.0
    %4524 = vmatprep.subr.mxu0 0.0
    %4525 = vmatpush1.msra.mxu0 0.0
    %4526 = vmatprep.subr.mxu0 0.0
    %4527 = vmatpush1.msra.mxu0 0.0
    %4528 = vmatprep.subr.mxu0 0.0
    %4529 = vmatpush1.msra.mxu0 0.0
    %4530 = vmatprep.subr.mxu0 0.0
    %4531 = vmatpush1.msra.mxu0 0.0
    %4532 = vmatprep.subr.mxu0 0.0
    %4533 = vmatpush1.msra.mxu0 0.0
    %4534 = vmatprep.subr.mxu0 0.0
    %4535 = vmatpush1.msra.mxu0 0.0
    %4536 = vmatprep.subr.mxu0 0.0
    %4537 = vmatpush1.msra.mxu0 0.0
    %4538 = vmatprep.subr.mxu0 0.0
    %4539 = vmatpush1.msra.mxu0 0.0
    %4540 = vmatprep.subr.mxu0 0.0
    %4541 = vmatpush1.msra.mxu0 0.0
    %4542 = vmatprep.subr.mxu0 0.0
    %4543 = vmatpush1.msra.mxu0 0.0
    %4544 = vmatprep.subr.mxu0 0.0
    %4545 = vmatpush1.msra.mxu0 0.0
    %4546 = vmatprep.subr.mxu0 0.0
    %4547 = vmatpush1.msra.mxu0 0.0
    %4548 = vmatprep.subr.mxu0 0.0
    %4549 = vmatpush1.msra.mxu0 0.0
    %4550 = vmatprep.subr.mxu0 0.0
    %4551 = vmatpush1.msra.mxu0 0.0
    %4552 = vmatprep.subr.mxu0 0.0
    %4553 = vmatpush1.msra.mxu0 0.0
    %4554 = vmatprep.subr.mxu0 0.0
    %4555 = vmatpush1.msra.mxu0 0.0
    %4556 = vmatprep.subr.mxu0 0.0
    %4557 = vmatpush1.msra.mxu0 0.0
    %4558 = vmatprep.subr.mxu0 0.0
    %4559 = vmatpush1.msra.mxu0 0.0
    %4560 = vmatprep.subr.mxu0 0.0
    %4561 = vmatpush1.msra.mxu0 0.0
    %4562 = vmatprep.subr.mxu0 0.0
    %4563 = vmatpush1.msra.mxu0 0.0
    %4564 = vmatprep.subr.mxu0 0.0
    %4565 = vmatpush1.msra.mxu0 0.0
    %4566 = vmatprep.subr.mxu0 0.0
    %4567 = vmatpush1.msra.mxu0 0.0
    %4568 = vmatprep.subr.mxu0 0.0
    %4569 = vmatpush1.msra.mxu0 0.0
    %4570 = vmatprep.subr.mxu0 0.0
    %4571 = vmatpush1.msra.mxu0 0.0
    %4572 = vmatprep.subr.mxu0 0.0
    %4573 = vmatpush1.msra.mxu0 0.0
    %4574 = vmatprep.subr.mxu0 0.0
    %4575 = vmatpush1.msra.mxu0 0.0
    %4576 = vmatprep.subr.mxu0 0.0
    %4577 = vmatpush1.msra.mxu0 0.0
    %4578 = vmatprep.subr.mxu0 0.0
    %4579 = vmatpush1.msra.mxu0 0.0
    %4580 = vmatprep.mubr.f32.mxu0 0.0
    %4581 = vmatmul.mubr.f32.gmra.mrb[0].mxu0 %v4505
    %v4582 = vpop.f32.mrb[0].mxu0
    %v4583 = vadd.f32 0.0, %v4582
    %v4584 = vpop.f32.mrb[0].mxu0
    %v4585 = vadd.f32 0.0, %v4584
    %4586 = vmatprep.mubr.f32.mxu0 0.0
    %4587 = vmatmul.mubr.f32.gmra.mrb[0].mxu0 %v4508
    %v4588 = vpop.f32.mrb[0].mxu0
    %v4589 = vadd.f32 0.0, %v4588
    %v4590 = vpop.f32.mrb[0].mxu0
    %v4591 = vadd.f32 0.0, %v4590
    %4592 = vmatprep.mubr.f32.mxu0 0.0
    %4593 = vmatmul.mubr.f32.gmra.mrb[0].mxu0 %v4511
    %v4594 = vpop.f32.mrb[0].mxu0
    %v4595 = vadd.f32 0.0, %v4594
    %v4596 = vpop.f32.mrb[0].mxu0
    %v4597 = vadd.f32 0.0, %v4596
    %4598 = vmatprep.mubr.f32.mxu0 0.0
    %4599 = vmatmul.mubr.f32.gmra.mrb[0].mxu0 %v4514
    %v4600 = vpop.f32.mrb[0].mxu0
    %v4601 = vadd.f32 0.0, %v4600
    %v4602 = vpop.f32.mrb[0].mxu0
    %v4603 = vadd.f32 0.0, %v4602
    %4604 = vdwg.mxu0
    %s4605 = scalar_lea.vmem %s18, 96
    %v4606 = vld [vmem:[%s4605] sm:$0xff]
    %v4607 = vld [vmem:[%s4605 + $0x8] sm:$0xff]
    %v4608 = vld [vmem:[%s4605 + $0x10] sm:$0xff]
    %v4609 = vld [vmem:[%s4605 + $0x18] sm:$0xf]
    %v4611 = vsel %vm2532, %v4606, 0
    %v4614 = vsel %vm2532, %v4607, 0
    %v4617 = vsel %vm2532, %v4608, 0
    %v4620 = vsel %vm2532, %v4609, 0
    %4622 = vmatprep.subr.mxu0 %v4268
    %4623 = vmatpush1.msra.mxu0 %v4266
    %4624 = vmatprep.subr.mxu0 %v4274
    %4625 = vmatpush1.msra.mxu0 %v4272
    %4626 = vmatprep.subr.mxu0 %v4302
    %4627 = vmatpush1.msra.mxu0 %v4299
    %4628 = vmatprep.subr.mxu0 0.0
    %4629 = vmatpush1.msra.mxu0 0.0
    %4630 = vmatprep.subr.mxu0 0.0
    %4631 = vmatpush1.msra.mxu0 0.0
    %4632 = vmatprep.subr.mxu0 0.0
    %4633 = vmatpush1.msra.mxu0 0.0
    %4634 = vmatprep.subr.mxu0 0.0
    %4635 = vmatpush1.msra.mxu0 0.0
    %4636 = vmatprep.subr.mxu0 0.0
    %4637 = vmatpush1.msra.mxu0 0.0
    %4638 = vmatprep.subr.mxu0 0.0
    %4639 = vmatpush1.msra.mxu0 0.0
    %4640 = vmatprep.subr.mxu0 0.0
    %4641 = vmatpush1.msra.mxu0 0.0
    %4642 = vmatprep.subr.mxu0 0.0
    %4643 = vmatpush1.msra.mxu0 0.0
    %4644 = vmatprep.subr.mxu0 0.0
    %4645 = vmatpush1.msra.mxu0 0.0
    %4646 = vmatprep.subr.mxu0 0.0
    %4647 = vmatpush1.msra.mxu0 0.0
    %4648 = vmatprep.subr.mxu0 0.0
    %4649 = vmatpush1.msra.mxu0 0.0
    %4650 = vmatprep.subr.mxu0 0.0
    %4651 = vmatpush1.msra.mxu0 0.0
    %4652 = vmatprep.subr.mxu0 0.0
    %4653 = vmatpush1.msra.mxu0 0.0
    %4654 = vmatprep.subr.mxu0 0.0
    %4655 = vmatpush1.msra.mxu0 0.0
    %4656 = vmatprep.subr.mxu0 0.0
    %4657 = vmatpush1.msra.mxu0 0.0
    %4658 = vmatprep.subr.mxu0 0.0
    %4659 = vmatpush1.msra.mxu0 0.0
    %4660 = vmatprep.subr.mxu0 0.0
    %4661 = vmatpush1.msra.mxu0 0.0
    %4662 = vmatprep.subr.mxu0 0.0
    %4663 = vmatpush1.msra.mxu0 0.0
    %4664 = vmatprep.subr.mxu0 0.0
    %4665 = vmatpush1.msra.mxu0 0.0
    %4666 = vmatprep.subr.mxu0 0.0
    %4667 = vmatpush1.msra.mxu0 0.0
    %4668 = vmatprep.subr.mxu0 0.0
    %4669 = vmatpush1.msra.mxu0 0.0
    %4670 = vmatprep.subr.mxu0 0.0
    %4671 = vmatpush1.msra.mxu0 0.0
    %4672 = vmatprep.subr.mxu0 0.0
    %4673 = vmatpush1.msra.mxu0 0.0
    %4674 = vmatprep.subr.mxu0 0.0
    %4675 = vmatpush1.msra.mxu0 0.0
    %4676 = vmatprep.subr.mxu0 0.0
    %4677 = vmatpush1.msra.mxu0 0.0
    %4678 = vmatprep.subr.mxu0 0.0
    %4679 = vmatpush1.msra.mxu0 0.0
    %4680 = vmatprep.subr.mxu0 0.0
    %4681 = vmatpush1.msra.mxu0 0.0
    %4682 = vmatprep.subr.mxu0 0.0
    %4683 = vmatpush1.msra.mxu0 0.0
    %4684 = vmatprep.subr.mxu0 0.0
    %4685 = vmatpush1.msra.mxu0 0.0
    %4686 = vmatprep.mubr.f32.mxu0 0.0
    %4687 = vmatmul.mubr.f32.gmra.mrb[0].mxu0 %v4611
    %v4688 = vpop.f32.mrb[0].mxu0
    %v4689 = vadd.f32 0.0, %v4688
    %v4690 = vpop.f32.mrb[0].mxu0
    %v4691 = vadd.f32 0.0, %v4690
    %4692 = vmatprep.mubr.f32.mxu0 0.0
    %4693 = vmatmul.mubr.f32.gmra.mrb[0].mxu0 %v4614
    %v4694 = vpop.f32.mrb[0].mxu0
    %v4695 = vadd.f32 0.0, %v4694
    %v4696 = vpop.f32.mrb[0].mxu0
    %v4697 = vadd.f32 0.0, %v4696
    %4698 = vmatprep.mubr.f32.mxu0 0.0
    %4699 = vmatmul.mubr.f32.gmra.mrb[0].mxu0 %v4617
    %v4700 = vpop.f32.mrb[0].mxu0
    %v4701 = vadd.f32 0.0, %v4700
    %v4702 = vpop.f32.mrb[0].mxu0
    %v4703 = vadd.f32 0.0, %v4702
    %4704 = vmatprep.mubr.f32.mxu0 0.0
    %4705 = vmatmul.mubr.f32.gmra.mrb[0].mxu0 %v4620
    %v4706 = vpop.f32.mrb[0].mxu0
    %v4707 = vadd.f32 0.0, %v4706
    %v4708 = vpop.f32.mrb[0].mxu0
    %v4709 = vadd.f32 0.0, %v4708
    %4710 = vdwg.mxu0
    %s4711 = scalar_lea.vmem %s18, 128
    %v4712 = vld [vmem:[%s4711] sm:$0xff]
    %v4713 = vld [vmem:[%s4711 + $0x8] sm:$0xff]
    %v4714 = vld [vmem:[%s4711 + $0x10] sm:$0xff]
    %v4715 = vld [vmem:[%s4711 + $0x18] sm:$0xf]
    %v4717 = vsel %vm2532, %v4712, 0
    %v4720 = vsel %vm2532, %v4713, 0
    %v4723 = vsel %vm2532, %v4714, 0
    %v4726 = vsel %vm2532, %v4715, 0
    %4728 = vmatprep.subr.mxu0 %v4268
    %4729 = vmatpush1.msra.mxu0 %v4266
    %4730 = vmatprep.subr.mxu0 %v4274
    %4731 = vmatpush1.msra.mxu0 %v4272
    %4732 = vmatprep.subr.mxu0 %v4302
    %4733 = vmatpush1.msra.mxu0 %v4299
    %4734 = vmatprep.subr.mxu0 0.0
    %4735 = vmatpush1.msra.mxu0 0.0
    %4736 = vmatprep.subr.mxu0 0.0
    %4737 = vmatpush1.msra.mxu0 0.0
    %4738 = vmatprep.subr.mxu0 0.0
    %4739 = vmatpush1.msra.mxu0 0.0
    %4740 = vmatprep.subr.mxu0 0.0
    %4741 = vmatpush1.msra.mxu0 0.0
    %4742 = vmatprep.subr.mxu0 0.0
    %4743 = vmatpush1.msra.mxu0 0.0
    %4744 = vmatprep.subr.mxu0 0.0
    %4745 = vmatpush1.msra.mxu0 0.0
    %4746 = vmatprep.subr.mxu0 0.0
    %4747 = vmatpush1.msra.mxu0 0.0
    %4748 = vmatprep.subr.mxu0 0.0
    %4749 = vmatpush1.msra.mxu0 0.0
    %4750 = vmatprep.subr.mxu0 0.0
    %4751 = vmatpush1.msra.mxu0 0.0
    %4752 = vmatprep.subr.mxu0 0.0
    %4753 = vmatpush1.msra.mxu0 0.0
    %4754 = vmatprep.subr.mxu0 0.0
    %4755 = vmatpush1.msra.mxu0 0.0
    %4756 = vmatprep.subr.mxu0 0.0
    %4757 = vmatpush1.msra.mxu0 0.0
    %4758 = vmatprep.subr.mxu0 0.0
    %4759 = vmatpush1.msra.mxu0 0.0
    %4760 = vmatprep.subr.mxu0 0.0
    %4761 = vmatpush1.msra.mxu0 0.0
    %4762 = vmatprep.subr.mxu0 0.0
    %4763 = vmatpush1.msra.mxu0 0.0
    %4764 = vmatprep.subr.mxu0 0.0
    %4765 = vmatpush1.msra.mxu0 0.0
    %4766 = vmatprep.subr.mxu0 0.0
    %4767 = vmatpush1.msra.mxu0 0.0
    %4768 = vmatprep.subr.mxu0 0.0
    %4769 = vmatpush1.msra.mxu0 0.0
    %4770 = vmatprep.subr.mxu0 0.0
    %4771 = vmatpush1.msra.mxu0 0.0
    %4772 = vmatprep.subr.mxu0 0.0
    %4773 = vmatpush1.msra.mxu0 0.0
    %4774 = vmatprep.subr.mxu0 0.0
    %4775 = vmatpush1.msra.mxu0 0.0
    %4776 = vmatprep.subr.mxu0 0.0
    %4777 = vmatpush1.msra.mxu0 0.0
    %4778 = vmatprep.subr.mxu0 0.0
    %4779 = vmatpush1.msra.mxu0 0.0
    %4780 = vmatprep.subr.mxu0 0.0
    %4781 = vmatpush1.msra.mxu0 0.0
    %4782 = vmatprep.subr.mxu0 0.0
    %4783 = vmatpush1.msra.mxu0 0.0
    %4784 = vmatprep.subr.mxu0 0.0
    %4785 = vmatpush1.msra.mxu0 0.0
    %4786 = vmatprep.subr.mxu0 0.0
    %4787 = vmatpush1.msra.mxu0 0.0
    %4788 = vmatprep.subr.mxu0 0.0
    %4789 = vmatpush1.msra.mxu0 0.0
    %4790 = vmatprep.subr.mxu0 0.0
    %4791 = vmatpush1.msra.mxu0 0.0
    %4792 = vmatprep.mubr.f32.mxu0 0.0
    %4793 = vmatmul.mubr.f32.gmra.mrb[0].mxu0 %v4717
    %v4794 = vpop.f32.mrb[0].mxu0
    %v4795 = vadd.f32 0.0, %v4794
    %v4796 = vpop.f32.mrb[0].mxu0
    %v4797 = vadd.f32 0.0, %v4796
    %4798 = vmatprep.mubr.f32.mxu0 0.0
    %4799 = vmatmul.mubr.f32.gmra.mrb[0].mxu0 %v4720
    %v4800 = vpop.f32.mrb[0].mxu0
    %v4801 = vadd.f32 0.0, %v4800
    %v4802 = vpop.f32.mrb[0].mxu0
    %v4803 = vadd.f32 0.0, %v4802
    %4804 = vmatprep.mubr.f32.mxu0 0.0
    %4805 = vmatmul.mubr.f32.gmra.mrb[0].mxu0 %v4723
    %v4806 = vpop.f32.mrb[0].mxu0
    %v4807 = vadd.f32 0.0, %v4806
    %v4808 = vpop.f32.mrb[0].mxu0
    %v4809 = vadd.f32 0.0, %v4808
    %4810 = vmatprep.mubr.f32.mxu0 0.0
    %4811 = vmatmul.mubr.f32.gmra.mrb[0].mxu0 %v4726
    %v4812 = vpop.f32.mrb[0].mxu0
    %v4813 = vadd.f32 0.0, %v4812
    %v4814 = vpop.f32.mrb[0].mxu0
    %v4815 = vadd.f32 0.0, %v4814
    %4816 = vdwg.mxu0
    %4825 = vrot.lane.b32.xlu0 %v4477, 32
    %v4826 = vpop.permute.xlu0 %4825
    %4827 = vrot.lane.b32.xlu0 %v4479, 32
    %v4828 = vpop.permute.xlu0 %4827
    %4829 = vrot.lane.b32.xlu0 %v4483, 32
    %v4830 = vpop.permute.xlu0 %4829
    %4831 = vrot.lane.b32.xlu0 %v4485, 32
    %v4832 = vpop.permute.xlu0 %4831
    %4833 = vrot.lane.b32.xlu0 %v4489, 32
    %v4834 = vpop.permute.xlu0 %4833
    %4835 = vrot.lane.b32.xlu0 %v4491, 32
    %v4836 = vpop.permute.xlu0 %4835
    %4837 = vrot.lane.b32.xlu0 %v4495, 32
    %v4838 = vpop.permute.xlu0 %4837
    %4839 = vrot.lane.b32.xlu0 %v4497, 32
    %v4840 = vpop.permute.xlu0 %4839
    %v4841 = vsel %vm838, %v4826, %v4828
    %v4842 = vsel %vm838, %v4830, %v4832
    %v4843 = vsel %vm838, %v4834, %v4836
    %v4844 = vsel %vm838, %v4838, %v4840
    %4861 = vrot.lane.b32.xlu0 %v4583, 64
    %v4862 = vpop.permute.xlu0 %4861
    %4863 = vrot.lane.b32.xlu0 %v4585, 64
    %v4864 = vpop.permute.xlu0 %4863
    %4865 = vrot.lane.b32.xlu0 %v4589, 64
    %v4866 = vpop.permute.xlu0 %4865
    %4867 = vrot.lane.b32.xlu0 %v4591, 64
    %v4868 = vpop.permute.xlu0 %4867
    %4869 = vrot.lane.b32.xlu0 %v4595, 64
    %v4870 = vpop.permute.xlu0 %4869
    %4871 = vrot.lane.b32.xlu0 %v4597, 64
    %v4872 = vpop.permute.xlu0 %4871
    %4873 = vrot.lane.b32.xlu0 %v4601, 64
    %v4874 = vpop.permute.xlu0 %4873
    %4875 = vrot.lane.b32.xlu0 %v4603, 64
    %v4876 = vpop.permute.xlu0 %4875
    %v4877 = vsel %vm101, %v4862, %v4864
    %v4878 = vsel %vm101, %v4866, %v4868
    %v4879 = vsel %vm101, %v4870, %v4872
    %v4880 = vsel %vm101, %v4874, %v4876
    %4897 = vrot.lane.b32.xlu0 %v4689, 96
    %v4898 = vpop.permute.xlu0 %4897
    %4899 = vrot.lane.b32.xlu0 %v4691, 96
    %v4900 = vpop.permute.xlu0 %4899
    %4901 = vrot.lane.b32.xlu0 %v4695, 96
    %v4902 = vpop.permute.xlu0 %4901
    %4903 = vrot.lane.b32.xlu0 %v4697, 96
    %v4904 = vpop.permute.xlu0 %4903
    %4905 = vrot.lane.b32.xlu0 %v4701, 96
    %v4906 = vpop.permute.xlu0 %4905
    %4907 = vrot.lane.b32.xlu0 %v4703, 96
    %v4908 = vpop.permute.xlu0 %4907
    %4909 = vrot.lane.b32.xlu0 %v4707, 96
    %v4910 = vpop.permute.xlu0 %4909
    %4911 = vrot.lane.b32.xlu0 %v4709, 96
    %v4912 = vpop.permute.xlu0 %4911
    %v4913 = vsel %vm823, %v4898, %v4900
    %v4914 = vsel %vm823, %v4902, %v4904
    %v4915 = vsel %vm823, %v4906, %v4908
    %v4916 = vsel %vm823, %v4910, %v4912
    %v4925 = vsel %vm838, %v4373, %v4826
    %v4926 = vsel %vm838, %v4379, %v4830
    %v4927 = vsel %vm838, %v4385, %v4834
    %v4928 = vsel %vm838, %v4391, %v4838
    %v4929 = vsel %vm101, %v4841, %v4862
    %v4930 = vsel %vm101, %v4842, %v4866
    %v4931 = vsel %vm101, %v4843, %v4870
    %v4932 = vsel %vm101, %v4844, %v4874
    %v4933 = vsel %vm823, %v4877, %v4898
    %v4934 = vsel %vm823, %v4878, %v4902
    %v4935 = vsel %vm823, %v4879, %v4906
    %v4936 = vsel %vm823, %v4880, %v4910
    %v4937 = vld [vmem:[%s19] sm:$0xff]
    %v4938 = vld [vmem:[%s19 + $0x8] sm:$0xff]
    %v4939 = vld [vmem:[%s19 + $0x10] sm:$0xff]
    %v4940 = vld [vmem:[%s19 + $0x18] sm:$0xff]
    %v4941 = vld [vmem:[%s19 + $0x20] sm:$0xff]
    %v4942 = vld [vmem:[%s19 + $0x28] sm:$0xff]
    %v4943 = vld [vmem:[%s19 + $0x30] sm:$0xff]
    %v4944 = vld [vmem:[%s19 + $0x38] sm:$0xff]
    %v4945 = vld [vmem:[%s19 + $0x40] sm:$0xff]
    %v4946 = vld [vmem:[%s19 + $0x48] sm:$0xff]
    %v4947 = vld [vmem:[%s19 + $0x50] sm:$0xff]
    %v4948 = vld [vmem:[%s19 + $0x58] sm:$0xff]
    %v4949 = vld [vmem:[%s19 + $0x60] sm:$0xff]
    %v4950 = vld [vmem:[%s19 + $0x68] sm:$0xff]
    %v4951 = vld [vmem:[%s19 + $0x70] sm:$0xff]
    %v4952 = vld [vmem:[%s19 + $0x78] sm:$0xff]
    %v4953 = vld [vmem:[%s19 + $0x80] sm:$0xff]
    %v4954 = vld [vmem:[%s19 + $0x88] sm:$0xff]
    %v4955 = vld [vmem:[%s19 + $0x90] sm:$0xff]
    %v4956 = vld [vmem:[%s19 + $0x98] sm:$0xff]
    %v4957 = vld [vmem:[%s19 + $0xa0] sm:$0xff]
    %v4958 = vld [vmem:[%s19 + $0xa8] sm:$0xff]
    %v4959 = vld [vmem:[%s19 + $0xb0] sm:$0xff]
    %v4960 = vld [vmem:[%s19 + $0xb8] sm:$0xff]
    %v4961 = vld [vmem:[%s19 + $0xc0] sm:$0xff]
    %v4962 = vld [vmem:[%s19 + $0xc8] sm:$0xff]
    %v4963 = vld [vmem:[%s19 + $0xd0] sm:$0xff]
    %v4964 = vld [vmem:[%s19 + $0xd8] sm:$0xff]
    %v4965 = vld [vmem:[%s19 + $0xe0] sm:$0xff]
    %v4966 = vld [vmem:[%s19 + $0xe8] sm:$0xff]
    %v4967 = vld [vmem:[%s19 + $0xf0] sm:$0xff]
    %v4968 = vld [vmem:[%s19 + $0xf8] sm:$0xff]
    %v4969 = vld [vmem:[%s19 + $0x100] sm:$0xff]
    %v4970 = vld [vmem:[%s19 + $0x108] sm:$0xff]
    %v4971 = vld [vmem:[%s19 + $0x110] sm:$0xff]
    %v4972 = vld [vmem:[%s19 + $0x118] sm:$0xff]
    %v4973 = vld [vmem:[%s19 + $0x120] sm:$0xff]
    %v4974 = vld [vmem:[%s19 + $0x128] sm:$0xff]
    %v4975 = vld [vmem:[%s19 + $0x130] sm:$0xff]
    %v4976 = vld [vmem:[%s19 + $0x138] sm:$0xff]
    %v4977 = vld [vmem:[%s19 + $0x140] sm:$0xff]
    %v4978 = vld [vmem:[%s19 + $0x148] sm:$0xff]
    %v4979 = vld [vmem:[%s19 + $0x150] sm:$0xff]
    %v4980 = vld [vmem:[%s19 + $0x158] sm:$0xff]
    %v4981 = vld [vmem:[%s19 + $0x160] sm:$0xff]
    %v4982 = vld [vmem:[%s19 + $0x168] sm:$0xff]
    %v4983 = vld [vmem:[%s19 + $0x170] sm:$0xff]
    %v4984 = vld [vmem:[%s19 + $0x178] sm:$0xff]
    %v4985 = vld [vmem:[%s19 + $0x180] sm:$0xff]
    %v4986 = vld [vmem:[%s19 + $0x188] sm:$0xff]
    %v4987 = vld [vmem:[%s19 + $0x190] sm:$0xff]
    %v4988 = vld [vmem:[%s19 + $0x198] sm:$0xff]
    %v4989 = vld [vmem:[%s19 + $0x1a0] sm:$0xff]
    %v4990 = vld [vmem:[%s19 + $0x1a8] sm:$0xff]
    %v4991 = vld [vmem:[%s19 + $0x1b0] sm:$0xff]
    %v4992 = vld [vmem:[%s19 + $0x1b8] sm:$0xff]
    %v4993 = vld [vmem:[%s19 + $0x1c0] sm:$0xff]
    %v4994 = vld [vmem:[%s19 + $0x1c8] sm:$0xff]
    %v4995 = vld [vmem:[%s19 + $0x1d0] sm:$0xff]
    %v4996 = vld [vmem:[%s19 + $0x1d8] sm:$0xff]
    %v4997 = vld [vmem:[%s19 + $0x1e0] sm:$0xff]
    %v4998 = vld [vmem:[%s19 + $0x1e8] sm:$0xff]
    %v4999 = vld [vmem:[%s19 + $0x1f0] sm:$0xff]
    %v5000 = vld [vmem:[%s19 + $0x1f8] sm:$0xff]
    %v5001 = vld [vmem:[%s19 + $0x200] sm:$0xff]
    %v5002 = vld [vmem:[%s19 + $0x208] sm:$0xff]
    %v5003 = vld [vmem:[%s19 + $0x210] sm:$0xff]
    %v5004 = vld [vmem:[%s19 + $0x218] sm:$0xff]
    %v5005 = vld [vmem:[%s19 + $0x220] sm:$0xff]
    %v5006 = vld [vmem:[%s19 + $0x228] sm:$0xff]
    %v5007 = vld [vmem:[%s19 + $0x230] sm:$0xff]
    %v5008 = vld [vmem:[%s19 + $0x238] sm:$0xff]
    %v5009 = vld [vmem:[%s19 + $0x240] sm:$0xff]
    %v5010 = vld [vmem:[%s19 + $0x248] sm:$0xff]
    %v5011 = vld [vmem:[%s19 + $0x250] sm:$0xff]
    %v5012 = vld [vmem:[%s19 + $0x258] sm:$0xff]
    %v5013 = vld [vmem:[%s19 + $0x260] sm:$0xff]
    %v5014 = vld [vmem:[%s19 + $0x268] sm:$0xff]
    %v5015 = vld [vmem:[%s19 + $0x270] sm:$0xff]
    %v5016 = vld [vmem:[%s19 + $0x278] sm:$0xff]
    %v5017 = vld [vmem:[%s19 + $0x280] sm:$0xff]
    %v5018 = vld [vmem:[%s19 + $0x288] sm:$0xff]
    %v5019 = vld [vmem:[%s19 + $0x290] sm:$0xff]
    %v5020 = vld [vmem:[%s19 + $0x298] sm:$0xff]
    %v5021 = vld [vmem:[%s19 + $0x2a0] sm:$0xff]
    %v5022 = vld [vmem:[%s19 + $0x2a8] sm:$0xff]
    %v5023 = vld [vmem:[%s19 + $0x2b0] sm:$0xff]
    %v5024 = vld [vmem:[%s19 + $0x2b8] sm:$0xff]
    %v5025 = vld [vmem:[%s19 + $0x2c0] sm:$0xff]
    %v5026 = vld [vmem:[%s19 + $0x2c8] sm:$0xff]
    %v5027 = vld [vmem:[%s19 + $0x2d0] sm:$0xff]
    %v5028 = vld [vmem:[%s19 + $0x2d8] sm:$0xff]
    %v5029 = vld [vmem:[%s19 + $0x2e0] sm:$0xff]
    %v5030 = vld [vmem:[%s19 + $0x2e8] sm:$0xff]
    %v5031 = vld [vmem:[%s19 + $0x2f0] sm:$0xff]
    %v5032 = vld [vmem:[%s19 + $0x2f8] sm:$0xff]
    %v5033 = vld [vmem:[%s19 + $0x300] sm:$0xff]
    %v5034 = vld [vmem:[%s19 + $0x308] sm:$0xff]
    %v5035 = vld [vmem:[%s19 + $0x310] sm:$0xff]
    %v5036 = vld [vmem:[%s19 + $0x318] sm:$0xff]
    %v5037 = vld [vmem:[%s20] sm:$0x1]
    %v5039 = vlaneseq
    %v5040 = vshrl.u32 %v5039, 7
    %v5041 = vsub.s32 0, %v5040
    %v5042 = vrot.slane %v5037, %v5041
    %v5045 = vsel %vm838, %v4797, 0
    %v5048 = vsel %vm838, %v4803, 0
    %v5051 = vsel %vm838, %v4809, 0
    %v5054 = vsel %vm838, %v4815, 0
    %5056 = vmatprep.subr.mxu0 0.0
    %5057 = vmatpush1.msra.mxu0 %v4937
    %5058 = vmatprep.subr.mxu0 0.0
    %5059 = vmatpush1.msra.mxu0 %v4938
    %5060 = vmatprep.subr.mxu0 0.0
    %5061 = vmatpush1.msra.mxu0 %v4939
    %5062 = vmatprep.subr.mxu0 0.0
    %5063 = vmatpush1.msra.mxu0 %v4940
    %5064 = vmatprep.subr.mxu0 0.0
    %5065 = vmatpush1.msra.mxu0 %v4941
    %5066 = vmatprep.subr.mxu0 0.0
    %5067 = vmatpush1.msra.mxu0 %v4942
    %5068 = vmatprep.subr.mxu0 0.0
    %5069 = vmatpush1.msra.mxu0 %v4943
    %5070 = vmatprep.subr.mxu0 0.0
    %5071 = vmatpush1.msra.mxu0 %v4944
    %5072 = vmatprep.subr.mxu0 0.0
    %5073 = vmatpush1.msra.mxu0 %v4945
    %5074 = vmatprep.subr.mxu0 0.0
    %5075 = vmatpush1.msra.mxu0 %v4946
    %5076 = vmatprep.subr.mxu0 0.0
    %5077 = vmatpush1.msra.mxu0 %v4947
    %5078 = vmatprep.subr.mxu0 0.0
    %5079 = vmatpush1.msra.mxu0 %v4948
    %5080 = vmatprep.subr.mxu0 0.0
    %5081 = vmatpush1.msra.mxu0 %v4949
    %5082 = vmatprep.subr.mxu0 0.0
    %5083 = vmatpush1.msra.mxu0 %v4950
    %5084 = vmatprep.subr.mxu0 0.0
    %5085 = vmatpush1.msra.mxu0 %v4951
    %5086 = vmatprep.subr.mxu0 0.0
    %5087 = vmatpush1.msra.mxu0 %v4952
    %5088 = vmatprep.subr.mxu0 0.0
    %5089 = vmatpush1.msra.mxu0 %v4953
    %5090 = vmatprep.subr.mxu0 0.0
    %5091 = vmatpush1.msra.mxu0 %v4954
    %5092 = vmatprep.subr.mxu0 0.0
    %5093 = vmatpush1.msra.mxu0 %v4955
    %5094 = vmatprep.subr.mxu0 0.0
    %5095 = vmatpush1.msra.mxu0 %v4956
    %5096 = vmatprep.subr.mxu0 0.0
    %5097 = vmatpush1.msra.mxu0 %v4957
    %5098 = vmatprep.subr.mxu0 0.0
    %5099 = vmatpush1.msra.mxu0 %v4958
    %5100 = vmatprep.subr.mxu0 0.0
    %5101 = vmatpush1.msra.mxu0 %v4959
    %5102 = vmatprep.subr.mxu0 0.0
    %5103 = vmatpush1.msra.mxu0 %v4960
    %5104 = vmatprep.subr.mxu0 0.0
    %5105 = vmatpush1.msra.mxu0 %v4961
    %5106 = vmatprep.subr.mxu0 0.0
    %5107 = vmatpush1.msra.mxu0 %v4962
    %5108 = vmatprep.subr.mxu0 0.0
    %5109 = vmatpush1.msra.mxu0 %v4963
    %5110 = vmatprep.subr.mxu0 0.0
    %5111 = vmatpush1.msra.mxu0 %v4964
    %5112 = vmatprep.subr.mxu0 0.0
    %5113 = vmatpush1.msra.mxu0 %v4965
    %5114 = vmatprep.subr.mxu0 0.0
    %5115 = vmatpush1.msra.mxu0 %v4966
    %5116 = vmatprep.subr.mxu0 0.0
    %5117 = vmatpush1.msra.mxu0 %v4967
    %5118 = vmatprep.subr.mxu0 0.0
    %5119 = vmatpush1.msra.mxu0 %v4968
    %5120 = vmatprep.mubr.f32.mxu0 %v4925
    %5121 = vmatmul.mubr.f32.gmra.mrb[0].mxu0 %v4371
    %v5122 = vpop.f32.mrb[0].mxu0
    %v5123 = vadd.f32 %v5042, %v5122
    %v5124 = vpop.f32.mrb[0].mxu0
    %5125 = vmatprep.mubr.f32.mxu0 %v4926
    %5126 = vmatmul.mubr.f32.gmra.mrb[0].mxu0 %v4377
    %v5127 = vpop.f32.mrb[0].mxu0
    %v5128 = vadd.f32 %v5042, %v5127
    %v5129 = vpop.f32.mrb[0].mxu0
    %5130 = vmatprep.mubr.f32.mxu0 %v4927
    %5131 = vmatmul.mubr.f32.gmra.mrb[0].mxu0 %v4383
    %v5132 = vpop.f32.mrb[0].mxu0
    %v5133 = vadd.f32 %v5042, %v5132
    %v5134 = vpop.f32.mrb[0].mxu0
    %5135 = vmatprep.mubr.f32.mxu0 %v4928
    %5136 = vmatmul.mubr.f32.gmra.mrb[0].mxu0 %v4389
    %v5137 = vpop.f32.mrb[0].mxu0
    %v5138 = vadd.f32 %v5042, %v5137
    %v5139 = vpop.f32.mrb[0].mxu0
    %5140 = vdwg.mxu0
    %5141 = vmatprep.subr.mxu0 0.0
    %5142 = vmatpush1.msra.mxu0 %v4969
    %5143 = vmatprep.subr.mxu0 0.0
    %5144 = vmatpush1.msra.mxu0 %v4970
    %5145 = vmatprep.subr.mxu0 0.0
    %5146 = vmatpush1.msra.mxu0 %v4971
    %5147 = vmatprep.subr.mxu0 0.0
    %5148 = vmatpush1.msra.mxu0 %v4972
    %5149 = vmatprep.subr.mxu0 0.0
    %5150 = vmatpush1.msra.mxu0 %v4973
    %5151 = vmatprep.subr.mxu0 0.0
    %5152 = vmatpush1.msra.mxu0 %v4974
    %5153 = vmatprep.subr.mxu0 0.0
    %5154 = vmatpush1.msra.mxu0 %v4975
    %5155 = vmatprep.subr.mxu0 0.0
    %5156 = vmatpush1.msra.mxu0 %v4976
    %5157 = vmatprep.subr.mxu0 0.0
    %5158 = vmatpush1.msra.mxu0 %v4977
    %5159 = vmatprep.subr.mxu0 0.0
    %5160 = vmatpush1.msra.mxu0 %v4978
    %5161 = vmatprep.subr.mxu0 0.0
    %5162 = vmatpush1.msra.mxu0 %v4979
    %5163 = vmatprep.subr.mxu0 0.0
    %5164 = vmatpush1.msra.mxu0 %v4980
    %5165 = vmatprep.subr.mxu0 0.0
    %5166 = vmatpush1.msra.mxu0 %v4981
    %5167 = vmatprep.subr.mxu0 0.0
    %5168 = vmatpush1.msra.mxu0 %v4982
    %5169 = vmatprep.subr.mxu0 0.0
    %5170 = vmatpush1.msra.mxu0 %v4983
    %5171 = vmatprep.subr.mxu0 0.0
    %5172 = vmatpush1.msra.mxu0 %v4984
    %5173 = vmatprep.subr.mxu0 0.0
    %5174 = vmatpush1.msra.mxu0 %v4985
    %5175 = vmatprep.subr.mxu0 0.0
    %5176 = vmatpush1.msra.mxu0 %v4986
    %5177 = vmatprep.subr.mxu0 0.0
    %5178 = vmatpush1.msra.mxu0 %v4987
    %5179 = vmatprep.subr.mxu0 0.0
    %5180 = vmatpush1.msra.mxu0 %v4988
    %5181 = vmatprep.subr.mxu0 0.0
    %5182 = vmatpush1.msra.mxu0 %v4989
    %5183 = vmatprep.subr.mxu0 0.0
    %5184 = vmatpush1.msra.mxu0 %v4990
    %5185 = vmatprep.subr.mxu0 0.0
    %5186 = vmatpush1.msra.mxu0 %v4991
    %5187 = vmatprep.subr.mxu0 0.0
    %5188 = vmatpush1.msra.mxu0 %v4992
    %5189 = vmatprep.subr.mxu0 0.0
    %5190 = vmatpush1.msra.mxu0 %v4993
    %5191 = vmatprep.subr.mxu0 0.0
    %5192 = vmatpush1.msra.mxu0 %v4994
    %5193 = vmatprep.subr.mxu0 0.0
    %5194 = vmatpush1.msra.mxu0 %v4995
    %5195 = vmatprep.subr.mxu0 0.0
    %5196 = vmatpush1.msra.mxu0 %v4996
    %5197 = vmatprep.subr.mxu0 0.0
    %5198 = vmatpush1.msra.mxu0 %v4997
    %5199 = vmatprep.subr.mxu0 0.0
    %5200 = vmatpush1.msra.mxu0 %v4998
    %5201 = vmatprep.subr.mxu0 0.0
    %5202 = vmatpush1.msra.mxu0 %v4999
    %5203 = vmatprep.subr.mxu0 0.0
    %5204 = vmatpush1.msra.mxu0 %v5000
    %5205 = vmatprep.mubr.f32.mxu0 %v4933
    %5206 = vmatmul.mubr.f32.gmra.mrb[0].mxu0 %v4929
    %v5207 = vpop.f32.mrb[0].mxu0
    %v5208 = vadd.f32 %v5123, %v5207
    %v5209 = vpop.f32.mrb[0].mxu0
    %5210 = vmatprep.mubr.f32.mxu0 %v4934
    %5211 = vmatmul.mubr.f32.gmra.mrb[0].mxu0 %v4930
    %v5212 = vpop.f32.mrb[0].mxu0
    %v5213 = vadd.f32 %v5128, %v5212
    %v5214 = vpop.f32.mrb[0].mxu0
    %5215 = vmatprep.mubr.f32.mxu0 %v4935
    %5216 = vmatmul.mubr.f32.gmra.mrb[0].mxu0 %v4931
    %v5217 = vpop.f32.mrb[0].mxu0
    %v5218 = vadd.f32 %v5133, %v5217
    %v5219 = vpop.f32.mrb[0].mxu0
    %5220 = vmatprep.mubr.f32.mxu0 %v4936
    %5221 = vmatmul.mubr.f32.gmra.mrb[0].mxu0 %v4932
    %v5222 = vpop.f32.mrb[0].mxu0
    %v5223 = vadd.f32 %v5138, %v5222
    %v5224 = vpop.f32.mrb[0].mxu0
    %5225 = vdwg.mxu0
    %5226 = vmatprep.subr.mxu0 0.0
    %5227 = vmatpush1.msra.mxu0 %v5001
    %5228 = vmatprep.subr.mxu0 0.0
    %5229 = vmatpush1.msra.mxu0 %v5002
    %5230 = vmatprep.subr.mxu0 0.0
    %5231 = vmatpush1.msra.mxu0 %v5003
    %5232 = vmatprep.subr.mxu0 0.0
    %5233 = vmatpush1.msra.mxu0 %v5004
    %5234 = vmatprep.subr.mxu0 0.0
    %5235 = vmatpush1.msra.mxu0 %v5005
    %5236 = vmatprep.subr.mxu0 0.0
    %5237 = vmatpush1.msra.mxu0 %v5006
    %5238 = vmatprep.subr.mxu0 0.0
    %5239 = vmatpush1.msra.mxu0 %v5007
    %5240 = vmatprep.subr.mxu0 0.0
    %5241 = vmatpush1.msra.mxu0 %v5008
    %5242 = vmatprep.subr.mxu0 0.0
    %5243 = vmatpush1.msra.mxu0 %v5009
    %5244 = vmatprep.subr.mxu0 0.0
    %5245 = vmatpush1.msra.mxu0 %v5010
    %5246 = vmatprep.subr.mxu0 0.0
    %5247 = vmatpush1.msra.mxu0 %v5011
    %5248 = vmatprep.subr.mxu0 0.0
    %5249 = vmatpush1.msra.mxu0 %v5012
    %5250 = vmatprep.subr.mxu0 0.0
    %5251 = vmatpush1.msra.mxu0 %v5013
    %5252 = vmatprep.subr.mxu0 0.0
    %5253 = vmatpush1.msra.mxu0 %v5014
    %5254 = vmatprep.subr.mxu0 0.0
    %5255 = vmatpush1.msra.mxu0 %v5015
    %5256 = vmatprep.subr.mxu0 0.0
    %5257 = vmatpush1.msra.mxu0 %v5016
    %5258 = vmatprep.subr.mxu0 0.0
    %5259 = vmatpush1.msra.mxu0 %v5017
    %5260 = vmatprep.subr.mxu0 0.0
    %5261 = vmatpush1.msra.mxu0 %v5018
    %5262 = vmatprep.subr.mxu0 0.0
    %5263 = vmatpush1.msra.mxu0 %v5019
    %5264 = vmatprep.subr.mxu0 0.0
    %5265 = vmatpush1.msra.mxu0 %v5020
    %5266 = vmatprep.subr.mxu0 0.0
    %5267 = vmatpush1.msra.mxu0 %v5021
    %5268 = vmatprep.subr.mxu0 0.0
    %5269 = vmatpush1.msra.mxu0 %v5022
    %5270 = vmatprep.subr.mxu0 0.0
    %5271 = vmatpush1.msra.mxu0 %v5023
    %5272 = vmatprep.subr.mxu0 0.0
    %5273 = vmatpush1.msra.mxu0 %v5024
    %5274 = vmatprep.subr.mxu0 0.0
    %5275 = vmatpush1.msra.mxu0 %v5025
    %5276 = vmatprep.subr.mxu0 0.0
    %5277 = vmatpush1.msra.mxu0 %v5026
    %5278 = vmatprep.subr.mxu0 0.0
    %5279 = vmatpush1.msra.mxu0 %v5027
    %5280 = vmatprep.subr.mxu0 0.0
    %5281 = vmatpush1.msra.mxu0 %v5028
    %5282 = vmatprep.subr.mxu0 0.0
    %5283 = vmatpush1.msra.mxu0 %v5029
    %5284 = vmatprep.subr.mxu0 0.0
    %5285 = vmatpush1.msra.mxu0 %v5030
    %5286 = vmatprep.subr.mxu0 0.0
    %5287 = vmatpush1.msra.mxu0 %v5031
    %5288 = vmatprep.subr.mxu0 0.0
    %5289 = vmatpush1.msra.mxu0 %v5032
    %5290 = vmatprep.mubr.f32.mxu0 %v4795
    %5291 = vmatmul.mubr.f32.gmra.mrb[0].mxu0 %v4913
    %v5292 = vpop.f32.mrb[0].mxu0
    %v5293 = vadd.f32 %v5208, %v5292
    %v5294 = vpop.f32.mrb[0].mxu0
    %5295 = vmatprep.mubr.f32.mxu0 %v4801
    %5296 = vmatmul.mubr.f32.gmra.mrb[0].mxu0 %v4914
    %v5297 = vpop.f32.mrb[0].mxu0
    %v5298 = vadd.f32 %v5213, %v5297
    %v5299 = vpop.f32.mrb[0].mxu0
    %5300 = vmatprep.mubr.f32.mxu0 %v4807
    %5301 = vmatmul.mubr.f32.gmra.mrb[0].mxu0 %v4915
    %v5302 = vpop.f32.mrb[0].mxu0
    %v5303 = vadd.f32 %v5218, %v5302
    %v5304 = vpop.f32.mrb[0].mxu0
    %5305 = vmatprep.mubr.f32.mxu0 %v4813
    %5306 = vmatmul.mubr.f32.gmra.mrb[0].mxu0 %v4916
    %v5307 = vpop.f32.mrb[0].mxu0
    %v5308 = vadd.f32 %v5223, %v5307
    %v5309 = vpop.f32.mrb[0].mxu0
    %5310 = vdwg.mxu0
    %5311 = vmatprep.subr.mxu0 0.0
    %5312 = vmatpush1.msra.mxu0 %v5033
    %5313 = vmatprep.subr.mxu0 0.0
    %5314 = vmatpush1.msra.mxu0 %v5034
    %5315 = vmatprep.subr.mxu0 0.0
    %5316 = vmatpush1.msra.mxu0 %v5035
    %5317 = vmatprep.subr.mxu0 0.0
    %5318 = vmatpush1.msra.mxu0 %v5036
    %5319 = vmatprep.subr.mxu0 0.0
    %5320 = vmatpush1.msra.mxu0 0.0
    %5321 = vmatprep.subr.mxu0 0.0
    %5322 = vmatpush1.msra.mxu0 0.0
    %5323 = vmatprep.subr.mxu0 0.0
    %5324 = vmatpush1.msra.mxu0 0.0
    %5325 = vmatprep.subr.mxu0 0.0
    %5326 = vmatpush1.msra.mxu0 0.0
    %5327 = vmatprep.subr.mxu0 0.0
    %5328 = vmatpush1.msra.mxu0 0.0
    %5329 = vmatprep.subr.mxu0 0.0
    %5330 = vmatpush1.msra.mxu0 0.0
    %5331 = vmatprep.subr.mxu0 0.0
    %5332 = vmatpush1.msra.mxu0 0.0
    %5333 = vmatprep.subr.mxu0 0.0
    %5334 = vmatpush1.msra.mxu0 0.0
    %5335 = vmatprep.subr.mxu0 0.0
    %5336 = vmatpush1.msra.mxu0 0.0
    %5337 = vmatprep.subr.mxu0 0.0
    %5338 = vmatpush1.msra.mxu0 0.0
    %5339 = vmatprep.subr.mxu0 0.0
    %5340 = vmatpush1.msra.mxu0 0.0
    %5341 = vmatprep.subr.mxu0 0.0
    %5342 = vmatpush1.msra.mxu0 0.0
    %5343 = vmatprep.subr.mxu0 0.0
    %5344 = vmatpush1.msra.mxu0 0.0
    %5345 = vmatprep.subr.mxu0 0.0
    %5346 = vmatpush1.msra.mxu0 0.0
    %5347 = vmatprep.subr.mxu0 0.0
    %5348 = vmatpush1.msra.mxu0 0.0
    %5349 = vmatprep.subr.mxu0 0.0
    %5350 = vmatpush1.msra.mxu0 0.0
    %5351 = vmatprep.subr.mxu0 0.0
    %5352 = vmatpush1.msra.mxu0 0.0
    %5353 = vmatprep.subr.mxu0 0.0
    %5354 = vmatpush1.msra.mxu0 0.0
    %5355 = vmatprep.subr.mxu0 0.0
    %5356 = vmatpush1.msra.mxu0 0.0
    %5357 = vmatprep.subr.mxu0 0.0
    %5358 = vmatpush1.msra.mxu0 0.0
    %5359 = vmatprep.subr.mxu0 0.0
    %5360 = vmatpush1.msra.mxu0 0.0
    %5361 = vmatprep.subr.mxu0 0.0
    %5362 = vmatpush1.msra.mxu0 0.0
    %5363 = vmatprep.subr.mxu0 0.0
    %5364 = vmatpush1.msra.mxu0 0.0
    %5365 = vmatprep.subr.mxu0 0.0
    %5366 = vmatpush1.msra.mxu0 0.0
    %5367 = vmatprep.subr.mxu0 0.0
    %5368 = vmatpush1.msra.mxu0 0.0
    %5369 = vmatprep.subr.mxu0 0.0
    %5370 = vmatpush1.msra.mxu0 0.0
    %5371 = vmatprep.subr.mxu0 0.0
    %5372 = vmatpush1.msra.mxu0 0.0
    %5373 = vmatprep.subr.mxu0 0.0
    %5374 = vmatpush1.msra.mxu0 0.0
    %5375 = vmatprep.mubr.f32.mxu0 0.0
    %5376 = vmatmul.mubr.f32.gmra.mrb[0].mxu0 %v5045
    %v5377 = vpop.f32.mrb[0].mxu0
    %v5378 = vadd.f32 %v5293, %v5377
    %v5379 = vpop.f32.mrb[0].mxu0
    %5380 = vmatprep.mubr.f32.mxu0 0.0
    %5381 = vmatmul.mubr.f32.gmra.mrb[0].mxu0 %v5048
    %v5382 = vpop.f32.mrb[0].mxu0
    %v5383 = vadd.f32 %v5298, %v5382
    %v5384 = vpop.f32.mrb[0].mxu0
    %5385 = vmatprep.mubr.f32.mxu0 0.0
    %5386 = vmatmul.mubr.f32.gmra.mrb[0].mxu0 %v5051
    %v5387 = vpop.f32.mrb[0].mxu0
    %v5388 = vadd.f32 %v5303, %v5387
    %v5389 = vpop.f32.mrb[0].mxu0
    %5390 = vmatprep.mubr.f32.mxu0 0.0
    %5391 = vmatmul.mubr.f32.gmra.mrb[0].mxu0 %v5054
    %v5392 = vpop.f32.mrb[0].mxu0
    %v5393 = vadd.f32 %v5308, %v5392
    %v5394 = vpop.f32.mrb[0].mxu0
    %5395 = vdwg.mxu0
    %v5396 = vmax.f32 %v5378, 0.0
    %v5397 = vmax.f32 %v5383, 0.0
    %v5398 = vmax.f32 %v5388, 0.0
    %v5399 = vmax.f32 %v5393, 0.0
    %vm5400 = vcmp.eq.s32.totalorder %v1690, 0
    %vm5401 = vcmp.eq.s32.totalorder %v1691, 0
    %vm5402 = vcmp.eq.s32.totalorder %v1692, 0
    %vm5403 = vcmp.eq.s32.totalorder %v1693, 0
    %v5404 = vsel %vm5400, %v5396, 0.0
    %v5405 = vsel %vm5401, %v5397, 0.0
    %v5406 = vsel %vm5402, %v5398, 0.0
    %v5407 = vsel %vm5403, %v5399, 0.0
    %vm5408 = vcmp.eq.s32.totalorder %v1690, 1
    %vm5409 = vcmp.eq.s32.totalorder %v1691, 1
    %vm5410 = vcmp.eq.s32.totalorder %v1692, 1
    %vm5411 = vcmp.eq.s32.totalorder %v1693, 1
    %v5412 = vsel %vm5408, %v5396, 0.0
    %v5413 = vsel %vm5409, %v5397, 0.0
    %v5414 = vsel %vm5410, %v5398, 0.0
    %v5415 = vsel %vm5411, %v5399, 0.0
    %vm5416 = vcmp.eq.s32.totalorder %v1690, 2
    %vm5417 = vcmp.eq.s32.totalorder %v1691, 2
    %vm5418 = vcmp.eq.s32.totalorder %v1692, 2
    %vm5419 = vcmp.eq.s32.totalorder %v1693, 2
    %v5420 = vsel %vm5416, %v5396, 0.0
    %v5421 = vsel %vm5417, %v5397, 0.0
    %v5422 = vsel %vm5418, %v5398, 0.0
    %v5423 = vsel %vm5419, %v5399, 0.0
    %vm5424 = vcmp.eq.s32.totalorder %v1690, 3
    %vm5425 = vcmp.eq.s32.totalorder %v1691, 3
    %vm5426 = vcmp.eq.s32.totalorder %v1692, 3
    %vm5427 = vcmp.eq.s32.totalorder %v1693, 3
    %v5428 = vsel %vm5424, %v5396, 0.0
    %v5429 = vsel %vm5425, %v5397, 0.0
    %v5430 = vsel %vm5426, %v5398, 0.0
    %v5431 = vsel %vm5427, %v5399, 0.0
    %v5432 = vld [vmem:[%s22] sm:$0xff]
    %v5433 = vld [vmem:[%s22 + $0x8] sm:$0xff]
    %v5434 = vld [vmem:[%s22 + $0x10] sm:$0xff]
    %v5435 = vld [vmem:[%s22 + $0x18] sm:$0xff]
    %v5436 = vld [vmem:[%s22 + $0x20] sm:$0xff]
    %v5437 = vld [vmem:[%s22 + $0x28] sm:$0xff]
    %v5438 = vld [vmem:[%s22 + $0x30] sm:$0xff]
    %v5439 = vld [vmem:[%s22 + $0x38] sm:$0xff]
    %v5440 = vld [vmem:[%s22 + $0x40] sm:$0xff]
    %v5441 = vld [vmem:[%s22 + $0x48] sm:$0xff]
    %v5442 = vld [vmem:[%s22 + $0x50] sm:$0xff]
    %v5443 = vld [vmem:[%s22 + $0x58] sm:$0xff]
    %v5444 = vld [vmem:[%s22 + $0x60] sm:$0xff]
    %v5445 = vld [vmem:[%s22 + $0x68] sm:$0xff]
    %v5446 = vld [vmem:[%s22 + $0x70] sm:$0xff]
    %v5447 = vld [vmem:[%s22 + $0x78] sm:$0xff]
    %v5448 = vld [vmem:[%s22 + $0x80] sm:$0xff]
    %v5449 = vld [vmem:[%s22 + $0x88] sm:$0xff]
    %v5450 = vld [vmem:[%s22 + $0x90] sm:$0xff]
    %v5451 = vld [vmem:[%s22 + $0x98] sm:$0xff]
    %v5452 = vld [vmem:[%s22 + $0xa0] sm:$0xf]
    %v5453 = vld [vmem:[%s22 + $0xa8] sm:$0xf]
    %s5454 = scalar_lea.vmem %s22, 176
    %v5455 = vld [vmem:[%s5454] sm:$0xff]
    %v5456 = vld [vmem:[%s5454 + $0x8] sm:$0xff]
    %v5457 = vld [vmem:[%s5454 + $0x10] sm:$0xff]
    %v5458 = vld [vmem:[%s5454 + $0x18] sm:$0xff]
    %v5459 = vld [vmem:[%s5454 + $0x20] sm:$0xff]
    %v5460 = vld [vmem:[%s5454 + $0x28] sm:$0xff]
    %v5461 = vld [vmem:[%s5454 + $0x30] sm:$0xff]
    %v5462 = vld [vmem:[%s5454 + $0x38] sm:$0xff]
    %v5463 = vld [vmem:[%s5454 + $0x40] sm:$0xff]
    %v5464 = vld [vmem:[%s5454 + $0x48] sm:$0xff]
    %v5465 = vld [vmem:[%s5454 + $0x50] sm:$0xff]
    %v5466 = vld [vmem:[%s5454 + $0x58] sm:$0xff]
    %v5467 = vld [vmem:[%s5454 + $0x60] sm:$0xff]
    %v5468 = vld [vmem:[%s5454 + $0x68] sm:$0xff]
    %v5469 = vld [vmem:[%s5454 + $0x70] sm:$0xff]
    %v5470 = vld [vmem:[%s5454 + $0x78] sm:$0xff]
    %v5471 = vld [vmem:[%s5454 + $0x80] sm:$0xff]
    %v5472 = vld [vmem:[%s5454 + $0x88] sm:$0xff]
    %v5473 = vld [vmem:[%s5454 + $0x90] sm:$0xff]
    %v5474 = vld [vmem:[%s5454 + $0x98] sm:$0xff]
    %v5475 = vld [vmem:[%s5454 + $0xa0] sm:$0xf]
    %v5476 = vld [vmem:[%s5454 + $0xa8] sm:$0xf]
    %v5478 = vsel %vm2211, %v5412, 0
    %v5481 = vsel %vm2211, %v5413, 0
    %v5484 = vsel %vm2211, %v5414, 0
    %v5487 = vsel %vm2211, %v5415, 0
    %v5490 = vsel %vm1707, %v5475, 0
    %v5493 = vsel %vm1707, %v5476, 0
    %5495 = vmatprep.subr.mxu0 %v5456
    %5496 = vmatpush1.msra.mxu0 %v5455
    %5497 = vmatprep.subr.mxu0 %v5458
    %5498 = vmatpush1.msra.mxu0 %v5457
    %5499 = vmatprep.subr.mxu0 %v5460
    %5500 = vmatpush1.msra.mxu0 %v5459
    %5501 = vmatprep.subr.mxu0 %v5462
    %5502 = vmatpush1.msra.mxu0 %v5461
    %5503 = vmatprep.subr.mxu0 %v5464
    %5504 = vmatpush1.msra.mxu0 %v5463
    %5505 = vmatprep.subr.mxu0 %v5466
    %5506 = vmatpush1.msra.mxu0 %v5465
    %5507 = vmatprep.subr.mxu0 %v5468
    %5508 = vmatpush1.msra.mxu0 %v5467
    %5509 = vmatprep.subr.mxu0 %v5470
    %5510 = vmatpush1.msra.mxu0 %v5469
    %5511 = vmatprep.subr.mxu0 %v5472
    %5512 = vmatpush1.msra.mxu0 %v5471
    %5513 = vmatprep.subr.mxu0 %v5474
    %5514 = vmatpush1.msra.mxu0 %v5473
    %5515 = vmatprep.subr.mxu0 %v5493
    %5516 = vmatpush1.msra.mxu0 %v5490
    %5517 = vmatprep.subr.mxu0 0.0
    %5518 = vmatpush1.msra.mxu0 0.0
    %5519 = vmatprep.subr.mxu0 0.0
    %5520 = vmatpush1.msra.mxu0 0.0
    %5521 = vmatprep.subr.mxu0 0.0
    %5522 = vmatpush1.msra.mxu0 0.0
    %5523 = vmatprep.subr.mxu0 0.0
    %5524 = vmatpush1.msra.mxu0 0.0
    %5525 = vmatprep.subr.mxu0 0.0
    %5526 = vmatpush1.msra.mxu0 0.0
    %5527 = vmatprep.subr.mxu0 0.0
    %5528 = vmatpush1.msra.mxu0 0.0
    %5529 = vmatprep.subr.mxu0 0.0
    %5530 = vmatpush1.msra.mxu0 0.0
    %5531 = vmatprep.subr.mxu0 0.0
    %5532 = vmatpush1.msra.mxu0 0.0
    %5533 = vmatprep.subr.mxu0 0.0
    %5534 = vmatpush1.msra.mxu0 0.0
    %5535 = vmatprep.subr.mxu0 0.0
    %5536 = vmatpush1.msra.mxu0 0.0
    %5537 = vmatprep.subr.mxu0 0.0
    %5538 = vmatpush1.msra.mxu0 0.0
    %5539 = vmatprep.subr.mxu0 0.0
    %5540 = vmatpush1.msra.mxu0 0.0
    %5541 = vmatprep.subr.mxu0 0.0
    %5542 = vmatpush1.msra.mxu0 0.0
    %5543 = vmatprep.subr.mxu0 0.0
    %5544 = vmatpush1.msra.mxu0 0.0
    %5545 = vmatprep.subr.mxu0 0.0
    %5546 = vmatpush1.msra.mxu0 0.0
    %5547 = vmatprep.subr.mxu0 0.0
    %5548 = vmatpush1.msra.mxu0 0.0
    %5549 = vmatprep.subr.mxu0 0.0
    %5550 = vmatpush1.msra.mxu0 0.0
    %5551 = vmatprep.subr.mxu0 0.0
    %5552 = vmatpush1.msra.mxu0 0.0
    %5553 = vmatprep.subr.mxu0 0.0
    %5554 = vmatpush1.msra.mxu0 0.0
    %5555 = vmatprep.subr.mxu0 0.0
    %5556 = vmatpush1.msra.mxu0 0.0
    %5557 = vmatprep.subr.mxu0 0.0
    %5558 = vmatpush1.msra.mxu0 0.0
    %5559 = vmatprep.mubr.f32.mxu0 0.0
    %5560 = vmatmul.mubr.f32.gmra.mrb[0].mxu0 %v5478
    %v5561 = vpop.f32.mrb[0].mxu0
    %v5562 = vadd.f32 0.0, %v5561
    %v5563 = vpop.f32.mrb[0].mxu0
    %v5564 = vadd.f32 0.0, %v5563
    %5565 = vmatprep.mubr.f32.mxu0 0.0
    %5566 = vmatmul.mubr.f32.gmra.mrb[0].mxu0 %v5481
    %v5567 = vpop.f32.mrb[0].mxu0
    %v5568 = vadd.f32 0.0, %v5567
    %v5569 = vpop.f32.mrb[0].mxu0
    %v5570 = vadd.f32 0.0, %v5569
    %5571 = vmatprep.mubr.f32.mxu0 0.0
    %5572 = vmatmul.mubr.f32.gmra.mrb[0].mxu0 %v5484
    %v5573 = vpop.f32.mrb[0].mxu0
    %v5574 = vadd.f32 0.0, %v5573
    %v5575 = vpop.f32.mrb[0].mxu0
    %v5576 = vadd.f32 0.0, %v5575
    %5577 = vmatprep.mubr.f32.mxu0 0.0
    %5578 = vmatmul.mubr.f32.gmra.mrb[0].mxu0 %v5487
    %v5579 = vpop.f32.mrb[0].mxu0
    %v5580 = vadd.f32 0.0, %v5579
    %v5581 = vpop.f32.mrb[0].mxu0
    %v5582 = vadd.f32 0.0, %v5581
    %5583 = vdwg.mxu0
    %v5585 = vsel %vm2211, %v5404, 0
    %v5588 = vsel %vm2211, %v5405, 0
    %v5591 = vsel %vm2211, %v5406, 0
    %v5594 = vsel %vm2211, %v5407, 0
    %v5597 = vsel %vm1707, %v5452, 0
    %v5600 = vsel %vm1707, %v5453, 0
    %5602 = vmatprep.subr.mxu0 %v5433
    %5603 = vmatpush1.msra.mxu0 %v5432
    %5604 = vmatprep.subr.mxu0 %v5435
    %5605 = vmatpush1.msra.mxu0 %v5434
    %5606 = vmatprep.subr.mxu0 %v5437
    %5607 = vmatpush1.msra.mxu0 %v5436
    %5608 = vmatprep.subr.mxu0 %v5439
    %5609 = vmatpush1.msra.mxu0 %v5438
    %5610 = vmatprep.subr.mxu0 %v5441
    %5611 = vmatpush1.msra.mxu0 %v5440
    %5612 = vmatprep.subr.mxu0 %v5443
    %5613 = vmatpush1.msra.mxu0 %v5442
    %5614 = vmatprep.subr.mxu0 %v5445
    %5615 = vmatpush1.msra.mxu0 %v5444
    %5616 = vmatprep.subr.mxu0 %v5447
    %5617 = vmatpush1.msra.mxu0 %v5446
    %5618 = vmatprep.subr.mxu0 %v5449
    %5619 = vmatpush1.msra.mxu0 %v5448
    %5620 = vmatprep.subr.mxu0 %v5451
    %5621 = vmatpush1.msra.mxu0 %v5450
    %5622 = vmatprep.subr.mxu0 %v5600
    %5623 = vmatpush1.msra.mxu0 %v5597
    %5624 = vmatprep.subr.mxu0 0.0
    %5625 = vmatpush1.msra.mxu0 0.0
    %5626 = vmatprep.subr.mxu0 0.0
    %5627 = vmatpush1.msra.mxu0 0.0
    %5628 = vmatprep.subr.mxu0 0.0
    %5629 = vmatpush1.msra.mxu0 0.0
    %5630 = vmatprep.subr.mxu0 0.0
    %5631 = vmatpush1.msra.mxu0 0.0
    %5632 = vmatprep.subr.mxu0 0.0
    %5633 = vmatpush1.msra.mxu0 0.0
    %5634 = vmatprep.subr.mxu0 0.0
    %5635 = vmatpush1.msra.mxu0 0.0
    %5636 = vmatprep.subr.mxu0 0.0
    %5637 = vmatpush1.msra.mxu0 0.0
    %5638 = vmatprep.subr.mxu0 0.0
    %5639 = vmatpush1.msra.mxu0 0.0
    %5640 = vmatprep.subr.mxu0 0.0
    %5641 = vmatpush1.msra.mxu0 0.0
    %5642 = vmatprep.subr.mxu0 0.0
    %5643 = vmatpush1.msra.mxu0 0.0
    %5644 = vmatprep.subr.mxu0 0.0
    %5645 = vmatpush1.msra.mxu0 0.0
    %5646 = vmatprep.subr.mxu0 0.0
    %5647 = vmatpush1.msra.mxu0 0.0
    %5648 = vmatprep.subr.mxu0 0.0
    %5649 = vmatpush1.msra.mxu0 0.0
    %5650 = vmatprep.subr.mxu0 0.0
    %5651 = vmatpush1.msra.mxu0 0.0
    %5652 = vmatprep.subr.mxu0 0.0
    %5653 = vmatpush1.msra.mxu0 0.0
    %5654 = vmatprep.subr.mxu0 0.0
    %5655 = vmatpush1.msra.mxu0 0.0
    %5656 = vmatprep.subr.mxu0 0.0
    %5657 = vmatpush1.msra.mxu0 0.0
    %5658 = vmatprep.subr.mxu0 0.0
    %5659 = vmatpush1.msra.mxu0 0.0
    %5660 = vmatprep.subr.mxu0 0.0
    %5661 = vmatpush1.msra.mxu0 0.0
    %5662 = vmatprep.subr.mxu0 0.0
    %5663 = vmatpush1.msra.mxu0 0.0
    %5664 = vmatprep.subr.mxu0 0.0
    %5665 = vmatpush1.msra.mxu0 0.0
    %5666 = vmatprep.mubr.f32.mxu0 0.0
    %5667 = vmatmul.mubr.f32.gmra.mrb[0].mxu0 %v5585
    %v5668 = vpop.f32.mrb[0].mxu0
    %v5669 = vadd.f32 %v5562, %v5668
    %v5670 = vpop.f32.mrb[0].mxu0
    %v5671 = vadd.f32 %v5564, %v5670
    %5672 = vmatprep.mubr.f32.mxu0 0.0
    %5673 = vmatmul.mubr.f32.gmra.mrb[0].mxu0 %v5588
    %v5674 = vpop.f32.mrb[0].mxu0
    %v5675 = vadd.f32 %v5568, %v5674
    %v5676 = vpop.f32.mrb[0].mxu0
    %v5677 = vadd.f32 %v5570, %v5676
    %5678 = vmatprep.mubr.f32.mxu0 0.0
    %5679 = vmatmul.mubr.f32.gmra.mrb[0].mxu0 %v5591
    %v5680 = vpop.f32.mrb[0].mxu0
    %v5681 = vadd.f32 %v5574, %v5680
    %v5682 = vpop.f32.mrb[0].mxu0
    %v5683 = vadd.f32 %v5576, %v5682
    %5684 = vmatprep.mubr.f32.mxu0 0.0
    %5685 = vmatmul.mubr.f32.gmra.mrb[0].mxu0 %v5594
    %v5686 = vpop.f32.mrb[0].mxu0
    %v5687 = vadd.f32 %v5580, %v5686
    %v5688 = vpop.f32.mrb[0].mxu0
    %v5689 = vadd.f32 %v5582, %v5688
    %5690 = vdwg.mxu0
    %v5692 = vsel %vm2211, %v5428, 0
    %v5695 = vsel %vm2211, %v5429, 0
    %v5698 = vsel %vm2211, %v5430, 0
    %v5701 = vsel %vm2211, %v5431, 0
    %5703 = vmatprep.subr.mxu0 %v5456
    %5704 = vmatpush1.msra.mxu0 %v5455
    %5705 = vmatprep.subr.mxu0 %v5458
    %5706 = vmatpush1.msra.mxu0 %v5457
    %5707 = vmatprep.subr.mxu0 %v5460
    %5708 = vmatpush1.msra.mxu0 %v5459
    %5709 = vmatprep.subr.mxu0 %v5462
    %5710 = vmatpush1.msra.mxu0 %v5461
    %5711 = vmatprep.subr.mxu0 %v5464
    %5712 = vmatpush1.msra.mxu0 %v5463
    %5713 = vmatprep.subr.mxu0 %v5466
    %5714 = vmatpush1.msra.mxu0 %v5465
    %5715 = vmatprep.subr.mxu0 %v5468
    %5716 = vmatpush1.msra.mxu0 %v5467
    %5717 = vmatprep.subr.mxu0 %v5470
    %5718 = vmatpush1.msra.mxu0 %v5469
    %5719 = vmatprep.subr.mxu0 %v5472
    %5720 = vmatpush1.msra.mxu0 %v5471
    %5721 = vmatprep.subr.mxu0 %v5474
    %5722 = vmatpush1.msra.mxu0 %v5473
    %5723 = vmatprep.subr.mxu0 %v5493
    %5724 = vmatpush1.msra.mxu0 %v5490
    %5725 = vmatprep.subr.mxu0 0.0
    %5726 = vmatpush1.msra.mxu0 0.0
    %5727 = vmatprep.subr.mxu0 0.0
    %5728 = vmatpush1.msra.mxu0 0.0
    %5729 = vmatprep.subr.mxu0 0.0
    %5730 = vmatpush1.msra.mxu0 0.0
    %5731 = vmatprep.subr.mxu0 0.0
    %5732 = vmatpush1.msra.mxu0 0.0
    %5733 = vmatprep.subr.mxu0 0.0
    %5734 = vmatpush1.msra.mxu0 0.0
    %5735 = vmatprep.subr.mxu0 0.0
    %5736 = vmatpush1.msra.mxu0 0.0
    %5737 = vmatprep.subr.mxu0 0.0
    %5738 = vmatpush1.msra.mxu0 0.0
    %5739 = vmatprep.subr.mxu0 0.0
    %5740 = vmatpush1.msra.mxu0 0.0
    %5741 = vmatprep.subr.mxu0 0.0
    %5742 = vmatpush1.msra.mxu0 0.0
    %5743 = vmatprep.subr.mxu0 0.0
    %5744 = vmatpush1.msra.mxu0 0.0
    %5745 = vmatprep.subr.mxu0 0.0
    %5746 = vmatpush1.msra.mxu0 0.0
    %5747 = vmatprep.subr.mxu0 0.0
    %5748 = vmatpush1.msra.mxu0 0.0
    %5749 = vmatprep.subr.mxu0 0.0
    %5750 = vmatpush1.msra.mxu0 0.0
    %5751 = vmatprep.subr.mxu0 0.0
    %5752 = vmatpush1.msra.mxu0 0.0
    %5753 = vmatprep.subr.mxu0 0.0
    %5754 = vmatpush1.msra.mxu0 0.0
    %5755 = vmatprep.subr.mxu0 0.0
    %5756 = vmatpush1.msra.mxu0 0.0
    %5757 = vmatprep.subr.mxu0 0.0
    %5758 = vmatpush1.msra.mxu0 0.0
    %5759 = vmatprep.subr.mxu0 0.0
    %5760 = vmatpush1.msra.mxu0 0.0
    %5761 = vmatprep.subr.mxu0 0.0
    %5762 = vmatpush1.msra.mxu0 0.0
    %5763 = vmatprep.subr.mxu0 0.0
    %5764 = vmatpush1.msra.mxu0 0.0
    %5765 = vmatprep.subr.mxu0 0.0
    %5766 = vmatpush1.msra.mxu0 0.0
    %5767 = vmatprep.mubr.f32.mxu0 0.0
    %5768 = vmatmul.mubr.f32.gmra.mrb[0].mxu0 %v5692
    %v5769 = vpop.f32.mrb[0].mxu0
    %v5770 = vadd.f32 0.0, %v5769
    %v5771 = vpop.f32.mrb[0].mxu0
    %v5772 = vadd.f32 0.0, %v5771
    %5773 = vmatprep.mubr.f32.mxu0 0.0
    %5774 = vmatmul.mubr.f32.gmra.mrb[0].mxu0 %v5695
    %v5775 = vpop.f32.mrb[0].mxu0
    %v5776 = vadd.f32 0.0, %v5775
    %v5777 = vpop.f32.mrb[0].mxu0
    %v5778 = vadd.f32 0.0, %v5777
    %5779 = vmatprep.mubr.f32.mxu0 0.0
    %5780 = vmatmul.mubr.f32.gmra.mrb[0].mxu0 %v5698
    %v5781 = vpop.f32.mrb[0].mxu0
    %v5782 = vadd.f32 0.0, %v5781
    %v5783 = vpop.f32.mrb[0].mxu0
    %v5784 = vadd.f32 0.0, %v5783
    %5785 = vmatprep.mubr.f32.mxu0 0.0
    %5786 = vmatmul.mubr.f32.gmra.mrb[0].mxu0 %v5701
    %v5787 = vpop.f32.mrb[0].mxu0
    %v5788 = vadd.f32 0.0, %v5787
    %v5789 = vpop.f32.mrb[0].mxu0
    %v5790 = vadd.f32 0.0, %v5789
    %5791 = vdwg.mxu0
    %v5793 = vsel %vm2211, %v5420, 0
    %v5796 = vsel %vm2211, %v5421, 0
    %v5799 = vsel %vm2211, %v5422, 0
    %v5802 = vsel %vm2211, %v5423, 0
    %5804 = vmatprep.subr.mxu0 %v5433
    %5805 = vmatpush1.msra.mxu0 %v5432
    %5806 = vmatprep.subr.mxu0 %v5435
    %5807 = vmatpush1.msra.mxu0 %v5434
    %5808 = vmatprep.subr.mxu0 %v5437
    %5809 = vmatpush1.msra.mxu0 %v5436
    %5810 = vmatprep.subr.mxu0 %v5439
    %5811 = vmatpush1.msra.mxu0 %v5438
    %5812 = vmatprep.subr.mxu0 %v5441
    %5813 = vmatpush1.msra.mxu0 %v5440
    %5814 = vmatprep.subr.mxu0 %v5443
    %5815 = vmatpush1.msra.mxu0 %v5442
    %5816 = vmatprep.subr.mxu0 %v5445
    %5817 = vmatpush1.msra.mxu0 %v5444
    %5818 = vmatprep.subr.mxu0 %v5447
    %5819 = vmatpush1.msra.mxu0 %v5446
    %5820 = vmatprep.subr.mxu0 %v5449
    %5821 = vmatpush1.msra.mxu0 %v5448
    %5822 = vmatprep.subr.mxu0 %v5451
    %5823 = vmatpush1.msra.mxu0 %v5450
    %5824 = vmatprep.subr.mxu0 %v5600
    %5825 = vmatpush1.msra.mxu0 %v5597
    %5826 = vmatprep.subr.mxu0 0.0
    %5827 = vmatpush1.msra.mxu0 0.0
    %5828 = vmatprep.subr.mxu0 0.0
    %5829 = vmatpush1.msra.mxu0 0.0
    %5830 = vmatprep.subr.mxu0 0.0
    %5831 = vmatpush1.msra.mxu0 0.0
    %5832 = vmatprep.subr.mxu0 0.0
    %5833 = vmatpush1.msra.mxu0 0.0
    %5834 = vmatprep.subr.mxu0 0.0
    %5835 = vmatpush1.msra.mxu0 0.0
    %5836 = vmatprep.subr.mxu0 0.0
    %5837 = vmatpush1.msra.mxu0 0.0
    %5838 = vmatprep.subr.mxu0 0.0
    %5839 = vmatpush1.msra.mxu0 0.0
    %5840 = vmatprep.subr.mxu0 0.0
    %5841 = vmatpush1.msra.mxu0 0.0
    %5842 = vmatprep.subr.mxu0 0.0
    %5843 = vmatpush1.msra.mxu0 0.0
    %5844 = vmatprep.subr.mxu0 0.0
    %5845 = vmatpush1.msra.mxu0 0.0
    %5846 = vmatprep.subr.mxu0 0.0
    %5847 = vmatpush1.msra.mxu0 0.0
    %5848 = vmatprep.subr.mxu0 0.0
    %5849 = vmatpush1.msra.mxu0 0.0
    %5850 = vmatprep.subr.mxu0 0.0
    %5851 = vmatpush1.msra.mxu0 0.0
    %5852 = vmatprep.subr.mxu0 0.0
    %5853 = vmatpush1.msra.mxu0 0.0
    %5854 = vmatprep.subr.mxu0 0.0
    %5855 = vmatpush1.msra.mxu0 0.0
    %5856 = vmatprep.subr.mxu0 0.0
    %5857 = vmatpush1.msra.mxu0 0.0
    %5858 = vmatprep.subr.mxu0 0.0
    %5859 = vmatpush1.msra.mxu0 0.0
    %5860 = vmatprep.subr.mxu0 0.0
    %5861 = vmatpush1.msra.mxu0 0.0
    %5862 = vmatprep.subr.mxu0 0.0
    %5863 = vmatpush1.msra.mxu0 0.0
    %5864 = vmatprep.subr.mxu0 0.0
    %5865 = vmatpush1.msra.mxu0 0.0
    %5866 = vmatprep.subr.mxu0 0.0
    %5867 = vmatpush1.msra.mxu0 0.0
    %5868 = vmatprep.mubr.f32.mxu0 0.0
    %5869 = vmatmul.mubr.f32.gmra.mrb[0].mxu0 %v5793
    %v5870 = vpop.f32.mrb[0].mxu0
    %v5871 = vadd.f32 %v5770, %v5870
    %v5872 = vpop.f32.mrb[0].mxu0
    %v5873 = vadd.f32 %v5772, %v5872
    %5874 = vmatprep.mubr.f32.mxu0 0.0
    %5875 = vmatmul.mubr.f32.gmra.mrb[0].mxu0 %v5796
    %v5876 = vpop.f32.mrb[0].mxu0
    %v5877 = vadd.f32 %v5776, %v5876
    %v5878 = vpop.f32.mrb[0].mxu0
    %v5879 = vadd.f32 %v5778, %v5878
    %5880 = vmatprep.mubr.f32.mxu0 0.0
    %5881 = vmatmul.mubr.f32.gmra.mrb[0].mxu0 %v5799
    %v5882 = vpop.f32.mrb[0].mxu0
    %v5883 = vadd.f32 %v5782, %v5882
    %v5884 = vpop.f32.mrb[0].mxu0
    %v5885 = vadd.f32 %v5784, %v5884
    %5886 = vmatprep.mubr.f32.mxu0 0.0
    %5887 = vmatmul.mubr.f32.gmra.mrb[0].mxu0 %v5802
    %v5888 = vpop.f32.mrb[0].mxu0
    %v5889 = vadd.f32 %v5788, %v5888
    %v5890 = vpop.f32.mrb[0].mxu0
    %v5891 = vadd.f32 %v5790, %v5890
    %5892 = vdwg.mxu0
    %v5893 = vld [vmem:[%s21] sm:$0xff]
    %v5894 = vld [vmem:[%s21 + $0x8] sm:$0xff]
    %v5895 = vld [vmem:[%s21 + $0x10] sm:$0xff]
    %v5896 = vld [vmem:[%s21 + $0x18] sm:$0xff]
    %v5897 = vld [vmem:[%s21 + $0x20] sm:$0xff]
    %v5898 = vld [vmem:[%s21 + $0x28] sm:$0xff]
    %v5899 = vld [vmem:[%s21 + $0x30] sm:$0xff]
    %s5900 = scalar_lea.vmem %s21, 56
    %v5901 = vld [vmem:[%s5900] sm:$0xff]
    %v5902 = vld [vmem:[%s5900 + $0x8] sm:$0xff]
    %v5903 = vld [vmem:[%s5900 + $0x10] sm:$0xff]
    %v5904 = vld [vmem:[%s5900 + $0x18] sm:$0xff]
    %v5905 = vld [vmem:[%s5900 + $0x20] sm:$0xff]
    %v5906 = vld [vmem:[%s5900 + $0x28] sm:$0xff]
    %v5907 = vld [vmem:[%s5900 + $0x30] sm:$0xff]
    %v5909 = vsel %vm1697, %v5901, 0
    %v5912 = vsel %vm1697, %v5902, 0
    %v5915 = vsel %vm1697, %v5903, 0
    %v5918 = vsel %vm1697, %v5904, 0
    %v5921 = vsel %vm1697, %v5905, 0
    %v5924 = vsel %vm1697, %v5906, 0
    %v5927 = vsel %vm1697, %v5907, 0
    %v5930 = vsel %vm1707, %v5889, 0
    %v5933 = vsel %vm1707, %v5891, 0
    %5935 = vmatprep.subr.mxu0 %v5873
    %5936 = vmatpush1.msra.mxu0 %v5871
    %5937 = vmatprep.subr.mxu0 %v5879
    %5938 = vmatpush1.msra.mxu0 %v5877
    %5939 = vmatprep.subr.mxu0 %v5885
    %5940 = vmatpush1.msra.mxu0 %v5883
    %5941 = vmatprep.subr.mxu0 %v5933
    %5942 = vmatpush1.msra.mxu0 %v5930
    %5943 = vmatprep.subr.mxu0 0.0
    %5944 = vmatpush1.msra.mxu0 0.0
    %5945 = vmatprep.subr.mxu0 0.0
    %5946 = vmatpush1.msra.mxu0 0.0
    %5947 = vmatprep.subr.mxu0 0.0
    %5948 = vmatpush1.msra.mxu0 0.0
    %5949 = vmatprep.subr.mxu0 0.0
    %5950 = vmatpush1.msra.mxu0 0.0
    %5951 = vmatprep.subr.mxu0 0.0
    %5952 = vmatpush1.msra.mxu0 0.0
    %5953 = vmatprep.subr.mxu0 0.0
    %5954 = vmatpush1.msra.mxu0 0.0
    %5955 = vmatprep.subr.mxu0 0.0
    %5956 = vmatpush1.msra.mxu0 0.0
    %5957 = vmatprep.subr.mxu0 0.0
    %5958 = vmatpush1.msra.mxu0 0.0
    %5959 = vmatprep.subr.mxu0 0.0
    %5960 = vmatpush1.msra.mxu0 0.0
    %5961 = vmatprep.subr.mxu0 0.0
    %5962 = vmatpush1.msra.mxu0 0.0
    %5963 = vmatprep.subr.mxu0 0.0
    %5964 = vmatpush1.msra.mxu0 0.0
    %5965 = vmatprep.subr.mxu0 0.0
    %5966 = vmatpush1.msra.mxu0 0.0
    %5967 = vmatprep.subr.mxu0 0.0
    %5968 = vmatpush1.msra.mxu0 0.0
    %5969 = vmatprep.subr.mxu0 0.0
    %5970 = vmatpush1.msra.mxu0 0.0
    %5971 = vmatprep.subr.mxu0 0.0
    %5972 = vmatpush1.msra.mxu0 0.0
    %5973 = vmatprep.subr.mxu0 0.0
    %5974 = vmatpush1.msra.mxu0 0.0
    %5975 = vmatprep.subr.mxu0 0.0
    %5976 = vmatpush1.msra.mxu0 0.0
    %5977 = vmatprep.subr.mxu0 0.0
    %5978 = vmatpush1.msra.mxu0 0.0
    %5979 = vmatprep.subr.mxu0 0.0
    %5980 = vmatpush1.msra.mxu0 0.0
    %5981 = vmatprep.subr.mxu0 0.0
    %5982 = vmatpush1.msra.mxu0 0.0
    %5983 = vmatprep.subr.mxu0 0.0
    %5984 = vmatpush1.msra.mxu0 0.0
    %5985 = vmatprep.subr.mxu0 0.0
    %5986 = vmatpush1.msra.mxu0 0.0
    %5987 = vmatprep.subr.mxu0 0.0
    %5988 = vmatpush1.msra.mxu0 0.0
    %5989 = vmatprep.subr.mxu0 0.0
    %5990 = vmatpush1.msra.mxu0 0.0
    %5991 = vmatprep.subr.mxu0 0.0
    %5992 = vmatpush1.msra.mxu0 0.0
    %5993 = vmatprep.subr.mxu0 0.0
    %5994 = vmatpush1.msra.mxu0 0.0
    %5995 = vmatprep.subr.mxu0 0.0
    %5996 = vmatpush1.msra.mxu0 0.0
    %5997 = vmatprep.subr.mxu0 0.0
    %5998 = vmatpush1.msra.mxu0 0.0
    %5999 = vmatprep.mubr.f32.mxu0 0.0
    %6000 = vmatmul.mubr.f32.gmra.mrb[0].mxu0 %v5909
    %v6001 = vpop.f32.mrb[0].mxu0
    %v6002 = vadd.f32 0.0, %v6001
    %v6003 = vpop.f32.mrb[0].mxu0
    %v6004 = vadd.f32 0.0, %v6003
    %6005 = vmatprep.mubr.f32.mxu0 0.0
    %6006 = vmatmul.mubr.f32.gmra.mrb[0].mxu0 %v5912
    %v6007 = vpop.f32.mrb[0].mxu0
    %v6008 = vadd.f32 0.0, %v6007
    %v6009 = vpop.f32.mrb[0].mxu0
    %v6010 = vadd.f32 0.0, %v6009
    %6011 = vmatprep.mubr.f32.mxu0 0.0
    %6012 = vmatmul.mubr.f32.gmra.mrb[0].mxu0 %v5915
    %v6013 = vpop.f32.mrb[0].mxu0
    %v6014 = vadd.f32 0.0, %v6013
    %v6015 = vpop.f32.mrb[0].mxu0
    %v6016 = vadd.f32 0.0, %v6015
    %6017 = vmatprep.mubr.f32.mxu0 0.0
    %6018 = vmatmul.mubr.f32.gmra.mrb[0].mxu0 %v5918
    %v6019 = vpop.f32.mrb[0].mxu0
    %v6020 = vadd.f32 0.0, %v6019
    %v6021 = vpop.f32.mrb[0].mxu0
    %v6022 = vadd.f32 0.0, %v6021
    %6023 = vmatprep.mubr.f32.mxu0 0.0
    %6024 = vmatmul.mubr.f32.gmra.mrb[0].mxu0 %v5921
    %v6025 = vpop.f32.mrb[0].mxu0
    %v6026 = vadd.f32 0.0, %v6025
    %v6027 = vpop.f32.mrb[0].mxu0
    %v6028 = vadd.f32 0.0, %v6027
    %6029 = vmatprep.mubr.f32.mxu0 0.0
    %6030 = vmatmul.mubr.f32.gmra.mrb[0].mxu0 %v5924
    %v6031 = vpop.f32.mrb[0].mxu0
    %v6032 = vadd.f32 0.0, %v6031
    %v6033 = vpop.f32.mrb[0].mxu0
    %v6034 = vadd.f32 0.0, %v6033
    %6035 = vmatprep.mubr.f32.mxu0 0.0
    %6036 = vmatmul.mubr.f32.gmra.mrb[0].mxu0 %v5927
    %v6037 = vpop.f32.mrb[0].mxu0
    %v6038 = vadd.f32 0.0, %v6037
    %v6039 = vpop.f32.mrb[0].mxu0
    %v6040 = vadd.f32 0.0, %v6039
    %6041 = vdwg.mxu0
    %v6043 = vsel %vm1697, %v5893, 0
    %v6046 = vsel %vm1697, %v5894, 0
    %v6049 = vsel %vm1697, %v5895, 0
    %v6052 = vsel %vm1697, %v5896, 0
    %v6055 = vsel %vm1697, %v5897, 0
    %v6058 = vsel %vm1697, %v5898, 0
    %v6061 = vsel %vm1697, %v5899, 0
    %v6064 = vsel %vm1707, %v5687, 0
    %v6067 = vsel %vm1707, %v5689, 0
    %6069 = vmatprep.subr.mxu0 %v5671
    %6070 = vmatpush1.msra.mxu0 %v5669
    %6071 = vmatprep.subr.mxu0 %v5677
    %6072 = vmatpush1.msra.mxu0 %v5675
    %6073 = vmatprep.subr.mxu0 %v5683
    %6074 = vmatpush1.msra.mxu0 %v5681
    %6075 = vmatprep.subr.mxu0 %v6067
    %6076 = vmatpush1.msra.mxu0 %v6064
    %6077 = vmatprep.subr.mxu0 0.0
    %6078 = vmatpush1.msra.mxu0 0.0
    %6079 = vmatprep.subr.mxu0 0.0
    %6080 = vmatpush1.msra.mxu0 0.0
    %6081 = vmatprep.subr.mxu0 0.0
    %6082 = vmatpush1.msra.mxu0 0.0
    %6083 = vmatprep.subr.mxu0 0.0
    %6084 = vmatpush1.msra.mxu0 0.0
    %6085 = vmatprep.subr.mxu0 0.0
    %6086 = vmatpush1.msra.mxu0 0.0
    %6087 = vmatprep.subr.mxu0 0.0
    %6088 = vmatpush1.msra.mxu0 0.0
    %6089 = vmatprep.subr.mxu0 0.0
    %6090 = vmatpush1.msra.mxu0 0.0
    %6091 = vmatprep.subr.mxu0 0.0
    %6092 = vmatpush1.msra.mxu0 0.0
    %6093 = vmatprep.subr.mxu0 0.0
    %6094 = vmatpush1.msra.mxu0 0.0
    %6095 = vmatprep.subr.mxu0 0.0
    %6096 = vmatpush1.msra.mxu0 0.0
    %6097 = vmatprep.subr.mxu0 0.0
    %6098 = vmatpush1.msra.mxu0 0.0
    %6099 = vmatprep.subr.mxu0 0.0
    %6100 = vmatpush1.msra.mxu0 0.0
    %6101 = vmatprep.subr.mxu0 0.0
    %6102 = vmatpush1.msra.mxu0 0.0
    %6103 = vmatprep.subr.mxu0 0.0
    %6104 = vmatpush1.msra.mxu0 0.0
    %6105 = vmatprep.subr.mxu0 0.0
    %6106 = vmatpush1.msra.mxu0 0.0
    %6107 = vmatprep.subr.mxu0 0.0
    %6108 = vmatpush1.msra.mxu0 0.0
    %6109 = vmatprep.subr.mxu0 0.0
    %6110 = vmatpush1.msra.mxu0 0.0
    %6111 = vmatprep.subr.mxu0 0.0
    %6112 = vmatpush1.msra.mxu0 0.0
    %6113 = vmatprep.subr.mxu0 0.0
    %6114 = vmatpush1.msra.mxu0 0.0
    %6115 = vmatprep.subr.mxu0 0.0
    %6116 = vmatpush1.msra.mxu0 0.0
    %6117 = vmatprep.subr.mxu0 0.0
    %6118 = vmatpush1.msra.mxu0 0.0
    %6119 = vmatprep.subr.mxu0 0.0
    %6120 = vmatpush1.msra.mxu0 0.0
    %6121 = vmatprep.subr.mxu0 0.0
    %6122 = vmatpush1.msra.mxu0 0.0
    %6123 = vmatprep.subr.mxu0 0.0
    %6124 = vmatpush1.msra.mxu0 0.0
    %6125 = vmatprep.subr.mxu0 0.0
    %6126 = vmatpush1.msra.mxu0 0.0
    %6127 = vmatprep.subr.mxu0 0.0
    %6128 = vmatpush1.msra.mxu0 0.0
    %6129 = vmatprep.subr.mxu0 0.0
    %6130 = vmatpush1.msra.mxu0 0.0
    %6131 = vmatprep.subr.mxu0 0.0
    %6132 = vmatpush1.msra.mxu0 0.0
    %6133 = vmatprep.mubr.f32.mxu0 0.0
    %6134 = vmatmul.mubr.f32.gmra.mrb[0].mxu0 %v6043
    %v6135 = vpop.f32.mrb[0].mxu0
    %v6136 = vadd.f32 %v6002, %v6135
    %v6137 = vpop.f32.mrb[0].mxu0
    %v6138 = vadd.f32 %v6004, %v6137
    %6139 = vmatprep.mubr.f32.mxu0 0.0
    %6140 = vmatmul.mubr.f32.gmra.mrb[0].mxu0 %v6046
    %v6141 = vpop.f32.mrb[0].mxu0
    %v6142 = vadd.f32 %v6008, %v6141
    %v6143 = vpop.f32.mrb[0].mxu0
    %v6144 = vadd.f32 %v6010, %v6143
    %6145 = vmatprep.mubr.f32.mxu0 0.0
    %6146 = vmatmul.mubr.f32.gmra.mrb[0].mxu0 %v6049
    %v6147 = vpop.f32.mrb[0].mxu0
    %v6148 = vadd.f32 %v6014, %v6147
    %v6149 = vpop.f32.mrb[0].mxu0
    %v6150 = vadd.f32 %v6016, %v6149
    %6151 = vmatprep.mubr.f32.mxu0 0.0
    %6152 = vmatmul.mubr.f32.gmra.mrb[0].mxu0 %v6052
    %v6153 = vpop.f32.mrb[0].mxu0
    %v6154 = vadd.f32 %v6020, %v6153
    %v6155 = vpop.f32.mrb[0].mxu0
    %v6156 = vadd.f32 %v6022, %v6155
    %6157 = vmatprep.mubr.f32.mxu0 0.0
    %6158 = vmatmul.mubr.f32.gmra.mrb[0].mxu0 %v6055
    %v6159 = vpop.f32.mrb[0].mxu0
    %v6160 = vadd.f32 %v6026, %v6159
    %v6161 = vpop.f32.mrb[0].mxu0
    %v6162 = vadd.f32 %v6028, %v6161
    %6163 = vmatprep.mubr.f32.mxu0 0.0
    %6164 = vmatmul.mubr.f32.gmra.mrb[0].mxu0 %v6058
    %v6165 = vpop.f32.mrb[0].mxu0
    %v6166 = vadd.f32 %v6032, %v6165
    %v6167 = vpop.f32.mrb[0].mxu0
    %v6168 = vadd.f32 %v6034, %v6167
    %6169 = vmatprep.mubr.f32.mxu0 0.0
    %6170 = vmatmul.mubr.f32.gmra.mrb[0].mxu0 %v6061
    %v6171 = vpop.f32.mrb[0].mxu0
    %v6172 = vadd.f32 %v6038, %v6171
    %v6173 = vpop.f32.mrb[0].mxu0
    %v6174 = vadd.f32 %v6040, %v6173
    %6175 = vdwg.mxu0
    %v6176 = vld [vmem:[%s23] sm:$0xff]
    %v6177 = vld [vmem:[%s23 + $0x8] sm:$0xff]
    %v6178 = vld [vmem:[%s23 + $0x10] sm:$0xff]
    %v6179 = vld [vmem:[%s23 + $0x18] sm:$0xff]
    %v6180 = vld [vmem:[%s23 + $0x20] sm:$0xff]
    %v6181 = vld [vmem:[%s23 + $0x28] sm:$0xff]
    %v6182 = vld [vmem:[%s23 + $0x30] sm:$0xff]
    %v6183 = vld [vmem:[%s23 + $0x38] sm:$0xff]
    %v6185 = vsel %vm1231, %v6176, 0
    %v6188 = vsel %vm1231, %v6177, 0
    %v6191 = vsel %vm1231, %v6178, 0
    %v6194 = vsel %vm1231, %v6179, 0
    %v6197 = vsel %vm1231, %v6180, 0
    %v6200 = vsel %vm1231, %v6181, 0
    %v6203 = vsel %vm1231, %v6182, 0
    %v6206 = vsel %vm1231, %v6183, 0
    %6208 = vmatprep.subr.mxu0 %v6138
    %6209 = vmatpush1.msra.mxu0 %v6136
    %6210 = vmatprep.subr.mxu0 %v6144
    %6211 = vmatpush1.msra.mxu0 %v6142
    %6212 = vmatprep.subr.mxu0 %v6150
    %6213 = vmatpush1.msra.mxu0 %v6148
    %6214 = vmatprep.subr.mxu0 %v6156
    %6215 = vmatpush1.msra.mxu0 %v6154
    %6216 = vmatprep.subr.mxu0 %v6162
    %6217 = vmatpush1.msra.mxu0 %v6160
    %6218 = vmatprep.subr.mxu0 %v6168
    %6219 = vmatpush1.msra.mxu0 %v6166
    %6220 = vmatprep.subr.mxu0 %v6174
    %6221 = vmatpush1.msra.mxu0 %v6172
    %6222 = vmatprep.subr.mxu0 0.0
    %6223 = vmatpush1.msra.mxu0 0.0
    %6224 = vmatprep.subr.mxu0 0.0
    %6225 = vmatpush1.msra.mxu0 0.0
    %6226 = vmatprep.subr.mxu0 0.0
    %6227 = vmatpush1.msra.mxu0 0.0
    %6228 = vmatprep.subr.mxu0 0.0
    %6229 = vmatpush1.msra.mxu0 0.0
    %6230 = vmatprep.subr.mxu0 0.0
    %6231 = vmatpush1.msra.mxu0 0.0
    %6232 = vmatprep.subr.mxu0 0.0
    %6233 = vmatpush1.msra.mxu0 0.0
    %6234 = vmatprep.subr.mxu0 0.0
    %6235 = vmatpush1.msra.mxu0 0.0
    %6236 = vmatprep.subr.mxu0 0.0
    %6237 = vmatpush1.msra.mxu0 0.0
    %6238 = vmatprep.subr.mxu0 0.0
    %6239 = vmatpush1.msra.mxu0 0.0
    %6240 = vmatprep.subr.mxu0 0.0
    %6241 = vmatpush1.msra.mxu0 0.0
    %6242 = vmatprep.subr.mxu0 0.0
    %6243 = vmatpush1.msra.mxu0 0.0
    %6244 = vmatprep.subr.mxu0 0.0
    %6245 = vmatpush1.msra.mxu0 0.0
    %6246 = vmatprep.subr.mxu0 0.0
    %6247 = vmatpush1.msra.mxu0 0.0
    %6248 = vmatprep.subr.mxu0 0.0
    %6249 = vmatpush1.msra.mxu0 0.0
    %6250 = vmatprep.subr.mxu0 0.0
    %6251 = vmatpush1.msra.mxu0 0.0
    %6252 = vmatprep.subr.mxu0 0.0
    %6253 = vmatpush1.msra.mxu0 0.0
    %6254 = vmatprep.subr.mxu0 0.0
    %6255 = vmatpush1.msra.mxu0 0.0
    %6256 = vmatprep.subr.mxu0 0.0
    %6257 = vmatpush1.msra.mxu0 0.0
    %6258 = vmatprep.subr.mxu0 0.0
    %6259 = vmatpush1.msra.mxu0 0.0
    %6260 = vmatprep.subr.mxu0 0.0
    %6261 = vmatpush1.msra.mxu0 0.0
    %6262 = vmatprep.subr.mxu0 0.0
    %6263 = vmatpush1.msra.mxu0 0.0
    %6264 = vmatprep.subr.mxu0 0.0
    %6265 = vmatpush1.msra.mxu0 0.0
    %6266 = vmatprep.subr.mxu0 0.0
    %6267 = vmatpush1.msra.mxu0 0.0
    %6268 = vmatprep.subr.mxu0 0.0
    %6269 = vmatpush1.msra.mxu0 0.0
    %6270 = vmatprep.subr.mxu0 0.0
    %6271 = vmatpush1.msra.mxu0 0.0
    %6272 = vmatprep.mubr.f32.mxu0 0.0
    %6273 = vmatmul.mubr.f32.gmra.mrb[0].mxu0 %v6185
    %v6274 = vpop.f32.mrb[0].mxu0
    %v6275 = vadd.f32 0.0, %v6274
    %v6276 = vpop.f32.mrb[0].mxu0
    %v6277 = vadd.f32 0.0, %v6276
    %6278 = vmatprep.mubr.f32.mxu0 0.0
    %6279 = vmatmul.mubr.f32.gmra.mrb[0].mxu0 %v6188
    %v6280 = vpop.f32.mrb[0].mxu0
    %v6281 = vadd.f32 0.0, %v6280
    %v6282 = vpop.f32.mrb[0].mxu0
    %v6283 = vadd.f32 0.0, %v6282
    %6284 = vmatprep.mubr.f32.mxu0 0.0
    %6285 = vmatmul.mubr.f32.gmra.mrb[0].mxu0 %v6191
    %v6286 = vpop.f32.mrb[0].mxu0
    %v6287 = vadd.f32 0.0, %v6286
    %v6288 = vpop.f32.mrb[0].mxu0
    %v6289 = vadd.f32 0.0, %v6288
    %6290 = vmatprep.mubr.f32.mxu0 0.0
    %6291 = vmatmul.mubr.f32.gmra.mrb[0].mxu0 %v6194
    %v6292 = vpop.f32.mrb[0].mxu0
    %v6293 = vadd.f32 0.0, %v6292
    %v6294 = vpop.f32.mrb[0].mxu0
    %v6295 = vadd.f32 0.0, %v6294
    %6296 = vmatprep.mubr.f32.mxu0 0.0
    %6297 = vmatmul.mubr.f32.gmra.mrb[0].mxu0 %v6197
    %v6298 = vpop.f32.mrb[0].mxu0
    %v6299 = vadd.f32 0.0, %v6298
    %v6300 = vpop.f32.mrb[0].mxu0
    %v6301 = vadd.f32 0.0, %v6300
    %6302 = vmatprep.mubr.f32.mxu0 0.0
    %6303 = vmatmul.mubr.f32.gmra.mrb[0].mxu0 %v6200
    %v6304 = vpop.f32.mrb[0].mxu0
    %v6305 = vadd.f32 0.0, %v6304
    %v6306 = vpop.f32.mrb[0].mxu0
    %v6307 = vadd.f32 0.0, %v6306
    %6308 = vmatprep.mubr.f32.mxu0 0.0
    %6309 = vmatmul.mubr.f32.gmra.mrb[0].mxu0 %v6203
    %v6310 = vpop.f32.mrb[0].mxu0
    %v6311 = vadd.f32 0.0, %v6310
    %v6312 = vpop.f32.mrb[0].mxu0
    %v6313 = vadd.f32 0.0, %v6312
    %6314 = vmatprep.mubr.f32.mxu0 0.0
    %6315 = vmatmul.mubr.f32.gmra.mrb[0].mxu0 %v6206
    %v6316 = vpop.f32.mrb[0].mxu0
    %v6317 = vadd.f32 0.0, %v6316
    %v6318 = vpop.f32.mrb[0].mxu0
    %v6319 = vadd.f32 0.0, %v6318
    %6320 = vdwg.mxu0
    %s6321 = scalar_lea.vmem %s23, 64
    %v6322 = vld [vmem:[%s6321] sm:$0xff]
    %v6323 = vld [vmem:[%s6321 + $0x8] sm:$0xff]
    %v6324 = vld [vmem:[%s6321 + $0x10] sm:$0xff]
    %v6325 = vld [vmem:[%s6321 + $0x18] sm:$0xff]
    %v6326 = vld [vmem:[%s6321 + $0x20] sm:$0xff]
    %v6327 = vld [vmem:[%s6321 + $0x28] sm:$0xff]
    %v6328 = vld [vmem:[%s6321 + $0x30] sm:$0xff]
    %v6329 = vld [vmem:[%s6321 + $0x38] sm:$0xff]
    %v6331 = vsel %vm1231, %v6322, 0
    %v6334 = vsel %vm1231, %v6323, 0
    %v6337 = vsel %vm1231, %v6324, 0
    %v6340 = vsel %vm1231, %v6325, 0
    %v6343 = vsel %vm1231, %v6326, 0
    %v6346 = vsel %vm1231, %v6327, 0
    %v6349 = vsel %vm1231, %v6328, 0
    %v6352 = vsel %vm1231, %v6329, 0
    %6354 = vmatprep.subr.mxu0 %v6138
    %6355 = vmatpush1.msra.mxu0 %v6136
    %6356 = vmatprep.subr.mxu0 %v6144
    %6357 = vmatpush1.msra.mxu0 %v6142
    %6358 = vmatprep.subr.mxu0 %v6150
    %6359 = vmatpush1.msra.mxu0 %v6148
    %6360 = vmatprep.subr.mxu0 %v6156
    %6361 = vmatpush1.msra.mxu0 %v6154
    %6362 = vmatprep.subr.mxu0 %v6162
    %6363 = vmatpush1.msra.mxu0 %v6160
    %6364 = vmatprep.subr.mxu0 %v6168
    %6365 = vmatpush1.msra.mxu0 %v6166
    %6366 = vmatprep.subr.mxu0 %v6174
    %6367 = vmatpush1.msra.mxu0 %v6172
    %6368 = vmatprep.subr.mxu0 0.0
    %6369 = vmatpush1.msra.mxu0 0.0
    %6370 = vmatprep.subr.mxu0 0.0
    %6371 = vmatpush1.msra.mxu0 0.0
    %6372 = vmatprep.subr.mxu0 0.0
    %6373 = vmatpush1.msra.mxu0 0.0
    %6374 = vmatprep.subr.mxu0 0.0
    %6375 = vmatpush1.msra.mxu0 0.0
    %6376 = vmatprep.subr.mxu0 0.0
    %6377 = vmatpush1.msra.mxu0 0.0
    %6378 = vmatprep.subr.mxu0 0.0
    %6379 = vmatpush1.msra.mxu0 0.0
    %6380 = vmatprep.subr.mxu0 0.0
    %6381 = vmatpush1.msra.mxu0 0.0
    %6382 = vmatprep.subr.mxu0 0.0
    %6383 = vmatpush1.msra.mxu0 0.0
    %6384 = vmatprep.subr.mxu0 0.0
    %6385 = vmatpush1.msra.mxu0 0.0
    %6386 = vmatprep.subr.mxu0 0.0
    %6387 = vmatpush1.msra.mxu0 0.0
    %6388 = vmatprep.subr.mxu0 0.0
    %6389 = vmatpush1.msra.mxu0 0.0
    %6390 = vmatprep.subr.mxu0 0.0
    %6391 = vmatpush1.msra.mxu0 0.0
    %6392 = vmatprep.subr.mxu0 0.0
    %6393 = vmatpush1.msra.mxu0 0.0
    %6394 = vmatprep.subr.mxu0 0.0
    %6395 = vmatpush1.msra.mxu0 0.0
    %6396 = vmatprep.subr.mxu0 0.0
    %6397 = vmatpush1.msra.mxu0 0.0
    %6398 = vmatprep.subr.mxu0 0.0
    %6399 = vmatpush1.msra.mxu0 0.0
    %6400 = vmatprep.subr.mxu0 0.0
    %6401 = vmatpush1.msra.mxu0 0.0
    %6402 = vmatprep.subr.mxu0 0.0
    %6403 = vmatpush1.msra.mxu0 0.0
    %6404 = vmatprep.subr.mxu0 0.0
    %6405 = vmatpush1.msra.mxu0 0.0
    %6406 = vmatprep.subr.mxu0 0.0
    %6407 = vmatpush1.msra.mxu0 0.0
    %6408 = vmatprep.subr.mxu0 0.0
    %6409 = vmatpush1.msra.mxu0 0.0
    %6410 = vmatprep.subr.mxu0 0.0
    %6411 = vmatpush1.msra.mxu0 0.0
    %6412 = vmatprep.subr.mxu0 0.0
    %6413 = vmatpush1.msra.mxu0 0.0
    %6414 = vmatprep.subr.mxu0 0.0
    %6415 = vmatpush1.msra.mxu0 0.0
    %6416 = vmatprep.subr.mxu0 0.0
    %6417 = vmatpush1.msra.mxu0 0.0
    %6418 = vmatprep.mubr.f32.mxu0 0.0
    %6419 = vmatmul.mubr.f32.gmra.mrb[0].mxu0 %v6331
    %v6420 = vpop.f32.mrb[0].mxu0
    %v6421 = vadd.f32 0.0, %v6420
    %v6422 = vpop.f32.mrb[0].mxu0
    %v6423 = vadd.f32 0.0, %v6422
    %6424 = vmatprep.mubr.f32.mxu0 0.0
    %6425 = vmatmul.mubr.f32.gmra.mrb[0].mxu0 %v6334
    %v6426 = vpop.f32.mrb[0].mxu0
    %v6427 = vadd.f32 0.0, %v6426
    %v6428 = vpop.f32.mrb[0].mxu0
    %v6429 = vadd.f32 0.0, %v6428
    %6430 = vmatprep.mubr.f32.mxu0 0.0
    %6431 = vmatmul.mubr.f32.gmra.mrb[0].mxu0 %v6337
    %v6432 = vpop.f32.mrb[0].mxu0
    %v6433 = vadd.f32 0.0, %v6432
    %v6434 = vpop.f32.mrb[0].mxu0
    %v6435 = vadd.f32 0.0, %v6434
    %6436 = vmatprep.mubr.f32.mxu0 0.0
    %6437 = vmatmul.mubr.f32.gmra.mrb[0].mxu0 %v6340
    %v6438 = vpop.f32.mrb[0].mxu0
    %v6439 = vadd.f32 0.0, %v6438
    %v6440 = vpop.f32.mrb[0].mxu0
    %v6441 = vadd.f32 0.0, %v6440
    %6442 = vmatprep.mubr.f32.mxu0 0.0
    %6443 = vmatmul.mubr.f32.gmra.mrb[0].mxu0 %v6343
    %v6444 = vpop.f32.mrb[0].mxu0
    %v6445 = vadd.f32 0.0, %v6444
    %v6446 = vpop.f32.mrb[0].mxu0
    %v6447 = vadd.f32 0.0, %v6446
    %6448 = vmatprep.mubr.f32.mxu0 0.0
    %6449 = vmatmul.mubr.f32.gmra.mrb[0].mxu0 %v6346
    %v6450 = vpop.f32.mrb[0].mxu0
    %v6451 = vadd.f32 0.0, %v6450
    %v6452 = vpop.f32.mrb[0].mxu0
    %v6453 = vadd.f32 0.0, %v6452
    %6454 = vmatprep.mubr.f32.mxu0 0.0
    %6455 = vmatmul.mubr.f32.gmra.mrb[0].mxu0 %v6349
    %v6456 = vpop.f32.mrb[0].mxu0
    %v6457 = vadd.f32 0.0, %v6456
    %v6458 = vpop.f32.mrb[0].mxu0
    %v6459 = vadd.f32 0.0, %v6458
    %6460 = vmatprep.mubr.f32.mxu0 0.0
    %6461 = vmatmul.mubr.f32.gmra.mrb[0].mxu0 %v6352
    %v6462 = vpop.f32.mrb[0].mxu0
    %v6463 = vadd.f32 0.0, %v6462
    %v6464 = vpop.f32.mrb[0].mxu0
    %v6465 = vadd.f32 0.0, %v6464
    %6466 = vdwg.mxu0
    %s6467 = scalar_lea.vmem %s23, 128
    %v6468 = vld [vmem:[%s6467] sm:$0xff]
    %v6469 = vld [vmem:[%s6467 + $0x8] sm:$0xff]
    %v6470 = vld [vmem:[%s6467 + $0x10] sm:$0xff]
    %v6471 = vld [vmem:[%s6467 + $0x18] sm:$0xff]
    %v6472 = vld [vmem:[%s6467 + $0x20] sm:$0xff]
    %v6473 = vld [vmem:[%s6467 + $0x28] sm:$0xff]
    %v6474 = vld [vmem:[%s6467 + $0x30] sm:$0xff]
    %v6475 = vld [vmem:[%s6467 + $0x38] sm:$0xff]
    %v6477 = vsel %vm1231, %v6468, 0
    %v6480 = vsel %vm1231, %v6469, 0
    %v6483 = vsel %vm1231, %v6470, 0
    %v6486 = vsel %vm1231, %v6471, 0
    %v6489 = vsel %vm1231, %v6472, 0
    %v6492 = vsel %vm1231, %v6473, 0
    %v6495 = vsel %vm1231, %v6474, 0
    %v6498 = vsel %vm1231, %v6475, 0
    %6500 = vmatprep.subr.mxu0 %v6138
    %6501 = vmatpush1.msra.mxu0 %v6136
    %6502 = vmatprep.subr.mxu0 %v6144
    %6503 = vmatpush1.msra.mxu0 %v6142
    %6504 = vmatprep.subr.mxu0 %v6150
    %6505 = vmatpush1.msra.mxu0 %v6148
    %6506 = vmatprep.subr.mxu0 %v6156
    %6507 = vmatpush1.msra.mxu0 %v6154
    %6508 = vmatprep.subr.mxu0 %v6162
    %6509 = vmatpush1.msra.mxu0 %v6160
    %6510 = vmatprep.subr.mxu0 %v6168
    %6511 = vmatpush1.msra.mxu0 %v6166
    %6512 = vmatprep.subr.mxu0 %v6174
    %6513 = vmatpush1.msra.mxu0 %v6172
    %6514 = vmatprep.subr.mxu0 0.0
    %6515 = vmatpush1.msra.mxu0 0.0
    %6516 = vmatprep.subr.mxu0 0.0
    %6517 = vmatpush1.msra.mxu0 0.0
    %6518 = vmatprep.subr.mxu0 0.0
    %6519 = vmatpush1.msra.mxu0 0.0
    %6520 = vmatprep.subr.mxu0 0.0
    %6521 = vmatpush1.msra.mxu0 0.0
    %6522 = vmatprep.subr.mxu0 0.0
    %6523 = vmatpush1.msra.mxu0 0.0
    %6524 = vmatprep.subr.mxu0 0.0
    %6525 = vmatpush1.msra.mxu0 0.0
    %6526 = vmatprep.subr.mxu0 0.0
    %6527 = vmatpush1.msra.mxu0 0.0
    %6528 = vmatprep.subr.mxu0 0.0
    %6529 = vmatpush1.msra.mxu0 0.0
    %6530 = vmatprep.subr.mxu0 0.0
    %6531 = vmatpush1.msra.mxu0 0.0
    %6532 = vmatprep.subr.mxu0 0.0
    %6533 = vmatpush1.msra.mxu0 0.0
    %6534 = vmatprep.subr.mxu0 0.0
    %6535 = vmatpush1.msra.mxu0 0.0
    %6536 = vmatprep.subr.mxu0 0.0
    %6537 = vmatpush1.msra.mxu0 0.0
    %6538 = vmatprep.subr.mxu0 0.0
    %6539 = vmatpush1.msra.mxu0 0.0
    %6540 = vmatprep.subr.mxu0 0.0
    %6541 = vmatpush1.msra.mxu0 0.0
    %6542 = vmatprep.subr.mxu0 0.0
    %6543 = vmatpush1.msra.mxu0 0.0
    %6544 = vmatprep.subr.mxu0 0.0
    %6545 = vmatpush1.msra.mxu0 0.0
    %6546 = vmatprep.subr.mxu0 0.0
    %6547 = vmatpush1.msra.mxu0 0.0
    %6548 = vmatprep.subr.mxu0 0.0
    %6549 = vmatpush1.msra.mxu0 0.0
    %6550 = vmatprep.subr.mxu0 0.0
    %6551 = vmatpush1.msra.mxu0 0.0
    %6552 = vmatprep.subr.mxu0 0.0
    %6553 = vmatpush1.msra.mxu0 0.0
    %6554 = vmatprep.subr.mxu0 0.0
    %6555 = vmatpush1.msra.mxu0 0.0
    %6556 = vmatprep.subr.mxu0 0.0
    %6557 = vmatpush1.msra.mxu0 0.0
    %6558 = vmatprep.subr.mxu0 0.0
    %6559 = vmatpush1.msra.mxu0 0.0
    %6560 = vmatprep.subr.mxu0 0.0
    %6561 = vmatpush1.msra.mxu0 0.0
    %6562 = vmatprep.subr.mxu0 0.0
    %6563 = vmatpush1.msra.mxu0 0.0
    %6564 = vmatprep.mubr.f32.mxu0 0.0
    %6565 = vmatmul.mubr.f32.gmra.mrb[0].mxu0 %v6477
    %v6566 = vpop.f32.mrb[0].mxu0
    %v6567 = vadd.f32 0.0, %v6566
    %v6568 = vpop.f32.mrb[0].mxu0
    %v6569 = vadd.f32 0.0, %v6568
    %6570 = vmatprep.mubr.f32.mxu0 0.0
    %6571 = vmatmul.mubr.f32.gmra.mrb[0].mxu0 %v6480
    %v6572 = vpop.f32.mrb[0].mxu0
    %v6573 = vadd.f32 0.0, %v6572
    %v6574 = vpop.f32.mrb[0].mxu0
    %v6575 = vadd.f32 0.0, %v6574
    %6576 = vmatprep.mubr.f32.mxu0 0.0
    %6577 = vmatmul.mubr.f32.gmra.mrb[0].mxu0 %v6483
    %v6578 = vpop.f32.mrb[0].mxu0
    %v6579 = vadd.f32 0.0, %v6578
    %v6580 = vpop.f32.mrb[0].mxu0
    %v6581 = vadd.f32 0.0, %v6580
    %6582 = vmatprep.mubr.f32.mxu0 0.0
    %6583 = vmatmul.mubr.f32.gmra.mrb[0].mxu0 %v6486
    %v6584 = vpop.f32.mrb[0].mxu0
    %v6585 = vadd.f32 0.0, %v6584
    %v6586 = vpop.f32.mrb[0].mxu0
    %v6587 = vadd.f32 0.0, %v6586
    %6588 = vmatprep.mubr.f32.mxu0 0.0
    %6589 = vmatmul.mubr.f32.gmra.mrb[0].mxu0 %v6489
    %v6590 = vpop.f32.mrb[0].mxu0
    %v6591 = vadd.f32 0.0, %v6590
    %v6592 = vpop.f32.mrb[0].mxu0
    %v6593 = vadd.f32 0.0, %v6592
    %6594 = vmatprep.mubr.f32.mxu0 0.0
    %6595 = vmatmul.mubr.f32.gmra.mrb[0].mxu0 %v6492
    %v6596 = vpop.f32.mrb[0].mxu0
    %v6597 = vadd.f32 0.0, %v6596
    %v6598 = vpop.f32.mrb[0].mxu0
    %v6599 = vadd.f32 0.0, %v6598
    %6600 = vmatprep.mubr.f32.mxu0 0.0
    %6601 = vmatmul.mubr.f32.gmra.mrb[0].mxu0 %v6495
    %v6602 = vpop.f32.mrb[0].mxu0
    %v6603 = vadd.f32 0.0, %v6602
    %v6604 = vpop.f32.mrb[0].mxu0
    %v6605 = vadd.f32 0.0, %v6604
    %6606 = vmatprep.mubr.f32.mxu0 0.0
    %6607 = vmatmul.mubr.f32.gmra.mrb[0].mxu0 %v6498
    %v6608 = vpop.f32.mrb[0].mxu0
    %v6609 = vadd.f32 0.0, %v6608
    %v6610 = vpop.f32.mrb[0].mxu0
    %v6611 = vadd.f32 0.0, %v6610
    %6612 = vdwg.mxu0
    %s6613 = scalar_lea.vmem %s23, 192
    %v6614 = vld [vmem:[%s6613] sm:$0xff]
    %v6615 = vld [vmem:[%s6613 + $0x8] sm:$0xff]
    %v6616 = vld [vmem:[%s6613 + $0x10] sm:$0xff]
    %v6617 = vld [vmem:[%s6613 + $0x18] sm:$0xff]
    %v6618 = vld [vmem:[%s6613 + $0x20] sm:$0xff]
    %v6619 = vld [vmem:[%s6613 + $0x28] sm:$0xff]
    %v6620 = vld [vmem:[%s6613 + $0x30] sm:$0xff]
    %v6621 = vld [vmem:[%s6613 + $0x38] sm:$0xff]
    %v6623 = vsel %vm1231, %v6614, 0
    %v6626 = vsel %vm1231, %v6615, 0
    %v6629 = vsel %vm1231, %v6616, 0
    %v6632 = vsel %vm1231, %v6617, 0
    %v6635 = vsel %vm1231, %v6618, 0
    %v6638 = vsel %vm1231, %v6619, 0
    %v6641 = vsel %vm1231, %v6620, 0
    %v6644 = vsel %vm1231, %v6621, 0
    %6646 = vmatprep.subr.mxu0 %v6138
    %6647 = vmatpush1.msra.mxu0 %v6136
    %6648 = vmatprep.subr.mxu0 %v6144
    %6649 = vmatpush1.msra.mxu0 %v6142
    %6650 = vmatprep.subr.mxu0 %v6150
    %6651 = vmatpush1.msra.mxu0 %v6148
    %6652 = vmatprep.subr.mxu0 %v6156
    %6653 = vmatpush1.msra.mxu0 %v6154
    %6654 = vmatprep.subr.mxu0 %v6162
    %6655 = vmatpush1.msra.mxu0 %v6160
    %6656 = vmatprep.subr.mxu0 %v6168
    %6657 = vmatpush1.msra.mxu0 %v6166
    %6658 = vmatprep.subr.mxu0 %v6174
    %6659 = vmatpush1.msra.mxu0 %v6172
    %6660 = vmatprep.subr.mxu0 0.0
    %6661 = vmatpush1.msra.mxu0 0.0
    %6662 = vmatprep.subr.mxu0 0.0
    %6663 = vmatpush1.msra.mxu0 0.0
    %6664 = vmatprep.subr.mxu0 0.0
    %6665 = vmatpush1.msra.mxu0 0.0
    %6666 = vmatprep.subr.mxu0 0.0
    %6667 = vmatpush1.msra.mxu0 0.0
    %6668 = vmatprep.subr.mxu0 0.0
    %6669 = vmatpush1.msra.mxu0 0.0
    %6670 = vmatprep.subr.mxu0 0.0
    %6671 = vmatpush1.msra.mxu0 0.0
    %6672 = vmatprep.subr.mxu0 0.0
    %6673 = vmatpush1.msra.mxu0 0.0
    %6674 = vmatprep.subr.mxu0 0.0
    %6675 = vmatpush1.msra.mxu0 0.0
    %6676 = vmatprep.subr.mxu0 0.0
    %6677 = vmatpush1.msra.mxu0 0.0
    %6678 = vmatprep.subr.mxu0 0.0
    %6679 = vmatpush1.msra.mxu0 0.0
    %6680 = vmatprep.subr.mxu0 0.0
    %6681 = vmatpush1.msra.mxu0 0.0
    %6682 = vmatprep.subr.mxu0 0.0
    %6683 = vmatpush1.msra.mxu0 0.0
    %6684 = vmatprep.subr.mxu0 0.0
    %6685 = vmatpush1.msra.mxu0 0.0
    %6686 = vmatprep.subr.mxu0 0.0
    %6687 = vmatpush1.msra.mxu0 0.0
    %6688 = vmatprep.subr.mxu0 0.0
    %6689 = vmatpush1.msra.mxu0 0.0
    %6690 = vmatprep.subr.mxu0 0.0
    %6691 = vmatpush1.msra.mxu0 0.0
    %6692 = vmatprep.subr.mxu0 0.0
    %6693 = vmatpush1.msra.mxu0 0.0
    %6694 = vmatprep.subr.mxu0 0.0
    %6695 = vmatpush1.msra.mxu0 0.0
    %6696 = vmatprep.subr.mxu0 0.0
    %6697 = vmatpush1.msra.mxu0 0.0
    %6698 = vmatprep.subr.mxu0 0.0
    %6699 = vmatpush1.msra.mxu0 0.0
    %6700 = vmatprep.subr.mxu0 0.0
    %6701 = vmatpush1.msra.mxu0 0.0
    %6702 = vmatprep.subr.mxu0 0.0
    %6703 = vmatpush1.msra.mxu0 0.0
    %6704 = vmatprep.subr.mxu0 0.0
    %6705 = vmatpush1.msra.mxu0 0.0
    %6706 = vmatprep.subr.mxu0 0.0
    %6707 = vmatpush1.msra.mxu0 0.0
    %6708 = vmatprep.subr.mxu0 0.0
    %6709 = vmatpush1.msra.mxu0 0.0
    %6710 = vmatprep.mubr.f32.mxu0 0.0
    %6711 = vmatmul.mubr.f32.gmra.mrb[0].mxu0 %v6623
    %v6712 = vpop.f32.mrb[0].mxu0
    %v6713 = vadd.f32 0.0, %v6712
    %v6714 = vpop.f32.mrb[0].mxu0
    %v6715 = vadd.f32 0.0, %v6714
    %6716 = vmatprep.mubr.f32.mxu0 0.0
    %6717 = vmatmul.mubr.f32.gmra.mrb[0].mxu0 %v6626
    %v6718 = vpop.f32.mrb[0].mxu0
    %v6719 = vadd.f32 0.0, %v6718
    %v6720 = vpop.f32.mrb[0].mxu0
    %v6721 = vadd.f32 0.0, %v6720
    %6722 = vmatprep.mubr.f32.mxu0 0.0
    %6723 = vmatmul.mubr.f32.gmra.mrb[0].mxu0 %v6629
    %v6724 = vpop.f32.mrb[0].mxu0
    %v6725 = vadd.f32 0.0, %v6724
    %v6726 = vpop.f32.mrb[0].mxu0
    %v6727 = vadd.f32 0.0, %v6726
    %6728 = vmatprep.mubr.f32.mxu0 0.0
    %6729 = vmatmul.mubr.f32.gmra.mrb[0].mxu0 %v6632
    %v6730 = vpop.f32.mrb[0].mxu0
    %v6731 = vadd.f32 0.0, %v6730
    %v6732 = vpop.f32.mrb[0].mxu0
    %v6733 = vadd.f32 0.0, %v6732
    %6734 = vmatprep.mubr.f32.mxu0 0.0
    %6735 = vmatmul.mubr.f32.gmra.mrb[0].mxu0 %v6635
    %v6736 = vpop.f32.mrb[0].mxu0
    %v6737 = vadd.f32 0.0, %v6736
    %v6738 = vpop.f32.mrb[0].mxu0
    %v6739 = vadd.f32 0.0, %v6738
    %6740 = vmatprep.mubr.f32.mxu0 0.0
    %6741 = vmatmul.mubr.f32.gmra.mrb[0].mxu0 %v6638
    %v6742 = vpop.f32.mrb[0].mxu0
    %v6743 = vadd.f32 0.0, %v6742
    %v6744 = vpop.f32.mrb[0].mxu0
    %v6745 = vadd.f32 0.0, %v6744
    %6746 = vmatprep.mubr.f32.mxu0 0.0
    %6747 = vmatmul.mubr.f32.gmra.mrb[0].mxu0 %v6641
    %v6748 = vpop.f32.mrb[0].mxu0
    %v6749 = vadd.f32 0.0, %v6748
    %v6750 = vpop.f32.mrb[0].mxu0
    %v6751 = vadd.f32 0.0, %v6750
    %6752 = vmatprep.mubr.f32.mxu0 0.0
    %6753 = vmatmul.mubr.f32.gmra.mrb[0].mxu0 %v6644
    %v6754 = vpop.f32.mrb[0].mxu0
    %v6755 = vadd.f32 0.0, %v6754
    %v6756 = vpop.f32.mrb[0].mxu0
    %v6757 = vadd.f32 0.0, %v6756
    %6758 = vdwg.mxu0
    %s6759 = scalar_lea.vmem %s23, 256
    %v6760 = vld [vmem:[%s6759] sm:$0xff]
    %v6761 = vld [vmem:[%s6759 + $0x8] sm:$0xff]
    %v6762 = vld [vmem:[%s6759 + $0x10] sm:$0xff]
    %v6763 = vld [vmem:[%s6759 + $0x18] sm:$0xff]
    %v6764 = vld [vmem:[%s6759 + $0x20] sm:$0xff]
    %v6765 = vld [vmem:[%s6759 + $0x28] sm:$0xff]
    %v6766 = vld [vmem:[%s6759 + $0x30] sm:$0xff]
    %v6767 = vld [vmem:[%s6759 + $0x38] sm:$0xff]
    %v6769 = vsel %vm1231, %v6760, 0
    %v6772 = vsel %vm1231, %v6761, 0
    %v6775 = vsel %vm1231, %v6762, 0
    %v6778 = vsel %vm1231, %v6763, 0
    %v6781 = vsel %vm1231, %v6764, 0
    %v6784 = vsel %vm1231, %v6765, 0
    %v6787 = vsel %vm1231, %v6766, 0
    %v6790 = vsel %vm1231, %v6767, 0
    %6792 = vmatprep.subr.mxu0 %v6138
    %6793 = vmatpush1.msra.mxu0 %v6136
    %6794 = vmatprep.subr.mxu0 %v6144
    %6795 = vmatpush1.msra.mxu0 %v6142
    %6796 = vmatprep.subr.mxu0 %v6150
    %6797 = vmatpush1.msra.mxu0 %v6148
    %6798 = vmatprep.subr.mxu0 %v6156
    %6799 = vmatpush1.msra.mxu0 %v6154
    %6800 = vmatprep.subr.mxu0 %v6162
    %6801 = vmatpush1.msra.mxu0 %v6160
    %6802 = vmatprep.subr.mxu0 %v6168
    %6803 = vmatpush1.msra.mxu0 %v6166
    %6804 = vmatprep.subr.mxu0 %v6174
    %6805 = vmatpush1.msra.mxu0 %v6172
    %6806 = vmatprep.subr.mxu0 0.0
    %6807 = vmatpush1.msra.mxu0 0.0
    %6808 = vmatprep.subr.mxu0 0.0
    %6809 = vmatpush1.msra.mxu0 0.0
    %6810 = vmatprep.subr.mxu0 0.0
    %6811 = vmatpush1.msra.mxu0 0.0
    %6812 = vmatprep.subr.mxu0 0.0
    %6813 = vmatpush1.msra.mxu0 0.0
    %6814 = vmatprep.subr.mxu0 0.0
    %6815 = vmatpush1.msra.mxu0 0.0
    %6816 = vmatprep.subr.mxu0 0.0
    %6817 = vmatpush1.msra.mxu0 0.0
    %6818 = vmatprep.subr.mxu0 0.0
    %6819 = vmatpush1.msra.mxu0 0.0
    %6820 = vmatprep.subr.mxu0 0.0
    %6821 = vmatpush1.msra.mxu0 0.0
    %6822 = vmatprep.subr.mxu0 0.0
    %6823 = vmatpush1.msra.mxu0 0.0
    %6824 = vmatprep.subr.mxu0 0.0
    %6825 = vmatpush1.msra.mxu0 0.0
    %6826 = vmatprep.subr.mxu0 0.0
    %6827 = vmatpush1.msra.mxu0 0.0
    %6828 = vmatprep.subr.mxu0 0.0
    %6829 = vmatpush1.msra.mxu0 0.0
    %6830 = vmatprep.subr.mxu0 0.0
    %6831 = vmatpush1.msra.mxu0 0.0
    %6832 = vmatprep.subr.mxu0 0.0
    %6833 = vmatpush1.msra.mxu0 0.0
    %6834 = vmatprep.subr.mxu0 0.0
    %6835 = vmatpush1.msra.mxu0 0.0
    %6836 = vmatprep.subr.mxu0 0.0
    %6837 = vmatpush1.msra.mxu0 0.0
    %6838 = vmatprep.subr.mxu0 0.0
    %6839 = vmatpush1.msra.mxu0 0.0
    %6840 = vmatprep.subr.mxu0 0.0
    %6841 = vmatpush1.msra.mxu0 0.0
    %6842 = vmatprep.subr.mxu0 0.0
    %6843 = vmatpush1.msra.mxu0 0.0
    %6844 = vmatprep.subr.mxu0 0.0
    %6845 = vmatpush1.msra.mxu0 0.0
    %6846 = vmatprep.subr.mxu0 0.0
    %6847 = vmatpush1.msra.mxu0 0.0
    %6848 = vmatprep.subr.mxu0 0.0
    %6849 = vmatpush1.msra.mxu0 0.0
    %6850 = vmatprep.subr.mxu0 0.0
    %6851 = vmatpush1.msra.mxu0 0.0
    %6852 = vmatprep.subr.mxu0 0.0
    %6853 = vmatpush1.msra.mxu0 0.0
    %6854 = vmatprep.subr.mxu0 0.0
    %6855 = vmatpush1.msra.mxu0 0.0
    %6856 = vmatprep.mubr.f32.mxu0 0.0
    %6857 = vmatmul.mubr.f32.gmra.mrb[0].mxu0 %v6769
    %v6858 = vpop.f32.mrb[0].mxu0
    %v6859 = vadd.f32 0.0, %v6858
    %v6860 = vpop.f32.mrb[0].mxu0
    %v6861 = vadd.f32 0.0, %v6860
    %6862 = vmatprep.mubr.f32.mxu0 0.0
    %6863 = vmatmul.mubr.f32.gmra.mrb[0].mxu0 %v6772
    %v6864 = vpop.f32.mrb[0].mxu0
    %v6865 = vadd.f32 0.0, %v6864
    %v6866 = vpop.f32.mrb[0].mxu0
    %v6867 = vadd.f32 0.0, %v6866
    %6868 = vmatprep.mubr.f32.mxu0 0.0
    %6869 = vmatmul.mubr.f32.gmra.mrb[0].mxu0 %v6775
    %v6870 = vpop.f32.mrb[0].mxu0
    %v6871 = vadd.f32 0.0, %v6870
    %v6872 = vpop.f32.mrb[0].mxu0
    %v6873 = vadd.f32 0.0, %v6872
    %6874 = vmatprep.mubr.f32.mxu0 0.0
    %6875 = vmatmul.mubr.f32.gmra.mrb[0].mxu0 %v6778
    %v6876 = vpop.f32.mrb[0].mxu0
    %v6877 = vadd.f32 0.0, %v6876
    %v6878 = vpop.f32.mrb[0].mxu0
    %v6879 = vadd.f32 0.0, %v6878
    %6880 = vmatprep.mubr.f32.mxu0 0.0
    %6881 = vmatmul.mubr.f32.gmra.mrb[0].mxu0 %v6781
    %v6882 = vpop.f32.mrb[0].mxu0
    %v6883 = vadd.f32 0.0, %v6882
    %v6884 = vpop.f32.mrb[0].mxu0
    %v6885 = vadd.f32 0.0, %v6884
    %6886 = vmatprep.mubr.f32.mxu0 0.0
    %6887 = vmatmul.mubr.f32.gmra.mrb[0].mxu0 %v6784
    %v6888 = vpop.f32.mrb[0].mxu0
    %v6889 = vadd.f32 0.0, %v6888
    %v6890 = vpop.f32.mrb[0].mxu0
    %v6891 = vadd.f32 0.0, %v6890
    %6892 = vmatprep.mubr.f32.mxu0 0.0
    %6893 = vmatmul.mubr.f32.gmra.mrb[0].mxu0 %v6787
    %v6894 = vpop.f32.mrb[0].mxu0
    %v6895 = vadd.f32 0.0, %v6894
    %v6896 = vpop.f32.mrb[0].mxu0
    %v6897 = vadd.f32 0.0, %v6896
    %6898 = vmatprep.mubr.f32.mxu0 0.0
    %6899 = vmatmul.mubr.f32.gmra.mrb[0].mxu0 %v6790
    %v6900 = vpop.f32.mrb[0].mxu0
    %v6901 = vadd.f32 0.0, %v6900
    %v6902 = vpop.f32.mrb[0].mxu0
    %v6903 = vadd.f32 0.0, %v6902
    %6904 = vdwg.mxu0
    %6921 = vrot.lane.b32.xlu0 %v6421, 40
    %v6922 = vpop.permute.xlu0 %6921
    %6923 = vrot.lane.b32.xlu0 %v6423, 40
    %v6924 = vpop.permute.xlu0 %6923
    %6925 = vrot.lane.b32.xlu0 %v6427, 40
    %v6926 = vpop.permute.xlu0 %6925
    %6927 = vrot.lane.b32.xlu0 %v6429, 40
    %v6928 = vpop.permute.xlu0 %6927
    %6929 = vrot.lane.b32.xlu0 %v6433, 40
    %v6930 = vpop.permute.xlu0 %6929
    %6931 = vrot.lane.b32.xlu0 %v6435, 40
    %v6932 = vpop.permute.xlu0 %6931
    %6933 = vrot.lane.b32.xlu0 %v6439, 40
    %v6934 = vpop.permute.xlu0 %6933
    %6935 = vrot.lane.b32.xlu0 %v6441, 40
    %v6936 = vpop.permute.xlu0 %6935
    %6937 = vrot.lane.b32.xlu0 %v6445, 40
    %v6938 = vpop.permute.xlu0 %6937
    %6939 = vrot.lane.b32.xlu0 %v6447, 40
    %v6940 = vpop.permute.xlu0 %6939
    %6941 = vrot.lane.b32.xlu0 %v6451, 40
    %v6942 = vpop.permute.xlu0 %6941
    %6943 = vrot.lane.b32.xlu0 %v6453, 40
    %v6944 = vpop.permute.xlu0 %6943
    %6945 = vrot.lane.b32.xlu0 %v6457, 40
    %v6946 = vpop.permute.xlu0 %6945
    %6947 = vrot.lane.b32.xlu0 %v6459, 40
    %v6948 = vpop.permute.xlu0 %6947
    %6949 = vrot.lane.b32.xlu0 %v6463, 40
    %v6950 = vpop.permute.xlu0 %6949
    %6951 = vrot.lane.b32.xlu0 %v6465, 40
    %v6952 = vpop.permute.xlu0 %6951
    %v6953 = vsel %vm2215, %v6922, %v6924
    %v6954 = vsel %vm2215, %v6926, %v6928
    %v6955 = vsel %vm2215, %v6930, %v6932
    %v6956 = vsel %vm2215, %v6934, %v6936
    %v6957 = vsel %vm2215, %v6938, %v6940
    %v6958 = vsel %vm2215, %v6942, %v6944
    %v6959 = vsel %vm2215, %v6946, %v6948
    %v6960 = vsel %vm2215, %v6950, %v6952
    %6993 = vrot.lane.b32.xlu0 %v6567, 80
    %v6994 = vpop.permute.xlu0 %6993
    %6995 = vrot.lane.b32.xlu0 %v6569, 80
    %v6996 = vpop.permute.xlu0 %6995
    %6997 = vrot.lane.b32.xlu0 %v6573, 80
    %v6998 = vpop.permute.xlu0 %6997
    %6999 = vrot.lane.b32.xlu0 %v6575, 80
    %v7000 = vpop.permute.xlu0 %6999
    %7001 = vrot.lane.b32.xlu0 %v6579, 80
    %v7002 = vpop.permute.xlu0 %7001
    %7003 = vrot.lane.b32.xlu0 %v6581, 80
    %v7004 = vpop.permute.xlu0 %7003
    %7005 = vrot.lane.b32.xlu0 %v6585, 80
    %v7006 = vpop.permute.xlu0 %7005
    %7007 = vrot.lane.b32.xlu0 %v6587, 80
    %v7008 = vpop.permute.xlu0 %7007
    %7009 = vrot.lane.b32.xlu0 %v6591, 80
    %v7010 = vpop.permute.xlu0 %7009
    %7011 = vrot.lane.b32.xlu0 %v6593, 80
    %v7012 = vpop.permute.xlu0 %7011
    %7013 = vrot.lane.b32.xlu0 %v6597, 80
    %v7014 = vpop.permute.xlu0 %7013
    %7015 = vrot.lane.b32.xlu0 %v6599, 80
    %v7016 = vpop.permute.xlu0 %7015
    %7017 = vrot.lane.b32.xlu0 %v6603, 80
    %v7018 = vpop.permute.xlu0 %7017
    %7019 = vrot.lane.b32.xlu0 %v6605, 80
    %v7020 = vpop.permute.xlu0 %7019
    %7021 = vrot.lane.b32.xlu0 %v6609, 80
    %v7022 = vpop.permute.xlu0 %7021
    %7023 = vrot.lane.b32.xlu0 %v6611, 80
    %v7024 = vpop.permute.xlu0 %7023
    %v7025 = vsel %vm2223, %v6994, %v6996
    %v7026 = vsel %vm2223, %v6998, %v7000
    %v7027 = vsel %vm2223, %v7002, %v7004
    %v7028 = vsel %vm2223, %v7006, %v7008
    %v7029 = vsel %vm2223, %v7010, %v7012
    %v7030 = vsel %vm2223, %v7014, %v7016
    %v7031 = vsel %vm2223, %v7018, %v7020
    %v7032 = vsel %vm2223, %v7022, %v7024
    %7065 = vrot.lane.b32.xlu0 %v6713, 120
    %v7066 = vpop.permute.xlu0 %7065
    %7067 = vrot.lane.b32.xlu0 %v6715, 120
    %v7068 = vpop.permute.xlu0 %7067
    %7069 = vrot.lane.b32.xlu0 %v6719, 120
    %v7070 = vpop.permute.xlu0 %7069
    %7071 = vrot.lane.b32.xlu0 %v6721, 120
    %v7072 = vpop.permute.xlu0 %7071
    %7073 = vrot.lane.b32.xlu0 %v6725, 120
    %v7074 = vpop.permute.xlu0 %7073
    %7075 = vrot.lane.b32.xlu0 %v6727, 120
    %v7076 = vpop.permute.xlu0 %7075
    %7077 = vrot.lane.b32.xlu0 %v6731, 120
    %v7078 = vpop.permute.xlu0 %7077
    %7079 = vrot.lane.b32.xlu0 %v6733, 120
    %v7080 = vpop.permute.xlu0 %7079
    %7081 = vrot.lane.b32.xlu0 %v6737, 120
    %v7082 = vpop.permute.xlu0 %7081
    %7083 = vrot.lane.b32.xlu0 %v6739, 120
    %v7084 = vpop.permute.xlu0 %7083
    %7085 = vrot.lane.b32.xlu0 %v6743, 120
    %v7086 = vpop.permute.xlu0 %7085
    %7087 = vrot.lane.b32.xlu0 %v6745, 120
    %v7088 = vpop.permute.xlu0 %7087
    %7089 = vrot.lane.b32.xlu0 %v6749, 120
    %v7090 = vpop.permute.xlu0 %7089
    %7091 = vrot.lane.b32.xlu0 %v6751, 120
    %v7092 = vpop.permute.xlu0 %7091
    %7093 = vrot.lane.b32.xlu0 %v6755, 120
    %v7094 = vpop.permute.xlu0 %7093
    %7095 = vrot.lane.b32.xlu0 %v6757, 120
    %v7096 = vpop.permute.xlu0 %7095
    %v7097 = vsel %vm3517, %v7066, %v7068
    %v7098 = vsel %vm3517, %v7070, %v7072
    %v7099 = vsel %vm3517, %v7074, %v7076
    %v7100 = vsel %vm3517, %v7078, %v7080
    %v7101 = vsel %vm3517, %v7082, %v7084
    %v7102 = vsel %vm3517, %v7086, %v7088
    %v7103 = vsel %vm3517, %v7090, %v7092
    %v7104 = vsel %vm3517, %v7094, %v7096
    %7145 = vrot.lane.b32.xlu0 %v6859, 32
    %v7146 = vpop.permute.xlu0 %7145
    %7147 = vrot.lane.b32.xlu0 %v6861, 32
    %v7148 = vpop.permute.xlu0 %7147
    %7149 = vrot.lane.b32.xlu0 %v6865, 32
    %v7150 = vpop.permute.xlu0 %7149
    %7151 = vrot.lane.b32.xlu0 %v6867, 32
    %v7152 = vpop.permute.xlu0 %7151
    %7153 = vrot.lane.b32.xlu0 %v6871, 32
    %v7154 = vpop.permute.xlu0 %7153
    %7155 = vrot.lane.b32.xlu0 %v6873, 32
    %v7156 = vpop.permute.xlu0 %7155
    %7157 = vrot.lane.b32.xlu0 %v6877, 32
    %v7158 = vpop.permute.xlu0 %7157
    %7159 = vrot.lane.b32.xlu0 %v6879, 32
    %v7160 = vpop.permute.xlu0 %7159
    %7161 = vrot.lane.b32.xlu0 %v6883, 32
    %v7162 = vpop.permute.xlu0 %7161
    %7163 = vrot.lane.b32.xlu0 %v6885, 32
    %v7164 = vpop.permute.xlu0 %7163
    %7165 = vrot.lane.b32.xlu0 %v6889, 32
    %v7166 = vpop.permute.xlu0 %7165
    %7167 = vrot.lane.b32.xlu0 %v6891, 32
    %v7168 = vpop.permute.xlu0 %7167
    %7169 = vrot.lane.b32.xlu0 %v6895, 32
    %v7170 = vpop.permute.xlu0 %7169
    %7171 = vrot.lane.b32.xlu0 %v6897, 32
    %v7172 = vpop.permute.xlu0 %7171
    %7173 = vrot.lane.b32.xlu0 %v6901, 32
    %v7174 = vpop.permute.xlu0 %7173
    %7175 = vrot.lane.b32.xlu0 %v6903, 32
    %v7176 = vpop.permute.xlu0 %7175
    %v7177 = vsel %vm838, %v7146, %v7148
    %v7178 = vsel %vm838, %v7150, %v7152
    %v7179 = vsel %vm838, %v7154, %v7156
    %v7180 = vsel %vm838, %v7158, %v7160
    %v7181 = vsel %vm838, %v7162, %v7164
    %v7182 = vsel %vm838, %v7166, %v7168
    %v7183 = vsel %vm838, %v7170, %v7172
    %v7184 = vsel %vm838, %v7174, %v7176
    %v7193 = vsel %vm2215, %v6277, %v6922
    %v7194 = vsel %vm2215, %v6283, %v6926
    %v7195 = vsel %vm2215, %v6289, %v6930
    %v7196 = vsel %vm2215, %v6295, %v6934
    %v7197 = vsel %vm2215, %v6301, %v6938
    %v7198 = vsel %vm2215, %v6307, %v6942
    %v7199 = vsel %vm2215, %v6313, %v6946
    %v7200 = vsel %vm2215, %v6319, %v6950
    %v7201 = vsel %vm2223, %v6953, %v6994
    %v7202 = vsel %vm2223, %v6954, %v6998
    %v7203 = vsel %vm2223, %v6955, %v7002
    %v7204 = vsel %vm2223, %v6956, %v7006
    %v7205 = vsel %vm2223, %v6957, %v7010
    %v7206 = vsel %vm2223, %v6958, %v7014
    %v7207 = vsel %vm2223, %v6959, %v7018
    %v7208 = vsel %vm2223, %v6960, %v7022
    %v7209 = vsel %vm3517, %v7025, %v7066
    %v7210 = vsel %vm3517, %v7026, %v7070
    %v7211 = vsel %vm3517, %v7027, %v7074
    %v7212 = vsel %vm3517, %v7028, %v7078
    %v7213 = vsel %vm3517, %v7029, %v7082
    %v7214 = vsel %vm3517, %v7030, %v7086
    %v7215 = vsel %vm3517, %v7031, %v7090
    %v7216 = vsel %vm3517, %v7032, %v7094
    %v7217 = vsel %vm838, %v7068, %v7146
    %v7218 = vsel %vm838, %v7072, %v7150
    %v7219 = vsel %vm838, %v7076, %v7154
    %v7220 = vsel %vm838, %v7080, %v7158
    %v7221 = vsel %vm838, %v7084, %v7162
    %v7222 = vsel %vm838, %v7088, %v7166
    %v7223 = vsel %vm838, %v7092, %v7170
    %v7224 = vsel %vm838, %v7096, %v7174
    %v7225 = vld [vmem:[%s24] sm:$0xff]
    %v7226 = vld [vmem:[%s24 + $0x8] sm:$0xff]
    %v7227 = vld [vmem:[%s24 + $0x10] sm:$0xff]
    %v7228 = vld [vmem:[%s24 + $0x18] sm:$0xff]
    %v7229 = vld [vmem:[%s24 + $0x20] sm:$0xff]
    %v7230 = vld [vmem:[%s24 + $0x28] sm:$0xff]
    %v7231 = vld [vmem:[%s24 + $0x30] sm:$0xff]
    %v7232 = vld [vmem:[%s24 + $0x38] sm:$0xff]
    %v7233 = vld [vmem:[%s24 + $0x40] sm:$0xff]
    %v7234 = vld [vmem:[%s24 + $0x48] sm:$0xff]
    %v7235 = vld [vmem:[%s24 + $0x50] sm:$0xff]
    %v7236 = vld [vmem:[%s24 + $0x58] sm:$0xff]
    %v7237 = vld [vmem:[%s24 + $0x60] sm:$0xff]
    %v7238 = vld [vmem:[%s24 + $0x68] sm:$0xff]
    %v7239 = vld [vmem:[%s24 + $0x70] sm:$0xff]
    %v7240 = vld [vmem:[%s24 + $0x78] sm:$0xff]
    %v7241 = vld [vmem:[%s24 + $0x80] sm:$0xff]
    %v7242 = vld [vmem:[%s24 + $0x88] sm:$0xff]
    %v7243 = vld [vmem:[%s24 + $0x90] sm:$0xff]
    %v7244 = vld [vmem:[%s24 + $0x98] sm:$0xff]
    %v7245 = vld [vmem:[%s24 + $0xa0] sm:$0xff]
    %v7246 = vld [vmem:[%s24 + $0xa8] sm:$0xff]
    %v7247 = vld [vmem:[%s24 + $0xb0] sm:$0xff]
    %v7248 = vld [vmem:[%s24 + $0xb8] sm:$0xff]
    %v7249 = vld [vmem:[%s24 + $0xc0] sm:$0xff]
    %v7250 = vld [vmem:[%s24 + $0xc8] sm:$0xff]
    %v7251 = vld [vmem:[%s24 + $0xd0] sm:$0xff]
    %v7252 = vld [vmem:[%s24 + $0xd8] sm:$0xff]
    %v7253 = vld [vmem:[%s24 + $0xe0] sm:$0xff]
    %v7254 = vld [vmem:[%s24 + $0xe8] sm:$0xff]
    %v7255 = vld [vmem:[%s24 + $0xf0] sm:$0xff]
    %v7256 = vld [vmem:[%s24 + $0xf8] sm:$0xff]
    %v7257 = vld [vmem:[%s24 + $0x100] sm:$0xff]
    %v7258 = vld [vmem:[%s24 + $0x108] sm:$0xff]
    %v7259 = vld [vmem:[%s24 + $0x110] sm:$0xff]
    %v7260 = vld [vmem:[%s24 + $0x118] sm:$0xff]
    %v7261 = vld [vmem:[%s24 + $0x120] sm:$0xff]
    %v7262 = vld [vmem:[%s24 + $0x128] sm:$0xff]
    %v7263 = vld [vmem:[%s24 + $0x130] sm:$0xff]
    %v7264 = vld [vmem:[%s24 + $0x138] sm:$0xff]
    %v7265 = vld [vmem:[%s24 + $0x140] sm:$0xff]
    %v7266 = vld [vmem:[%s24 + $0x148] sm:$0xff]
    %v7267 = vld [vmem:[%s24 + $0x150] sm:$0xff]
    %v7268 = vld [vmem:[%s24 + $0x158] sm:$0xff]
    %v7269 = vld [vmem:[%s24 + $0x160] sm:$0xff]
    %v7270 = vld [vmem:[%s24 + $0x168] sm:$0xff]
    %v7271 = vld [vmem:[%s24 + $0x170] sm:$0xff]
    %v7272 = vld [vmem:[%s24 + $0x178] sm:$0xff]
    %v7273 = vld [vmem:[%s24 + $0x180] sm:$0xff]
    %v7274 = vld [vmem:[%s24 + $0x188] sm:$0xff]
    %v7275 = vld [vmem:[%s24 + $0x190] sm:$0xff]
    %v7276 = vld [vmem:[%s24 + $0x198] sm:$0xff]
    %v7277 = vld [vmem:[%s24 + $0x1a0] sm:$0xff]
    %v7278 = vld [vmem:[%s24 + $0x1a8] sm:$0xff]
    %v7279 = vld [vmem:[%s24 + $0x1b0] sm:$0xff]
    %v7280 = vld [vmem:[%s24 + $0x1b8] sm:$0xff]
    %v7281 = vld [vmem:[%s24 + $0x1c0] sm:$0xff]
    %v7282 = vld [vmem:[%s24 + $0x1c8] sm:$0xff]
    %v7283 = vld [vmem:[%s24 + $0x1d0] sm:$0xff]
    %v7284 = vld [vmem:[%s24 + $0x1d8] sm:$0xff]
    %v7285 = vld [vmem:[%s24 + $0x1e0] sm:$0xff]
    %v7286 = vld [vmem:[%s24 + $0x1e8] sm:$0xff]
    %v7287 = vld [vmem:[%s24 + $0x1f0] sm:$0xff]
    %v7288 = vld [vmem:[%s24 + $0x1f8] sm:$0xff]
    %v7289 = vld [vmem:[%s24 + $0x200] sm:$0xff]
    %v7290 = vld [vmem:[%s24 + $0x208] sm:$0xff]
    %v7291 = vld [vmem:[%s24 + $0x210] sm:$0xff]
    %v7292 = vld [vmem:[%s24 + $0x218] sm:$0xff]
    %v7293 = vld [vmem:[%s24 + $0x220] sm:$0xff]
    %v7294 = vld [vmem:[%s24 + $0x228] sm:$0xff]
    %v7295 = vld [vmem:[%s24 + $0x230] sm:$0xff]
    %v7296 = vld [vmem:[%s24 + $0x238] sm:$0xff]
    %v7297 = vld [vmem:[%s24 + $0x240] sm:$0xff]
    %v7298 = vld [vmem:[%s24 + $0x248] sm:$0xff]
    %v7299 = vld [vmem:[%s24 + $0x250] sm:$0xff]
    %v7300 = vld [vmem:[%s24 + $0x258] sm:$0xff]
    %v7301 = vld [vmem:[%s24 + $0x260] sm:$0xff]
    %v7302 = vld [vmem:[%s24 + $0x268] sm:$0xff]
    %v7303 = vld [vmem:[%s24 + $0x270] sm:$0xff]
    %v7304 = vld [vmem:[%s24 + $0x278] sm:$0xff]
    %v7305 = vld [vmem:[%s24 + $0x280] sm:$0xff]
    %v7306 = vld [vmem:[%s24 + $0x288] sm:$0xff]
    %v7307 = vld [vmem:[%s24 + $0x290] sm:$0xff]
    %v7308 = vld [vmem:[%s24 + $0x298] sm:$0xff]
    %v7309 = vld [vmem:[%s24 + $0x2a0] sm:$0xff]
    %v7310 = vld [vmem:[%s24 + $0x2a8] sm:$0xff]
    %v7311 = vld [vmem:[%s24 + $0x2b0] sm:$0xff]
    %v7312 = vld [vmem:[%s24 + $0x2b8] sm:$0xff]
    %v7313 = vld [vmem:[%s24 + $0x2c0] sm:$0xff]
    %v7314 = vld [vmem:[%s24 + $0x2c8] sm:$0xff]
    %v7315 = vld [vmem:[%s24 + $0x2d0] sm:$0xff]
    %v7316 = vld [vmem:[%s24 + $0x2d8] sm:$0xff]
    %v7317 = vld [vmem:[%s24 + $0x2e0] sm:$0xff]
    %v7318 = vld [vmem:[%s24 + $0x2e8] sm:$0xff]
    %v7319 = vld [vmem:[%s24 + $0x2f0] sm:$0xff]
    %v7320 = vld [vmem:[%s24 + $0x2f8] sm:$0xff]
    %v7321 = vld [vmem:[%s24 + $0x300] sm:$0xff]
    %v7322 = vld [vmem:[%s24 + $0x308] sm:$0xff]
    %v7323 = vld [vmem:[%s24 + $0x310] sm:$0xff]
    %v7324 = vld [vmem:[%s24 + $0x318] sm:$0xff]
    %v7325 = vld [vmem:[%s24 + $0x320] sm:$0xff]
    %v7326 = vld [vmem:[%s24 + $0x328] sm:$0xff]
    %v7327 = vld [vmem:[%s24 + $0x330] sm:$0xff]
    %v7328 = vld [vmem:[%s24 + $0x338] sm:$0xff]
    %v7329 = vld [vmem:[%s24 + $0x340] sm:$0xff]
    %v7330 = vld [vmem:[%s25] sm:$0x1]
    %v7332 = vlaneseq
    %v7333 = vshrl.u32 %v7332, 7
    %v7334 = vsub.s32 0, %v7333
    %v7335 = vrot.slane %v7330, %v7334
    %vm7337 = vcmask 588800
    %v7338 = vsel %vm7337, %v7177, 0
    %v7340 = vsel %vm7337, %v7178, 0
    %v7342 = vsel %vm7337, %v7179, 0
    %v7344 = vsel %vm7337, %v7180, 0
    %v7346 = vsel %vm7337, %v7181, 0
    %v7348 = vsel %vm7337, %v7182, 0
    %v7350 = vsel %vm7337, %v7183, 0
    %v7352 = vsel %vm7337, %v7184, 0
    %7354 = vmatprep.subr.mxu0 0.0
    %7355 = vmatpush1.msra.mxu0 %v7225
    %7356 = vmatprep.subr.mxu0 0.0
    %7357 = vmatpush1.msra.mxu0 %v7226
    %7358 = vmatprep.subr.mxu0 0.0
    %7359 = vmatpush1.msra.mxu0 %v7227
    %7360 = vmatprep.subr.mxu0 0.0
    %7361 = vmatpush1.msra.mxu0 %v7228
    %7362 = vmatprep.subr.mxu0 0.0
    %7363 = vmatpush1.msra.mxu0 %v7229
    %7364 = vmatprep.subr.mxu0 0.0
    %7365 = vmatpush1.msra.mxu0 %v7230
    %7366 = vmatprep.subr.mxu0 0.0
    %7367 = vmatpush1.msra.mxu0 %v7231
    %7368 = vmatprep.subr.mxu0 0.0
    %7369 = vmatpush1.msra.mxu0 %v7232
    %7370 = vmatprep.subr.mxu0 0.0
    %7371 = vmatpush1.msra.mxu0 %v7233
    %7372 = vmatprep.subr.mxu0 0.0
    %7373 = vmatpush1.msra.mxu0 %v7234
    %7374 = vmatprep.subr.mxu0 0.0
    %7375 = vmatpush1.msra.mxu0 %v7235
    %7376 = vmatprep.subr.mxu0 0.0
    %7377 = vmatpush1.msra.mxu0 %v7236
    %7378 = vmatprep.subr.mxu0 0.0
    %7379 = vmatpush1.msra.mxu0 %v7237
    %7380 = vmatprep.subr.mxu0 0.0
    %7381 = vmatpush1.msra.mxu0 %v7238
    %7382 = vmatprep.subr.mxu0 0.0
    %7383 = vmatpush1.msra.mxu0 %v7239
    %7384 = vmatprep.subr.mxu0 0.0
    %7385 = vmatpush1.msra.mxu0 %v7240
    %7386 = vmatprep.subr.mxu0 0.0
    %7387 = vmatpush1.msra.mxu0 %v7241
    %7388 = vmatprep.subr.mxu0 0.0
    %7389 = vmatpush1.msra.mxu0 %v7242
    %7390 = vmatprep.subr.mxu0 0.0
    %7391 = vmatpush1.msra.mxu0 %v7243
    %7392 = vmatprep.subr.mxu0 0.0
    %7393 = vmatpush1.msra.mxu0 %v7244
    %7394 = vmatprep.subr.mxu0 0.0
    %7395 = vmatpush1.msra.mxu0 %v7245
    %7396 = vmatprep.subr.mxu0 0.0
    %7397 = vmatpush1.msra.mxu0 %v7246
    %7398 = vmatprep.subr.mxu0 0.0
    %7399 = vmatpush1.msra.mxu0 %v7247
    %7400 = vmatprep.subr.mxu0 0.0
    %7401 = vmatpush1.msra.mxu0 %v7248
    %7402 = vmatprep.subr.mxu0 0.0
    %7403 = vmatpush1.msra.mxu0 %v7249
    %7404 = vmatprep.subr.mxu0 0.0
    %7405 = vmatpush1.msra.mxu0 %v7250
    %7406 = vmatprep.subr.mxu0 0.0
    %7407 = vmatpush1.msra.mxu0 %v7251
    %7408 = vmatprep.subr.mxu0 0.0
    %7409 = vmatpush1.msra.mxu0 %v7252
    %7410 = vmatprep.subr.mxu0 0.0
    %7411 = vmatpush1.msra.mxu0 %v7253
    %7412 = vmatprep.subr.mxu0 0.0
    %7413 = vmatpush1.msra.mxu0 %v7254
    %7414 = vmatprep.subr.mxu0 0.0
    %7415 = vmatpush1.msra.mxu0 %v7255
    %7416 = vmatprep.subr.mxu0 0.0
    %7417 = vmatpush1.msra.mxu0 %v7256
    %7418 = vmatprep.mubr.f32.mxu0 %v7193
    %7419 = vmatmul.mubr.f32.gmra.mrb[0].mxu0 %v6275
    %v7420 = vpop.f32.mrb[0].mxu0
    %v7421 = vadd.f32 %v7335, %v7420
    %v7422 = vpop.f32.mrb[0].mxu0
    %7423 = vmatprep.mubr.f32.mxu0 %v7194
    %7424 = vmatmul.mubr.f32.gmra.mrb[0].mxu0 %v6281
    %v7425 = vpop.f32.mrb[0].mxu0
    %v7426 = vadd.f32 %v7335, %v7425
    %v7427 = vpop.f32.mrb[0].mxu0
    %7428 = vmatprep.mubr.f32.mxu0 %v7195
    %7429 = vmatmul.mubr.f32.gmra.mrb[0].mxu0 %v6287
    %v7430 = vpop.f32.mrb[0].mxu0
    %v7431 = vadd.f32 %v7335, %v7430
    %v7432 = vpop.f32.mrb[0].mxu0
    %7433 = vmatprep.mubr.f32.mxu0 %v7196
    %7434 = vmatmul.mubr.f32.gmra.mrb[0].mxu0 %v6293
    %v7435 = vpop.f32.mrb[0].mxu0
    %v7436 = vadd.f32 %v7335, %v7435
    %v7437 = vpop.f32.mrb[0].mxu0
    %7438 = vmatprep.mubr.f32.mxu0 %v7197
    %7439 = vmatmul.mubr.f32.gmra.mrb[0].mxu0 %v6299
    %v7440 = vpop.f32.mrb[0].mxu0
    %v7441 = vadd.f32 %v7335, %v7440
    %v7442 = vpop.f32.mrb[0].mxu0
    %7443 = vmatprep.mubr.f32.mxu0 %v7198
    %7444 = vmatmul.mubr.f32.gmra.mrb[0].mxu0 %v6305
    %v7445 = vpop.f32.mrb[0].mxu0
    %v7446 = vadd.f32 %v7335, %v7445
    %v7447 = vpop.f32.mrb[0].mxu0
    %7448 = vmatprep.mubr.f32.mxu0 %v7199
    %7449 = vmatmul.mubr.f32.gmra.mrb[0].mxu0 %v6311
    %v7450 = vpop.f32.mrb[0].mxu0
    %v7451 = vadd.f32 %v7335, %v7450
    %v7452 = vpop.f32.mrb[0].mxu0
    %7453 = vmatprep.mubr.f32.mxu0 %v7200
    %7454 = vmatmul.mubr.f32.gmra.mrb[0].mxu0 %v6317
    %v7455 = vpop.f32.mrb[0].mxu0
    %v7456 = vadd.f32 %v7335, %v7455
    %v7457 = vpop.f32.mrb[0].mxu0
    %7458 = vdwg.mxu0
    %7459 = vmatprep.subr.mxu0 0.0
    %7460 = vmatpush1.msra.mxu0 %v7257
    %7461 = vmatprep.subr.mxu0 0.0
    %7462 = vmatpush1.msra.mxu0 %v7258
    %7463 = vmatprep.subr.mxu0 0.0
    %7464 = vmatpush1.msra.mxu0 %v7259
    %7465 = vmatprep.subr.mxu0 0.0
    %7466 = vmatpush1.msra.mxu0 %v7260
    %7467 = vmatprep.subr.mxu0 0.0
    %7468 = vmatpush1.msra.mxu0 %v7261
    %7469 = vmatprep.subr.mxu0 0.0
    %7470 = vmatpush1.msra.mxu0 %v7262
    %7471 = vmatprep.subr.mxu0 0.0
    %7472 = vmatpush1.msra.mxu0 %v7263
    %7473 = vmatprep.subr.mxu0 0.0
    %7474 = vmatpush1.msra.mxu0 %v7264
    %7475 = vmatprep.subr.mxu0 0.0
    %7476 = vmatpush1.msra.mxu0 %v7265
    %7477 = vmatprep.subr.mxu0 0.0
    %7478 = vmatpush1.msra.mxu0 %v7266
    %7479 = vmatprep.subr.mxu0 0.0
    %7480 = vmatpush1.msra.mxu0 %v7267
    %7481 = vmatprep.subr.mxu0 0.0
    %7482 = vmatpush1.msra.mxu0 %v7268
    %7483 = vmatprep.subr.mxu0 0.0
    %7484 = vmatpush1.msra.mxu0 %v7269
    %7485 = vmatprep.subr.mxu0 0.0
    %7486 = vmatpush1.msra.mxu0 %v7270
    %7487 = vmatprep.subr.mxu0 0.0
    %7488 = vmatpush1.msra.mxu0 %v7271
    %7489 = vmatprep.subr.mxu0 0.0
    %7490 = vmatpush1.msra.mxu0 %v7272
    %7491 = vmatprep.subr.mxu0 0.0
    %7492 = vmatpush1.msra.mxu0 %v7273
    %7493 = vmatprep.subr.mxu0 0.0
    %7494 = vmatpush1.msra.mxu0 %v7274
    %7495 = vmatprep.subr.mxu0 0.0
    %7496 = vmatpush1.msra.mxu0 %v7275
    %7497 = vmatprep.subr.mxu0 0.0
    %7498 = vmatpush1.msra.mxu0 %v7276
    %7499 = vmatprep.subr.mxu0 0.0
    %7500 = vmatpush1.msra.mxu0 %v7277
    %7501 = vmatprep.subr.mxu0 0.0
    %7502 = vmatpush1.msra.mxu0 %v7278
    %7503 = vmatprep.subr.mxu0 0.0
    %7504 = vmatpush1.msra.mxu0 %v7279
    %7505 = vmatprep.subr.mxu0 0.0
    %7506 = vmatpush1.msra.mxu0 %v7280
    %7507 = vmatprep.subr.mxu0 0.0
    %7508 = vmatpush1.msra.mxu0 %v7281
    %7509 = vmatprep.subr.mxu0 0.0
    %7510 = vmatpush1.msra.mxu0 %v7282
    %7511 = vmatprep.subr.mxu0 0.0
    %7512 = vmatpush1.msra.mxu0 %v7283
    %7513 = vmatprep.subr.mxu0 0.0
    %7514 = vmatpush1.msra.mxu0 %v7284
    %7515 = vmatprep.subr.mxu0 0.0
    %7516 = vmatpush1.msra.mxu0 %v7285
    %7517 = vmatprep.subr.mxu0 0.0
    %7518 = vmatpush1.msra.mxu0 %v7286
    %7519 = vmatprep.subr.mxu0 0.0
    %7520 = vmatpush1.msra.mxu0 %v7287
    %7521 = vmatprep.subr.mxu0 0.0
    %7522 = vmatpush1.msra.mxu0 %v7288
    %7523 = vmatprep.mubr.f32.mxu0 %v7209
    %7524 = vmatmul.mubr.f32.gmra.mrb[0].mxu0 %v7201
    %v7525 = vpop.f32.mrb[0].mxu0
    %v7526 = vadd.f32 %v7421, %v7525
    %v7527 = vpop.f32.mrb[0].mxu0
    %7528 = vmatprep.mubr.f32.mxu0 %v7210
    %7529 = vmatmul.mubr.f32.gmra.mrb[0].mxu0 %v7202
    %v7530 = vpop.f32.mrb[0].mxu0
    %v7531 = vadd.f32 %v7426, %v7530
    %v7532 = vpop.f32.mrb[0].mxu0
    %7533 = vmatprep.mubr.f32.mxu0 %v7211
    %7534 = vmatmul.mubr.f32.gmra.mrb[0].mxu0 %v7203
    %v7535 = vpop.f32.mrb[0].mxu0
    %v7536 = vadd.f32 %v7431, %v7535
    %v7537 = vpop.f32.mrb[0].mxu0
    %7538 = vmatprep.mubr.f32.mxu0 %v7212
    %7539 = vmatmul.mubr.f32.gmra.mrb[0].mxu0 %v7204
    %v7540 = vpop.f32.mrb[0].mxu0
    %v7541 = vadd.f32 %v7436, %v7540
    %v7542 = vpop.f32.mrb[0].mxu0
    %7543 = vmatprep.mubr.f32.mxu0 %v7213
    %7544 = vmatmul.mubr.f32.gmra.mrb[0].mxu0 %v7205
    %v7545 = vpop.f32.mrb[0].mxu0
    %v7546 = vadd.f32 %v7441, %v7545
    %v7547 = vpop.f32.mrb[0].mxu0
    %7548 = vmatprep.mubr.f32.mxu0 %v7214
    %7549 = vmatmul.mubr.f32.gmra.mrb[0].mxu0 %v7206
    %v7550 = vpop.f32.mrb[0].mxu0
    %v7551 = vadd.f32 %v7446, %v7550
    %v7552 = vpop.f32.mrb[0].mxu0
    %7553 = vmatprep.mubr.f32.mxu0 %v7215
    %7554 = vmatmul.mubr.f32.gmra.mrb[0].mxu0 %v7207
    %v7555 = vpop.f32.mrb[0].mxu0
    %v7556 = vadd.f32 %v7451, %v7555
    %v7557 = vpop.f32.mrb[0].mxu0
    %7558 = vmatprep.mubr.f32.mxu0 %v7216
    %7559 = vmatmul.mubr.f32.gmra.mrb[0].mxu0 %v7208
    %v7560 = vpop.f32.mrb[0].mxu0
    %v7561 = vadd.f32 %v7456, %v7560
    %v7562 = vpop.f32.mrb[0].mxu0
    %7563 = vdwg.mxu0
    %7564 = vmatprep.subr.mxu0 0.0
    %7565 = vmatpush1.msra.mxu0 %v7289
    %7566 = vmatprep.subr.mxu0 0.0
    %7567 = vmatpush1.msra.mxu0 %v7290
    %7568 = vmatprep.subr.mxu0 0.0
    %7569 = vmatpush1.msra.mxu0 %v7291
    %7570 = vmatprep.subr.mxu0 0.0
    %7571 = vmatpush1.msra.mxu0 %v7292
    %7572 = vmatprep.subr.mxu0 0.0
    %7573 = vmatpush1.msra.mxu0 %v7293
    %7574 = vmatprep.subr.mxu0 0.0
    %7575 = vmatpush1.msra.mxu0 %v7294
    %7576 = vmatprep.subr.mxu0 0.0
    %7577 = vmatpush1.msra.mxu0 %v7295
    %7578 = vmatprep.subr.mxu0 0.0
    %7579 = vmatpush1.msra.mxu0 %v7296
    %7580 = vmatprep.subr.mxu0 0.0
    %7581 = vmatpush1.msra.mxu0 %v7297
    %7582 = vmatprep.subr.mxu0 0.0
    %7583 = vmatpush1.msra.mxu0 %v7298
    %7584 = vmatprep.subr.mxu0 0.0
    %7585 = vmatpush1.msra.mxu0 %v7299
    %7586 = vmatprep.subr.mxu0 0.0
    %7587 = vmatpush1.msra.mxu0 %v7300
    %7588 = vmatprep.subr.mxu0 0.0
    %7589 = vmatpush1.msra.mxu0 %v7301
    %7590 = vmatprep.subr.mxu0 0.0
    %7591 = vmatpush1.msra.mxu0 %v7302
    %7592 = vmatprep.subr.mxu0 0.0
    %7593 = vmatpush1.msra.mxu0 %v7303
    %7594 = vmatprep.subr.mxu0 0.0
    %7595 = vmatpush1.msra.mxu0 %v7304
    %7596 = vmatprep.subr.mxu0 0.0
    %7597 = vmatpush1.msra.mxu0 %v7305
    %7598 = vmatprep.subr.mxu0 0.0
    %7599 = vmatpush1.msra.mxu0 %v7306
    %7600 = vmatprep.subr.mxu0 0.0
    %7601 = vmatpush1.msra.mxu0 %v7307
    %7602 = vmatprep.subr.mxu0 0.0
    %7603 = vmatpush1.msra.mxu0 %v7308
    %7604 = vmatprep.subr.mxu0 0.0
    %7605 = vmatpush1.msra.mxu0 %v7309
    %7606 = vmatprep.subr.mxu0 0.0
    %7607 = vmatpush1.msra.mxu0 %v7310
    %7608 = vmatprep.subr.mxu0 0.0
    %7609 = vmatpush1.msra.mxu0 %v7311
    %7610 = vmatprep.subr.mxu0 0.0
    %7611 = vmatpush1.msra.mxu0 %v7312
    %7612 = vmatprep.subr.mxu0 0.0
    %7613 = vmatpush1.msra.mxu0 %v7313
    %7614 = vmatprep.subr.mxu0 0.0
    %7615 = vmatpush1.msra.mxu0 %v7314
    %7616 = vmatprep.subr.mxu0 0.0
    %7617 = vmatpush1.msra.mxu0 %v7315
    %7618 = vmatprep.subr.mxu0 0.0
    %7619 = vmatpush1.msra.mxu0 %v7316
    %7620 = vmatprep.subr.mxu0 0.0
    %7621 = vmatpush1.msra.mxu0 %v7317
    %7622 = vmatprep.subr.mxu0 0.0
    %7623 = vmatpush1.msra.mxu0 %v7318
    %7624 = vmatprep.subr.mxu0 0.0
    %7625 = vmatpush1.msra.mxu0 %v7319
    %7626 = vmatprep.subr.mxu0 0.0
    %7627 = vmatpush1.msra.mxu0 %v7320
    %7628 = vmatprep.mubr.f32.mxu0 %v7217
    %7629 = vmatmul.mubr.f32.gmra.mrb[0].mxu0 %v7097
    %v7630 = vpop.f32.mrb[0].mxu0
    %v7631 = vadd.f32 %v7526, %v7630
    %v7632 = vpop.f32.mrb[0].mxu0
    %7633 = vmatprep.mubr.f32.mxu0 %v7218
    %7634 = vmatmul.mubr.f32.gmra.mrb[0].mxu0 %v7098
    %v7635 = vpop.f32.mrb[0].mxu0
    %v7636 = vadd.f32 %v7531, %v7635
    %v7637 = vpop.f32.mrb[0].mxu0
    %7638 = vmatprep.mubr.f32.mxu0 %v7219
    %7639 = vmatmul.mubr.f32.gmra.mrb[0].mxu0 %v7099
    %v7640 = vpop.f32.mrb[0].mxu0
    %v7641 = vadd.f32 %v7536, %v7640
    %v7642 = vpop.f32.mrb[0].mxu0
    %7643 = vmatprep.mubr.f32.mxu0 %v7220
    %7644 = vmatmul.mubr.f32.gmra.mrb[0].mxu0 %v7100
    %v7645 = vpop.f32.mrb[0].mxu0
    %v7646 = vadd.f32 %v7541, %v7645
    %v7647 = vpop.f32.mrb[0].mxu0
    %7648 = vmatprep.mubr.f32.mxu0 %v7221
    %7649 = vmatmul.mubr.f32.gmra.mrb[0].mxu0 %v7101
    %v7650 = vpop.f32.mrb[0].mxu0
    %v7651 = vadd.f32 %v7546, %v7650
    %v7652 = vpop.f32.mrb[0].mxu0
    %7653 = vmatprep.mubr.f32.mxu0 %v7222
    %7654 = vmatmul.mubr.f32.gmra.mrb[0].mxu0 %v7102
    %v7655 = vpop.f32.mrb[0].mxu0
    %v7656 = vadd.f32 %v7551, %v7655
    %v7657 = vpop.f32.mrb[0].mxu0
    %7658 = vmatprep.mubr.f32.mxu0 %v7223
    %7659 = vmatmul.mubr.f32.gmra.mrb[0].mxu0 %v7103
    %v7660 = vpop.f32.mrb[0].mxu0
    %v7661 = vadd.f32 %v7556, %v7660
    %v7662 = vpop.f32.mrb[0].mxu0
    %7663 = vmatprep.mubr.f32.mxu0 %v7224
    %7664 = vmatmul.mubr.f32.gmra.mrb[0].mxu0 %v7104
    %v7665 = vpop.f32.mrb[0].mxu0
    %v7666 = vadd.f32 %v7561, %v7665
    %v7667 = vpop.f32.mrb[0].mxu0
    %7668 = vdwg.mxu0
    %7669 = vmatprep.subr.mxu0 0.0
    %7670 = vmatpush1.msra.mxu0 %v7321
    %7671 = vmatprep.subr.mxu0 0.0
    %7672 = vmatpush1.msra.mxu0 %v7322
    %7673 = vmatprep.subr.mxu0 0.0
    %7674 = vmatpush1.msra.mxu0 %v7323
    %7675 = vmatprep.subr.mxu0 0.0
    %7676 = vmatpush1.msra.mxu0 %v7324
    %7677 = vmatprep.subr.mxu0 0.0
    %7678 = vmatpush1.msra.mxu0 %v7325
    %7679 = vmatprep.subr.mxu0 0.0
    %7680 = vmatpush1.msra.mxu0 %v7326
    %7681 = vmatprep.subr.mxu0 0.0
    %7682 = vmatpush1.msra.mxu0 %v7327
    %7683 = vmatprep.subr.mxu0 0.0
    %7684 = vmatpush1.msra.mxu0 %v7328
    %7685 = vmatprep.subr.mxu0 0.0
    %7686 = vmatpush1.msra.mxu0 %v7329
    %7687 = vmatprep.subr.mxu0 0.0
    %7688 = vmatpush1.msra.mxu0 0.0
    %7689 = vmatprep.subr.mxu0 0.0
    %7690 = vmatpush1.msra.mxu0 0.0
    %7691 = vmatprep.subr.mxu0 0.0
    %7692 = vmatpush1.msra.mxu0 0.0
    %7693 = vmatprep.subr.mxu0 0.0
    %7694 = vmatpush1.msra.mxu0 0.0
    %7695 = vmatprep.subr.mxu0 0.0
    %7696 = vmatpush1.msra.mxu0 0.0
    %7697 = vmatprep.subr.mxu0 0.0
    %7698 = vmatpush1.msra.mxu0 0.0
    %7699 = vmatprep.subr.mxu0 0.0
    %7700 = vmatpush1.msra.mxu0 0.0
    %7701 = vmatprep.subr.mxu0 0.0
    %7702 = vmatpush1.msra.mxu0 0.0
    %7703 = vmatprep.subr.mxu0 0.0
    %7704 = vmatpush1.msra.mxu0 0.0
    %7705 = vmatprep.subr.mxu0 0.0
    %7706 = vmatpush1.msra.mxu0 0.0
    %7707 = vmatprep.subr.mxu0 0.0
    %7708 = vmatpush1.msra.mxu0 0.0
    %7709 = vmatprep.subr.mxu0 0.0
    %7710 = vmatpush1.msra.mxu0 0.0
    %7711 = vmatprep.subr.mxu0 0.0
    %7712 = vmatpush1.msra.mxu0 0.0
    %7713 = vmatprep.subr.mxu0 0.0
    %7714 = vmatpush1.msra.mxu0 0.0
    %7715 = vmatprep.subr.mxu0 0.0
    %7716 = vmatpush1.msra.mxu0 0.0
    %7717 = vmatprep.subr.mxu0 0.0
    %7718 = vmatpush1.msra.mxu0 0.0
    %7719 = vmatprep.subr.mxu0 0.0
    %7720 = vmatpush1.msra.mxu0 0.0
    %7721 = vmatprep.subr.mxu0 0.0
    %7722 = vmatpush1.msra.mxu0 0.0
    %7723 = vmatprep.subr.mxu0 0.0
    %7724 = vmatpush1.msra.mxu0 0.0
    %7725 = vmatprep.subr.mxu0 0.0
    %7726 = vmatpush1.msra.mxu0 0.0
    %7727 = vmatprep.subr.mxu0 0.0
    %7728 = vmatpush1.msra.mxu0 0.0
    %7729 = vmatprep.subr.mxu0 0.0
    %7730 = vmatpush1.msra.mxu0 0.0
    %7731 = vmatprep.subr.mxu0 0.0
    %7732 = vmatpush1.msra.mxu0 0.0
    %7733 = vmatprep.mubr.f32.mxu0 0.0
    %7734 = vmatmul.mubr.f32.gmra.mrb[0].mxu0 %v7338
    %v7735 = vpop.f32.mrb[0].mxu0
    %v7736 = vadd.f32 %v7631, %v7735
    %v7737 = vpop.f32.mrb[0].mxu0
    %7738 = vmatprep.mubr.f32.mxu0 0.0
    %7739 = vmatmul.mubr.f32.gmra.mrb[0].mxu0 %v7340
    %v7740 = vpop.f32.mrb[0].mxu0
    %v7741 = vadd.f32 %v7636, %v7740
    %v7742 = vpop.f32.mrb[0].mxu0
    %7743 = vmatprep.mubr.f32.mxu0 0.0
    %7744 = vmatmul.mubr.f32.gmra.mrb[0].mxu0 %v7342
    %v7745 = vpop.f32.mrb[0].mxu0
    %v7746 = vadd.f32 %v7641, %v7745
    %v7747 = vpop.f32.mrb[0].mxu0
    %7748 = vmatprep.mubr.f32.mxu0 0.0
    %7749 = vmatmul.mubr.f32.gmra.mrb[0].mxu0 %v7344
    %v7750 = vpop.f32.mrb[0].mxu0
    %v7751 = vadd.f32 %v7646, %v7750
    %v7752 = vpop.f32.mrb[0].mxu0
    %7753 = vmatprep.mubr.f32.mxu0 0.0
    %7754 = vmatmul.mubr.f32.gmra.mrb[0].mxu0 %v7346
    %v7755 = vpop.f32.mrb[0].mxu0
    %v7756 = vadd.f32 %v7651, %v7755
    %v7757 = vpop.f32.mrb[0].mxu0
    %7758 = vmatprep.mubr.f32.mxu0 0.0
    %7759 = vmatmul.mubr.f32.gmra.mrb[0].mxu0 %v7348
    %v7760 = vpop.f32.mrb[0].mxu0
    %v7761 = vadd.f32 %v7656, %v7760
    %v7762 = vpop.f32.mrb[0].mxu0
    %7763 = vmatprep.mubr.f32.mxu0 0.0
    %7764 = vmatmul.mubr.f32.gmra.mrb[0].mxu0 %v7350
    %v7765 = vpop.f32.mrb[0].mxu0
    %v7766 = vadd.f32 %v7661, %v7765
    %v7767 = vpop.f32.mrb[0].mxu0
    %7768 = vmatprep.mubr.f32.mxu0 0.0
    %7769 = vmatmul.mubr.f32.gmra.mrb[0].mxu0 %v7352
    %v7770 = vpop.f32.mrb[0].mxu0
    %v7771 = vadd.f32 %v7666, %v7770
    %v7772 = vpop.f32.mrb[0].mxu0
    %7773 = vdwg.mxu0
    %7774 = vst.msk [vmem:[%s27] sm:$0xff] %vm823, %v7736
    %7775 = vst.msk [vmem:[%s27 + $0x8] sm:$0xff] %vm823, %v7741
    %7776 = vst.msk [vmem:[%s27 + $0x10] sm:$0xff] %vm823, %v7746
    %7777 = vst.msk [vmem:[%s27 + $0x18] sm:$0xff] %vm823, %v7751
    %7778 = vst.msk [vmem:[%s27 + $0x20] sm:$0xff] %vm823, %v7756
    %7779 = vst.msk [vmem:[%s27 + $0x28] sm:$0xff] %vm823, %v7761
    %7780 = vst.msk [vmem:[%s27 + $0x30] sm:$0xff] %vm823, %v7766
    %7781 = vst.msk [vmem:[%s27 + $0x38] sm:$0xff] %vm823, %v7771
    // Predicated region
    $region106: #{recon_net_forward.1} parent=1 // pred_check
      _
    $region107: #{recon_net_forward.1} parent=1 // pred_check_branch
      %7783 = sbr.rel (0) target = $region109
    $region108: #{recon_net_forward.1} parent=1 // pred_region
      %s7785 = ssub.s32 32, 32
      %7786 = vsyncadd [#allocation3], %s7785
      %s7788 = sshll.u32 [#allocation2], 4
      %s7789 = int_to_ptr.vmem [resolvable:$true] %s7788
      %7791 = dma.vmem_to_hbm [thread:$0]  %s7789, 32, %s26, [#allocation3]
    $region109: #{recon_net_forward.1} parent=1 // pred_fallthru
      _
    // Predicated region
    $region110: #{recon_net_forward.1} parent=1 // pred_check
      _
    $region111: #{recon_net_forward.1} parent=1 // pred_check_branch
      %7793 = sbr.rel (0) target = $region113
    $region112: #{recon_net_forward.1} parent=1 // pred_region
      _
    $region113: #{recon_net_forward.1} parent=1 // pred_fallthru
      _
    // Predicated region
    $region114: #{recon_net_forward.1} parent=1 // pred_check
      _
    $region115: #{recon_net_forward.1} parent=1 // pred_check_branch
      %7795 = sbr.rel (0) target = $region117
    $region116: #{recon_net_forward.1} parent=1 // pred_region
      %7796 = dma.done [#allocation3], 32
    $region117: #{recon_net_forward.1} parent=1 // pred_fallthru
      _
    // Predicated region
    $region118: #{recon_net_forward.1} parent=1 // pred_check
      _
    $region119: #{recon_net_forward.1} parent=1 // pred_check_branch
      %7798 = sbr.rel (0) target = $region121
    $region120: #{recon_net_forward.1} parent=1 // pred_region
      _
    $region121: #{recon_net_forward.1} parent=1 // pred_fallthru
      _
    %7799 = vsyncpa [#allocation3], 1

</llo_original>
